<compile_context>
chip_gen: v6e
topology: v6e:2x2x1
jax: 0.10.0
libtpu: 0.0.40
codegen_flags: <defaults>
</compile_context>

<pallas_src>
import functools

import jax
import jax.numpy as jnp
from jax import lax
from jax.experimental import pallas as pl
from jax.experimental.pallas import tpu as pltpu

LEAKY_SLOPE = 0.01  # PyTorch nn.LeakyReLU default negative_slope


def _leaky(x):
    return jnp.where(x > 0, x, LEAKY_SLOPE * x)


def _fused_double_conv_kernel(x_ref, w1_ref, b1_ref, w2_ref, b2_ref, o_ref,
                              xpad_ref, midpad_ref, *, H, W, Cin, Cmid, Cout, TH):
    """One (batch, row-tile) step of the fused double conv.

    x_ref:      (1, H, W, Cin)       full (unpadded) input image of this batch element
    w1_ref:     (3, 3, Cin, Cmid)    HWIO weights, stage 1
    b1_ref:     (1, Cmid)
    w2_ref:     (3, 3, Cmid, Cout)   HWIO weights, stage 2
    b2_ref:     (1, Cout)
    o_ref:      (1, TH, W, Cout)     output row-tile
    xpad_ref:   VMEM (H+2, W+2, Cin)     replication-padded input (built in-kernel)
    midpad_ref: VMEM (TH+2, W+2, Cmid)   replication-padded mid activation (tile + halo)
    """
    h0 = pl.program_id(1) * TH  # first output row of this tile

    # ---- ReplicationPad2d(1) of the input, built in VMEM (no HBM padded copy) ----
    x = x_ref[0]                                              # (H, W, Cin)
    xpad_ref[1:H + 1, 1:W + 1, :] = x
    xpad_ref[1:H + 1, 0:1, :] = x[:, 0:1, :]
    xpad_ref[1:H + 1, W + 1:W + 2, :] = x[:, W - 1:W, :]
    xpad_ref[0:1, :, :] = xpad_ref[1:2, :, :]
    xpad_ref[H + 1:H + 2, :, :] = xpad_ref[H:H + 1, :, :]

    def conv1_rows(row_start, nrows):
        """Mid rows [row_start, row_start + nrows): conv1 + bias + LeakyReLU."""
        acc = jnp.zeros((nrows, W, Cmid), jnp.float32)
        for dy in range(3):
            for dx in range(3):
                patch = xpad_ref[pl.ds(row_start + dy, nrows), dx:dx + W, :]
                acc = acc + lax.dot_general(
                    patch, w1_ref[dy, dx],
                    dimension_numbers=(((2,), (0,)), ((), ())),
                    preferred_element_type=jnp.float32)
        return _leaky(acc + b1_ref[...].reshape(1, 1, Cmid))

    # ---- stage 1: mid activation for this tile (+ 1-row replication halo each side) ----
    # midpad row i  <->  mid image row clamp(h0 - 1 + i, 0, H - 1)
    midpad_ref[1:TH + 1, 1:W + 1, :] = conv1_rows(h0, TH)
    midpad_ref[0:1, 1:W + 1, :] = conv1_rows(jnp.maximum(h0 - 1, 0), 1)
    midpad_ref[TH + 1:TH + 2, 1:W + 1, :] = conv1_rows(jnp.minimum(h0 + TH, H - 1), 1)
    # width replication of the mid activation
    midpad_ref[:, 0:1, :] = midpad_ref[:, 1:2, :]
    midpad_ref[:, W + 1:W + 2, :] = midpad_ref[:, W:W + 1, :]

    # ---- stage 2: conv2 + bias + LeakyReLU on the tile ----
    acc = jnp.zeros((TH, W, Cout), jnp.float32)
    for dy in range(3):
        for dx in range(3):
            patch = midpad_ref[dy:dy + TH, dx:dx + W, :]
            acc = acc + lax.dot_general(
                patch, w2_ref[dy, dx],
                dimension_numbers=(((2,), (0,)), ((), ())),
                preferred_element_type=jnp.float32)
    acc = acc + b2_ref[...].reshape(1, 1, Cout)
    o_ref[0] = _leaky(acc).astype(o_ref.dtype)


def _pick_row_tile(H, max_rows=256):
    """Largest divisor of H <= max_rows, preferring >=2 tiles so DMA pipelines."""
    if H <= 8:
        return H
    for th in range(min(H // 2, max_rows), 3, -1):
        if H % th == 0:
            return th
    return H


def double_conv_m_nhwc(x_nhwc, w1_hwio, b1, w2_hwio, b2):
    """Fused (pad -> conv3x3 -> LeakyReLU) x 2, NHWC in / NHWC out, one pallas_call."""
    N, H, W, Cin = x_nhwc.shape
    Cmid = w1_hwio.shape[-1]
    Cout = w2_hwio.shape[-1]
    TH = _pick_row_tile(H)
    n_ht = H // TH

    kernel = functools.partial(_fused_double_conv_kernel,
                               H=H, W=W, Cin=Cin, Cmid=Cmid, Cout=Cout, TH=TH)

    return pl.pallas_call(
        kernel,
        out_shape=jax.ShapeDtypeStruct((N, H, W, Cout), x_nhwc.dtype),
        grid_spec=pltpu.PrefetchScalarGridSpec(
            num_scalar_prefetch=0,
            grid=(N, n_ht),
            in_specs=[
                pl.BlockSpec((1, H, W, Cin), lambda n, h: (n, 0, 0, 0)),
                pl.BlockSpec((3, 3, Cin, Cmid), lambda n, h: (0, 0, 0, 0)),
                pl.BlockSpec((1, Cmid), lambda n, h: (0, 0)),
                pl.BlockSpec((3, 3, Cmid, Cout), lambda n, h: (0, 0, 0, 0)),
                pl.BlockSpec((1, Cout), lambda n, h: (0, 0)),
            ],
            out_specs=pl.BlockSpec((1, TH, W, Cout), lambda n, h: (n, h, 0, 0)),
            scratch_shapes=[
                pltpu.VMEM((H + 2, W + 2, Cin), jnp.float32),
                pltpu.VMEM((TH + 2, W + 2, Cmid), jnp.float32),
            ],
        ),
        compiler_params=pltpu.CompilerParams(
            dimension_semantics=("parallel", "parallel"),
            vmem_limit_bytes=32 * 1024 * 1024,
        ),
    )(x_nhwc, w1_hwio, b1.reshape(1, Cmid), w2_hwio, b2.reshape(1, Cout))


def double_conv_m(x_nchw, params):
    """DoubleConvM forward, PyTorch NCHW in/out (transposes only at the module boundary)."""
    w1, b1, w2, b2 = params                      # w*: (Cout, Cin, 3, 3), b*: (Cout,)
    x = jnp.transpose(x_nchw, (0, 2, 3, 1))      # NCHW -> NHWC (activation)
    w1_hwio = jnp.transpose(w1, (2, 3, 1, 0))    # OIHW -> HWIO (jit-constant-folded)
    w2_hwio = jnp.transpose(w2, (2, 3, 1, 0))
    y = double_conv_m_nhwc(x, w1_hwio, b1, w2_hwio, b2)
    return jnp.transpose(y, (0, 3, 1, 2))        # NHWC -> NCHW


def init_params(key, in_channels, out_channels, mid_channels=None):
    if not mid_channels:
        mid_channels = out_channels
    k1, k2, k3, k4 = jax.random.split(key, 4)
    bound1 = (1.0 / (in_channels * 9)) ** 0.5
    bound2 = (1.0 / (mid_channels * 9)) ** 0.5
    w1 = jax.random.uniform(k1, (mid_channels, in_channels, 3, 3),
                            jnp.float32, -bound1, bound1)
    b1 = jax.random.uniform(k2, (mid_channels,), jnp.float32, -bound1, bound1)
    w2 = jax.random.uniform(k3, (out_channels, mid_channels, 3, 3),
                            jnp.float32, -bound2, bound2)
    b2 = jax.random.uniform(k4, (out_channels,), jnp.float32, -bound2, bound2)
    return (w1, b1, w2, b2)


def _reference(x_nchw, params):
    """Pure-JAX reference (NCHW, matches PyTorch semantics)."""
    w1, b1, w2, b2 = params

    def block(x, w, b):
        xp = jnp.pad(x, ((0, 0), (0, 0), (1, 1), (1, 1)), mode="edge")
        y = lax.conv_general_dilated(
            xp, w, window_strides=(1, 1), padding="VALID",
            dimension_numbers=("NCHW", "OIHW", "NCHW"))
        y = y + b.reshape(1, -1, 1, 1)
        return jnp.where(y > 0, y, LEAKY_SLOPE * y)

    return block(block(x_nchw, w1, b1), w2, b2)


if __name__ == "__main__":
    key = jax.random.PRNGKey(0)
    kx, kp = jax.random.split(key)

    N, Cin, H, W = 2, 4, 16, 16
    Cout = 8
    x = jax.random.normal(kx, (N, Cin, H, W), jnp.float32)
    params = init_params(kp, Cin, Cout)

    fwd = jax.jit(functools.partial(double_conv_m, params=params))
    y = fwd(x)
    jax.block_until_ready(y)

    assert y.shape == (N, Cout, H, W), y.shape

    y_ref = _reference(x, params)
    assert jnp.allclose(y, y_ref, atol=2e-5, rtol=2e-5), \
        float(jnp.max(jnp.abs(y - y_ref)))

    print("KERNEL_OK")
</pallas_src>

<mosaic_0001>
module attributes {stable_mosaic.version = 11 : i64} {
  func.func @_fused_double_conv_kernel(%arg0: i32, %arg1: i32, %arg2: memref<1x16x16x4xf32, #tpu.memory_space<vmem>>, %arg3: memref<3x3x4x8xf32, #tpu.memory_space<vmem>>, %arg4: memref<1x8xf32, #tpu.memory_space<vmem>>, %arg5: memref<3x3x8x8xf32, #tpu.memory_space<vmem>>, %arg6: memref<1x8xf32, #tpu.memory_space<vmem>>, %arg7: memref<1x8x16x8xf32, #tpu.memory_space<vmem>>, %arg8: memref<18x18x4xf32, #tpu.memory_space<vmem>>, %arg9: memref<10x18x8xf32, #tpu.memory_space<vmem>>) attributes {dimension_semantics = [#tpu.dimension_semantics<parallel>, #tpu.dimension_semantics<parallel>], iteration_bounds = array<i64: 2, 2>, scalar_prefetch = 0 : i64, scratch_operands = 2 : i64, tpu.core_type = #tpu.core_type<tc>, window_params = [{transform_indices = @transform_0, window_bounds = array<i64: 1, 16, 16, 4>}, {pipeline_mode = #tpu.pipeline_mode<synchronous>, transform_indices = @transform_1, window_bounds = array<i64: 3, 3, 4, 8>}, {pipeline_mode = #tpu.pipeline_mode<synchronous>, transform_indices = @transform_2, window_bounds = array<i64: 1, 8>}, {pipeline_mode = #tpu.pipeline_mode<synchronous>, transform_indices = @transform_3, window_bounds = array<i64: 3, 3, 8, 8>}, {pipeline_mode = #tpu.pipeline_mode<synchronous>, transform_indices = @transform_4, window_bounds = array<i64: 1, 8>}, {transform_indices = @transform_5, window_bounds = array<i64: 1, 8, 16, 8>}]} {
    %c8_i32 = arith.constant 8 : i32
    %0 = arith.muli %arg1, %c8_i32 : i32
    %c0 = arith.constant 0 : index
    %c0_0 = arith.constant 0 : index
    %c0_1 = arith.constant 0 : index
    %c0_2 = arith.constant 0 : index
    %1 = vector.load %arg2[%c0, %c0_0, %c0_1, %c0_2] : memref<1x16x16x4xf32, #tpu.memory_space<vmem>>, vector<1x16x16x4xf32>
    %2 = vector.shape_cast %1 : vector<1x16x16x4xf32> to vector<16x16x4xf32>
    %c1 = arith.constant 1 : index
    %c1_3 = arith.constant 1 : index
    %c0_4 = arith.constant 0 : index
    %3 = vector.load %arg8[%c1, %c1_3, %c0_4] : memref<18x18x4xf32, #tpu.memory_space<vmem>>, vector<16x16x4xf32>
    tpu.vector_store %arg8[%c1, %c1_3, %c0_4], %2 {strides = array<i32>} : memref<18x18x4xf32, #tpu.memory_space<vmem>>, vector<16x16x4xf32>,
    %4 = vector.extract_strided_slice %2 {offsets = [0, 0, 0], sizes = [16, 1, 4], strides = [1, 1, 1]} : vector<16x16x4xf32> to vector<16x1x4xf32>
    %c1_5 = arith.constant 1 : index
    %c0_6 = arith.constant 0 : index
    %c0_7 = arith.constant 0 : index
    %5 = vector.load %arg8[%c1_5, %c0_6, %c0_7] : memref<18x18x4xf32, #tpu.memory_space<vmem>>, vector<16x1x4xf32>
    tpu.vector_store %arg8[%c1_5, %c0_6, %c0_7], %4 {strides = array<i32>} : memref<18x18x4xf32, #tpu.memory_space<vmem>>, vector<16x1x4xf32>,
    %6 = vector.extract_strided_slice %2 {offsets = [0, 15, 0], sizes = [16, 1, 4], strides = [1, 1, 1]} : vector<16x16x4xf32> to vector<16x1x4xf32>
    %c1_8 = arith.constant 1 : index
    %c17 = arith.constant 17 : index
    %c0_9 = arith.constant 0 : index
    %7 = vector.load %arg8[%c1_8, %c17, %c0_9] : memref<18x18x4xf32, #tpu.memory_space<vmem>>, vector<16x1x4xf32>
    tpu.vector_store %arg8[%c1_8, %c17, %c0_9], %6 {strides = array<i32>} : memref<18x18x4xf32, #tpu.memory_space<vmem>>, vector<16x1x4xf32>,
    %c1_10 = arith.constant 1 : index
    %c0_11 = arith.constant 0 : index
    %c0_12 = arith.constant 0 : index
    %8 = vector.load %arg8[%c1_10, %c0_11, %c0_12] : memref<18x18x4xf32, #tpu.memory_space<vmem>>, vector<1x18x4xf32>
    %c0_13 = arith.constant 0 : index
    %c0_14 = arith.constant 0 : index
    %c0_15 = arith.constant 0 : index
    %9 = vector.load %arg8[%c0_13, %c0_14, %c0_15] : memref<18x18x4xf32, #tpu.memory_space<vmem>>, vector<1x18x4xf32>
    tpu.vector_store %arg8[%c0_13, %c0_14, %c0_15], %8 {strides = array<i32>} : memref<18x18x4xf32, #tpu.memory_space<vmem>>, vector<1x18x4xf32>,
    %c16 = arith.constant 16 : index
    %c0_16 = arith.constant 0 : index
    %c0_17 = arith.constant 0 : index
    %10 = vector.load %arg8[%c16, %c0_16, %c0_17] : memref<18x18x4xf32, #tpu.memory_space<vmem>>, vector<1x18x4xf32>
    %c17_18 = arith.constant 17 : index
    %c0_19 = arith.constant 0 : index
    %c0_20 = arith.constant 0 : index
    %11 = vector.load %arg8[%c17_18, %c0_19, %c0_20] : memref<18x18x4xf32, #tpu.memory_space<vmem>>, vector<1x18x4xf32>
    tpu.vector_store %arg8[%c17_18, %c0_19, %c0_20], %10 {strides = array<i32>} : memref<18x18x4xf32, #tpu.memory_space<vmem>>, vector<1x18x4xf32>,
    %cst = arith.constant 0.000000e+00 : f32
    %12 = vector.broadcast %cst : f32 to vector<8x16x8xf32>
    %c0_i32 = arith.constant 0 : i32
    %13 = arith.addi %0, %c0_i32 : i32
    %14 = arith.index_cast %13 : i32 to index
    %c0_21 = arith.constant 0 : index
    %c0_22 = arith.constant 0 : index
    %15 = vector.load %arg8[%14, %c0_21, %c0_22] : memref<18x18x4xf32, #tpu.memory_space<vmem>>, vector<8x16x4xf32>
    %c0_23 = arith.constant 0 : index
    %c0_24 = arith.constant 0 : index
    %c0_25 = arith.constant 0 : index
    %c0_26 = arith.constant 0 : index
    %16 = vector.load %arg3[%c0_23, %c0_24, %c0_25, %c0_26] : memref<3x3x4x8xf32, #tpu.memory_space<vmem>>, vector<1x1x4x8xf32>
    %17 = vector.shape_cast %16 : vector<1x1x4x8xf32> to vector<4x8xf32>
    %cst_27 = arith.constant dense<0.000000e+00> : vector<8x16x8xf32>
    %18 = tpu.matmul %15, %17, %cst_27 {dimension_numbers = #tpu.dot_dimension_numbers<[2], [0], [0, 1], [1], [0, 0, 0, 1, 1, 1], [], []>} : vector<8x16x4xf32>, vector<4x8xf32>, vector<8x16x8xf32> -> vector<8x16x8xf32>
    %19 = arith.addf %12, %18 : vector<8x16x8xf32>
    %c0_i32_28 = arith.constant 0 : i32
    %20 = arith.addi %0, %c0_i32_28 : i32
    %21 = arith.index_cast %20 : i32 to index
    %c1_29 = arith.constant 1 : index
    %c0_30 = arith.constant 0 : index
    %22 = vector.load %arg8[%21, %c1_29, %c0_30] : memref<18x18x4xf32, #tpu.memory_space<vmem>>, vector<8x16x4xf32>
    %c0_31 = arith.constant 0 : index
    %c1_32 = arith.constant 1 : index
    %c0_33 = arith.constant 0 : index
    %c0_34 = arith.constant 0 : index
    %23 = vector.load %arg3[%c0_31, %c1_32, %c0_33, %c0_34] : memref<3x3x4x8xf32, #tpu.memory_space<vmem>>, vector<1x1x4x8xf32>
    %24 = vector.shape_cast %23 : vector<1x1x4x8xf32> to vector<4x8xf32>
    %cst_35 = arith.constant dense<0.000000e+00> : vector<8x16x8xf32>
    %25 = tpu.matmul %22, %24, %cst_35 {dimension_numbers = #tpu.dot_dimension_numbers<[2], [0], [0, 1], [1], [0, 0, 0, 1, 1, 1], [], []>} : vector<8x16x4xf32>, vector<4x8xf32>, vector<8x16x8xf32> -> vector<8x16x8xf32>
    %26 = arith.addf %19, %25 : vector<8x16x8xf32>
    %c0_i32_36 = arith.constant 0 : i32
    %27 = arith.addi %0, %c0_i32_36 : i32
    %28 = arith.index_cast %27 : i32 to index
    %c2 = arith.constant 2 : index
    %c0_37 = arith.constant 0 : index
    %29 = vector.load %arg8[%28, %c2, %c0_37] : memref<18x18x4xf32, #tpu.memory_space<vmem>>, vector<8x16x4xf32>
    %c0_38 = arith.constant 0 : index
    %c2_39 = arith.constant 2 : index
    %c0_40 = arith.constant 0 : index
    %c0_41 = arith.constant 0 : index
    %30 = vector.load %arg3[%c0_38, %c2_39, %c0_40, %c0_41] : memref<3x3x4x8xf32, #tpu.memory_space<vmem>>, vector<1x1x4x8xf32>
    %31 = vector.shape_cast %30 : vector<1x1x4x8xf32> to vector<4x8xf32>
    %cst_42 = arith.constant dense<0.000000e+00> : vector<8x16x8xf32>
    %32 = tpu.matmul %29, %31, %cst_42 {dimension_numbers = #tpu.dot_dimension_numbers<[2], [0], [0, 1], [1], [0, 0, 0, 1, 1, 1], [], []>} : vector<8x16x4xf32>, vector<4x8xf32>, vector<8x16x8xf32> -> vector<8x16x8xf32>
    %33 = arith.addf %26, %32 : vector<8x16x8xf32>
    %c1_i32 = arith.constant 1 : i32
    %34 = arith.addi %0, %c1_i32 : i32
    %35 = arith.index_cast %34 : i32 to index
    %c0_43 = arith.constant 0 : index
    %c0_44 = arith.constant 0 : index
    %36 = vector.load %arg8[%35, %c0_43, %c0_44] : memref<18x18x4xf32, #tpu.memory_space<vmem>>, vector<8x16x4xf32>
    %c1_45 = arith.constant 1 : index
    %c0_46 = arith.constant 0 : index
    %c0_47 = arith.constant 0 : index
    %c0_48 = arith.constant 0 : index
    %37 = vector.load %arg3[%c1_45, %c0_46, %c0_47, %c0_48] : memref<3x3x4x8xf32, #tpu.memory_space<vmem>>, vector<1x1x4x8xf32>
    %38 = vector.shape_cast %37 : vector<1x1x4x8xf32> to vector<4x8xf32>
    %cst_49 = arith.constant dense<0.000000e+00> : vector<8x16x8xf32>
    %39 = tpu.matmul %36, %38, %cst_49 {dimension_numbers = #tpu.dot_dimension_numbers<[2], [0], [0, 1], [1], [0, 0, 0, 1, 1, 1], [], []>} : vector<8x16x4xf32>, vector<4x8xf32>, vector<8x16x8xf32> -> vector<8x16x8xf32>
    %40 = arith.addf %33, %39 : vector<8x16x8xf32>
    %c1_i32_50 = arith.constant 1 : i32
    %41 = arith.addi %0, %c1_i32_50 : i32
    %42 = arith.index_cast %41 : i32 to index
    %c1_51 = arith.constant 1 : index
    %c0_52 = arith.constant 0 : index
    %43 = vector.load %arg8[%42, %c1_51, %c0_52] : memref<18x18x4xf32, #tpu.memory_space<vmem>>, vector<8x16x4xf32>
    %c1_53 = arith.constant 1 : index
    %c1_54 = arith.constant 1 : index
    %c0_55 = arith.constant 0 : index
    %c0_56 = arith.constant 0 : index
    %44 = vector.load %arg3[%c1_53, %c1_54, %c0_55, %c0_56] : memref<3x3x4x8xf32, #tpu.memory_space<vmem>>, vector<1x1x4x8xf32>
    %45 = vector.shape_cast %44 : vector<1x1x4x8xf32> to vector<4x8xf32>
    %cst_57 = arith.constant dense<0.000000e+00> : vector<8x16x8xf32>
    %46 = tpu.matmul %43, %45, %cst_57 {dimension_numbers = #tpu.dot_dimension_numbers<[2], [0], [0, 1], [1], [0, 0, 0, 1, 1, 1], [], []>} : vector<8x16x4xf32>, vector<4x8xf32>, vector<8x16x8xf32> -> vector<8x16x8xf32>
    %47 = arith.addf %40, %46 : vector<8x16x8xf32>
    %c1_i32_58 = arith.constant 1 : i32
    %48 = arith.addi %0, %c1_i32_58 : i32
    %49 = arith.index_cast %48 : i32 to index
    %c2_59 = arith.constant 2 : index
    %c0_60 = arith.constant 0 : index
    %50 = vector.load %arg8[%49, %c2_59, %c0_60] : memref<18x18x4xf32, #tpu.memory_space<vmem>>, vector<8x16x4xf32>
    %c1_61 = arith.constant 1 : index
    %c2_62 = arith.constant 2 : index
    %c0_63 = arith.constant 0 : index
    %c0_64 = arith.constant 0 : index
    %51 = vector.load %arg3[%c1_61, %c2_62, %c0_63, %c0_64] : memref<3x3x4x8xf32, #tpu.memory_space<vmem>>, vector<1x1x4x8xf32>
    %52 = vector.shape_cast %51 : vector<1x1x4x8xf32> to vector<4x8xf32>
    %cst_65 = arith.constant dense<0.000000e+00> : vector<8x16x8xf32>
    %53 = tpu.matmul %50, %52, %cst_65 {dimension_numbers = #tpu.dot_dimension_numbers<[2], [0], [0, 1], [1], [0, 0, 0, 1, 1, 1], [], []>} : vector<8x16x4xf32>, vector<4x8xf32>, vector<8x16x8xf32> -> vector<8x16x8xf32>
    %54 = arith.addf %47, %53 : vector<8x16x8xf32>
    %c2_i32 = arith.constant 2 : i32
    %55 = arith.addi %0, %c2_i32 : i32
    %56 = arith.index_cast %55 : i32 to index
    %c0_66 = arith.constant 0 : index
    %c0_67 = arith.constant 0 : index
    %57 = vector.load %arg8[%56, %c0_66, %c0_67] : memref<18x18x4xf32, #tpu.memory_space<vmem>>, vector<8x16x4xf32>
    %c2_68 = arith.constant 2 : index
    %c0_69 = arith.constant 0 : index
    %c0_70 = arith.constant 0 : index
    %c0_71 = arith.constant 0 : index
    %58 = vector.load %arg3[%c2_68, %c0_69, %c0_70, %c0_71] : memref<3x3x4x8xf32, #tpu.memory_space<vmem>>, vector<1x1x4x8xf32>
    %59 = vector.shape_cast %58 : vector<1x1x4x8xf32> to vector<4x8xf32>
    %cst_72 = arith.constant dense<0.000000e+00> : vector<8x16x8xf32>
    %60 = tpu.matmul %57, %59, %cst_72 {dimension_numbers = #tpu.dot_dimension_numbers<[2], [0], [0, 1], [1], [0, 0, 0, 1, 1, 1], [], []>} : vector<8x16x4xf32>, vector<4x8xf32>, vector<8x16x8xf32> -> vector<8x16x8xf32>
    %61 = arith.addf %54, %60 : vector<8x16x8xf32>
    %c2_i32_73 = arith.constant 2 : i32
    %62 = arith.addi %0, %c2_i32_73 : i32
    %63 = arith.index_cast %62 : i32 to index
    %c1_74 = arith.constant 1 : index
    %c0_75 = arith.constant 0 : index
    %64 = vector.load %arg8[%63, %c1_74, %c0_75] : memref<18x18x4xf32, #tpu.memory_space<vmem>>, vector<8x16x4xf32>
    %c2_76 = arith.constant 2 : index
    %c1_77 = arith.constant 1 : index
    %c0_78 = arith.constant 0 : index
    %c0_79 = arith.constant 0 : index
    %65 = vector.load %arg3[%c2_76, %c1_77, %c0_78, %c0_79] : memref<3x3x4x8xf32, #tpu.memory_space<vmem>>, vector<1x1x4x8xf32>
    %66 = vector.shape_cast %65 : vector<1x1x4x8xf32> to vector<4x8xf32>
    %cst_80 = arith.constant dense<0.000000e+00> : vector<8x16x8xf32>
    %67 = tpu.matmul %64, %66, %cst_80 {dimension_numbers = #tpu.dot_dimension_numbers<[2], [0], [0, 1], [1], [0, 0, 0, 1, 1, 1], [], []>} : vector<8x16x4xf32>, vector<4x8xf32>, vector<8x16x8xf32> -> vector<8x16x8xf32>
    %68 = arith.addf %61, %67 : vector<8x16x8xf32>
    %c2_i32_81 = arith.constant 2 : i32
    %69 = arith.addi %0, %c2_i32_81 : i32
    %70 = arith.index_cast %69 : i32 to index
    %c2_82 = arith.constant 2 : index
    %c0_83 = arith.constant 0 : index
    %71 = vector.load %arg8[%70, %c2_82, %c0_83] : memref<18x18x4xf32, #tpu.memory_space<vmem>>, vector<8x16x4xf32>
    %c2_84 = arith.constant 2 : index
    %c2_85 = arith.constant 2 : index
    %c0_86 = arith.constant 0 : index
    %c0_87 = arith.constant 0 : index
    %72 = vector.load %arg3[%c2_84, %c2_85, %c0_86, %c0_87] : memref<3x3x4x8xf32, #tpu.memory_space<vmem>>, vector<1x1x4x8xf32>
    %73 = vector.shape_cast %72 : vector<1x1x4x8xf32> to vector<4x8xf32>
    %cst_88 = arith.constant dense<0.000000e+00> : vector<8x16x8xf32>
    %74 = tpu.matmul %71, %73, %cst_88 {dimension_numbers = #tpu.dot_dimension_numbers<[2], [0], [0, 1], [1], [0, 0, 0, 1, 1, 1], [], []>} : vector<8x16x4xf32>, vector<4x8xf32>, vector<8x16x8xf32> -> vector<8x16x8xf32>
    %75 = arith.addf %68, %74 : vector<8x16x8xf32>
    %c0_89 = arith.constant 0 : index
    %c0_90 = arith.constant 0 : index
    %76 = vector.load %arg4[%c0_89, %c0_90] : memref<1x8xf32, #tpu.memory_space<vmem>>, vector<1x8xf32>
    %77 = vector.shape_cast %76 : vector<1x8xf32> to vector<1x1x8xf32>
    %78 = vector.broadcast %77 : vector<1x1x8xf32> to vector<8x16x8xf32>
    %79 = arith.addf %75, %78 : vector<8x16x8xf32>
    %cst_91 = arith.constant 0.000000e+00 : f32
    %80 = vector.broadcast %cst_91 : f32 to vector<8x16x8xf32>
    %81 = arith.cmpf ogt, %79, %80 : vector<8x16x8xf32>
    %cst_92 = arith.constant 0.00999999977 : f32
    %82 = vector.broadcast %cst_92 : f32 to vector<8x16x8xf32>
    %83 = arith.mulf %82, %79 : vector<8x16x8xf32>
    %84 = arith.select %81, %79, %83 : vector<8x16x8xi1>, vector<8x16x8xf32>
    %c1_93 = arith.constant 1 : index
    %c1_94 = arith.constant 1 : index
    %c0_95 = arith.constant 0 : index
    %85 = vector.load %arg9[%c1_93, %c1_94, %c0_95] : memref<10x18x8xf32, #tpu.memory_space<vmem>>, vector<8x16x8xf32>
    tpu.vector_store %arg9[%c1_93, %c1_94, %c0_95], %84 {strides = array<i32>} : memref<10x18x8xf32, #tpu.memory_space<vmem>>, vector<8x16x8xf32>,
    %c1_i32_96 = arith.constant 1 : i32
    %86 = arith.subi %0, %c1_i32_96 : i32
    %c0_i32_97 = arith.constant 0 : i32
    %87 = arith.maxsi %86, %c0_i32_97 : i32
    %cst_98 = arith.constant 0.000000e+00 : f32
    %88 = vector.broadcast %cst_98 : f32 to vector<1x16x8xf32>
    %c0_i32_99 = arith.constant 0 : i32
    %89 = arith.addi %87, %c0_i32_99 : i32
    %90 = arith.index_cast %89 : i32 to index
    %c0_100 = arith.constant 0 : index
    %c0_101 = arith.constant 0 : index
    %91 = vector.load %arg8[%90, %c0_100, %c0_101] : memref<18x18x4xf32, #tpu.memory_space<vmem>>, vector<1x16x4xf32>
    %c0_102 = arith.constant 0 : index
    %c0_103 = arith.constant 0 : index
    %c0_104 = arith.constant 0 : index
    %c0_105 = arith.constant 0 : index
    %92 = vector.load %arg3[%c0_102, %c0_103, %c0_104, %c0_105] : memref<3x3x4x8xf32, #tpu.memory_space<vmem>>, vector<1x1x4x8xf32>
    %93 = vector.shape_cast %92 : vector<1x1x4x8xf32> to vector<4x8xf32>
    %cst_106 = arith.constant dense<0.000000e+00> : vector<1x16x8xf32>
    %94 = tpu.matmul %91, %93, %cst_106 {dimension_numbers = #tpu.dot_dimension_numbers<[2], [0], [0, 1], [1], [0, 0, 0, 1, 1, 1], [], []>} : vector<1x16x4xf32>, vector<4x8xf32>, vector<1x16x8xf32> -> vector<1x16x8xf32>
    %95 = arith.addf %88, %94 : vector<1x16x8xf32>
    %c0_i32_107 = arith.constant 0 : i32
    %96 = arith.addi %87, %c0_i32_107 : i32
    %97 = arith.index_cast %96 : i32 to index
    %c1_108 = arith.constant 1 : index
    %c0_109 = arith.constant 0 : index
    %98 = vector.load %arg8[%97, %c1_108, %c0_109] : memref<18x18x4xf32, #tpu.memory_space<vmem>>, vector<1x16x4xf32>
    %c0_110 = arith.constant 0 : index
    %c1_111 = arith.constant 1 : index
    %c0_112 = arith.constant 0 : index
    %c0_113 = arith.constant 0 : index
    %99 = vector.load %arg3[%c0_110, %c1_111, %c0_112, %c0_113] : memref<3x3x4x8xf32, #tpu.memory_space<vmem>>, vector<1x1x4x8xf32>
    %100 = vector.shape_cast %99 : vector<1x1x4x8xf32> to vector<4x8xf32>
    %cst_114 = arith.constant dense<0.000000e+00> : vector<1x16x8xf32>
    %101 = tpu.matmul %98, %100, %cst_114 {dimension_numbers = #tpu.dot_dimension_numbers<[2], [0], [0, 1], [1], [0, 0, 0, 1, 1, 1], [], []>} : vector<1x16x4xf32>, vector<4x8xf32>, vector<1x16x8xf32> -> vector<1x16x8xf32>
    %102 = arith.addf %95, %101 : vector<1x16x8xf32>
    %c0_i32_115 = arith.constant 0 : i32
    %103 = arith.addi %87, %c0_i32_115 : i32
    %104 = arith.index_cast %103 : i32 to index
    %c2_116 = arith.constant 2 : index
    %c0_117 = arith.constant 0 : index
    %105 = vector.load %arg8[%104, %c2_116, %c0_117] : memref<18x18x4xf32, #tpu.memory_space<vmem>>, vector<1x16x4xf32>
    %c0_118 = arith.constant 0 : index
    %c2_119 = arith.constant 2 : index
    %c0_120 = arith.constant 0 : index
    %c0_121 = arith.constant 0 : index
    %106 = vector.load %arg3[%c0_118, %c2_119, %c0_120, %c0_121] : memref<3x3x4x8xf32, #tpu.memory_space<vmem>>, vector<1x1x4x8xf32>
    %107 = vector.shape_cast %106 : vector<1x1x4x8xf32> to vector<4x8xf32>
    %cst_122 = arith.constant dense<0.000000e+00> : vector<1x16x8xf32>
    %108 = tpu.matmul %105, %107, %cst_122 {dimension_numbers = #tpu.dot_dimension_numbers<[2], [0], [0, 1], [1], [0, 0, 0, 1, 1, 1], [], []>} : vector<1x16x4xf32>, vector<4x8xf32>, vector<1x16x8xf32> -> vector<1x16x8xf32>
    %109 = arith.addf %102, %108 : vector<1x16x8xf32>
    %c1_i32_123 = arith.constant 1 : i32
    %110 = arith.addi %87, %c1_i32_123 : i32
    %111 = arith.index_cast %110 : i32 to index
    %c0_124 = arith.constant 0 : index
    %c0_125 = arith.constant 0 : index
    %112 = vector.load %arg8[%111, %c0_124, %c0_125] : memref<18x18x4xf32, #tpu.memory_space<vmem>>, vector<1x16x4xf32>
    %c1_126 = arith.constant 1 : index
    %c0_127 = arith.constant 0 : index
    %c0_128 = arith.constant 0 : index
    %c0_129 = arith.constant 0 : index
    %113 = vector.load %arg3[%c1_126, %c0_127, %c0_128, %c0_129] : memref<3x3x4x8xf32, #tpu.memory_space<vmem>>, vector<1x1x4x8xf32>
    %114 = vector.shape_cast %113 : vector<1x1x4x8xf32> to vector<4x8xf32>
    %cst_130 = arith.constant dense<0.000000e+00> : vector<1x16x8xf32>
    %115 = tpu.matmul %112, %114, %cst_130 {dimension_numbers = #tpu.dot_dimension_numbers<[2], [0], [0, 1], [1], [0, 0, 0, 1, 1, 1], [], []>} : vector<1x16x4xf32>, vector<4x8xf32>, vector<1x16x8xf32> -> vector<1x16x8xf32>
    %116 = arith.addf %109, %115 : vector<1x16x8xf32>
    %c1_i32_131 = arith.constant 1 : i32
    %117 = arith.addi %87, %c1_i32_131 : i32
    %118 = arith.index_cast %117 : i32 to index
    %c1_132 = arith.constant 1 : index
    %c0_133 = arith.constant 0 : index
    %119 = vector.load %arg8[%118, %c1_132, %c0_133] : memref<18x18x4xf32, #tpu.memory_space<vmem>>, vector<1x16x4xf32>
    %c1_134 = arith.constant 1 : index
    %c1_135 = arith.constant 1 : index
    %c0_136 = arith.constant 0 : index
    %c0_137 = arith.constant 0 : index
    %120 = vector.load %arg3[%c1_134, %c1_135, %c0_136, %c0_137] : memref<3x3x4x8xf32, #tpu.memory_space<vmem>>, vector<1x1x4x8xf32>
    %121 = vector.shape_cast %120 : vector<1x1x4x8xf32> to vector<4x8xf32>
    %cst_138 = arith.constant dense<0.000000e+00> : vector<1x16x8xf32>
    %122 = tpu.matmul %119, %121, %cst_138 {dimension_numbers = #tpu.dot_dimension_numbers<[2], [0], [0, 1], [1], [0, 0, 0, 1, 1, 1], [], []>} : vector<1x16x4xf32>, vector<4x8xf32>, vector<1x16x8xf32> -> vector<1x16x8xf32>
    %123 = arith.addf %116, %122 : vector<1x16x8xf32>
    %c1_i32_139 = arith.constant 1 : i32
    %124 = arith.addi %87, %c1_i32_139 : i32
    %125 = arith.index_cast %124 : i32 to index
    %c2_140 = arith.constant 2 : index
    %c0_141 = arith.constant 0 : index
    %126 = vector.load %arg8[%125, %c2_140, %c0_141] : memref<18x18x4xf32, #tpu.memory_space<vmem>>, vector<1x16x4xf32>
    %c1_142 = arith.constant 1 : index
    %c2_143 = arith.constant 2 : index
    %c0_144 = arith.constant 0 : index
    %c0_145 = arith.constant 0 : index
    %127 = vector.load %arg3[%c1_142, %c2_143, %c0_144, %c0_145] : memref<3x3x4x8xf32, #tpu.memory_space<vmem>>, vector<1x1x4x8xf32>
    %128 = vector.shape_cast %127 : vector<1x1x4x8xf32> to vector<4x8xf32>
    %cst_146 = arith.constant dense<0.000000e+00> : vector<1x16x8xf32>
    %129 = tpu.matmul %126, %128, %cst_146 {dimension_numbers = #tpu.dot_dimension_numbers<[2], [0], [0, 1], [1], [0, 0, 0, 1, 1, 1], [], []>} : vector<1x16x4xf32>, vector<4x8xf32>, vector<1x16x8xf32> -> vector<1x16x8xf32>
    %130 = arith.addf %123, %129 : vector<1x16x8xf32>
    %c2_i32_147 = arith.constant 2 : i32
    %131 = arith.addi %87, %c2_i32_147 : i32
    %132 = arith.index_cast %131 : i32 to index
    %c0_148 = arith.constant 0 : index
    %c0_149 = arith.constant 0 : index
    %133 = vector.load %arg8[%132, %c0_148, %c0_149] : memref<18x18x4xf32, #tpu.memory_space<vmem>>, vector<1x16x4xf32>
    %c2_150 = arith.constant 2 : index
    %c0_151 = arith.constant 0 : index
    %c0_152 = arith.constant 0 : index
    %c0_153 = arith.constant 0 : index
    %134 = vector.load %arg3[%c2_150, %c0_151, %c0_152, %c0_153] : memref<3x3x4x8xf32, #tpu.memory_space<vmem>>, vector<1x1x4x8xf32>
    %135 = vector.shape_cast %134 : vector<1x1x4x8xf32> to vector<4x8xf32>
    %cst_154 = arith.constant dense<0.000000e+00> : vector<1x16x8xf32>
    %136 = tpu.matmul %133, %135, %cst_154 {dimension_numbers = #tpu.dot_dimension_numbers<[2], [0], [0, 1], [1], [0, 0, 0, 1, 1, 1], [], []>} : vector<1x16x4xf32>, vector<4x8xf32>, vector<1x16x8xf32> -> vector<1x16x8xf32>
    %137 = arith.addf %130, %136 : vector<1x16x8xf32>
    %c2_i32_155 = arith.constant 2 : i32
    %138 = arith.addi %87, %c2_i32_155 : i32
    %139 = arith.index_cast %138 : i32 to index
    %c1_156 = arith.constant 1 : index
    %c0_157 = arith.constant 0 : index
    %140 = vector.load %arg8[%139, %c1_156, %c0_157] : memref<18x18x4xf32, #tpu.memory_space<vmem>>, vector<1x16x4xf32>
    %c2_158 = arith.constant 2 : index
    %c1_159 = arith.constant 1 : index
    %c0_160 = arith.constant 0 : index
    %c0_161 = arith.constant 0 : index
    %141 = vector.load %arg3[%c2_158, %c1_159, %c0_160, %c0_161] : memref<3x3x4x8xf32, #tpu.memory_space<vmem>>, vector<1x1x4x8xf32>
    %142 = vector.shape_cast %141 : vector<1x1x4x8xf32> to vector<4x8xf32>
    %cst_162 = arith.constant dense<0.000000e+00> : vector<1x16x8xf32>
    %143 = tpu.matmul %140, %142, %cst_162 {dimension_numbers = #tpu.dot_dimension_numbers<[2], [0], [0, 1], [1], [0, 0, 0, 1, 1, 1], [], []>} : vector<1x16x4xf32>, vector<4x8xf32>, vector<1x16x8xf32> -> vector<1x16x8xf32>
    %144 = arith.addf %137, %143 : vector<1x16x8xf32>
    %c2_i32_163 = arith.constant 2 : i32
    %145 = arith.addi %87, %c2_i32_163 : i32
    %146 = arith.index_cast %145 : i32 to index
    %c2_164 = arith.constant 2 : index
    %c0_165 = arith.constant 0 : index
    %147 = vector.load %arg8[%146, %c2_164, %c0_165] : memref<18x18x4xf32, #tpu.memory_space<vmem>>, vector<1x16x4xf32>
    %c2_166 = arith.constant 2 : index
    %c2_167 = arith.constant 2 : index
    %c0_168 = arith.constant 0 : index
    %c0_169 = arith.constant 0 : index
    %148 = vector.load %arg3[%c2_166, %c2_167, %c0_168, %c0_169] : memref<3x3x4x8xf32, #tpu.memory_space<vmem>>, vector<1x1x4x8xf32>
    %149 = vector.shape_cast %148 : vector<1x1x4x8xf32> to vector<4x8xf32>
    %cst_170 = arith.constant dense<0.000000e+00> : vector<1x16x8xf32>
    %150 = tpu.matmul %147, %149, %cst_170 {dimension_numbers = #tpu.dot_dimension_numbers<[2], [0], [0, 1], [1], [0, 0, 0, 1, 1, 1], [], []>} : vector<1x16x4xf32>, vector<4x8xf32>, vector<1x16x8xf32> -> vector<1x16x8xf32>
    %151 = arith.addf %144, %150 : vector<1x16x8xf32>
    %c0_171 = arith.constant 0 : index
    %c0_172 = arith.constant 0 : index
    %152 = vector.load %arg4[%c0_171, %c0_172] : memref<1x8xf32, #tpu.memory_space<vmem>>, vector<1x8xf32>
    %153 = vector.shape_cast %152 : vector<1x8xf32> to vector<1x1x8xf32>
    %154 = vector.broadcast %153 : vector<1x1x8xf32> to vector<1x16x8xf32>
    %155 = arith.addf %151, %154 : vector<1x16x8xf32>
    %cst_173 = arith.constant 0.000000e+00 : f32
    %156 = vector.broadcast %cst_173 : f32 to vector<1x16x8xf32>
    %157 = arith.cmpf ogt, %155, %156 : vector<1x16x8xf32>
    %cst_174 = arith.constant 0.00999999977 : f32
    %158 = vector.broadcast %cst_174 : f32 to vector<1x16x8xf32>
    %159 = arith.mulf %158, %155 : vector<1x16x8xf32>
    %160 = arith.select %157, %155, %159 : vector<1x16x8xi1>, vector<1x16x8xf32>
    %c0_175 = arith.constant 0 : index
    %c1_176 = arith.constant 1 : index
    %c0_177 = arith.constant 0 : index
    %161 = vector.load %arg9[%c0_175, %c1_176, %c0_177] : memref<10x18x8xf32, #tpu.memory_space<vmem>>, vector<1x16x8xf32>
    tpu.vector_store %arg9[%c0_175, %c1_176, %c0_177], %160 {strides = array<i32>} : memref<10x18x8xf32, #tpu.memory_space<vmem>>, vector<1x16x8xf32>,
    %c8_i32_178 = arith.constant 8 : i32
    %162 = arith.addi %0, %c8_i32_178 : i32
    %c15_i32 = arith.constant 15 : i32
    %163 = arith.minsi %162, %c15_i32 : i32
    %cst_179 = arith.constant 0.000000e+00 : f32
    %164 = vector.broadcast %cst_179 : f32 to vector<1x16x8xf32>
    %c0_i32_180 = arith.constant 0 : i32
    %165 = arith.addi %163, %c0_i32_180 : i32
    %166 = arith.index_cast %165 : i32 to index
    %c0_181 = arith.constant 0 : index
    %c0_182 = arith.constant 0 : index
    %167 = vector.load %arg8[%166, %c0_181, %c0_182] : memref<18x18x4xf32, #tpu.memory_space<vmem>>, vector<1x16x4xf32>
    %c0_183 = arith.constant 0 : index
    %c0_184 = arith.constant 0 : index
    %c0_185 = arith.constant 0 : index
    %c0_186 = arith.constant 0 : index
    %168 = vector.load %arg3[%c0_183, %c0_184, %c0_185, %c0_186] : memref<3x3x4x8xf32, #tpu.memory_space<vmem>>, vector<1x1x4x8xf32>
    %169 = vector.shape_cast %168 : vector<1x1x4x8xf32> to vector<4x8xf32>
    %cst_187 = arith.constant dense<0.000000e+00> : vector<1x16x8xf32>
    %170 = tpu.matmul %167, %169, %cst_187 {dimension_numbers = #tpu.dot_dimension_numbers<[2], [0], [0, 1], [1], [0, 0, 0, 1, 1, 1], [], []>} : vector<1x16x4xf32>, vector<4x8xf32>, vector<1x16x8xf32> -> vector<1x16x8xf32>
    %171 = arith.addf %164, %170 : vector<1x16x8xf32>
    %c0_i32_188 = arith.constant 0 : i32
    %172 = arith.addi %163, %c0_i32_188 : i32
    %173 = arith.index_cast %172 : i32 to index
    %c1_189 = arith.constant 1 : index
    %c0_190 = arith.constant 0 : index
    %174 = vector.load %arg8[%173, %c1_189, %c0_190] : memref<18x18x4xf32, #tpu.memory_space<vmem>>, vector<1x16x4xf32>
    %c0_191 = arith.constant 0 : index
    %c1_192 = arith.constant 1 : index
    %c0_193 = arith.constant 0 : index
    %c0_194 = arith.constant 0 : index
    %175 = vector.load %arg3[%c0_191, %c1_192, %c0_193, %c0_194] : memref<3x3x4x8xf32, #tpu.memory_space<vmem>>, vector<1x1x4x8xf32>
    %176 = vector.shape_cast %175 : vector<1x1x4x8xf32> to vector<4x8xf32>
    %cst_195 = arith.constant dense<0.000000e+00> : vector<1x16x8xf32>
    %177 = tpu.matmul %174, %176, %cst_195 {dimension_numbers = #tpu.dot_dimension_numbers<[2], [0], [0, 1], [1], [0, 0, 0, 1, 1, 1], [], []>} : vector<1x16x4xf32>, vector<4x8xf32>, vector<1x16x8xf32> -> vector<1x16x8xf32>
    %178 = arith.addf %171, %177 : vector<1x16x8xf32>
    %c0_i32_196 = arith.constant 0 : i32
    %179 = arith.addi %163, %c0_i32_196 : i32
    %180 = arith.index_cast %179 : i32 to index
    %c2_197 = arith.constant 2 : index
    %c0_198 = arith.constant 0 : index
    %181 = vector.load %arg8[%180, %c2_197, %c0_198] : memref<18x18x4xf32, #tpu.memory_space<vmem>>, vector<1x16x4xf32>
    %c0_199 = arith.constant 0 : index
    %c2_200 = arith.constant 2 : index
    %c0_201 = arith.constant 0 : index
    %c0_202 = arith.constant 0 : index
    %182 = vector.load %arg3[%c0_199, %c2_200, %c0_201, %c0_202] : memref<3x3x4x8xf32, #tpu.memory_space<vmem>>, vector<1x1x4x8xf32>
    %183 = vector.shape_cast %182 : vector<1x1x4x8xf32> to vector<4x8xf32>
    %cst_203 = arith.constant dense<0.000000e+00> : vector<1x16x8xf32>
    %184 = tpu.matmul %181, %183, %cst_203 {dimension_numbers = #tpu.dot_dimension_numbers<[2], [0], [0, 1], [1], [0, 0, 0, 1, 1, 1], [], []>} : vector<1x16x4xf32>, vector<4x8xf32>, vector<1x16x8xf32> -> vector<1x16x8xf32>
    %185 = arith.addf %178, %184 : vector<1x16x8xf32>
    %c1_i32_204 = arith.constant 1 : i32
    %186 = arith.addi %163, %c1_i32_204 : i32
    %187 = arith.index_cast %186 : i32 to index
    %c0_205 = arith.constant 0 : index
    %c0_206 = arith.constant 0 : index
    %188 = vector.load %arg8[%187, %c0_205, %c0_206] : memref<18x18x4xf32, #tpu.memory_space<vmem>>, vector<1x16x4xf32>
    %c1_207 = arith.constant 1 : index
    %c0_208 = arith.constant 0 : index
    %c0_209 = arith.constant 0 : index
    %c0_210 = arith.constant 0 : index
    %189 = vector.load %arg3[%c1_207, %c0_208, %c0_209, %c0_210] : memref<3x3x4x8xf32, #tpu.memory_space<vmem>>, vector<1x1x4x8xf32>
    %190 = vector.shape_cast %189 : vector<1x1x4x8xf32> to vector<4x8xf32>
    %cst_211 = arith.constant dense<0.000000e+00> : vector<1x16x8xf32>
    %191 = tpu.matmul %188, %190, %cst_211 {dimension_numbers = #tpu.dot_dimension_numbers<[2], [0], [0, 1], [1], [0, 0, 0, 1, 1, 1], [], []>} : vector<1x16x4xf32>, vector<4x8xf32>, vector<1x16x8xf32> -> vector<1x16x8xf32>
    %192 = arith.addf %185, %191 : vector<1x16x8xf32>
    %c1_i32_212 = arith.constant 1 : i32
    %193 = arith.addi %163, %c1_i32_212 : i32
    %194 = arith.index_cast %193 : i32 to index
    %c1_213 = arith.constant 1 : index
    %c0_214 = arith.constant 0 : index
    %195 = vector.load %arg8[%194, %c1_213, %c0_214] : memref<18x18x4xf32, #tpu.memory_space<vmem>>, vector<1x16x4xf32>
    %c1_215 = arith.constant 1 : index
    %c1_216 = arith.constant 1 : index
    %c0_217 = arith.constant 0 : index
    %c0_218 = arith.constant 0 : index
    %196 = vector.load %arg3[%c1_215, %c1_216, %c0_217, %c0_218] : memref<3x3x4x8xf32, #tpu.memory_space<vmem>>, vector<1x1x4x8xf32>
    %197 = vector.shape_cast %196 : vector<1x1x4x8xf32> to vector<4x8xf32>
    %cst_219 = arith.constant dense<0.000000e+00> : vector<1x16x8xf32>
    %198 = tpu.matmul %195, %197, %cst_219 {dimension_numbers = #tpu.dot_dimension_numbers<[2], [0], [0, 1], [1], [0, 0, 0, 1, 1, 1], [], []>} : vector<1x16x4xf32>, vector<4x8xf32>, vector<1x16x8xf32> -> vector<1x16x8xf32>
    %199 = arith.addf %192, %198 : vector<1x16x8xf32>
    %c1_i32_220 = arith.constant 1 : i32
    %200 = arith.addi %163, %c1_i32_220 : i32
    %201 = arith.index_cast %200 : i32 to index
    %c2_221 = arith.constant 2 : index
    %c0_222 = arith.constant 0 : index
    %202 = vector.load %arg8[%201, %c2_221, %c0_222] : memref<18x18x4xf32, #tpu.memory_space<vmem>>, vector<1x16x4xf32>
    %c1_223 = arith.constant 1 : index
    %c2_224 = arith.constant 2 : index
    %c0_225 = arith.constant 0 : index
    %c0_226 = arith.constant 0 : index
    %203 = vector.load %arg3[%c1_223, %c2_224, %c0_225, %c0_226] : memref<3x3x4x8xf32, #tpu.memory_space<vmem>>, vector<1x1x4x8xf32>
    %204 = vector.shape_cast %203 : vector<1x1x4x8xf32> to vector<4x8xf32>
    %cst_227 = arith.constant dense<0.000000e+00> : vector<1x16x8xf32>
    %205 = tpu.matmul %202, %204, %cst_227 {dimension_numbers = #tpu.dot_dimension_numbers<[2], [0], [0, 1], [1], [0, 0, 0, 1, 1, 1], [], []>} : vector<1x16x4xf32>, vector<4x8xf32>, vector<1x16x8xf32> -> vector<1x16x8xf32>
    %206 = arith.addf %199, %205 : vector<1x16x8xf32>
    %c2_i32_228 = arith.constant 2 : i32
    %207 = arith.addi %163, %c2_i32_228 : i32
    %208 = arith.index_cast %207 : i32 to index
    %c0_229 = arith.constant 0 : index
    %c0_230 = arith.constant 0 : index
    %209 = vector.load %arg8[%208, %c0_229, %c0_230] : memref<18x18x4xf32, #tpu.memory_space<vmem>>, vector<1x16x4xf32>
    %c2_231 = arith.constant 2 : index
    %c0_232 = arith.constant 0 : index
    %c0_233 = arith.constant 0 : index
    %c0_234 = arith.constant 0 : index
    %210 = vector.load %arg3[%c2_231, %c0_232, %c0_233, %c0_234] : memref<3x3x4x8xf32, #tpu.memory_space<vmem>>, vector<1x1x4x8xf32>
    %211 = vector.shape_cast %210 : vector<1x1x4x8xf32> to vector<4x8xf32>
    %cst_235 = arith.constant dense<0.000000e+00> : vector<1x16x8xf32>
    %212 = tpu.matmul %209, %211, %cst_235 {dimension_numbers = #tpu.dot_dimension_numbers<[2], [0], [0, 1], [1], [0, 0, 0, 1, 1, 1], [], []>} : vector<1x16x4xf32>, vector<4x8xf32>, vector<1x16x8xf32> -> vector<1x16x8xf32>
    %213 = arith.addf %206, %212 : vector<1x16x8xf32>
    %c2_i32_236 = arith.constant 2 : i32
    %214 = arith.addi %163, %c2_i32_236 : i32
    %215 = arith.index_cast %214 : i32 to index
    %c1_237 = arith.constant 1 : index
    %c0_238 = arith.constant 0 : index
    %216 = vector.load %arg8[%215, %c1_237, %c0_238] : memref<18x18x4xf32, #tpu.memory_space<vmem>>, vector<1x16x4xf32>
    %c2_239 = arith.constant 2 : index
    %c1_240 = arith.constant 1 : index
    %c0_241 = arith.constant 0 : index
    %c0_242 = arith.constant 0 : index
    %217 = vector.load %arg3[%c2_239, %c1_240, %c0_241, %c0_242] : memref<3x3x4x8xf32, #tpu.memory_space<vmem>>, vector<1x1x4x8xf32>
    %218 = vector.shape_cast %217 : vector<1x1x4x8xf32> to vector<4x8xf32>
    %cst_243 = arith.constant dense<0.000000e+00> : vector<1x16x8xf32>
    %219 = tpu.matmul %216, %218, %cst_243 {dimension_numbers = #tpu.dot_dimension_numbers<[2], [0], [0, 1], [1], [0, 0, 0, 1, 1, 1], [], []>} : vector<1x16x4xf32>, vector<4x8xf32>, vector<1x16x8xf32> -> vector<1x16x8xf32>
    %220 = arith.addf %213, %219 : vector<1x16x8xf32>
    %c2_i32_244 = arith.constant 2 : i32
    %221 = arith.addi %163, %c2_i32_244 : i32
    %222 = arith.index_cast %221 : i32 to index
    %c2_245 = arith.constant 2 : index
    %c0_246 = arith.constant 0 : index
    %223 = vector.load %arg8[%222, %c2_245, %c0_246] : memref<18x18x4xf32, #tpu.memory_space<vmem>>, vector<1x16x4xf32>
    %c2_247 = arith.constant 2 : index
    %c2_248 = arith.constant 2 : index
    %c0_249 = arith.constant 0 : index
    %c0_250 = arith.constant 0 : index
    %224 = vector.load %arg3[%c2_247, %c2_248, %c0_249, %c0_250] : memref<3x3x4x8xf32, #tpu.memory_space<vmem>>, vector<1x1x4x8xf32>
    %225 = vector.shape_cast %224 : vector<1x1x4x8xf32> to vector<4x8xf32>
    %cst_251 = arith.constant dense<0.000000e+00> : vector<1x16x8xf32>
    %226 = tpu.matmul %223, %225, %cst_251 {dimension_numbers = #tpu.dot_dimension_numbers<[2], [0], [0, 1], [1], [0, 0, 0, 1, 1, 1], [], []>} : vector<1x16x4xf32>, vector<4x8xf32>, vector<1x16x8xf32> -> vector<1x16x8xf32>
    %227 = arith.addf %220, %226 : vector<1x16x8xf32>
    %c0_252 = arith.constant 0 : index
    %c0_253 = arith.constant 0 : index
    %228 = vector.load %arg4[%c0_252, %c0_253] : memref<1x8xf32, #tpu.memory_space<vmem>>, vector<1x8xf32>
    %229 = vector.shape_cast %228 : vector<1x8xf32> to vector<1x1x8xf32>
    %230 = vector.broadcast %229 : vector<1x1x8xf32> to vector<1x16x8xf32>
    %231 = arith.addf %227, %230 : vector<1x16x8xf32>
    %cst_254 = arith.constant 0.000000e+00 : f32
    %232 = vector.broadcast %cst_254 : f32 to vector<1x16x8xf32>
    %233 = arith.cmpf ogt, %231, %232 : vector<1x16x8xf32>
    %cst_255 = arith.constant 0.00999999977 : f32
    %234 = vector.broadcast %cst_255 : f32 to vector<1x16x8xf32>
    %235 = arith.mulf %234, %231 : vector<1x16x8xf32>
    %236 = arith.select %233, %231, %235 : vector<1x16x8xi1>, vector<1x16x8xf32>
    %c9 = arith.constant 9 : index
    %c1_256 = arith.constant 1 : index
    %c0_257 = arith.constant 0 : index
    %237 = vector.load %arg9[%c9, %c1_256, %c0_257] : memref<10x18x8xf32, #tpu.memory_space<vmem>>, vector<1x16x8xf32>
    tpu.vector_store %arg9[%c9, %c1_256, %c0_257], %236 {strides = array<i32>} : memref<10x18x8xf32, #tpu.memory_space<vmem>>, vector<1x16x8xf32>,
    %c0_258 = arith.constant 0 : index
    %c1_259 = arith.constant 1 : index
    %c0_260 = arith.constant 0 : index
    %238 = vector.load %arg9[%c0_258, %c1_259, %c0_260] : memref<10x18x8xf32, #tpu.memory_space<vmem>>, vector<10x1x8xf32>
    %c0_261 = arith.constant 0 : index
    %c0_262 = arith.constant 0 : index
    %c0_263 = arith.constant 0 : index
    %239 = vector.load %arg9[%c0_261, %c0_262, %c0_263] : memref<10x18x8xf32, #tpu.memory_space<vmem>>, vector<10x1x8xf32>
    tpu.vector_store %arg9[%c0_261, %c0_262, %c0_263], %238 {strides = array<i32>} : memref<10x18x8xf32, #tpu.memory_space<vmem>>, vector<10x1x8xf32>,
    %c0_264 = arith.constant 0 : index
    %c16_265 = arith.constant 16 : index
    %c0_266 = arith.constant 0 : index
    %240 = vector.load %arg9[%c0_264, %c16_265, %c0_266] : memref<10x18x8xf32, #tpu.memory_space<vmem>>, vector<10x1x8xf32>
    %c0_267 = arith.constant 0 : index
    %c17_268 = arith.constant 17 : index
    %c0_269 = arith.constant 0 : index
    %241 = vector.load %arg9[%c0_267, %c17_268, %c0_269] : memref<10x18x8xf32, #tpu.memory_space<vmem>>, vector<10x1x8xf32>
    tpu.vector_store %arg9[%c0_267, %c17_268, %c0_269], %240 {strides = array<i32>} : memref<10x18x8xf32, #tpu.memory_space<vmem>>, vector<10x1x8xf32>,
    %cst_270 = arith.constant 0.000000e+00 : f32
    %242 = vector.broadcast %cst_270 : f32 to vector<8x16x8xf32>
    %c0_271 = arith.constant 0 : index
    %c0_272 = arith.constant 0 : index
    %c0_273 = arith.constant 0 : index
    %243 = vector.load %arg9[%c0_271, %c0_272, %c0_273] : memref<10x18x8xf32, #tpu.memory_space<vmem>>, vector<8x16x8xf32>
    %c0_274 = arith.constant 0 : index
    %c0_275 = arith.constant 0 : index
    %c0_276 = arith.constant 0 : index
    %c0_277 = arith.constant 0 : index
    %244 = vector.load %arg5[%c0_274, %c0_275, %c0_276, %c0_277] : memref<3x3x8x8xf32, #tpu.memory_space<vmem>>, vector<1x1x8x8xf32>
    %245 = vector.shape_cast %244 : vector<1x1x8x8xf32> to vector<8x8xf32>
    %cst_278 = arith.constant dense<0.000000e+00> : vector<8x16x8xf32>
    %246 = tpu.matmul %243, %245, %cst_278 {dimension_numbers = #tpu.dot_dimension_numbers<[2], [0], [0, 1], [1], [0, 0, 0, 1, 1, 1], [], []>} : vector<8x16x8xf32>, vector<8x8xf32>, vector<8x16x8xf32> -> vector<8x16x8xf32>
    %247 = arith.addf %242, %246 : vector<8x16x8xf32>
    %c0_279 = arith.constant 0 : index
    %c1_280 = arith.constant 1 : index
    %c0_281 = arith.constant 0 : index
    %248 = vector.load %arg9[%c0_279, %c1_280, %c0_281] : memref<10x18x8xf32, #tpu.memory_space<vmem>>, vector<8x16x8xf32>
    %c0_282 = arith.constant 0 : index
    %c1_283 = arith.constant 1 : index
    %c0_284 = arith.constant 0 : index
    %c0_285 = arith.constant 0 : index
    %249 = vector.load %arg5[%c0_282, %c1_283, %c0_284, %c0_285] : memref<3x3x8x8xf32, #tpu.memory_space<vmem>>, vector<1x1x8x8xf32>
    %250 = vector.shape_cast %249 : vector<1x1x8x8xf32> to vector<8x8xf32>
    %cst_286 = arith.constant dense<0.000000e+00> : vector<8x16x8xf32>
    %251 = tpu.matmul %248, %250, %cst_286 {dimension_numbers = #tpu.dot_dimension_numbers<[2], [0], [0, 1], [1], [0, 0, 0, 1, 1, 1], [], []>} : vector<8x16x8xf32>, vector<8x8xf32>, vector<8x16x8xf32> -> vector<8x16x8xf32>
    %252 = arith.addf %247, %251 : vector<8x16x8xf32>
    %c0_287 = arith.constant 0 : index
    %c2_288 = arith.constant 2 : index
    %c0_289 = arith.constant 0 : index
    %253 = vector.load %arg9[%c0_287, %c2_288, %c0_289] : memref<10x18x8xf32, #tpu.memory_space<vmem>>, vector<8x16x8xf32>
    %c0_290 = arith.constant 0 : index
    %c2_291 = arith.constant 2 : index
    %c0_292 = arith.constant 0 : index
    %c0_293 = arith.constant 0 : index
    %254 = vector.load %arg5[%c0_290, %c2_291, %c0_292, %c0_293] : memref<3x3x8x8xf32, #tpu.memory_space<vmem>>, vector<1x1x8x8xf32>
    %255 = vector.shape_cast %254 : vector<1x1x8x8xf32> to vector<8x8xf32>
    %cst_294 = arith.constant dense<0.000000e+00> : vector<8x16x8xf32>
    %256 = tpu.matmul %253, %255, %cst_294 {dimension_numbers = #tpu.dot_dimension_numbers<[2], [0], [0, 1], [1], [0, 0, 0, 1, 1, 1], [], []>} : vector<8x16x8xf32>, vector<8x8xf32>, vector<8x16x8xf32> -> vector<8x16x8xf32>
    %257 = arith.addf %252, %256 : vector<8x16x8xf32>
    %c1_295 = arith.constant 1 : index
    %c0_296 = arith.constant 0 : index
    %c0_297 = arith.constant 0 : index
    %258 = vector.load %arg9[%c1_295, %c0_296, %c0_297] : memref<10x18x8xf32, #tpu.memory_space<vmem>>, vector<8x16x8xf32>
    %c1_298 = arith.constant 1 : index
    %c0_299 = arith.constant 0 : index
    %c0_300 = arith.constant 0 : index
    %c0_301 = arith.constant 0 : index
    %259 = vector.load %arg5[%c1_298, %c0_299, %c0_300, %c0_301] : memref<3x3x8x8xf32, #tpu.memory_space<vmem>>, vector<1x1x8x8xf32>
    %260 = vector.shape_cast %259 : vector<1x1x8x8xf32> to vector<8x8xf32>
    %cst_302 = arith.constant dense<0.000000e+00> : vector<8x16x8xf32>
    %261 = tpu.matmul %258, %260, %cst_302 {dimension_numbers = #tpu.dot_dimension_numbers<[2], [0], [0, 1], [1], [0, 0, 0, 1, 1, 1], [], []>} : vector<8x16x8xf32>, vector<8x8xf32>, vector<8x16x8xf32> -> vector<8x16x8xf32>
    %262 = arith.addf %257, %261 : vector<8x16x8xf32>
    %c1_303 = arith.constant 1 : index
    %c1_304 = arith.constant 1 : index
    %c0_305 = arith.constant 0 : index
    %263 = vector.load %arg9[%c1_303, %c1_304, %c0_305] : memref<10x18x8xf32, #tpu.memory_space<vmem>>, vector<8x16x8xf32>
    %c1_306 = arith.constant 1 : index
    %c1_307 = arith.constant 1 : index
    %c0_308 = arith.constant 0 : index
    %c0_309 = arith.constant 0 : index
    %264 = vector.load %arg5[%c1_306, %c1_307, %c0_308, %c0_309] : memref<3x3x8x8xf32, #tpu.memory_space<vmem>>, vector<1x1x8x8xf32>
    %265 = vector.shape_cast %264 : vector<1x1x8x8xf32> to vector<8x8xf32>
    %cst_310 = arith.constant dense<0.000000e+00> : vector<8x16x8xf32>
    %266 = tpu.matmul %263, %265, %cst_310 {dimension_numbers = #tpu.dot_dimension_numbers<[2], [0], [0, 1], [1], [0, 0, 0, 1, 1, 1], [], []>} : vector<8x16x8xf32>, vector<8x8xf32>, vector<8x16x8xf32> -> vector<8x16x8xf32>
    %267 = arith.addf %262, %266 : vector<8x16x8xf32>
    %c1_311 = arith.constant 1 : index
    %c2_312 = arith.constant 2 : index
    %c0_313 = arith.constant 0 : index
    %268 = vector.load %arg9[%c1_311, %c2_312, %c0_313] : memref<10x18x8xf32, #tpu.memory_space<vmem>>, vector<8x16x8xf32>
    %c1_314 = arith.constant 1 : index
    %c2_315 = arith.constant 2 : index
    %c0_316 = arith.constant 0 : index
    %c0_317 = arith.constant 0 : index
    %269 = vector.load %arg5[%c1_314, %c2_315, %c0_316, %c0_317] : memref<3x3x8x8xf32, #tpu.memory_space<vmem>>, vector<1x1x8x8xf32>
    %270 = vector.shape_cast %269 : vector<1x1x8x8xf32> to vector<8x8xf32>
    %cst_318 = arith.constant dense<0.000000e+00> : vector<8x16x8xf32>
    %271 = tpu.matmul %268, %270, %cst_318 {dimension_numbers = #tpu.dot_dimension_numbers<[2], [0], [0, 1], [1], [0, 0, 0, 1, 1, 1], [], []>} : vector<8x16x8xf32>, vector<8x8xf32>, vector<8x16x8xf32> -> vector<8x16x8xf32>
    %272 = arith.addf %267, %271 : vector<8x16x8xf32>
    %c2_319 = arith.constant 2 : index
    %c0_320 = arith.constant 0 : index
    %c0_321 = arith.constant 0 : index
    %273 = vector.load %arg9[%c2_319, %c0_320, %c0_321] : memref<10x18x8xf32, #tpu.memory_space<vmem>>, vector<8x16x8xf32>
    %c2_322 = arith.constant 2 : index
    %c0_323 = arith.constant 0 : index
    %c0_324 = arith.constant 0 : index
    %c0_325 = arith.constant 0 : index
    %274 = vector.load %arg5[%c2_322, %c0_323, %c0_324, %c0_325] : memref<3x3x8x8xf32, #tpu.memory_space<vmem>>, vector<1x1x8x8xf32>
    %275 = vector.shape_cast %274 : vector<1x1x8x8xf32> to vector<8x8xf32>
    %cst_326 = arith.constant dense<0.000000e+00> : vector<8x16x8xf32>
    %276 = tpu.matmul %273, %275, %cst_326 {dimension_numbers = #tpu.dot_dimension_numbers<[2], [0], [0, 1], [1], [0, 0, 0, 1, 1, 1], [], []>} : vector<8x16x8xf32>, vector<8x8xf32>, vector<8x16x8xf32> -> vector<8x16x8xf32>
    %277 = arith.addf %272, %276 : vector<8x16x8xf32>
    %c2_327 = arith.constant 2 : index
    %c1_328 = arith.constant 1 : index
    %c0_329 = arith.constant 0 : index
    %278 = vector.load %arg9[%c2_327, %c1_328, %c0_329] : memref<10x18x8xf32, #tpu.memory_space<vmem>>, vector<8x16x8xf32>
    %c2_330 = arith.constant 2 : index
    %c1_331 = arith.constant 1 : index
    %c0_332 = arith.constant 0 : index
    %c0_333 = arith.constant 0 : index
    %279 = vector.load %arg5[%c2_330, %c1_331, %c0_332, %c0_333] : memref<3x3x8x8xf32, #tpu.memory_space<vmem>>, vector<1x1x8x8xf32>
    %280 = vector.shape_cast %279 : vector<1x1x8x8xf32> to vector<8x8xf32>
    %cst_334 = arith.constant dense<0.000000e+00> : vector<8x16x8xf32>
    %281 = tpu.matmul %278, %280, %cst_334 {dimension_numbers = #tpu.dot_dimension_numbers<[2], [0], [0, 1], [1], [0, 0, 0, 1, 1, 1], [], []>} : vector<8x16x8xf32>, vector<8x8xf32>, vector<8x16x8xf32> -> vector<8x16x8xf32>
    %282 = arith.addf %277, %281 : vector<8x16x8xf32>
    %c2_335 = arith.constant 2 : index
    %c2_336 = arith.constant 2 : index
    %c0_337 = arith.constant 0 : index
    %283 = vector.load %arg9[%c2_335, %c2_336, %c0_337] : memref<10x18x8xf32, #tpu.memory_space<vmem>>, vector<8x16x8xf32>
    %c2_338 = arith.constant 2 : index
    %c2_339 = arith.constant 2 : index
    %c0_340 = arith.constant 0 : index
    %c0_341 = arith.constant 0 : index
    %284 = vector.load %arg5[%c2_338, %c2_339, %c0_340, %c0_341] : memref<3x3x8x8xf32, #tpu.memory_space<vmem>>, vector<1x1x8x8xf32>
    %285 = vector.shape_cast %284 : vector<1x1x8x8xf32> to vector<8x8xf32>
    %cst_342 = arith.constant dense<0.000000e+00> : vector<8x16x8xf32>
    %286 = tpu.matmul %283, %285, %cst_342 {dimension_numbers = #tpu.dot_dimension_numbers<[2], [0], [0, 1], [1], [0, 0, 0, 1, 1, 1], [], []>} : vector<8x16x8xf32>, vector<8x8xf32>, vector<8x16x8xf32> -> vector<8x16x8xf32>
    %287 = arith.addf %282, %286 : vector<8x16x8xf32>
    %c0_343 = arith.constant 0 : index
    %c0_344 = arith.constant 0 : index
    %288 = vector.load %arg6[%c0_343, %c0_344] : memref<1x8xf32, #tpu.memory_space<vmem>>, vector<1x8xf32>
    %289 = vector.shape_cast %288 : vector<1x8xf32> to vector<1x1x8xf32>
    %290 = vector.broadcast %289 : vector<1x1x8xf32> to vector<8x16x8xf32>
    %291 = arith.addf %287, %290 : vector<8x16x8xf32>
    %cst_345 = arith.constant 0.000000e+00 : f32
    %292 = vector.broadcast %cst_345 : f32 to vector<8x16x8xf32>
    %293 = arith.cmpf ogt, %291, %292 : vector<8x16x8xf32>
    %cst_346 = arith.constant 0.00999999977 : f32
    %294 = vector.broadcast %cst_346 : f32 to vector<8x16x8xf32>
    %295 = arith.mulf %294, %291 : vector<8x16x8xf32>
    %296 = arith.select %293, %291, %295 : vector<8x16x8xi1>, vector<8x16x8xf32>
    %c0_347 = arith.constant 0 : index
    %c0_348 = arith.constant 0 : index
    %c0_349 = arith.constant 0 : index
    %c0_350 = arith.constant 0 : index
    %297 = vector.load %arg7[%c0_347, %c0_348, %c0_349, %c0_350] : memref<1x8x16x8xf32, #tpu.memory_space<vmem>>, vector<1x8x16x8xf32>
    %298 = vector.shape_cast %297 : vector<1x8x16x8xf32> to vector<8x16x8xf32>
    %299 = vector.shape_cast %296 : vector<8x16x8xf32> to vector<1x8x16x8xf32>
    tpu.vector_store %arg7[%c0_347, %c0_348, %c0_349, %c0_350], %299 {strides = array<i32>} : memref<1x8x16x8xf32, #tpu.memory_space<vmem>>, vector<1x8x16x8xf32>,
    return
  }
  func.func @transform_0(%arg0: i32, %arg1: i32) -> (i32, i32, i32, i32) {
    %c0_i32 = arith.constant 0 : i32
    %c0_i32_0 = arith.constant 0 : i32
    %c0_i32_1 = arith.constant 0 : i32
    %c0_i32_2 = arith.constant 0 : i32
    return %arg0, %c0_i32, %c0_i32_0, %c0_i32_1 : i32, i32, i32, i32
  }
  func.func @transform_1(%arg0: i32, %arg1: i32) -> (i32, i32, i32, i32) {
    %c0_i32 = arith.constant 0 : i32
    %c0_i32_0 = arith.constant 0 : i32
    %c0_i32_1 = arith.constant 0 : i32
    %c0_i32_2 = arith.constant 0 : i32
    %c0_i32_3 = arith.constant 0 : i32
    return %c0_i32, %c0_i32_0, %c0_i32_1, %c0_i32_2 : i32, i32, i32, i32
  }
  func.func @transform_2(%arg0: i32, %arg1: i32) -> (i32, i32) {
    %c0_i32 = arith.constant 0 : i32
    %c0_i32_0 = arith.constant 0 : i32
    %c0_i32_1 = arith.constant 0 : i32
    return %c0_i32, %c0_i32_0 : i32, i32
  }
  func.func @transform_3(%arg0: i32, %arg1: i32) -> (i32, i32, i32, i32) {
    %c0_i32 = arith.constant 0 : i32
    %c0_i32_0 = arith.constant 0 : i32
    %c0_i32_1 = arith.constant 0 : i32
    %c0_i32_2 = arith.constant 0 : i32
    %c0_i32_3 = arith.constant 0 : i32
    return %c0_i32, %c0_i32_0, %c0_i32_1, %c0_i32_2 : i32, i32, i32, i32
  }
  func.func @transform_4(%arg0: i32, %arg1: i32) -> (i32, i32) {
    %c0_i32 = arith.constant 0 : i32
    %c0_i32_0 = arith.constant 0 : i32
    %c0_i32_1 = arith.constant 0 : i32
    return %c0_i32, %c0_i32_0 : i32, i32
  }
  func.func @transform_5(%arg0: i32, %arg1: i32) -> (i32, i32, i32, i32) {
    %c0_i32 = arith.constant 0 : i32
    %c0_i32_0 = arith.constant 0 : i32
    %c0_i32_1 = arith.constant 0 : i32
    return %arg0, %arg1, %c0_i32, %c0_i32_0 : i32, i32, i32, i32
  }
}

</mosaic_0001>

<llo_original>
// kernel: double_conv_m.1
$region0: #{double_conv_m.1}
  #allocation0 [shape = 'u32[]', space=smem, size = 0x4, offset = 0x4, fixed_abs, tag = 'smem constant byte address 0x4 - core index']
  #allocation1 [shape = 'u32[144,128]{1,0:T(1,128)}', space=vmem, size = 0x12000, scoped, tag = 'internal scratch']
  #allocation2 [shape = 'f32[18,18,4]{2,1,0:T(8,128)}', space=vmem, size = 0x36000, scoped, tag = 'scratch operand']
  #allocation3 [shape = 'f32[10,18,8]{2,1,0:T(8,128)}', space=vmem, size = 0x1e000, scoped, tag = 'scratch operand']
  %s0 = inlined_call_operand.vmem [shape: f32[2,16,16,4], index: 0, kind: input, shape index: {}]
  %s1 = inlined_call_operand.vmem [shape: f32[3,3,4,8], index: 1, kind: input, shape index: {}]
  %s2 = inlined_call_operand.vmem [shape: f32[1,8], index: 2, kind: input, shape index: {}]
  %s3 = inlined_call_operand.vmem [shape: f32[3,3,8,8], index: 3, kind: input, shape index: {}]
  %s4 = inlined_call_operand.vmem [shape: f32[1,8], index: 4, kind: input, shape index: {}]
  %s5 = inlined_call_operand.vmem [shape: f32[2,16,16,8], index: 5, kind: output, shape index: {}]
  %s6 = sld [smem:[#allocation0]]
  $region53: #{double_conv_m.1} parent=0
    _
  %s8 = ssub.s32 1, %s6
  %s9 = scalar_select 0, %s8, %s6
  loop: start=0, step=1, limit=6
  $region2: #{double_conv_m.1} parent=0 // loop_pre_header
    _
  $region3: #{double_conv_m.1} parent=0 // loop_header
    %s11 = sphi 0, %s15
    %p12 = scmp.ge.s32.totalorder %s11, 6
    %s18 = sphi 0, %s30
    %s19 = sphi 0, %s26
    %s20 = sphi 0, %s18
    %s21 = sphi 0, %s19
    %s22 = sphi 0, %s20
    %s23 = sphi 0, %s21
    %s33 = sphi 0, %s35
    %s36 = sphi 0, %s33
    %s37 = sphi 0, %s36
    %s53 = sphi 0, %s37
    %s57 = sphi 0, %s57
    %s59 = sphi 0, %s57
    %s60 = sphi 0, %s59
    %s74 = sphi 0, %s60
    %s78 = sphi 0, %s78
    %s80 = sphi 0, %s78
    %s81 = sphi 0, %s80
    %s95 = sphi 0, %s81
    %s99 = sphi 0, %s99
    %s101 = sphi 0, %s99
    %s102 = sphi 0, %s101
    %s116 = sphi 0, %s102
    %s120 = sphi 0, %s120
    %s122 = sphi 0, %s120
    %s123 = sphi 0, %s122
    %s137 = sphi 0, %s123
    %s145 = sphi 0, %s147
    %s148 = sphi 0, %s145
    %s149 = sphi 0, %s148
    %s165 = sphi 0, %s149
  $region4: #{double_conv_m.1} parent=0 // loop_header_branch
    %14 = sbr.rel (%p12) target = $region8
  $region5: #{double_conv_m.1} parent=0 // loop_body
    %s16 = ssub.s32 %s11, 1
    %s17 = ssub.s32 %s11, 2
    %s24 = sadd.s32 1, %s19
    %p25 = scmp.ge.s32.totalorder %s24, 2
    %s26 = scalar_select %p25, 0, %s24
    %s27 = sadd.s32 1, %s18
    %s28 = scalar_select %p25, %s27, %s18
    %p29 = scmp.ge.s32.totalorder %s28, 2
    %s30 = scalar_select %p29, 0, %s28
    %s31 = ssub.s32 %s18, %s30
    %p32 = scmp.eq.s32.totalorder %s31, 0
    %s34 = sadd.s32 %s33, 1
    %s35 = scalar_select %p32, %s33, %s34
    %p38 = pneg %p32
    %p39 = scmp.eq.s32.totalorder %s11, 3
    %p40 = por %p38, %p39
    %p41 = scmp.ne.s32.totalorder %s33, %s36
    %p42 = scmp.eq.s32.totalorder %s11, 0
    %p43 = por %p41, %p42
    %p44 = scmp.ne.s32.totalorder %s33, %s36
    %p45 = scmp.eq.s32.totalorder %s16, 3
    %p46 = por %p44, %p45
    %p47 = scmp.ne.s32.totalorder %s36, %s37
    %p48 = scmp.eq.s32.totalorder %s16, 0
    %p49 = por %p47, %p48
    %p50 = scmp.ne.s32.totalorder %s36, %s37
    %p51 = scmp.eq.s32.totalorder %s17, 3
    %p52 = por %p50, %p51
    %p54 = scmp.ne.s32.totalorder %s37, %s53
    %p55 = scmp.eq.s32.totalorder %s17, 0
    %p56 = por %p54, %p55
    %s58 = sadd.s32 %s57, 1
    %p61 = scmp.eq.s32.totalorder %s11, 3
    %p62 = scmp.ne.s32.totalorder %s57, %s59
    %p63 = scmp.eq.s32.totalorder %s11, 0
    %p64 = por %p62, %p63
    %p65 = scmp.ne.s32.totalorder %s57, %s59
    %p66 = scmp.eq.s32.totalorder %s16, 3
    %p67 = por %p65, %p66
    %p68 = scmp.ne.s32.totalorder %s59, %s60
    %p69 = scmp.eq.s32.totalorder %s16, 0
    %p70 = por %p68, %p69
    %p71 = scmp.ne.s32.totalorder %s59, %s60
    %p72 = scmp.eq.s32.totalorder %s17, 3
    %p73 = por %p71, %p72
    %p75 = scmp.ne.s32.totalorder %s60, %s74
    %p76 = scmp.eq.s32.totalorder %s17, 0
    %p77 = por %p75, %p76
    %s79 = sadd.s32 %s78, 1
    %p82 = scmp.eq.s32.totalorder %s11, 3
    %p83 = scmp.ne.s32.totalorder %s78, %s80
    %p84 = scmp.eq.s32.totalorder %s11, 0
    %p85 = por %p83, %p84
    %p86 = scmp.ne.s32.totalorder %s78, %s80
    %p87 = scmp.eq.s32.totalorder %s16, 3
    %p88 = por %p86, %p87
    %p89 = scmp.ne.s32.totalorder %s80, %s81
    %p90 = scmp.eq.s32.totalorder %s16, 0
    %p91 = por %p89, %p90
    %p92 = scmp.ne.s32.totalorder %s80, %s81
    %p93 = scmp.eq.s32.totalorder %s17, 3
    %p94 = por %p92, %p93
    %p96 = scmp.ne.s32.totalorder %s81, %s95
    %p97 = scmp.eq.s32.totalorder %s17, 0
    %p98 = por %p96, %p97
    %s100 = sadd.s32 %s99, 1
    %p103 = scmp.eq.s32.totalorder %s11, 3
    %p104 = scmp.ne.s32.totalorder %s99, %s101
    %p105 = scmp.eq.s32.totalorder %s11, 0
    %p106 = por %p104, %p105
    %p107 = scmp.ne.s32.totalorder %s99, %s101
    %p108 = scmp.eq.s32.totalorder %s16, 3
    %p109 = por %p107, %p108
    %p110 = scmp.ne.s32.totalorder %s101, %s102
    %p111 = scmp.eq.s32.totalorder %s16, 0
    %p112 = por %p110, %p111
    %p113 = scmp.ne.s32.totalorder %s101, %s102
    %p114 = scmp.eq.s32.totalorder %s17, 3
    %p115 = por %p113, %p114
    %p117 = scmp.ne.s32.totalorder %s102, %s116
    %p118 = scmp.eq.s32.totalorder %s17, 0
    %p119 = por %p117, %p118
    %s121 = sadd.s32 %s120, 1
    %p124 = scmp.eq.s32.totalorder %s11, 3
    %p125 = scmp.ne.s32.totalorder %s120, %s122
    %p126 = scmp.eq.s32.totalorder %s11, 0
    %p127 = por %p125, %p126
    %p128 = scmp.ne.s32.totalorder %s120, %s122
    %p129 = scmp.eq.s32.totalorder %s16, 3
    %p130 = por %p128, %p129
    %p131 = scmp.ne.s32.totalorder %s122, %s123
    %p132 = scmp.eq.s32.totalorder %s16, 0
    %p133 = por %p131, %p132
    %p134 = scmp.ne.s32.totalorder %s122, %s123
    %p135 = scmp.eq.s32.totalorder %s17, 3
    %p136 = por %p134, %p135
    %p138 = scmp.ne.s32.totalorder %s123, %s137
    %p139 = scmp.eq.s32.totalorder %s17, 0
    %p140 = por %p138, %p139
    %s141 = ssub.s32 %s18, %s30
    %s142 = ssub.s32 %s19, %s26
    %s143 = sor.u32 %s141, %s142
    %p144 = scmp.eq.s32.totalorder %s143, 0
    %s146 = sadd.s32 %s145, 1
    %s147 = scalar_select %p144, %s145, %s146
    %p150 = pneg %p144
    %p151 = scmp.eq.s32.totalorder %s11, 3
    %p152 = por %p150, %p151
    %p153 = scmp.ne.s32.totalorder %s145, %s148
    %p154 = scmp.eq.s32.totalorder %s11, 0
    %p155 = por %p153, %p154
    %p156 = scmp.ne.s32.totalorder %s145, %s148
    %p157 = scmp.eq.s32.totalorder %s16, 3
    %p158 = por %p156, %p157
    %p159 = scmp.ne.s32.totalorder %s148, %s149
    %p160 = scmp.eq.s32.totalorder %s16, 0
    %p161 = por %p159, %p160
    %p162 = scmp.ne.s32.totalorder %s148, %s149
    %p163 = scmp.eq.s32.totalorder %s17, 3
    %p164 = por %p162, %p163
    %p166 = scmp.ne.s32.totalorder %s149, %s165
    %p167 = scmp.eq.s32.totalorder %s17, 0
    %p168 = por %p166, %p167
    %p169 = scmp.le.s32.totalorder 1, %s11
    %p170 = scmp.lt.s32.totalorder %s11, 5
    %p171 = pnand %p169, %p170
    %p172 = pneg %p171
    // Predicated region
    $region9: #{double_conv_m.1} parent=5 // pred_check
      _
    $region10: #{double_conv_m.1} parent=5 // pred_check_branch
      %174 = sbr.rel (%p171) target = $region12
    $region11: #{double_conv_m.1} parent=5 // pred_region
      %s175 = ssub.s32 %s11, 1
      // Predicated region
      $region13: #{double_conv_m.1} parent=11 // pred_check
        %p176 = pneg %p70
      $region14: #{double_conv_m.1} parent=11 // pred_check_branch
        %178 = sbr.rel (%p176) target = $region16
      $region15: #{double_conv_m.1} parent=11 // pred_region
        _
      $region16: #{double_conv_m.1} parent=11 // pred_fallthru
        _
      // Predicated region
      $region17: #{double_conv_m.1} parent=11 // pred_check
        %p179 = pneg %p91
      $region18: #{double_conv_m.1} parent=11 // pred_check_branch
        %181 = sbr.rel (%p179) target = $region20
      $region19: #{double_conv_m.1} parent=11 // pred_region
        _
      $region20: #{double_conv_m.1} parent=11 // pred_fallthru
        _
      // Predicated region
      $region21: #{double_conv_m.1} parent=11 // pred_check
        %p182 = pneg %p112
      $region22: #{double_conv_m.1} parent=11 // pred_check_branch
        %184 = sbr.rel (%p182) target = $region24
      $region23: #{double_conv_m.1} parent=11 // pred_region
        _
      $region24: #{double_conv_m.1} parent=11 // pred_fallthru
        _
      // Predicated region
      $region25: #{double_conv_m.1} parent=11 // pred_check
        %p185 = pneg %p133
      $region26: #{double_conv_m.1} parent=11 // pred_check_branch
        %187 = sbr.rel (%p185) target = $region28
      $region27: #{double_conv_m.1} parent=11 // pred_region
        _
      $region28: #{double_conv_m.1} parent=11 // pred_fallthru
        _
    $region12: #{double_conv_m.1} parent=5 // pred_fallthru
      _
    %p188 = scmp.lt.s32.totalorder %s11, 4
    // Predicated region
    $region29: #{double_conv_m.1} parent=5 // pred_check
      %p189 = pneg %p188
    $region30: #{double_conv_m.1} parent=5 // pred_check_branch
      %191 = sbr.rel (%p189) target = $region32
    $region31: #{double_conv_m.1} parent=5 // pred_region
      // Predicated region
      $region33: #{double_conv_m.1} parent=31 // pred_check
        %p192 = pneg %p43
      $region34: #{double_conv_m.1} parent=31 // pred_check_branch
        %194 = sbr.rel (%p192) target = $region36
      $region35: #{double_conv_m.1} parent=31 // pred_region
        %p195 = scmp.lt.s32.totalorder %s18, 1
        %s196 = scalar_select %p195, %s18, 1
        %s197 = smul.addr %s196, 32
        %s198 = smul.addr %s197, 8
        %s199 = scalar_lea.vmem %s0, %s198
      $region36: #{double_conv_m.1} parent=31 // pred_fallthru
        _
    $region32: #{double_conv_m.1} parent=5 // pred_fallthru
      _
    %p200 = scmp.le.s32.totalorder 1, %s11
    %p201 = scmp.lt.s32.totalorder %s11, 5
    %p202 = pnand %p200, %p201
    %p203 = pneg %p202
    // Predicated region
    $region37: #{double_conv_m.1} parent=5 // pred_check
      _
    $region38: #{double_conv_m.1} parent=5 // pred_check_branch
      %205 = sbr.rel (%p202) target = $region40
    $region39: #{double_conv_m.1} parent=5 // pred_region
      %s206 = ssub.s32 %s11, 1
      %p207 = scmp.lt.s32.totalorder %s20, 1
      %s208 = scalar_select %p207, %s20, 1
      %s209 = smul.addr %s208, 32
      %s210 = smul.addr %s209, 8
      %s211 = scalar_lea.vmem %s0, %s210
      %p212 = pneg %p49
      %p213 = pneg %p46
      %p214 = pneg %p70
      %p215 = pneg %p67
      %p216 = pneg %p91
      %p217 = pneg %p88
      %p218 = pneg %p112
      %p219 = pneg %p109
      %p220 = pneg %p133
      %p221 = pneg %p130
      %p222 = pneg %p161
      %p223 = pneg %p158
      %s224 = smul.u32 8, %s21
      %p225 = scmp.lt.s32.totalorder %s20, 1
      %s226 = scalar_select %p225, %s20, 1
      %p227 = scmp.lt.s32.totalorder %s224, 15
      %s228 = scalar_select %p227, %s224, 15
      %s229 = smul.addr %s228, 2
      %s230 = smul.addr %s226, 32
      %s231 = sadd.s32 %s229, %s230
      %s232 = smul.addr %s231, 8
      %s233 = scalar_lea.vmem %s5, %s232
      %p234 = scmp.lt.s32.totalorder %s20, 1
      %s235 = scalar_select %p234, %s20, 1
      %s236 = smul.addr %s235, 32
      %s237 = smul.addr %s236, 8
      %s238 = scalar_lea.vmem %s0, %s237
      %s239 = smul.u32 8, %s21
      %p240 = scmp.lt.s32.totalorder %s20, 1
      %s241 = scalar_select %p240, %s20, 1
      %p242 = scmp.lt.s32.totalorder %s239, 15
      %s243 = scalar_select %p242, %s239, 15
      %s244 = smul.addr %s243, 2
      %s245 = smul.addr %s241, 32
      %s246 = sadd.s32 %s244, %s245
      %s247 = smul.addr %s246, 8
      %s248 = scalar_lea.vmem %s5, %s247
      %s249 = smul.u32 8, %s21
      %s250 = smul.u32 %s21, 8
      %v251 = vld [vmem:[%s238] sm:$0xff]
      %v252 = vld [vmem:[%s238 + $0x8] sm:$0xff]
      %v253 = vld [vmem:[%s238 + $0x10] sm:$0xff]
      %v254 = vld [vmem:[%s238 + $0x18] sm:$0xff]
      %v255 = vld [vmem:[%s238 + $0x20] sm:$0xff]
      %v256 = vld [vmem:[%s238 + $0x28] sm:$0xff]
      %v257 = vld [vmem:[%s238 + $0x30] sm:$0xff]
      %v258 = vld [vmem:[%s238 + $0x38] sm:$0xff]
      %v259 = vld [vmem:[%s238 + $0x40] sm:$0xff]
      %v260 = vld [vmem:[%s238 + $0x48] sm:$0xff]
      %v261 = vld [vmem:[%s238 + $0x50] sm:$0xff]
      %v262 = vld [vmem:[%s238 + $0x58] sm:$0xff]
      %v263 = vld [vmem:[%s238 + $0x60] sm:$0xff]
      %v264 = vld [vmem:[%s238 + $0x68] sm:$0xff]
      %v265 = vld [vmem:[%s238 + $0x70] sm:$0xff]
      %v266 = vld [vmem:[%s238 + $0x78] sm:$0xff]
      %v267 = vld [vmem:[%s238 + $0x80] sm:$0xff]
      %v268 = vld [vmem:[%s238 + $0x88] sm:$0xff]
      %v269 = vld [vmem:[%s238 + $0x90] sm:$0xff]
      %v270 = vld [vmem:[%s238 + $0x98] sm:$0xff]
      %v271 = vld [vmem:[%s238 + $0xa0] sm:$0xff]
      %v272 = vld [vmem:[%s238 + $0xa8] sm:$0xff]
      %v273 = vld [vmem:[%s238 + $0xb0] sm:$0xff]
      %v274 = vld [vmem:[%s238 + $0xb8] sm:$0xff]
      %v275 = vld [vmem:[%s238 + $0xc0] sm:$0xff]
      %v276 = vld [vmem:[%s238 + $0xc8] sm:$0xff]
      %v277 = vld [vmem:[%s238 + $0xd0] sm:$0xff]
      %v278 = vld [vmem:[%s238 + $0xd8] sm:$0xff]
      %v279 = vld [vmem:[%s238 + $0xe0] sm:$0xff]
      %v280 = vld [vmem:[%s238 + $0xe8] sm:$0xff]
      %v281 = vld [vmem:[%s238 + $0xf0] sm:$0xff]
      %v282 = vld [vmem:[%s238 + $0xf8] sm:$0xff]
      %s283 = scalar_lea.vmem [#allocation2], 24
      %vm284 = vcmask 31744
      %285 = vst.msk [vmem:[%s283 + $0x1] sm:$0xff] %vm284, %v251
      %286 = vst.msk [vmem:[%s283 + $0x9] sm:$0xff] %vm284, %v252
      %287 = vst.msk [vmem:[%s283 + $0x19] sm:$0xff] %vm284, %v253
      %288 = vst.msk [vmem:[%s283 + $0x21] sm:$0xff] %vm284, %v254
      %289 = vst.msk [vmem:[%s283 + $0x31] sm:$0xff] %vm284, %v255
      %290 = vst.msk [vmem:[%s283 + $0x39] sm:$0xff] %vm284, %v256
      %291 = vst.msk [vmem:[%s283 + $0x49] sm:$0xff] %vm284, %v257
      %292 = vst.msk [vmem:[%s283 + $0x51] sm:$0xff] %vm284, %v258
      %293 = vst.msk [vmem:[%s283 + $0x61] sm:$0xff] %vm284, %v259
      %294 = vst.msk [vmem:[%s283 + $0x69] sm:$0xff] %vm284, %v260
      %295 = vst.msk [vmem:[%s283 + $0x79] sm:$0xff] %vm284, %v261
      %296 = vst.msk [vmem:[%s283 + $0x81] sm:$0xff] %vm284, %v262
      %297 = vst.msk [vmem:[%s283 + $0x91] sm:$0xff] %vm284, %v263
      %298 = vst.msk [vmem:[%s283 + $0x99] sm:$0xff] %vm284, %v264
      %299 = vst.msk [vmem:[%s283 + $0xa9] sm:$0xff] %vm284, %v265
      %300 = vst.msk [vmem:[%s283 + $0xb1] sm:$0xff] %vm284, %v266
      %301 = vst.msk [vmem:[%s283 + $0xc1] sm:$0xff] %vm284, %v267
      %302 = vst.msk [vmem:[%s283 + $0xc9] sm:$0xff] %vm284, %v268
      %303 = vst.msk [vmem:[%s283 + $0xd9] sm:$0xff] %vm284, %v269
      %304 = vst.msk [vmem:[%s283 + $0xe1] sm:$0xff] %vm284, %v270
      %305 = vst.msk [vmem:[%s283 + $0xf1] sm:$0xff] %vm284, %v271
      %306 = vst.msk [vmem:[%s283 + $0xf9] sm:$0xff] %vm284, %v272
      %307 = vst.msk [vmem:[%s283 + $0x109] sm:$0xff] %vm284, %v273
      %308 = vst.msk [vmem:[%s283 + $0x111] sm:$0xff] %vm284, %v274
      %309 = vst.msk [vmem:[%s283 + $0x121] sm:$0xff] %vm284, %v275
      %310 = vst.msk [vmem:[%s283 + $0x129] sm:$0xff] %vm284, %v276
      %311 = vst.msk [vmem:[%s283 + $0x139] sm:$0xff] %vm284, %v277
      %312 = vst.msk [vmem:[%s283 + $0x141] sm:$0xff] %vm284, %v278
      %313 = vst.msk [vmem:[%s283 + $0x151] sm:$0xff] %vm284, %v279
      %314 = vst.msk [vmem:[%s283 + $0x159] sm:$0xff] %vm284, %v280
      %315 = vst.msk [vmem:[%s283 + $0x169] sm:$0xff] %vm284, %v281
      %316 = vst.msk [vmem:[%s283 + $0x171] sm:$0xff] %vm284, %v282
      %vm317 = vcmask 24576
      %318 = vst.msk [vmem:[%s283] sm:$0x1] %vm317, %v251
      %319 = vst.msk [vmem:[%s283 + $0x18] sm:$0x1] %vm317, %v253
      %320 = vst.msk [vmem:[%s283 + $0x30] sm:$0x1] %vm317, %v255
      %321 = vst.msk [vmem:[%s283 + $0x48] sm:$0x1] %vm317, %v257
      %322 = vst.msk [vmem:[%s283 + $0x60] sm:$0x1] %vm317, %v259
      %323 = vst.msk [vmem:[%s283 + $0x78] sm:$0x1] %vm317, %v261
      %324 = vst.msk [vmem:[%s283 + $0x90] sm:$0x1] %vm317, %v263
      %325 = vst.msk [vmem:[%s283 + $0xa8] sm:$0x1] %vm317, %v265
      %326 = vst.msk [vmem:[%s283 + $0xc0] sm:$0x1] %vm317, %v267
      %327 = vst.msk [vmem:[%s283 + $0xd8] sm:$0x1] %vm317, %v269
      %328 = vst.msk [vmem:[%s283 + $0xf0] sm:$0x1] %vm317, %v271
      %329 = vst.msk [vmem:[%s283 + $0x108] sm:$0x1] %vm317, %v273
      %330 = vst.msk [vmem:[%s283 + $0x120] sm:$0x1] %vm317, %v275
      %331 = vst.msk [vmem:[%s283 + $0x138] sm:$0x1] %vm317, %v277
      %332 = vst.msk [vmem:[%s283 + $0x150] sm:$0x1] %vm317, %v279
      %333 = vst.msk [vmem:[%s283 + $0x168] sm:$0x1] %vm317, %v281
      %vm334 = vcmask 31751
      %335 = vst.msk [vmem:[%s283 + $0xa] sm:$0x80] %vm334, %v252
      %336 = vst.msk [vmem:[%s283 + $0x22] sm:$0x80] %vm334, %v254
      %337 = vst.msk [vmem:[%s283 + $0x3a] sm:$0x80] %vm334, %v256
      %338 = vst.msk [vmem:[%s283 + $0x52] sm:$0x80] %vm334, %v258
      %339 = vst.msk [vmem:[%s283 + $0x6a] sm:$0x80] %vm334, %v260
      %340 = vst.msk [vmem:[%s283 + $0x82] sm:$0x80] %vm334, %v262
      %341 = vst.msk [vmem:[%s283 + $0x9a] sm:$0x80] %vm334, %v264
      %342 = vst.msk [vmem:[%s283 + $0xb2] sm:$0x80] %vm334, %v266
      %343 = vst.msk [vmem:[%s283 + $0xca] sm:$0x80] %vm334, %v268
      %344 = vst.msk [vmem:[%s283 + $0xe2] sm:$0x80] %vm334, %v270
      %345 = vst.msk [vmem:[%s283 + $0xfa] sm:$0x80] %vm334, %v272
      %346 = vst.msk [vmem:[%s283 + $0x112] sm:$0x80] %vm334, %v274
      %347 = vst.msk [vmem:[%s283 + $0x12a] sm:$0x80] %vm334, %v276
      %348 = vst.msk [vmem:[%s283 + $0x142] sm:$0x80] %vm334, %v278
      %349 = vst.msk [vmem:[%s283 + $0x15a] sm:$0x80] %vm334, %v280
      %350 = vst.msk [vmem:[%s283 + $0x172] sm:$0x80] %vm334, %v282
      %v351 = vld [vmem:[%s283] sm:$0xff]
      %v352 = vld [vmem:[%s283 + $0x8] sm:$0xff]
      %v353 = vld [vmem:[%s283 + $0x10] sm:$0x3]
      %354 = vst.msk [vmem:[#allocation2] sm:$0xff] %vm284, %v351
      %355 = vst.msk [vmem:[#allocation2 + $0x8] sm:$0xff] %vm284, %v352
      %vm356 = vcmask 25600
      %357 = vst.msk [vmem:[#allocation2 + $0x10] sm:$0x3] %vm356, %v353
      %s358 = scalar_lea.vmem [#allocation2], 384
      %v359 = vld [vmem:[%s358] sm:$0xff]
      %v360 = vld [vmem:[%s358 + $0x8] sm:$0xff]
      %v361 = vld [vmem:[%s358 + $0x10] sm:$0x3]
      %s362 = scalar_lea.vmem [#allocation2], 408
      %363 = vst.msk [vmem:[%s362] sm:$0xff] %vm284, %v359
      %364 = vst.msk [vmem:[%s362 + $0x8] sm:$0xff] %vm284, %v360
      %365 = vst.msk [vmem:[%s362 + $0x10] sm:$0x3] %vm356, %v361
      %s366 = smul.u32 %s250, 24
      %s367 = scalar_lea.vmem [#allocation2], %s366
      %v368 = vld [vmem:[%s367] sm:$0xff]
      %v369 = vld [vmem:[%s367 + $0x8] sm:$0xff]
      %v370 = vld [vmem:[%s367 + $0x18] sm:$0xff]
      %v371 = vld [vmem:[%s367 + $0x20] sm:$0xff]
      %v372 = vld [vmem:[%s367 + $0x30] sm:$0xff]
      %v373 = vld [vmem:[%s367 + $0x38] sm:$0xff]
      %v374 = vld [vmem:[%s367 + $0x48] sm:$0xff]
      %v375 = vld [vmem:[%s367 + $0x50] sm:$0xff]
      %v376 = vld [vmem:[%s367 + $0x60] sm:$0xff]
      %v377 = vld [vmem:[%s367 + $0x68] sm:$0xff]
      %v378 = vld [vmem:[%s367 + $0x78] sm:$0xff]
      %v379 = vld [vmem:[%s367 + $0x80] sm:$0xff]
      %v380 = vld [vmem:[%s367 + $0x90] sm:$0xff]
      %v381 = vld [vmem:[%s367 + $0x98] sm:$0xff]
      %v382 = vld [vmem:[%s367 + $0xa8] sm:$0xff]
      %v383 = vld [vmem:[%s367 + $0xb0] sm:$0xff]
      %v384 = vld [vmem:[%s1] sm:$0xf]
      %v385 = vld [vmem:[%s367 + $0x1] sm:$0xff]
      %v386 = vld [vmem:[%s367 + $0x9] sm:$0xff]
      %v387 = vld [vmem:[%s367 + $0x19] sm:$0xff]
      %v388 = vld [vmem:[%s367 + $0x21] sm:$0xff]
      %v389 = vld [vmem:[%s367 + $0x31] sm:$0xff]
      %v390 = vld [vmem:[%s367 + $0x39] sm:$0xff]
      %v391 = vld [vmem:[%s367 + $0x49] sm:$0xff]
      %v392 = vld [vmem:[%s367 + $0x51] sm:$0xff]
      %v393 = vld [vmem:[%s367 + $0x61] sm:$0xff]
      %v394 = vld [vmem:[%s367 + $0x69] sm:$0xff]
      %v395 = vld [vmem:[%s367 + $0x79] sm:$0xff]
      %v396 = vld [vmem:[%s367 + $0x81] sm:$0xff]
      %v397 = vld [vmem:[%s367 + $0x91] sm:$0xff]
      %v398 = vld [vmem:[%s367 + $0x99] sm:$0xff]
      %v399 = vld [vmem:[%s367 + $0xa9] sm:$0xff]
      %v400 = vld [vmem:[%s367 + $0xb1] sm:$0xff]
      %s401 = scalar_lea.vmem %s1, 4
      %v402 = vld [vmem:[%s401] sm:$0xf]
      %v404 = vsel %vm284, %v385, 0
      %v407 = vsel %vm284, %v386, 0
      %v410 = vsel %vm284, %v387, 0
      %v413 = vsel %vm284, %v388, 0
      %v416 = vsel %vm284, %v389, 0
      %v419 = vsel %vm284, %v390, 0
      %v422 = vsel %vm284, %v391, 0
      %v425 = vsel %vm284, %v392, 0
      %v428 = vsel %vm284, %v393, 0
      %v431 = vsel %vm284, %v394, 0
      %v434 = vsel %vm284, %v395, 0
      %v437 = vsel %vm284, %v396, 0
      %v440 = vsel %vm284, %v397, 0
      %v443 = vsel %vm284, %v398, 0
      %v446 = vsel %vm284, %v399, 0
      %v449 = vsel %vm284, %v400, 0
      %vm451 = vcmask 1043456
      %v453 = vsel %vm451, %v402, 0
      %455 = vmatprep.subr.mxu0 0.0
      %456 = vmatpush1.msra.mxu0 0.0
      %457 = vmatprep.subr.mxu0 0.0
      %458 = vmatpush1.msra.mxu0 0.0
      %459 = vmatprep.subr.mxu0 0.0
      %460 = vmatpush1.msra.mxu0 0.0
      %461 = vmatprep.subr.mxu0 0.0
      %462 = vmatpush1.msra.mxu0 0.0
      %463 = vmatprep.subr.mxu0 0.0
      %464 = vmatpush1.msra.mxu0 0.0
      %465 = vmatprep.subr.mxu0 0.0
      %466 = vmatpush1.msra.mxu0 0.0
      %467 = vmatprep.subr.mxu0 0.0
      %468 = vmatpush1.msra.mxu0 0.0
      %469 = vmatprep.subr.mxu0 0.0
      %470 = vmatpush1.msra.mxu0 0.0
      %471 = vmatprep.subr.mxu0 0.0
      %472 = vmatpush1.msra.mxu0 0.0
      %473 = vmatprep.subr.mxu0 0.0
      %474 = vmatpush1.msra.mxu0 0.0
      %475 = vmatprep.subr.mxu0 0.0
      %476 = vmatpush1.msra.mxu0 0.0
      %477 = vmatprep.subr.mxu0 0.0
      %478 = vmatpush1.msra.mxu0 0.0
      %479 = vmatprep.subr.mxu0 0.0
      %480 = vmatpush1.msra.mxu0 0.0
      %481 = vmatprep.subr.mxu0 0.0
      %482 = vmatpush1.msra.mxu0 0.0
      %483 = vmatprep.subr.mxu0 0.0
      %484 = vmatpush1.msra.mxu0 0.0
      %485 = vmatprep.subr.mxu0 0.0
      %486 = vmatpush1.msra.mxu0 %v453
      %487 = vmatprep.subr.mxu0 0.0
      %488 = vmatpush2.msra.mxu0 0.0
      %489 = vmatprep.subr.mxu0 0.0
      %490 = vmatpush2.msra.mxu0 0.0
      %491 = vmatprep.subr.mxu0 0.0
      %492 = vmatpush2.msra.mxu0 0.0
      %493 = vmatprep.subr.mxu0 0.0
      %494 = vmatpush2.msra.mxu0 0.0
      %495 = vmatprep.subr.mxu0 0.0
      %496 = vmatpush2.msra.mxu0 0.0
      %497 = vmatprep.subr.mxu0 0.0
      %498 = vmatpush2.msra.mxu0 0.0
      %499 = vmatprep.subr.mxu0 0.0
      %500 = vmatpush2.msra.mxu0 0.0
      %501 = vmatprep.subr.mxu0 0.0
      %502 = vmatpush2.msra.mxu0 0.0
      %503 = vmatprep.subr.mxu0 0.0
      %504 = vmatpush2.msra.mxu0 0.0
      %505 = vmatprep.subr.mxu0 0.0
      %506 = vmatpush2.msra.mxu0 0.0
      %507 = vmatprep.subr.mxu0 0.0
      %508 = vmatpush2.msra.mxu0 0.0
      %509 = vmatprep.subr.mxu0 0.0
      %510 = vmatpush2.msra.mxu0 0.0
      %511 = vmatprep.subr.mxu0 0.0
      %512 = vmatpush2.msra.mxu0 0.0
      %513 = vmatprep.subr.mxu0 0.0
      %514 = vmatpush2.msra.mxu0 0.0
      %515 = vmatprep.subr.mxu0 0.0
      %516 = vmatpush2.msra.mxu0 0.0
      %517 = vmatprep.subr.mxu0 0.0
      %518 = vmatpush2.msra.mxu0 0.0
      %519 = vmatprep.mubr.f32.mxu0 0.0
      %520 = vmatmul.mubr.f32.gmra.mxu0 %v404
      %v521 = vpop.f32.mrf.mxu0
      %v522 = vadd.f32 0.0, %v521
      %v523 = vpop.f32.mrf.mxu0
      %524 = vmatprep.mubr.f32.mxu0 0.0
      %525 = vmatmul.mubr.f32.gmra.mxu0 %v407
      %v526 = vpop.f32.mrf.mxu0
      %v527 = vadd.f32 0.0, %v526
      %v528 = vpop.f32.mrf.mxu0
      %529 = vmatprep.mubr.f32.mxu0 0.0
      %530 = vmatmul.mubr.f32.gmra.mxu0 %v410
      %v531 = vpop.f32.mrf.mxu0
      %v532 = vadd.f32 0.0, %v531
      %v533 = vpop.f32.mrf.mxu0
      %534 = vmatprep.mubr.f32.mxu0 0.0
      %535 = vmatmul.mubr.f32.gmra.mxu0 %v413
      %v536 = vpop.f32.mrf.mxu0
      %v537 = vadd.f32 0.0, %v536
      %v538 = vpop.f32.mrf.mxu0
      %539 = vmatprep.mubr.f32.mxu0 0.0
      %540 = vmatmul.mubr.f32.gmra.mxu0 %v416
      %v541 = vpop.f32.mrf.mxu0
      %v542 = vadd.f32 0.0, %v541
      %v543 = vpop.f32.mrf.mxu0
      %544 = vmatprep.mubr.f32.mxu0 0.0
      %545 = vmatmul.mubr.f32.gmra.mxu0 %v419
      %v546 = vpop.f32.mrf.mxu0
      %v547 = vadd.f32 0.0, %v546
      %v548 = vpop.f32.mrf.mxu0
      %549 = vmatprep.mubr.f32.mxu0 0.0
      %550 = vmatmul.mubr.f32.gmra.mxu0 %v422
      %v551 = vpop.f32.mrf.mxu0
      %v552 = vadd.f32 0.0, %v551
      %v553 = vpop.f32.mrf.mxu0
      %554 = vmatprep.mubr.f32.mxu0 0.0
      %555 = vmatmul.mubr.f32.gmra.mxu0 %v425
      %v556 = vpop.f32.mrf.mxu0
      %v557 = vadd.f32 0.0, %v556
      %v558 = vpop.f32.mrf.mxu0
      %559 = vmatprep.mubr.f32.mxu0 0.0
      %560 = vmatmul.mubr.f32.gmra.mxu0 %v428
      %v561 = vpop.f32.mrf.mxu0
      %v562 = vadd.f32 0.0, %v561
      %v563 = vpop.f32.mrf.mxu0
      %564 = vmatprep.mubr.f32.mxu0 0.0
      %565 = vmatmul.mubr.f32.gmra.mxu0 %v431
      %v566 = vpop.f32.mrf.mxu0
      %v567 = vadd.f32 0.0, %v566
      %v568 = vpop.f32.mrf.mxu0
      %569 = vmatprep.mubr.f32.mxu0 0.0
      %570 = vmatmul.mubr.f32.gmra.mxu0 %v434
      %v571 = vpop.f32.mrf.mxu0
      %v572 = vadd.f32 0.0, %v571
      %v573 = vpop.f32.mrf.mxu0
      %574 = vmatprep.mubr.f32.mxu0 0.0
      %575 = vmatmul.mubr.f32.gmra.mxu0 %v437
      %v576 = vpop.f32.mrf.mxu0
      %v577 = vadd.f32 0.0, %v576
      %v578 = vpop.f32.mrf.mxu0
      %579 = vmatprep.mubr.f32.mxu0 0.0
      %580 = vmatmul.mubr.f32.gmra.mxu0 %v440
      %v581 = vpop.f32.mrf.mxu0
      %v582 = vadd.f32 0.0, %v581
      %v583 = vpop.f32.mrf.mxu0
      %584 = vmatprep.mubr.f32.mxu0 0.0
      %585 = vmatmul.mubr.f32.gmra.mxu0 %v443
      %v586 = vpop.f32.mrf.mxu0
      %v587 = vadd.f32 0.0, %v586
      %v588 = vpop.f32.mrf.mxu0
      %589 = vmatprep.mubr.f32.mxu0 0.0
      %590 = vmatmul.mubr.f32.gmra.mxu0 %v446
      %v591 = vpop.f32.mrf.mxu0
      %v592 = vadd.f32 0.0, %v591
      %v593 = vpop.f32.mrf.mxu0
      %594 = vmatprep.mubr.f32.mxu0 0.0
      %595 = vmatmul.mubr.f32.gmra.mxu0 %v449
      %v596 = vpop.f32.mrf.mxu0
      %v597 = vadd.f32 0.0, %v596
      %v598 = vpop.f32.mrf.mxu0
      %599 = vdwg.mxu0
      %v601 = vsel %vm284, %v368, 0
      %v604 = vsel %vm284, %v369, 0
      %v607 = vsel %vm284, %v370, 0
      %v610 = vsel %vm284, %v371, 0
      %v613 = vsel %vm284, %v372, 0
      %v616 = vsel %vm284, %v373, 0
      %v619 = vsel %vm284, %v374, 0
      %v622 = vsel %vm284, %v375, 0
      %v625 = vsel %vm284, %v376, 0
      %v628 = vsel %vm284, %v377, 0
      %v631 = vsel %vm284, %v378, 0
      %v634 = vsel %vm284, %v379, 0
      %v637 = vsel %vm284, %v380, 0
      %v640 = vsel %vm284, %v381, 0
      %v643 = vsel %vm284, %v382, 0
      %v646 = vsel %vm284, %v383, 0
      %v649 = vsel %vm451, %v384, 0
      %651 = vmatprep.subr.mxu0 0.0
      %652 = vmatpush1.msra.mxu0 0.0
      %653 = vmatprep.subr.mxu0 0.0
      %654 = vmatpush1.msra.mxu0 0.0
      %655 = vmatprep.subr.mxu0 0.0
      %656 = vmatpush1.msra.mxu0 0.0
      %657 = vmatprep.subr.mxu0 0.0
      %658 = vmatpush1.msra.mxu0 0.0
      %659 = vmatprep.subr.mxu0 0.0
      %660 = vmatpush1.msra.mxu0 0.0
      %661 = vmatprep.subr.mxu0 0.0
      %662 = vmatpush1.msra.mxu0 0.0
      %663 = vmatprep.subr.mxu0 0.0
      %664 = vmatpush1.msra.mxu0 0.0
      %665 = vmatprep.subr.mxu0 0.0
      %666 = vmatpush1.msra.mxu0 0.0
      %667 = vmatprep.subr.mxu0 0.0
      %668 = vmatpush1.msra.mxu0 0.0
      %669 = vmatprep.subr.mxu0 0.0
      %670 = vmatpush1.msra.mxu0 0.0
      %671 = vmatprep.subr.mxu0 0.0
      %672 = vmatpush1.msra.mxu0 0.0
      %673 = vmatprep.subr.mxu0 0.0
      %674 = vmatpush1.msra.mxu0 0.0
      %675 = vmatprep.subr.mxu0 0.0
      %676 = vmatpush1.msra.mxu0 0.0
      %677 = vmatprep.subr.mxu0 0.0
      %678 = vmatpush1.msra.mxu0 0.0
      %679 = vmatprep.subr.mxu0 0.0
      %680 = vmatpush1.msra.mxu0 0.0
      %681 = vmatprep.subr.mxu0 0.0
      %682 = vmatpush1.msra.mxu0 %v649
      %683 = vmatprep.subr.mxu0 0.0
      %684 = vmatpush2.msra.mxu0 0.0
      %685 = vmatprep.subr.mxu0 0.0
      %686 = vmatpush2.msra.mxu0 0.0
      %687 = vmatprep.subr.mxu0 0.0
      %688 = vmatpush2.msra.mxu0 0.0
      %689 = vmatprep.subr.mxu0 0.0
      %690 = vmatpush2.msra.mxu0 0.0
      %691 = vmatprep.subr.mxu0 0.0
      %692 = vmatpush2.msra.mxu0 0.0
      %693 = vmatprep.subr.mxu0 0.0
      %694 = vmatpush2.msra.mxu0 0.0
      %695 = vmatprep.subr.mxu0 0.0
      %696 = vmatpush2.msra.mxu0 0.0
      %697 = vmatprep.subr.mxu0 0.0
      %698 = vmatpush2.msra.mxu0 0.0
      %699 = vmatprep.subr.mxu0 0.0
      %700 = vmatpush2.msra.mxu0 0.0
      %701 = vmatprep.subr.mxu0 0.0
      %702 = vmatpush2.msra.mxu0 0.0
      %703 = vmatprep.subr.mxu0 0.0
      %704 = vmatpush2.msra.mxu0 0.0
      %705 = vmatprep.subr.mxu0 0.0
      %706 = vmatpush2.msra.mxu0 0.0
      %707 = vmatprep.subr.mxu0 0.0
      %708 = vmatpush2.msra.mxu0 0.0
      %709 = vmatprep.subr.mxu0 0.0
      %710 = vmatpush2.msra.mxu0 0.0
      %711 = vmatprep.subr.mxu0 0.0
      %712 = vmatpush2.msra.mxu0 0.0
      %713 = vmatprep.subr.mxu0 0.0
      %714 = vmatpush2.msra.mxu0 0.0
      %715 = vmatprep.mubr.f32.mxu0 0.0
      %716 = vmatmul.mubr.f32.gmra.mxu0 %v601
      %v717 = vpop.f32.mrf.mxu0
      %v718 = vadd.f32 %v522, %v717
      %v719 = vpop.f32.mrf.mxu0
      %720 = vmatprep.mubr.f32.mxu0 0.0
      %721 = vmatmul.mubr.f32.gmra.mxu0 %v604
      %v722 = vpop.f32.mrf.mxu0
      %v723 = vadd.f32 %v527, %v722
      %v724 = vpop.f32.mrf.mxu0
      %725 = vmatprep.mubr.f32.mxu0 0.0
      %726 = vmatmul.mubr.f32.gmra.mxu0 %v607
      %v727 = vpop.f32.mrf.mxu0
      %v728 = vadd.f32 %v532, %v727
      %v729 = vpop.f32.mrf.mxu0
      %730 = vmatprep.mubr.f32.mxu0 0.0
      %731 = vmatmul.mubr.f32.gmra.mxu0 %v610
      %v732 = vpop.f32.mrf.mxu0
      %v733 = vadd.f32 %v537, %v732
      %v734 = vpop.f32.mrf.mxu0
      %735 = vmatprep.mubr.f32.mxu0 0.0
      %736 = vmatmul.mubr.f32.gmra.mxu0 %v613
      %v737 = vpop.f32.mrf.mxu0
      %v738 = vadd.f32 %v542, %v737
      %v739 = vpop.f32.mrf.mxu0
      %740 = vmatprep.mubr.f32.mxu0 0.0
      %741 = vmatmul.mubr.f32.gmra.mxu0 %v616
      %v742 = vpop.f32.mrf.mxu0
      %v743 = vadd.f32 %v547, %v742
      %v744 = vpop.f32.mrf.mxu0
      %745 = vmatprep.mubr.f32.mxu0 0.0
      %746 = vmatmul.mubr.f32.gmra.mxu0 %v619
      %v747 = vpop.f32.mrf.mxu0
      %v748 = vadd.f32 %v552, %v747
      %v749 = vpop.f32.mrf.mxu0
      %750 = vmatprep.mubr.f32.mxu0 0.0
      %751 = vmatmul.mubr.f32.gmra.mxu0 %v622
      %v752 = vpop.f32.mrf.mxu0
      %v753 = vadd.f32 %v557, %v752
      %v754 = vpop.f32.mrf.mxu0
      %755 = vmatprep.mubr.f32.mxu0 0.0
      %756 = vmatmul.mubr.f32.gmra.mxu0 %v625
      %v757 = vpop.f32.mrf.mxu0
      %v758 = vadd.f32 %v562, %v757
      %v759 = vpop.f32.mrf.mxu0
      %760 = vmatprep.mubr.f32.mxu0 0.0
      %761 = vmatmul.mubr.f32.gmra.mxu0 %v628
      %v762 = vpop.f32.mrf.mxu0
      %v763 = vadd.f32 %v567, %v762
      %v764 = vpop.f32.mrf.mxu0
      %765 = vmatprep.mubr.f32.mxu0 0.0
      %766 = vmatmul.mubr.f32.gmra.mxu0 %v631
      %v767 = vpop.f32.mrf.mxu0
      %v768 = vadd.f32 %v572, %v767
      %v769 = vpop.f32.mrf.mxu0
      %770 = vmatprep.mubr.f32.mxu0 0.0
      %771 = vmatmul.mubr.f32.gmra.mxu0 %v634
      %v772 = vpop.f32.mrf.mxu0
      %v773 = vadd.f32 %v577, %v772
      %v774 = vpop.f32.mrf.mxu0
      %775 = vmatprep.mubr.f32.mxu0 0.0
      %776 = vmatmul.mubr.f32.gmra.mxu0 %v637
      %v777 = vpop.f32.mrf.mxu0
      %v778 = vadd.f32 %v582, %v777
      %v779 = vpop.f32.mrf.mxu0
      %780 = vmatprep.mubr.f32.mxu0 0.0
      %781 = vmatmul.mubr.f32.gmra.mxu0 %v640
      %v782 = vpop.f32.mrf.mxu0
      %v783 = vadd.f32 %v587, %v782
      %v784 = vpop.f32.mrf.mxu0
      %785 = vmatprep.mubr.f32.mxu0 0.0
      %786 = vmatmul.mubr.f32.gmra.mxu0 %v643
      %v787 = vpop.f32.mrf.mxu0
      %v788 = vadd.f32 %v592, %v787
      %v789 = vpop.f32.mrf.mxu0
      %790 = vmatprep.mubr.f32.mxu0 0.0
      %791 = vmatmul.mubr.f32.gmra.mxu0 %v646
      %v792 = vpop.f32.mrf.mxu0
      %v793 = vadd.f32 %v597, %v792
      %v794 = vpop.f32.mrf.mxu0
      %795 = vdwg.mxu0
      %v796 = vld [vmem:[%s367 + $0x2] sm:$0xff]
      %v797 = vld [vmem:[%s367 + $0xa] sm:$0xff]
      %v798 = vld [vmem:[%s367 + $0x1a] sm:$0xff]
      %v799 = vld [vmem:[%s367 + $0x22] sm:$0xff]
      %v800 = vld [vmem:[%s367 + $0x32] sm:$0xff]
      %v801 = vld [vmem:[%s367 + $0x3a] sm:$0xff]
      %v802 = vld [vmem:[%s367 + $0x4a] sm:$0xff]
      %v803 = vld [vmem:[%s367 + $0x52] sm:$0xff]
      %v804 = vld [vmem:[%s367 + $0x62] sm:$0xff]
      %v805 = vld [vmem:[%s367 + $0x6a] sm:$0xff]
      %v806 = vld [vmem:[%s367 + $0x7a] sm:$0xff]
      %v807 = vld [vmem:[%s367 + $0x82] sm:$0xff]
      %v808 = vld [vmem:[%s367 + $0x92] sm:$0xff]
      %v809 = vld [vmem:[%s367 + $0x9a] sm:$0xff]
      %v810 = vld [vmem:[%s367 + $0xaa] sm:$0xff]
      %v811 = vld [vmem:[%s367 + $0xb2] sm:$0xff]
      %s812 = scalar_lea.vmem %s1, 8
      %v813 = vld [vmem:[%s812] sm:$0xf]
      %v815 = vsel %vm284, %v796, 0
      %v818 = vsel %vm284, %v797, 0
      %v821 = vsel %vm284, %v798, 0
      %v824 = vsel %vm284, %v799, 0
      %v827 = vsel %vm284, %v800, 0
      %v830 = vsel %vm284, %v801, 0
      %v833 = vsel %vm284, %v802, 0
      %v836 = vsel %vm284, %v803, 0
      %v839 = vsel %vm284, %v804, 0
      %v842 = vsel %vm284, %v805, 0
      %v845 = vsel %vm284, %v806, 0
      %v848 = vsel %vm284, %v807, 0
      %v851 = vsel %vm284, %v808, 0
      %v854 = vsel %vm284, %v809, 0
      %v857 = vsel %vm284, %v810, 0
      %v860 = vsel %vm284, %v811, 0
      %v863 = vsel %vm451, %v813, 0
      %865 = vmatprep.subr.mxu0 0.0
      %866 = vmatpush1.msra.mxu0 0.0
      %867 = vmatprep.subr.mxu0 0.0
      %868 = vmatpush1.msra.mxu0 0.0
      %869 = vmatprep.subr.mxu0 0.0
      %870 = vmatpush1.msra.mxu0 0.0
      %871 = vmatprep.subr.mxu0 0.0
      %872 = vmatpush1.msra.mxu0 0.0
      %873 = vmatprep.subr.mxu0 0.0
      %874 = vmatpush1.msra.mxu0 0.0
      %875 = vmatprep.subr.mxu0 0.0
      %876 = vmatpush1.msra.mxu0 0.0
      %877 = vmatprep.subr.mxu0 0.0
      %878 = vmatpush1.msra.mxu0 0.0
      %879 = vmatprep.subr.mxu0 0.0
      %880 = vmatpush1.msra.mxu0 0.0
      %881 = vmatprep.subr.mxu0 0.0
      %882 = vmatpush1.msra.mxu0 0.0
      %883 = vmatprep.subr.mxu0 0.0
      %884 = vmatpush1.msra.mxu0 0.0
      %885 = vmatprep.subr.mxu0 0.0
      %886 = vmatpush1.msra.mxu0 0.0
      %887 = vmatprep.subr.mxu0 0.0
      %888 = vmatpush1.msra.mxu0 0.0
      %889 = vmatprep.subr.mxu0 0.0
      %890 = vmatpush1.msra.mxu0 0.0
      %891 = vmatprep.subr.mxu0 0.0
      %892 = vmatpush1.msra.mxu0 0.0
      %893 = vmatprep.subr.mxu0 0.0
      %894 = vmatpush1.msra.mxu0 0.0
      %895 = vmatprep.subr.mxu0 0.0
      %896 = vmatpush1.msra.mxu0 %v863
      %897 = vmatprep.subr.mxu0 0.0
      %898 = vmatpush2.msra.mxu0 0.0
      %899 = vmatprep.subr.mxu0 0.0
      %900 = vmatpush2.msra.mxu0 0.0
      %901 = vmatprep.subr.mxu0 0.0
      %902 = vmatpush2.msra.mxu0 0.0
      %903 = vmatprep.subr.mxu0 0.0
      %904 = vmatpush2.msra.mxu0 0.0
      %905 = vmatprep.subr.mxu0 0.0
      %906 = vmatpush2.msra.mxu0 0.0
      %907 = vmatprep.subr.mxu0 0.0
      %908 = vmatpush2.msra.mxu0 0.0
      %909 = vmatprep.subr.mxu0 0.0
      %910 = vmatpush2.msra.mxu0 0.0
      %911 = vmatprep.subr.mxu0 0.0
      %912 = vmatpush2.msra.mxu0 0.0
      %913 = vmatprep.subr.mxu0 0.0
      %914 = vmatpush2.msra.mxu0 0.0
      %915 = vmatprep.subr.mxu0 0.0
      %916 = vmatpush2.msra.mxu0 0.0
      %917 = vmatprep.subr.mxu0 0.0
      %918 = vmatpush2.msra.mxu0 0.0
      %919 = vmatprep.subr.mxu0 0.0
      %920 = vmatpush2.msra.mxu0 0.0
      %921 = vmatprep.subr.mxu0 0.0
      %922 = vmatpush2.msra.mxu0 0.0
      %923 = vmatprep.subr.mxu0 0.0
      %924 = vmatpush2.msra.mxu0 0.0
      %925 = vmatprep.subr.mxu0 0.0
      %926 = vmatpush2.msra.mxu0 0.0
      %927 = vmatprep.subr.mxu0 0.0
      %928 = vmatpush2.msra.mxu0 0.0
      %929 = vmatprep.mubr.f32.mxu0 0.0
      %930 = vmatmul.mubr.f32.gmra.mxu0 %v815
      %v931 = vpop.f32.mrf.mxu0
      %v932 = vadd.f32 0.0, %v931
      %v933 = vpop.f32.mrf.mxu0
      %934 = vmatprep.mubr.f32.mxu0 0.0
      %935 = vmatmul.mubr.f32.gmra.mxu0 %v818
      %v936 = vpop.f32.mrf.mxu0
      %v937 = vadd.f32 0.0, %v936
      %v938 = vpop.f32.mrf.mxu0
      %939 = vmatprep.mubr.f32.mxu0 0.0
      %940 = vmatmul.mubr.f32.gmra.mxu0 %v821
      %v941 = vpop.f32.mrf.mxu0
      %v942 = vadd.f32 0.0, %v941
      %v943 = vpop.f32.mrf.mxu0
      %944 = vmatprep.mubr.f32.mxu0 0.0
      %945 = vmatmul.mubr.f32.gmra.mxu0 %v824
      %v946 = vpop.f32.mrf.mxu0
      %v947 = vadd.f32 0.0, %v946
      %v948 = vpop.f32.mrf.mxu0
      %949 = vmatprep.mubr.f32.mxu0 0.0
      %950 = vmatmul.mubr.f32.gmra.mxu0 %v827
      %v951 = vpop.f32.mrf.mxu0
      %v952 = vadd.f32 0.0, %v951
      %v953 = vpop.f32.mrf.mxu0
      %954 = vmatprep.mubr.f32.mxu0 0.0
      %955 = vmatmul.mubr.f32.gmra.mxu0 %v830
      %v956 = vpop.f32.mrf.mxu0
      %v957 = vadd.f32 0.0, %v956
      %v958 = vpop.f32.mrf.mxu0
      %959 = vmatprep.mubr.f32.mxu0 0.0
      %960 = vmatmul.mubr.f32.gmra.mxu0 %v833
      %v961 = vpop.f32.mrf.mxu0
      %v962 = vadd.f32 0.0, %v961
      %v963 = vpop.f32.mrf.mxu0
      %964 = vmatprep.mubr.f32.mxu0 0.0
      %965 = vmatmul.mubr.f32.gmra.mxu0 %v836
      %v966 = vpop.f32.mrf.mxu0
      %v967 = vadd.f32 0.0, %v966
      %v968 = vpop.f32.mrf.mxu0
      %969 = vmatprep.mubr.f32.mxu0 0.0
      %970 = vmatmul.mubr.f32.gmra.mxu0 %v839
      %v971 = vpop.f32.mrf.mxu0
      %v972 = vadd.f32 0.0, %v971
      %v973 = vpop.f32.mrf.mxu0
      %974 = vmatprep.mubr.f32.mxu0 0.0
      %975 = vmatmul.mubr.f32.gmra.mxu0 %v842
      %v976 = vpop.f32.mrf.mxu0
      %v977 = vadd.f32 0.0, %v976
      %v978 = vpop.f32.mrf.mxu0
      %979 = vmatprep.mubr.f32.mxu0 0.0
      %980 = vmatmul.mubr.f32.gmra.mxu0 %v845
      %v981 = vpop.f32.mrf.mxu0
      %v982 = vadd.f32 0.0, %v981
      %v983 = vpop.f32.mrf.mxu0
      %984 = vmatprep.mubr.f32.mxu0 0.0
      %985 = vmatmul.mubr.f32.gmra.mxu0 %v848
      %v986 = vpop.f32.mrf.mxu0
      %v987 = vadd.f32 0.0, %v986
      %v988 = vpop.f32.mrf.mxu0
      %989 = vmatprep.mubr.f32.mxu0 0.0
      %990 = vmatmul.mubr.f32.gmra.mxu0 %v851
      %v991 = vpop.f32.mrf.mxu0
      %v992 = vadd.f32 0.0, %v991
      %v993 = vpop.f32.mrf.mxu0
      %994 = vmatprep.mubr.f32.mxu0 0.0
      %995 = vmatmul.mubr.f32.gmra.mxu0 %v854
      %v996 = vpop.f32.mrf.mxu0
      %v997 = vadd.f32 0.0, %v996
      %v998 = vpop.f32.mrf.mxu0
      %999 = vmatprep.mubr.f32.mxu0 0.0
      %1000 = vmatmul.mubr.f32.gmra.mxu0 %v857
      %v1001 = vpop.f32.mrf.mxu0
      %v1002 = vadd.f32 0.0, %v1001
      %v1003 = vpop.f32.mrf.mxu0
      %1004 = vmatprep.mubr.f32.mxu0 0.0
      %1005 = vmatmul.mubr.f32.gmra.mxu0 %v860
      %v1006 = vpop.f32.mrf.mxu0
      %v1007 = vadd.f32 0.0, %v1006
      %v1008 = vpop.f32.mrf.mxu0
      %1009 = vdwg.mxu0
      %v1010 = vadd.f32 %v718, %v932
      %v1011 = vadd.f32 %v723, %v937
      %v1012 = vadd.f32 %v728, %v942
      %v1013 = vadd.f32 %v733, %v947
      %v1014 = vadd.f32 %v738, %v952
      %v1015 = vadd.f32 %v743, %v957
      %v1016 = vadd.f32 %v748, %v962
      %v1017 = vadd.f32 %v753, %v967
      %v1018 = vadd.f32 %v758, %v972
      %v1019 = vadd.f32 %v763, %v977
      %v1020 = vadd.f32 %v768, %v982
      %v1021 = vadd.f32 %v773, %v987
      %v1022 = vadd.f32 %v778, %v992
      %v1023 = vadd.f32 %v783, %v997
      %v1024 = vadd.f32 %v788, %v1002
      %v1025 = vadd.f32 %v793, %v1007
      %s1026 = sadd.s32 %s250, 1
      %s1027 = smul.u32 %s1026, 24
      %s1028 = scalar_lea.vmem [#allocation2], %s1027
      %v1029 = vld [vmem:[%s1028] sm:$0xff]
      %v1030 = vld [vmem:[%s1028 + $0x8] sm:$0xff]
      %v1031 = vld [vmem:[%s1028 + $0x18] sm:$0xff]
      %v1032 = vld [vmem:[%s1028 + $0x20] sm:$0xff]
      %v1033 = vld [vmem:[%s1028 + $0x30] sm:$0xff]
      %v1034 = vld [vmem:[%s1028 + $0x38] sm:$0xff]
      %v1035 = vld [vmem:[%s1028 + $0x48] sm:$0xff]
      %v1036 = vld [vmem:[%s1028 + $0x50] sm:$0xff]
      %v1037 = vld [vmem:[%s1028 + $0x60] sm:$0xff]
      %v1038 = vld [vmem:[%s1028 + $0x68] sm:$0xff]
      %v1039 = vld [vmem:[%s1028 + $0x78] sm:$0xff]
      %v1040 = vld [vmem:[%s1028 + $0x80] sm:$0xff]
      %v1041 = vld [vmem:[%s1028 + $0x90] sm:$0xff]
      %v1042 = vld [vmem:[%s1028 + $0x98] sm:$0xff]
      %v1043 = vld [vmem:[%s1028 + $0xa8] sm:$0xff]
      %v1044 = vld [vmem:[%s1028 + $0xb0] sm:$0xff]
      %s1045 = scalar_lea.vmem %s1, 12
      %v1046 = vld [vmem:[%s1045] sm:$0xf]
      %v1048 = vsel %vm284, %v1029, 0
      %v1051 = vsel %vm284, %v1030, 0
      %v1054 = vsel %vm284, %v1031, 0
      %v1057 = vsel %vm284, %v1032, 0
      %v1060 = vsel %vm284, %v1033, 0
      %v1063 = vsel %vm284, %v1034, 0
      %v1066 = vsel %vm284, %v1035, 0
      %v1069 = vsel %vm284, %v1036, 0
      %v1072 = vsel %vm284, %v1037, 0
      %v1075 = vsel %vm284, %v1038, 0
      %v1078 = vsel %vm284, %v1039, 0
      %v1081 = vsel %vm284, %v1040, 0
      %v1084 = vsel %vm284, %v1041, 0
      %v1087 = vsel %vm284, %v1042, 0
      %v1090 = vsel %vm284, %v1043, 0
      %v1093 = vsel %vm284, %v1044, 0
      %v1096 = vsel %vm451, %v1046, 0
      %1098 = vmatprep.subr.mxu0 0.0
      %1099 = vmatpush1.msra.mxu0 0.0
      %1100 = vmatprep.subr.mxu0 0.0
      %1101 = vmatpush1.msra.mxu0 0.0
      %1102 = vmatprep.subr.mxu0 0.0
      %1103 = vmatpush1.msra.mxu0 0.0
      %1104 = vmatprep.subr.mxu0 0.0
      %1105 = vmatpush1.msra.mxu0 0.0
      %1106 = vmatprep.subr.mxu0 0.0
      %1107 = vmatpush1.msra.mxu0 0.0
      %1108 = vmatprep.subr.mxu0 0.0
      %1109 = vmatpush1.msra.mxu0 0.0
      %1110 = vmatprep.subr.mxu0 0.0
      %1111 = vmatpush1.msra.mxu0 0.0
      %1112 = vmatprep.subr.mxu0 0.0
      %1113 = vmatpush1.msra.mxu0 0.0
      %1114 = vmatprep.subr.mxu0 0.0
      %1115 = vmatpush1.msra.mxu0 0.0
      %1116 = vmatprep.subr.mxu0 0.0
      %1117 = vmatpush1.msra.mxu0 0.0
      %1118 = vmatprep.subr.mxu0 0.0
      %1119 = vmatpush1.msra.mxu0 0.0
      %1120 = vmatprep.subr.mxu0 0.0
      %1121 = vmatpush1.msra.mxu0 0.0
      %1122 = vmatprep.subr.mxu0 0.0
      %1123 = vmatpush1.msra.mxu0 0.0
      %1124 = vmatprep.subr.mxu0 0.0
      %1125 = vmatpush1.msra.mxu0 0.0
      %1126 = vmatprep.subr.mxu0 0.0
      %1127 = vmatpush1.msra.mxu0 0.0
      %1128 = vmatprep.subr.mxu0 0.0
      %1129 = vmatpush1.msra.mxu0 %v1096
      %1130 = vmatprep.subr.mxu0 0.0
      %1131 = vmatpush2.msra.mxu0 0.0
      %1132 = vmatprep.subr.mxu0 0.0
      %1133 = vmatpush2.msra.mxu0 0.0
      %1134 = vmatprep.subr.mxu0 0.0
      %1135 = vmatpush2.msra.mxu0 0.0
      %1136 = vmatprep.subr.mxu0 0.0
      %1137 = vmatpush2.msra.mxu0 0.0
      %1138 = vmatprep.subr.mxu0 0.0
      %1139 = vmatpush2.msra.mxu0 0.0
      %1140 = vmatprep.subr.mxu0 0.0
      %1141 = vmatpush2.msra.mxu0 0.0
      %1142 = vmatprep.subr.mxu0 0.0
      %1143 = vmatpush2.msra.mxu0 0.0
      %1144 = vmatprep.subr.mxu0 0.0
      %1145 = vmatpush2.msra.mxu0 0.0
      %1146 = vmatprep.subr.mxu0 0.0
      %1147 = vmatpush2.msra.mxu0 0.0
      %1148 = vmatprep.subr.mxu0 0.0
      %1149 = vmatpush2.msra.mxu0 0.0
      %1150 = vmatprep.subr.mxu0 0.0
      %1151 = vmatpush2.msra.mxu0 0.0
      %1152 = vmatprep.subr.mxu0 0.0
      %1153 = vmatpush2.msra.mxu0 0.0
      %1154 = vmatprep.subr.mxu0 0.0
      %1155 = vmatpush2.msra.mxu0 0.0
      %1156 = vmatprep.subr.mxu0 0.0
      %1157 = vmatpush2.msra.mxu0 0.0
      %1158 = vmatprep.subr.mxu0 0.0
      %1159 = vmatpush2.msra.mxu0 0.0
      %1160 = vmatprep.subr.mxu0 0.0
      %1161 = vmatpush2.msra.mxu0 0.0
      %1162 = vmatprep.mubr.f32.mxu0 0.0
      %1163 = vmatmul.mubr.f32.gmra.mxu0 %v1048
      %v1164 = vpop.f32.mrf.mxu0
      %v1165 = vadd.f32 0.0, %v1164
      %v1166 = vpop.f32.mrf.mxu0
      %1167 = vmatprep.mubr.f32.mxu0 0.0
      %1168 = vmatmul.mubr.f32.gmra.mxu0 %v1051
      %v1169 = vpop.f32.mrf.mxu0
      %v1170 = vadd.f32 0.0, %v1169
      %v1171 = vpop.f32.mrf.mxu0
      %1172 = vmatprep.mubr.f32.mxu0 0.0
      %1173 = vmatmul.mubr.f32.gmra.mxu0 %v1054
      %v1174 = vpop.f32.mrf.mxu0
      %v1175 = vadd.f32 0.0, %v1174
      %v1176 = vpop.f32.mrf.mxu0
      %1177 = vmatprep.mubr.f32.mxu0 0.0
      %1178 = vmatmul.mubr.f32.gmra.mxu0 %v1057
      %v1179 = vpop.f32.mrf.mxu0
      %v1180 = vadd.f32 0.0, %v1179
      %v1181 = vpop.f32.mrf.mxu0
      %1182 = vmatprep.mubr.f32.mxu0 0.0
      %1183 = vmatmul.mubr.f32.gmra.mxu0 %v1060
      %v1184 = vpop.f32.mrf.mxu0
      %v1185 = vadd.f32 0.0, %v1184
      %v1186 = vpop.f32.mrf.mxu0
      %1187 = vmatprep.mubr.f32.mxu0 0.0
      %1188 = vmatmul.mubr.f32.gmra.mxu0 %v1063
      %v1189 = vpop.f32.mrf.mxu0
      %v1190 = vadd.f32 0.0, %v1189
      %v1191 = vpop.f32.mrf.mxu0
      %1192 = vmatprep.mubr.f32.mxu0 0.0
      %1193 = vmatmul.mubr.f32.gmra.mxu0 %v1066
      %v1194 = vpop.f32.mrf.mxu0
      %v1195 = vadd.f32 0.0, %v1194
      %v1196 = vpop.f32.mrf.mxu0
      %1197 = vmatprep.mubr.f32.mxu0 0.0
      %1198 = vmatmul.mubr.f32.gmra.mxu0 %v1069
      %v1199 = vpop.f32.mrf.mxu0
      %v1200 = vadd.f32 0.0, %v1199
      %v1201 = vpop.f32.mrf.mxu0
      %1202 = vmatprep.mubr.f32.mxu0 0.0
      %1203 = vmatmul.mubr.f32.gmra.mxu0 %v1072
      %v1204 = vpop.f32.mrf.mxu0
      %v1205 = vadd.f32 0.0, %v1204
      %v1206 = vpop.f32.mrf.mxu0
      %1207 = vmatprep.mubr.f32.mxu0 0.0
      %1208 = vmatmul.mubr.f32.gmra.mxu0 %v1075
      %v1209 = vpop.f32.mrf.mxu0
      %v1210 = vadd.f32 0.0, %v1209
      %v1211 = vpop.f32.mrf.mxu0
      %1212 = vmatprep.mubr.f32.mxu0 0.0
      %1213 = vmatmul.mubr.f32.gmra.mxu0 %v1078
      %v1214 = vpop.f32.mrf.mxu0
      %v1215 = vadd.f32 0.0, %v1214
      %v1216 = vpop.f32.mrf.mxu0
      %1217 = vmatprep.mubr.f32.mxu0 0.0
      %1218 = vmatmul.mubr.f32.gmra.mxu0 %v1081
      %v1219 = vpop.f32.mrf.mxu0
      %v1220 = vadd.f32 0.0, %v1219
      %v1221 = vpop.f32.mrf.mxu0
      %1222 = vmatprep.mubr.f32.mxu0 0.0
      %1223 = vmatmul.mubr.f32.gmra.mxu0 %v1084
      %v1224 = vpop.f32.mrf.mxu0
      %v1225 = vadd.f32 0.0, %v1224
      %v1226 = vpop.f32.mrf.mxu0
      %1227 = vmatprep.mubr.f32.mxu0 0.0
      %1228 = vmatmul.mubr.f32.gmra.mxu0 %v1087
      %v1229 = vpop.f32.mrf.mxu0
      %v1230 = vadd.f32 0.0, %v1229
      %v1231 = vpop.f32.mrf.mxu0
      %1232 = vmatprep.mubr.f32.mxu0 0.0
      %1233 = vmatmul.mubr.f32.gmra.mxu0 %v1090
      %v1234 = vpop.f32.mrf.mxu0
      %v1235 = vadd.f32 0.0, %v1234
      %v1236 = vpop.f32.mrf.mxu0
      %1237 = vmatprep.mubr.f32.mxu0 0.0
      %1238 = vmatmul.mubr.f32.gmra.mxu0 %v1093
      %v1239 = vpop.f32.mrf.mxu0
      %v1240 = vadd.f32 0.0, %v1239
      %v1241 = vpop.f32.mrf.mxu0
      %1242 = vdwg.mxu0
      %v1243 = vadd.f32 %v1010, %v1165
      %v1244 = vadd.f32 %v1011, %v1170
      %v1245 = vadd.f32 %v1012, %v1175
      %v1246 = vadd.f32 %v1013, %v1180
      %v1247 = vadd.f32 %v1014, %v1185
      %v1248 = vadd.f32 %v1015, %v1190
      %v1249 = vadd.f32 %v1016, %v1195
      %v1250 = vadd.f32 %v1017, %v1200
      %v1251 = vadd.f32 %v1018, %v1205
      %v1252 = vadd.f32 %v1019, %v1210
      %v1253 = vadd.f32 %v1020, %v1215
      %v1254 = vadd.f32 %v1021, %v1220
      %v1255 = vadd.f32 %v1022, %v1225
      %v1256 = vadd.f32 %v1023, %v1230
      %v1257 = vadd.f32 %v1024, %v1235
      %v1258 = vadd.f32 %v1025, %v1240
      %v1259 = vld [vmem:[%s1028 + $0x1] sm:$0xff]
      %v1260 = vld [vmem:[%s1028 + $0x9] sm:$0xff]
      %v1261 = vld [vmem:[%s1028 + $0x19] sm:$0xff]
      %v1262 = vld [vmem:[%s1028 + $0x21] sm:$0xff]
      %v1263 = vld [vmem:[%s1028 + $0x31] sm:$0xff]
      %v1264 = vld [vmem:[%s1028 + $0x39] sm:$0xff]
      %v1265 = vld [vmem:[%s1028 + $0x49] sm:$0xff]
      %v1266 = vld [vmem:[%s1028 + $0x51] sm:$0xff]
      %v1267 = vld [vmem:[%s1028 + $0x61] sm:$0xff]
      %v1268 = vld [vmem:[%s1028 + $0x69] sm:$0xff]
      %v1269 = vld [vmem:[%s1028 + $0x79] sm:$0xff]
      %v1270 = vld [vmem:[%s1028 + $0x81] sm:$0xff]
      %v1271 = vld [vmem:[%s1028 + $0x91] sm:$0xff]
      %v1272 = vld [vmem:[%s1028 + $0x99] sm:$0xff]
      %v1273 = vld [vmem:[%s1028 + $0xa9] sm:$0xff]
      %v1274 = vld [vmem:[%s1028 + $0xb1] sm:$0xff]
      %s1275 = scalar_lea.vmem %s1, 16
      %v1276 = vld [vmem:[%s1275] sm:$0xf]
      %v1278 = vsel %vm284, %v1259, 0
      %v1281 = vsel %vm284, %v1260, 0
      %v1284 = vsel %vm284, %v1261, 0
      %v1287 = vsel %vm284, %v1262, 0
      %v1290 = vsel %vm284, %v1263, 0
      %v1293 = vsel %vm284, %v1264, 0
      %v1296 = vsel %vm284, %v1265, 0
      %v1299 = vsel %vm284, %v1266, 0
      %v1302 = vsel %vm284, %v1267, 0
      %v1305 = vsel %vm284, %v1268, 0
      %v1308 = vsel %vm284, %v1269, 0
      %v1311 = vsel %vm284, %v1270, 0
      %v1314 = vsel %vm284, %v1271, 0
      %v1317 = vsel %vm284, %v1272, 0
      %v1320 = vsel %vm284, %v1273, 0
      %v1323 = vsel %vm284, %v1274, 0
      %v1326 = vsel %vm451, %v1276, 0
      %1328 = vmatprep.subr.mxu0 0.0
      %1329 = vmatpush1.msra.mxu0 0.0
      %1330 = vmatprep.subr.mxu0 0.0
      %1331 = vmatpush1.msra.mxu0 0.0
      %1332 = vmatprep.subr.mxu0 0.0
      %1333 = vmatpush1.msra.mxu0 0.0
      %1334 = vmatprep.subr.mxu0 0.0
      %1335 = vmatpush1.msra.mxu0 0.0
      %1336 = vmatprep.subr.mxu0 0.0
      %1337 = vmatpush1.msra.mxu0 0.0
      %1338 = vmatprep.subr.mxu0 0.0
      %1339 = vmatpush1.msra.mxu0 0.0
      %1340 = vmatprep.subr.mxu0 0.0
      %1341 = vmatpush1.msra.mxu0 0.0
      %1342 = vmatprep.subr.mxu0 0.0
      %1343 = vmatpush1.msra.mxu0 0.0
      %1344 = vmatprep.subr.mxu0 0.0
      %1345 = vmatpush1.msra.mxu0 0.0
      %1346 = vmatprep.subr.mxu0 0.0
      %1347 = vmatpush1.msra.mxu0 0.0
      %1348 = vmatprep.subr.mxu0 0.0
      %1349 = vmatpush1.msra.mxu0 0.0
      %1350 = vmatprep.subr.mxu0 0.0
      %1351 = vmatpush1.msra.mxu0 0.0
      %1352 = vmatprep.subr.mxu0 0.0
      %1353 = vmatpush1.msra.mxu0 0.0
      %1354 = vmatprep.subr.mxu0 0.0
      %1355 = vmatpush1.msra.mxu0 0.0
      %1356 = vmatprep.subr.mxu0 0.0
      %1357 = vmatpush1.msra.mxu0 0.0
      %1358 = vmatprep.subr.mxu0 0.0
      %1359 = vmatpush1.msra.mxu0 %v1326
      %1360 = vmatprep.subr.mxu0 0.0
      %1361 = vmatpush2.msra.mxu0 0.0
      %1362 = vmatprep.subr.mxu0 0.0
      %1363 = vmatpush2.msra.mxu0 0.0
      %1364 = vmatprep.subr.mxu0 0.0
      %1365 = vmatpush2.msra.mxu0 0.0
      %1366 = vmatprep.subr.mxu0 0.0
      %1367 = vmatpush2.msra.mxu0 0.0
      %1368 = vmatprep.subr.mxu0 0.0
      %1369 = vmatpush2.msra.mxu0 0.0
      %1370 = vmatprep.subr.mxu0 0.0
      %1371 = vmatpush2.msra.mxu0 0.0
      %1372 = vmatprep.subr.mxu0 0.0
      %1373 = vmatpush2.msra.mxu0 0.0
      %1374 = vmatprep.subr.mxu0 0.0
      %1375 = vmatpush2.msra.mxu0 0.0
      %1376 = vmatprep.subr.mxu0 0.0
      %1377 = vmatpush2.msra.mxu0 0.0
      %1378 = vmatprep.subr.mxu0 0.0
      %1379 = vmatpush2.msra.mxu0 0.0
      %1380 = vmatprep.subr.mxu0 0.0
      %1381 = vmatpush2.msra.mxu0 0.0
      %1382 = vmatprep.subr.mxu0 0.0
      %1383 = vmatpush2.msra.mxu0 0.0
      %1384 = vmatprep.subr.mxu0 0.0
      %1385 = vmatpush2.msra.mxu0 0.0
      %1386 = vmatprep.subr.mxu0 0.0
      %1387 = vmatpush2.msra.mxu0 0.0
      %1388 = vmatprep.subr.mxu0 0.0
      %1389 = vmatpush2.msra.mxu0 0.0
      %1390 = vmatprep.subr.mxu0 0.0
      %1391 = vmatpush2.msra.mxu0 0.0
      %1392 = vmatprep.mubr.f32.mxu0 0.0
      %1393 = vmatmul.mubr.f32.gmra.mxu0 %v1278
      %v1394 = vpop.f32.mrf.mxu0
      %v1395 = vadd.f32 0.0, %v1394
      %v1396 = vpop.f32.mrf.mxu0
      %1397 = vmatprep.mubr.f32.mxu0 0.0
      %1398 = vmatmul.mubr.f32.gmra.mxu0 %v1281
      %v1399 = vpop.f32.mrf.mxu0
      %v1400 = vadd.f32 0.0, %v1399
      %v1401 = vpop.f32.mrf.mxu0
      %1402 = vmatprep.mubr.f32.mxu0 0.0
      %1403 = vmatmul.mubr.f32.gmra.mxu0 %v1284
      %v1404 = vpop.f32.mrf.mxu0
      %v1405 = vadd.f32 0.0, %v1404
      %v1406 = vpop.f32.mrf.mxu0
      %1407 = vmatprep.mubr.f32.mxu0 0.0
      %1408 = vmatmul.mubr.f32.gmra.mxu0 %v1287
      %v1409 = vpop.f32.mrf.mxu0
      %v1410 = vadd.f32 0.0, %v1409
      %v1411 = vpop.f32.mrf.mxu0
      %1412 = vmatprep.mubr.f32.mxu0 0.0
      %1413 = vmatmul.mubr.f32.gmra.mxu0 %v1290
      %v1414 = vpop.f32.mrf.mxu0
      %v1415 = vadd.f32 0.0, %v1414
      %v1416 = vpop.f32.mrf.mxu0
      %1417 = vmatprep.mubr.f32.mxu0 0.0
      %1418 = vmatmul.mubr.f32.gmra.mxu0 %v1293
      %v1419 = vpop.f32.mrf.mxu0
      %v1420 = vadd.f32 0.0, %v1419
      %v1421 = vpop.f32.mrf.mxu0
      %1422 = vmatprep.mubr.f32.mxu0 0.0
      %1423 = vmatmul.mubr.f32.gmra.mxu0 %v1296
      %v1424 = vpop.f32.mrf.mxu0
      %v1425 = vadd.f32 0.0, %v1424
      %v1426 = vpop.f32.mrf.mxu0
      %1427 = vmatprep.mubr.f32.mxu0 0.0
      %1428 = vmatmul.mubr.f32.gmra.mxu0 %v1299
      %v1429 = vpop.f32.mrf.mxu0
      %v1430 = vadd.f32 0.0, %v1429
      %v1431 = vpop.f32.mrf.mxu0
      %1432 = vmatprep.mubr.f32.mxu0 0.0
      %1433 = vmatmul.mubr.f32.gmra.mxu0 %v1302
      %v1434 = vpop.f32.mrf.mxu0
      %v1435 = vadd.f32 0.0, %v1434
      %v1436 = vpop.f32.mrf.mxu0
      %1437 = vmatprep.mubr.f32.mxu0 0.0
      %1438 = vmatmul.mubr.f32.gmra.mxu0 %v1305
      %v1439 = vpop.f32.mrf.mxu0
      %v1440 = vadd.f32 0.0, %v1439
      %v1441 = vpop.f32.mrf.mxu0
      %1442 = vmatprep.mubr.f32.mxu0 0.0
      %1443 = vmatmul.mubr.f32.gmra.mxu0 %v1308
      %v1444 = vpop.f32.mrf.mxu0
      %v1445 = vadd.f32 0.0, %v1444
      %v1446 = vpop.f32.mrf.mxu0
      %1447 = vmatprep.mubr.f32.mxu0 0.0
      %1448 = vmatmul.mubr.f32.gmra.mxu0 %v1311
      %v1449 = vpop.f32.mrf.mxu0
      %v1450 = vadd.f32 0.0, %v1449
      %v1451 = vpop.f32.mrf.mxu0
      %1452 = vmatprep.mubr.f32.mxu0 0.0
      %1453 = vmatmul.mubr.f32.gmra.mxu0 %v1314
      %v1454 = vpop.f32.mrf.mxu0
      %v1455 = vadd.f32 0.0, %v1454
      %v1456 = vpop.f32.mrf.mxu0
      %1457 = vmatprep.mubr.f32.mxu0 0.0
      %1458 = vmatmul.mubr.f32.gmra.mxu0 %v1317
      %v1459 = vpop.f32.mrf.mxu0
      %v1460 = vadd.f32 0.0, %v1459
      %v1461 = vpop.f32.mrf.mxu0
      %1462 = vmatprep.mubr.f32.mxu0 0.0
      %1463 = vmatmul.mubr.f32.gmra.mxu0 %v1320
      %v1464 = vpop.f32.mrf.mxu0
      %v1465 = vadd.f32 0.0, %v1464
      %v1466 = vpop.f32.mrf.mxu0
      %1467 = vmatprep.mubr.f32.mxu0 0.0
      %1468 = vmatmul.mubr.f32.gmra.mxu0 %v1323
      %v1469 = vpop.f32.mrf.mxu0
      %v1470 = vadd.f32 0.0, %v1469
      %v1471 = vpop.f32.mrf.mxu0
      %1472 = vdwg.mxu0
      %v1473 = vadd.f32 %v1243, %v1395
      %v1474 = vadd.f32 %v1244, %v1400
      %v1475 = vadd.f32 %v1245, %v1405
      %v1476 = vadd.f32 %v1246, %v1410
      %v1477 = vadd.f32 %v1247, %v1415
      %v1478 = vadd.f32 %v1248, %v1420
      %v1479 = vadd.f32 %v1249, %v1425
      %v1480 = vadd.f32 %v1250, %v1430
      %v1481 = vadd.f32 %v1251, %v1435
      %v1482 = vadd.f32 %v1252, %v1440
      %v1483 = vadd.f32 %v1253, %v1445
      %v1484 = vadd.f32 %v1254, %v1450
      %v1485 = vadd.f32 %v1255, %v1455
      %v1486 = vadd.f32 %v1256, %v1460
      %v1487 = vadd.f32 %v1257, %v1465
      %v1488 = vadd.f32 %v1258, %v1470
      %v1489 = vld [vmem:[%s1028 + $0x2] sm:$0xff]
      %v1490 = vld [vmem:[%s1028 + $0xa] sm:$0xff]
      %v1491 = vld [vmem:[%s1028 + $0x1a] sm:$0xff]
      %v1492 = vld [vmem:[%s1028 + $0x22] sm:$0xff]
      %v1493 = vld [vmem:[%s1028 + $0x32] sm:$0xff]
      %v1494 = vld [vmem:[%s1028 + $0x3a] sm:$0xff]
      %v1495 = vld [vmem:[%s1028 + $0x4a] sm:$0xff]
      %v1496 = vld [vmem:[%s1028 + $0x52] sm:$0xff]
      %v1497 = vld [vmem:[%s1028 + $0x62] sm:$0xff]
      %v1498 = vld [vmem:[%s1028 + $0x6a] sm:$0xff]
      %v1499 = vld [vmem:[%s1028 + $0x7a] sm:$0xff]
      %v1500 = vld [vmem:[%s1028 + $0x82] sm:$0xff]
      %v1501 = vld [vmem:[%s1028 + $0x92] sm:$0xff]
      %v1502 = vld [vmem:[%s1028 + $0x9a] sm:$0xff]
      %v1503 = vld [vmem:[%s1028 + $0xaa] sm:$0xff]
      %v1504 = vld [vmem:[%s1028 + $0xb2] sm:$0xff]
      %s1505 = scalar_lea.vmem %s1, 20
      %v1506 = vld [vmem:[%s1505] sm:$0xf]
      %v1508 = vsel %vm284, %v1489, 0
      %v1511 = vsel %vm284, %v1490, 0
      %v1514 = vsel %vm284, %v1491, 0
      %v1517 = vsel %vm284, %v1492, 0
      %v1520 = vsel %vm284, %v1493, 0
      %v1523 = vsel %vm284, %v1494, 0
      %v1526 = vsel %vm284, %v1495, 0
      %v1529 = vsel %vm284, %v1496, 0
      %v1532 = vsel %vm284, %v1497, 0
      %v1535 = vsel %vm284, %v1498, 0
      %v1538 = vsel %vm284, %v1499, 0
      %v1541 = vsel %vm284, %v1500, 0
      %v1544 = vsel %vm284, %v1501, 0
      %v1547 = vsel %vm284, %v1502, 0
      %v1550 = vsel %vm284, %v1503, 0
      %v1553 = vsel %vm284, %v1504, 0
      %v1556 = vsel %vm451, %v1506, 0
      %1558 = vmatprep.subr.mxu0 0.0
      %1559 = vmatpush1.msra.mxu0 0.0
      %1560 = vmatprep.subr.mxu0 0.0
      %1561 = vmatpush1.msra.mxu0 0.0
      %1562 = vmatprep.subr.mxu0 0.0
      %1563 = vmatpush1.msra.mxu0 0.0
      %1564 = vmatprep.subr.mxu0 0.0
      %1565 = vmatpush1.msra.mxu0 0.0
      %1566 = vmatprep.subr.mxu0 0.0
      %1567 = vmatpush1.msra.mxu0 0.0
      %1568 = vmatprep.subr.mxu0 0.0
      %1569 = vmatpush1.msra.mxu0 0.0
      %1570 = vmatprep.subr.mxu0 0.0
      %1571 = vmatpush1.msra.mxu0 0.0
      %1572 = vmatprep.subr.mxu0 0.0
      %1573 = vmatpush1.msra.mxu0 0.0
      %1574 = vmatprep.subr.mxu0 0.0
      %1575 = vmatpush1.msra.mxu0 0.0
      %1576 = vmatprep.subr.mxu0 0.0
      %1577 = vmatpush1.msra.mxu0 0.0
      %1578 = vmatprep.subr.mxu0 0.0
      %1579 = vmatpush1.msra.mxu0 0.0
      %1580 = vmatprep.subr.mxu0 0.0
      %1581 = vmatpush1.msra.mxu0 0.0
      %1582 = vmatprep.subr.mxu0 0.0
      %1583 = vmatpush1.msra.mxu0 0.0
      %1584 = vmatprep.subr.mxu0 0.0
      %1585 = vmatpush1.msra.mxu0 0.0
      %1586 = vmatprep.subr.mxu0 0.0
      %1587 = vmatpush1.msra.mxu0 0.0
      %1588 = vmatprep.subr.mxu0 0.0
      %1589 = vmatpush1.msra.mxu0 %v1556
      %1590 = vmatprep.subr.mxu0 0.0
      %1591 = vmatpush2.msra.mxu0 0.0
      %1592 = vmatprep.subr.mxu0 0.0
      %1593 = vmatpush2.msra.mxu0 0.0
      %1594 = vmatprep.subr.mxu0 0.0
      %1595 = vmatpush2.msra.mxu0 0.0
      %1596 = vmatprep.subr.mxu0 0.0
      %1597 = vmatpush2.msra.mxu0 0.0
      %1598 = vmatprep.subr.mxu0 0.0
      %1599 = vmatpush2.msra.mxu0 0.0
      %1600 = vmatprep.subr.mxu0 0.0
      %1601 = vmatpush2.msra.mxu0 0.0
      %1602 = vmatprep.subr.mxu0 0.0
      %1603 = vmatpush2.msra.mxu0 0.0
      %1604 = vmatprep.subr.mxu0 0.0
      %1605 = vmatpush2.msra.mxu0 0.0
      %1606 = vmatprep.subr.mxu0 0.0
      %1607 = vmatpush2.msra.mxu0 0.0
      %1608 = vmatprep.subr.mxu0 0.0
      %1609 = vmatpush2.msra.mxu0 0.0
      %1610 = vmatprep.subr.mxu0 0.0
      %1611 = vmatpush2.msra.mxu0 0.0
      %1612 = vmatprep.subr.mxu0 0.0
      %1613 = vmatpush2.msra.mxu0 0.0
      %1614 = vmatprep.subr.mxu0 0.0
      %1615 = vmatpush2.msra.mxu0 0.0
      %1616 = vmatprep.subr.mxu0 0.0
      %1617 = vmatpush2.msra.mxu0 0.0
      %1618 = vmatprep.subr.mxu0 0.0
      %1619 = vmatpush2.msra.mxu0 0.0
      %1620 = vmatprep.subr.mxu0 0.0
      %1621 = vmatpush2.msra.mxu0 0.0
      %1622 = vmatprep.mubr.f32.mxu0 0.0
      %1623 = vmatmul.mubr.f32.gmra.mxu0 %v1508
      %v1624 = vpop.f32.mrf.mxu0
      %v1625 = vadd.f32 0.0, %v1624
      %v1626 = vpop.f32.mrf.mxu0
      %1627 = vmatprep.mubr.f32.mxu0 0.0
      %1628 = vmatmul.mubr.f32.gmra.mxu0 %v1511
      %v1629 = vpop.f32.mrf.mxu0
      %v1630 = vadd.f32 0.0, %v1629
      %v1631 = vpop.f32.mrf.mxu0
      %1632 = vmatprep.mubr.f32.mxu0 0.0
      %1633 = vmatmul.mubr.f32.gmra.mxu0 %v1514
      %v1634 = vpop.f32.mrf.mxu0
      %v1635 = vadd.f32 0.0, %v1634
      %v1636 = vpop.f32.mrf.mxu0
      %1637 = vmatprep.mubr.f32.mxu0 0.0
      %1638 = vmatmul.mubr.f32.gmra.mxu0 %v1517
      %v1639 = vpop.f32.mrf.mxu0
      %v1640 = vadd.f32 0.0, %v1639
      %v1641 = vpop.f32.mrf.mxu0
      %1642 = vmatprep.mubr.f32.mxu0 0.0
      %1643 = vmatmul.mubr.f32.gmra.mxu0 %v1520
      %v1644 = vpop.f32.mrf.mxu0
      %v1645 = vadd.f32 0.0, %v1644
      %v1646 = vpop.f32.mrf.mxu0
      %1647 = vmatprep.mubr.f32.mxu0 0.0
      %1648 = vmatmul.mubr.f32.gmra.mxu0 %v1523
      %v1649 = vpop.f32.mrf.mxu0
      %v1650 = vadd.f32 0.0, %v1649
      %v1651 = vpop.f32.mrf.mxu0
      %1652 = vmatprep.mubr.f32.mxu0 0.0
      %1653 = vmatmul.mubr.f32.gmra.mxu0 %v1526
      %v1654 = vpop.f32.mrf.mxu0
      %v1655 = vadd.f32 0.0, %v1654
      %v1656 = vpop.f32.mrf.mxu0
      %1657 = vmatprep.mubr.f32.mxu0 0.0
      %1658 = vmatmul.mubr.f32.gmra.mxu0 %v1529
      %v1659 = vpop.f32.mrf.mxu0
      %v1660 = vadd.f32 0.0, %v1659
      %v1661 = vpop.f32.mrf.mxu0
      %1662 = vmatprep.mubr.f32.mxu0 0.0
      %1663 = vmatmul.mubr.f32.gmra.mxu0 %v1532
      %v1664 = vpop.f32.mrf.mxu0
      %v1665 = vadd.f32 0.0, %v1664
      %v1666 = vpop.f32.mrf.mxu0
      %1667 = vmatprep.mubr.f32.mxu0 0.0
      %1668 = vmatmul.mubr.f32.gmra.mxu0 %v1535
      %v1669 = vpop.f32.mrf.mxu0
      %v1670 = vadd.f32 0.0, %v1669
      %v1671 = vpop.f32.mrf.mxu0
      %1672 = vmatprep.mubr.f32.mxu0 0.0
      %1673 = vmatmul.mubr.f32.gmra.mxu0 %v1538
      %v1674 = vpop.f32.mrf.mxu0
      %v1675 = vadd.f32 0.0, %v1674
      %v1676 = vpop.f32.mrf.mxu0
      %1677 = vmatprep.mubr.f32.mxu0 0.0
      %1678 = vmatmul.mubr.f32.gmra.mxu0 %v1541
      %v1679 = vpop.f32.mrf.mxu0
      %v1680 = vadd.f32 0.0, %v1679
      %v1681 = vpop.f32.mrf.mxu0
      %1682 = vmatprep.mubr.f32.mxu0 0.0
      %1683 = vmatmul.mubr.f32.gmra.mxu0 %v1544
      %v1684 = vpop.f32.mrf.mxu0
      %v1685 = vadd.f32 0.0, %v1684
      %v1686 = vpop.f32.mrf.mxu0
      %1687 = vmatprep.mubr.f32.mxu0 0.0
      %1688 = vmatmul.mubr.f32.gmra.mxu0 %v1547
      %v1689 = vpop.f32.mrf.mxu0
      %v1690 = vadd.f32 0.0, %v1689
      %v1691 = vpop.f32.mrf.mxu0
      %1692 = vmatprep.mubr.f32.mxu0 0.0
      %1693 = vmatmul.mubr.f32.gmra.mxu0 %v1550
      %v1694 = vpop.f32.mrf.mxu0
      %v1695 = vadd.f32 0.0, %v1694
      %v1696 = vpop.f32.mrf.mxu0
      %1697 = vmatprep.mubr.f32.mxu0 0.0
      %1698 = vmatmul.mubr.f32.gmra.mxu0 %v1553
      %v1699 = vpop.f32.mrf.mxu0
      %v1700 = vadd.f32 0.0, %v1699
      %v1701 = vpop.f32.mrf.mxu0
      %1702 = vdwg.mxu0
      %v1703 = vadd.f32 %v1473, %v1625
      %v1704 = vadd.f32 %v1474, %v1630
      %v1705 = vadd.f32 %v1475, %v1635
      %v1706 = vadd.f32 %v1476, %v1640
      %v1707 = vadd.f32 %v1477, %v1645
      %v1708 = vadd.f32 %v1478, %v1650
      %v1709 = vadd.f32 %v1479, %v1655
      %v1710 = vadd.f32 %v1480, %v1660
      %v1711 = vadd.f32 %v1481, %v1665
      %v1712 = vadd.f32 %v1482, %v1670
      %v1713 = vadd.f32 %v1483, %v1675
      %v1714 = vadd.f32 %v1484, %v1680
      %v1715 = vadd.f32 %v1485, %v1685
      %v1716 = vadd.f32 %v1486, %v1690
      %v1717 = vadd.f32 %v1487, %v1695
      %v1718 = vadd.f32 %v1488, %v1700
      %s1719 = sadd.s32 %s250, 2
      %s1720 = smul.u32 %s1719, 24
      %s1721 = scalar_lea.vmem [#allocation2], %s1720
      %v1722 = vld [vmem:[%s1721] sm:$0xff]
      %v1723 = vld [vmem:[%s1721 + $0x8] sm:$0xff]
      %v1724 = vld [vmem:[%s1721 + $0x18] sm:$0xff]
      %v1725 = vld [vmem:[%s1721 + $0x20] sm:$0xff]
      %v1726 = vld [vmem:[%s1721 + $0x30] sm:$0xff]
      %v1727 = vld [vmem:[%s1721 + $0x38] sm:$0xff]
      %v1728 = vld [vmem:[%s1721 + $0x48] sm:$0xff]
      %v1729 = vld [vmem:[%s1721 + $0x50] sm:$0xff]
      %v1730 = vld [vmem:[%s1721 + $0x60] sm:$0xff]
      %v1731 = vld [vmem:[%s1721 + $0x68] sm:$0xff]
      %v1732 = vld [vmem:[%s1721 + $0x78] sm:$0xff]
      %v1733 = vld [vmem:[%s1721 + $0x80] sm:$0xff]
      %v1734 = vld [vmem:[%s1721 + $0x90] sm:$0xff]
      %v1735 = vld [vmem:[%s1721 + $0x98] sm:$0xff]
      %v1736 = vld [vmem:[%s1721 + $0xa8] sm:$0xff]
      %v1737 = vld [vmem:[%s1721 + $0xb0] sm:$0xff]
      %s1738 = scalar_lea.vmem %s1, 24
      %v1739 = vld [vmem:[%s1738] sm:$0xf]
      %v1741 = vsel %vm284, %v1722, 0
      %v1744 = vsel %vm284, %v1723, 0
      %v1747 = vsel %vm284, %v1724, 0
      %v1750 = vsel %vm284, %v1725, 0
      %v1753 = vsel %vm284, %v1726, 0
      %v1756 = vsel %vm284, %v1727, 0
      %v1759 = vsel %vm284, %v1728, 0
      %v1762 = vsel %vm284, %v1729, 0
      %v1765 = vsel %vm284, %v1730, 0
      %v1768 = vsel %vm284, %v1731, 0
      %v1771 = vsel %vm284, %v1732, 0
      %v1774 = vsel %vm284, %v1733, 0
      %v1777 = vsel %vm284, %v1734, 0
      %v1780 = vsel %vm284, %v1735, 0
      %v1783 = vsel %vm284, %v1736, 0
      %v1786 = vsel %vm284, %v1737, 0
      %v1789 = vsel %vm451, %v1739, 0
      %1791 = vmatprep.subr.mxu0 0.0
      %1792 = vmatpush1.msra.mxu0 0.0
      %1793 = vmatprep.subr.mxu0 0.0
      %1794 = vmatpush1.msra.mxu0 0.0
      %1795 = vmatprep.subr.mxu0 0.0
      %1796 = vmatpush1.msra.mxu0 0.0
      %1797 = vmatprep.subr.mxu0 0.0
      %1798 = vmatpush1.msra.mxu0 0.0
      %1799 = vmatprep.subr.mxu0 0.0
      %1800 = vmatpush1.msra.mxu0 0.0
      %1801 = vmatprep.subr.mxu0 0.0
      %1802 = vmatpush1.msra.mxu0 0.0
      %1803 = vmatprep.subr.mxu0 0.0
      %1804 = vmatpush1.msra.mxu0 0.0
      %1805 = vmatprep.subr.mxu0 0.0
      %1806 = vmatpush1.msra.mxu0 0.0
      %1807 = vmatprep.subr.mxu0 0.0
      %1808 = vmatpush1.msra.mxu0 0.0
      %1809 = vmatprep.subr.mxu0 0.0
      %1810 = vmatpush1.msra.mxu0 0.0
      %1811 = vmatprep.subr.mxu0 0.0
      %1812 = vmatpush1.msra.mxu0 0.0
      %1813 = vmatprep.subr.mxu0 0.0
      %1814 = vmatpush1.msra.mxu0 0.0
      %1815 = vmatprep.subr.mxu0 0.0
      %1816 = vmatpush1.msra.mxu0 0.0
      %1817 = vmatprep.subr.mxu0 0.0
      %1818 = vmatpush1.msra.mxu0 0.0
      %1819 = vmatprep.subr.mxu0 0.0
      %1820 = vmatpush1.msra.mxu0 0.0
      %1821 = vmatprep.subr.mxu0 0.0
      %1822 = vmatpush1.msra.mxu0 %v1789
      %1823 = vmatprep.subr.mxu0 0.0
      %1824 = vmatpush2.msra.mxu0 0.0
      %1825 = vmatprep.subr.mxu0 0.0
      %1826 = vmatpush2.msra.mxu0 0.0
      %1827 = vmatprep.subr.mxu0 0.0
      %1828 = vmatpush2.msra.mxu0 0.0
      %1829 = vmatprep.subr.mxu0 0.0
      %1830 = vmatpush2.msra.mxu0 0.0
      %1831 = vmatprep.subr.mxu0 0.0
      %1832 = vmatpush2.msra.mxu0 0.0
      %1833 = vmatprep.subr.mxu0 0.0
      %1834 = vmatpush2.msra.mxu0 0.0
      %1835 = vmatprep.subr.mxu0 0.0
      %1836 = vmatpush2.msra.mxu0 0.0
      %1837 = vmatprep.subr.mxu0 0.0
      %1838 = vmatpush2.msra.mxu0 0.0
      %1839 = vmatprep.subr.mxu0 0.0
      %1840 = vmatpush2.msra.mxu0 0.0
      %1841 = vmatprep.subr.mxu0 0.0
      %1842 = vmatpush2.msra.mxu0 0.0
      %1843 = vmatprep.subr.mxu0 0.0
      %1844 = vmatpush2.msra.mxu0 0.0
      %1845 = vmatprep.subr.mxu0 0.0
      %1846 = vmatpush2.msra.mxu0 0.0
      %1847 = vmatprep.subr.mxu0 0.0
      %1848 = vmatpush2.msra.mxu0 0.0
      %1849 = vmatprep.subr.mxu0 0.0
      %1850 = vmatpush2.msra.mxu0 0.0
      %1851 = vmatprep.subr.mxu0 0.0
      %1852 = vmatpush2.msra.mxu0 0.0
      %1853 = vmatprep.subr.mxu0 0.0
      %1854 = vmatpush2.msra.mxu0 0.0
      %1855 = vmatprep.mubr.f32.mxu0 0.0
      %1856 = vmatmul.mubr.f32.gmra.mxu0 %v1741
      %v1857 = vpop.f32.mrf.mxu0
      %v1858 = vadd.f32 0.0, %v1857
      %v1859 = vpop.f32.mrf.mxu0
      %1860 = vmatprep.mubr.f32.mxu0 0.0
      %1861 = vmatmul.mubr.f32.gmra.mxu0 %v1744
      %v1862 = vpop.f32.mrf.mxu0
      %v1863 = vadd.f32 0.0, %v1862
      %v1864 = vpop.f32.mrf.mxu0
      %1865 = vmatprep.mubr.f32.mxu0 0.0
      %1866 = vmatmul.mubr.f32.gmra.mxu0 %v1747
      %v1867 = vpop.f32.mrf.mxu0
      %v1868 = vadd.f32 0.0, %v1867
      %v1869 = vpop.f32.mrf.mxu0
      %1870 = vmatprep.mubr.f32.mxu0 0.0
      %1871 = vmatmul.mubr.f32.gmra.mxu0 %v1750
      %v1872 = vpop.f32.mrf.mxu0
      %v1873 = vadd.f32 0.0, %v1872
      %v1874 = vpop.f32.mrf.mxu0
      %1875 = vmatprep.mubr.f32.mxu0 0.0
      %1876 = vmatmul.mubr.f32.gmra.mxu0 %v1753
      %v1877 = vpop.f32.mrf.mxu0
      %v1878 = vadd.f32 0.0, %v1877
      %v1879 = vpop.f32.mrf.mxu0
      %1880 = vmatprep.mubr.f32.mxu0 0.0
      %1881 = vmatmul.mubr.f32.gmra.mxu0 %v1756
      %v1882 = vpop.f32.mrf.mxu0
      %v1883 = vadd.f32 0.0, %v1882
      %v1884 = vpop.f32.mrf.mxu0
      %1885 = vmatprep.mubr.f32.mxu0 0.0
      %1886 = vmatmul.mubr.f32.gmra.mxu0 %v1759
      %v1887 = vpop.f32.mrf.mxu0
      %v1888 = vadd.f32 0.0, %v1887
      %v1889 = vpop.f32.mrf.mxu0
      %1890 = vmatprep.mubr.f32.mxu0 0.0
      %1891 = vmatmul.mubr.f32.gmra.mxu0 %v1762
      %v1892 = vpop.f32.mrf.mxu0
      %v1893 = vadd.f32 0.0, %v1892
      %v1894 = vpop.f32.mrf.mxu0
      %1895 = vmatprep.mubr.f32.mxu0 0.0
      %1896 = vmatmul.mubr.f32.gmra.mxu0 %v1765
      %v1897 = vpop.f32.mrf.mxu0
      %v1898 = vadd.f32 0.0, %v1897
      %v1899 = vpop.f32.mrf.mxu0
      %1900 = vmatprep.mubr.f32.mxu0 0.0
      %1901 = vmatmul.mubr.f32.gmra.mxu0 %v1768
      %v1902 = vpop.f32.mrf.mxu0
      %v1903 = vadd.f32 0.0, %v1902
      %v1904 = vpop.f32.mrf.mxu0
      %1905 = vmatprep.mubr.f32.mxu0 0.0
      %1906 = vmatmul.mubr.f32.gmra.mxu0 %v1771
      %v1907 = vpop.f32.mrf.mxu0
      %v1908 = vadd.f32 0.0, %v1907
      %v1909 = vpop.f32.mrf.mxu0
      %1910 = vmatprep.mubr.f32.mxu0 0.0
      %1911 = vmatmul.mubr.f32.gmra.mxu0 %v1774
      %v1912 = vpop.f32.mrf.mxu0
      %v1913 = vadd.f32 0.0, %v1912
      %v1914 = vpop.f32.mrf.mxu0
      %1915 = vmatprep.mubr.f32.mxu0 0.0
      %1916 = vmatmul.mubr.f32.gmra.mxu0 %v1777
      %v1917 = vpop.f32.mrf.mxu0
      %v1918 = vadd.f32 0.0, %v1917
      %v1919 = vpop.f32.mrf.mxu0
      %1920 = vmatprep.mubr.f32.mxu0 0.0
      %1921 = vmatmul.mubr.f32.gmra.mxu0 %v1780
      %v1922 = vpop.f32.mrf.mxu0
      %v1923 = vadd.f32 0.0, %v1922
      %v1924 = vpop.f32.mrf.mxu0
      %1925 = vmatprep.mubr.f32.mxu0 0.0
      %1926 = vmatmul.mubr.f32.gmra.mxu0 %v1783
      %v1927 = vpop.f32.mrf.mxu0
      %v1928 = vadd.f32 0.0, %v1927
      %v1929 = vpop.f32.mrf.mxu0
      %1930 = vmatprep.mubr.f32.mxu0 0.0
      %1931 = vmatmul.mubr.f32.gmra.mxu0 %v1786
      %v1932 = vpop.f32.mrf.mxu0
      %v1933 = vadd.f32 0.0, %v1932
      %v1934 = vpop.f32.mrf.mxu0
      %1935 = vdwg.mxu0
      %v1936 = vadd.f32 %v1703, %v1858
      %v1937 = vadd.f32 %v1704, %v1863
      %v1938 = vadd.f32 %v1705, %v1868
      %v1939 = vadd.f32 %v1706, %v1873
      %v1940 = vadd.f32 %v1707, %v1878
      %v1941 = vadd.f32 %v1708, %v1883
      %v1942 = vadd.f32 %v1709, %v1888
      %v1943 = vadd.f32 %v1710, %v1893
      %v1944 = vadd.f32 %v1711, %v1898
      %v1945 = vadd.f32 %v1712, %v1903
      %v1946 = vadd.f32 %v1713, %v1908
      %v1947 = vadd.f32 %v1714, %v1913
      %v1948 = vadd.f32 %v1715, %v1918
      %v1949 = vadd.f32 %v1716, %v1923
      %v1950 = vadd.f32 %v1717, %v1928
      %v1951 = vadd.f32 %v1718, %v1933
      %v1952 = vld [vmem:[%s1721 + $0x1] sm:$0xff]
      %v1953 = vld [vmem:[%s1721 + $0x9] sm:$0xff]
      %v1954 = vld [vmem:[%s1721 + $0x19] sm:$0xff]
      %v1955 = vld [vmem:[%s1721 + $0x21] sm:$0xff]
      %v1956 = vld [vmem:[%s1721 + $0x31] sm:$0xff]
      %v1957 = vld [vmem:[%s1721 + $0x39] sm:$0xff]
      %v1958 = vld [vmem:[%s1721 + $0x49] sm:$0xff]
      %v1959 = vld [vmem:[%s1721 + $0x51] sm:$0xff]
      %v1960 = vld [vmem:[%s1721 + $0x61] sm:$0xff]
      %v1961 = vld [vmem:[%s1721 + $0x69] sm:$0xff]
      %v1962 = vld [vmem:[%s1721 + $0x79] sm:$0xff]
      %v1963 = vld [vmem:[%s1721 + $0x81] sm:$0xff]
      %v1964 = vld [vmem:[%s1721 + $0x91] sm:$0xff]
      %v1965 = vld [vmem:[%s1721 + $0x99] sm:$0xff]
      %v1966 = vld [vmem:[%s1721 + $0xa9] sm:$0xff]
      %v1967 = vld [vmem:[%s1721 + $0xb1] sm:$0xff]
      %s1968 = scalar_lea.vmem %s1, 28
      %v1969 = vld [vmem:[%s1968] sm:$0xf]
      %v1971 = vsel %vm284, %v1952, 0
      %v1974 = vsel %vm284, %v1953, 0
      %v1977 = vsel %vm284, %v1954, 0
      %v1980 = vsel %vm284, %v1955, 0
      %v1983 = vsel %vm284, %v1956, 0
      %v1986 = vsel %vm284, %v1957, 0
      %v1989 = vsel %vm284, %v1958, 0
      %v1992 = vsel %vm284, %v1959, 0
      %v1995 = vsel %vm284, %v1960, 0
      %v1998 = vsel %vm284, %v1961, 0
      %v2001 = vsel %vm284, %v1962, 0
      %v2004 = vsel %vm284, %v1963, 0
      %v2007 = vsel %vm284, %v1964, 0
      %v2010 = vsel %vm284, %v1965, 0
      %v2013 = vsel %vm284, %v1966, 0
      %v2016 = vsel %vm284, %v1967, 0
      %v2019 = vsel %vm451, %v1969, 0
      %2021 = vmatprep.subr.mxu0 0.0
      %2022 = vmatpush1.msra.mxu0 0.0
      %2023 = vmatprep.subr.mxu0 0.0
      %2024 = vmatpush1.msra.mxu0 0.0
      %2025 = vmatprep.subr.mxu0 0.0
      %2026 = vmatpush1.msra.mxu0 0.0
      %2027 = vmatprep.subr.mxu0 0.0
      %2028 = vmatpush1.msra.mxu0 0.0
      %2029 = vmatprep.subr.mxu0 0.0
      %2030 = vmatpush1.msra.mxu0 0.0
      %2031 = vmatprep.subr.mxu0 0.0
      %2032 = vmatpush1.msra.mxu0 0.0
      %2033 = vmatprep.subr.mxu0 0.0
      %2034 = vmatpush1.msra.mxu0 0.0
      %2035 = vmatprep.subr.mxu0 0.0
      %2036 = vmatpush1.msra.mxu0 0.0
      %2037 = vmatprep.subr.mxu0 0.0
      %2038 = vmatpush1.msra.mxu0 0.0
      %2039 = vmatprep.subr.mxu0 0.0
      %2040 = vmatpush1.msra.mxu0 0.0
      %2041 = vmatprep.subr.mxu0 0.0
      %2042 = vmatpush1.msra.mxu0 0.0
      %2043 = vmatprep.subr.mxu0 0.0
      %2044 = vmatpush1.msra.mxu0 0.0
      %2045 = vmatprep.subr.mxu0 0.0
      %2046 = vmatpush1.msra.mxu0 0.0
      %2047 = vmatprep.subr.mxu0 0.0
      %2048 = vmatpush1.msra.mxu0 0.0
      %2049 = vmatprep.subr.mxu0 0.0
      %2050 = vmatpush1.msra.mxu0 0.0
      %2051 = vmatprep.subr.mxu0 0.0
      %2052 = vmatpush1.msra.mxu0 %v2019
      %2053 = vmatprep.subr.mxu0 0.0
      %2054 = vmatpush2.msra.mxu0 0.0
      %2055 = vmatprep.subr.mxu0 0.0
      %2056 = vmatpush2.msra.mxu0 0.0
      %2057 = vmatprep.subr.mxu0 0.0
      %2058 = vmatpush2.msra.mxu0 0.0
      %2059 = vmatprep.subr.mxu0 0.0
      %2060 = vmatpush2.msra.mxu0 0.0
      %2061 = vmatprep.subr.mxu0 0.0
      %2062 = vmatpush2.msra.mxu0 0.0
      %2063 = vmatprep.subr.mxu0 0.0
      %2064 = vmatpush2.msra.mxu0 0.0
      %2065 = vmatprep.subr.mxu0 0.0
      %2066 = vmatpush2.msra.mxu0 0.0
      %2067 = vmatprep.subr.mxu0 0.0
      %2068 = vmatpush2.msra.mxu0 0.0
      %2069 = vmatprep.subr.mxu0 0.0
      %2070 = vmatpush2.msra.mxu0 0.0
      %2071 = vmatprep.subr.mxu0 0.0
      %2072 = vmatpush2.msra.mxu0 0.0
      %2073 = vmatprep.subr.mxu0 0.0
      %2074 = vmatpush2.msra.mxu0 0.0
      %2075 = vmatprep.subr.mxu0 0.0
      %2076 = vmatpush2.msra.mxu0 0.0
      %2077 = vmatprep.subr.mxu0 0.0
      %2078 = vmatpush2.msra.mxu0 0.0
      %2079 = vmatprep.subr.mxu0 0.0
      %2080 = vmatpush2.msra.mxu0 0.0
      %2081 = vmatprep.subr.mxu0 0.0
      %2082 = vmatpush2.msra.mxu0 0.0
      %2083 = vmatprep.subr.mxu0 0.0
      %2084 = vmatpush2.msra.mxu0 0.0
      %2085 = vmatprep.mubr.f32.mxu0 0.0
      %2086 = vmatmul.mubr.f32.gmra.mxu0 %v1971
      %v2087 = vpop.f32.mrf.mxu0
      %v2088 = vadd.f32 0.0, %v2087
      %v2089 = vpop.f32.mrf.mxu0
      %2090 = vmatprep.mubr.f32.mxu0 0.0
      %2091 = vmatmul.mubr.f32.gmra.mxu0 %v1974
      %v2092 = vpop.f32.mrf.mxu0
      %v2093 = vadd.f32 0.0, %v2092
      %v2094 = vpop.f32.mrf.mxu0
      %2095 = vmatprep.mubr.f32.mxu0 0.0
      %2096 = vmatmul.mubr.f32.gmra.mxu0 %v1977
      %v2097 = vpop.f32.mrf.mxu0
      %v2098 = vadd.f32 0.0, %v2097
      %v2099 = vpop.f32.mrf.mxu0
      %2100 = vmatprep.mubr.f32.mxu0 0.0
      %2101 = vmatmul.mubr.f32.gmra.mxu0 %v1980
      %v2102 = vpop.f32.mrf.mxu0
      %v2103 = vadd.f32 0.0, %v2102
      %v2104 = vpop.f32.mrf.mxu0
      %2105 = vmatprep.mubr.f32.mxu0 0.0
      %2106 = vmatmul.mubr.f32.gmra.mxu0 %v1983
      %v2107 = vpop.f32.mrf.mxu0
      %v2108 = vadd.f32 0.0, %v2107
      %v2109 = vpop.f32.mrf.mxu0
      %2110 = vmatprep.mubr.f32.mxu0 0.0
      %2111 = vmatmul.mubr.f32.gmra.mxu0 %v1986
      %v2112 = vpop.f32.mrf.mxu0
      %v2113 = vadd.f32 0.0, %v2112
      %v2114 = vpop.f32.mrf.mxu0
      %2115 = vmatprep.mubr.f32.mxu0 0.0
      %2116 = vmatmul.mubr.f32.gmra.mxu0 %v1989
      %v2117 = vpop.f32.mrf.mxu0
      %v2118 = vadd.f32 0.0, %v2117
      %v2119 = vpop.f32.mrf.mxu0
      %2120 = vmatprep.mubr.f32.mxu0 0.0
      %2121 = vmatmul.mubr.f32.gmra.mxu0 %v1992
      %v2122 = vpop.f32.mrf.mxu0
      %v2123 = vadd.f32 0.0, %v2122
      %v2124 = vpop.f32.mrf.mxu0
      %2125 = vmatprep.mubr.f32.mxu0 0.0
      %2126 = vmatmul.mubr.f32.gmra.mxu0 %v1995
      %v2127 = vpop.f32.mrf.mxu0
      %v2128 = vadd.f32 0.0, %v2127
      %v2129 = vpop.f32.mrf.mxu0
      %2130 = vmatprep.mubr.f32.mxu0 0.0
      %2131 = vmatmul.mubr.f32.gmra.mxu0 %v1998
      %v2132 = vpop.f32.mrf.mxu0
      %v2133 = vadd.f32 0.0, %v2132
      %v2134 = vpop.f32.mrf.mxu0
      %2135 = vmatprep.mubr.f32.mxu0 0.0
      %2136 = vmatmul.mubr.f32.gmra.mxu0 %v2001
      %v2137 = vpop.f32.mrf.mxu0
      %v2138 = vadd.f32 0.0, %v2137
      %v2139 = vpop.f32.mrf.mxu0
      %2140 = vmatprep.mubr.f32.mxu0 0.0
      %2141 = vmatmul.mubr.f32.gmra.mxu0 %v2004
      %v2142 = vpop.f32.mrf.mxu0
      %v2143 = vadd.f32 0.0, %v2142
      %v2144 = vpop.f32.mrf.mxu0
      %2145 = vmatprep.mubr.f32.mxu0 0.0
      %2146 = vmatmul.mubr.f32.gmra.mxu0 %v2007
      %v2147 = vpop.f32.mrf.mxu0
      %v2148 = vadd.f32 0.0, %v2147
      %v2149 = vpop.f32.mrf.mxu0
      %2150 = vmatprep.mubr.f32.mxu0 0.0
      %2151 = vmatmul.mubr.f32.gmra.mxu0 %v2010
      %v2152 = vpop.f32.mrf.mxu0
      %v2153 = vadd.f32 0.0, %v2152
      %v2154 = vpop.f32.mrf.mxu0
      %2155 = vmatprep.mubr.f32.mxu0 0.0
      %2156 = vmatmul.mubr.f32.gmra.mxu0 %v2013
      %v2157 = vpop.f32.mrf.mxu0
      %v2158 = vadd.f32 0.0, %v2157
      %v2159 = vpop.f32.mrf.mxu0
      %2160 = vmatprep.mubr.f32.mxu0 0.0
      %2161 = vmatmul.mubr.f32.gmra.mxu0 %v2016
      %v2162 = vpop.f32.mrf.mxu0
      %v2163 = vadd.f32 0.0, %v2162
      %v2164 = vpop.f32.mrf.mxu0
      %2165 = vdwg.mxu0
      %v2166 = vadd.f32 %v1936, %v2088
      %v2167 = vadd.f32 %v1937, %v2093
      %v2168 = vadd.f32 %v1938, %v2098
      %v2169 = vadd.f32 %v1939, %v2103
      %v2170 = vadd.f32 %v1940, %v2108
      %v2171 = vadd.f32 %v1941, %v2113
      %v2172 = vadd.f32 %v1942, %v2118
      %v2173 = vadd.f32 %v1943, %v2123
      %v2174 = vadd.f32 %v1944, %v2128
      %v2175 = vadd.f32 %v1945, %v2133
      %v2176 = vadd.f32 %v1946, %v2138
      %v2177 = vadd.f32 %v1947, %v2143
      %v2178 = vadd.f32 %v1948, %v2148
      %v2179 = vadd.f32 %v1949, %v2153
      %v2180 = vadd.f32 %v1950, %v2158
      %v2181 = vadd.f32 %v1951, %v2163
      %v2182 = vld [vmem:[%s1721 + $0x2] sm:$0xff]
      %v2183 = vld [vmem:[%s1721 + $0xa] sm:$0xff]
      %v2184 = vld [vmem:[%s1721 + $0x1a] sm:$0xff]
      %v2185 = vld [vmem:[%s1721 + $0x22] sm:$0xff]
      %v2186 = vld [vmem:[%s1721 + $0x32] sm:$0xff]
      %v2187 = vld [vmem:[%s1721 + $0x3a] sm:$0xff]
      %v2188 = vld [vmem:[%s1721 + $0x4a] sm:$0xff]
      %v2189 = vld [vmem:[%s1721 + $0x52] sm:$0xff]
      %v2190 = vld [vmem:[%s1721 + $0x62] sm:$0xff]
      %v2191 = vld [vmem:[%s1721 + $0x6a] sm:$0xff]
      %v2192 = vld [vmem:[%s1721 + $0x7a] sm:$0xff]
      %v2193 = vld [vmem:[%s1721 + $0x82] sm:$0xff]
      %v2194 = vld [vmem:[%s1721 + $0x92] sm:$0xff]
      %v2195 = vld [vmem:[%s1721 + $0x9a] sm:$0xff]
      %v2196 = vld [vmem:[%s1721 + $0xaa] sm:$0xff]
      %v2197 = vld [vmem:[%s1721 + $0xb2] sm:$0xff]
      %s2198 = scalar_lea.vmem %s1, 32
      %v2199 = vld [vmem:[%s2198] sm:$0xf]
      %v2201 = vsel %vm284, %v2182, 0
      %v2204 = vsel %vm284, %v2183, 0
      %v2207 = vsel %vm284, %v2184, 0
      %v2210 = vsel %vm284, %v2185, 0
      %v2213 = vsel %vm284, %v2186, 0
      %v2216 = vsel %vm284, %v2187, 0
      %v2219 = vsel %vm284, %v2188, 0
      %v2222 = vsel %vm284, %v2189, 0
      %v2225 = vsel %vm284, %v2190, 0
      %v2228 = vsel %vm284, %v2191, 0
      %v2231 = vsel %vm284, %v2192, 0
      %v2234 = vsel %vm284, %v2193, 0
      %v2237 = vsel %vm284, %v2194, 0
      %v2240 = vsel %vm284, %v2195, 0
      %v2243 = vsel %vm284, %v2196, 0
      %v2246 = vsel %vm284, %v2197, 0
      %v2249 = vsel %vm451, %v2199, 0
      %2251 = vmatprep.subr.mxu0 0.0
      %2252 = vmatpush1.msra.mxu0 0.0
      %2253 = vmatprep.subr.mxu0 0.0
      %2254 = vmatpush1.msra.mxu0 0.0
      %2255 = vmatprep.subr.mxu0 0.0
      %2256 = vmatpush1.msra.mxu0 0.0
      %2257 = vmatprep.subr.mxu0 0.0
      %2258 = vmatpush1.msra.mxu0 0.0
      %2259 = vmatprep.subr.mxu0 0.0
      %2260 = vmatpush1.msra.mxu0 0.0
      %2261 = vmatprep.subr.mxu0 0.0
      %2262 = vmatpush1.msra.mxu0 0.0
      %2263 = vmatprep.subr.mxu0 0.0
      %2264 = vmatpush1.msra.mxu0 0.0
      %2265 = vmatprep.subr.mxu0 0.0
      %2266 = vmatpush1.msra.mxu0 0.0
      %2267 = vmatprep.subr.mxu0 0.0
      %2268 = vmatpush1.msra.mxu0 0.0
      %2269 = vmatprep.subr.mxu0 0.0
      %2270 = vmatpush1.msra.mxu0 0.0
      %2271 = vmatprep.subr.mxu0 0.0
      %2272 = vmatpush1.msra.mxu0 0.0
      %2273 = vmatprep.subr.mxu0 0.0
      %2274 = vmatpush1.msra.mxu0 0.0
      %2275 = vmatprep.subr.mxu0 0.0
      %2276 = vmatpush1.msra.mxu0 0.0
      %2277 = vmatprep.subr.mxu0 0.0
      %2278 = vmatpush1.msra.mxu0 0.0
      %2279 = vmatprep.subr.mxu0 0.0
      %2280 = vmatpush1.msra.mxu0 0.0
      %2281 = vmatprep.subr.mxu0 0.0
      %2282 = vmatpush1.msra.mxu0 %v2249
      %2283 = vmatprep.subr.mxu0 0.0
      %2284 = vmatpush2.msra.mxu0 0.0
      %2285 = vmatprep.subr.mxu0 0.0
      %2286 = vmatpush2.msra.mxu0 0.0
      %2287 = vmatprep.subr.mxu0 0.0
      %2288 = vmatpush2.msra.mxu0 0.0
      %2289 = vmatprep.subr.mxu0 0.0
      %2290 = vmatpush2.msra.mxu0 0.0
      %2291 = vmatprep.subr.mxu0 0.0
      %2292 = vmatpush2.msra.mxu0 0.0
      %2293 = vmatprep.subr.mxu0 0.0
      %2294 = vmatpush2.msra.mxu0 0.0
      %2295 = vmatprep.subr.mxu0 0.0
      %2296 = vmatpush2.msra.mxu0 0.0
      %2297 = vmatprep.subr.mxu0 0.0
      %2298 = vmatpush2.msra.mxu0 0.0
      %2299 = vmatprep.subr.mxu0 0.0
      %2300 = vmatpush2.msra.mxu0 0.0
      %2301 = vmatprep.subr.mxu0 0.0
      %2302 = vmatpush2.msra.mxu0 0.0
      %2303 = vmatprep.subr.mxu0 0.0
      %2304 = vmatpush2.msra.mxu0 0.0
      %2305 = vmatprep.subr.mxu0 0.0
      %2306 = vmatpush2.msra.mxu0 0.0
      %2307 = vmatprep.subr.mxu0 0.0
      %2308 = vmatpush2.msra.mxu0 0.0
      %2309 = vmatprep.subr.mxu0 0.0
      %2310 = vmatpush2.msra.mxu0 0.0
      %2311 = vmatprep.subr.mxu0 0.0
      %2312 = vmatpush2.msra.mxu0 0.0
      %2313 = vmatprep.subr.mxu0 0.0
      %2314 = vmatpush2.msra.mxu0 0.0
      %2315 = vmatprep.mubr.f32.mxu0 0.0
      %2316 = vmatmul.mubr.f32.gmra.mxu0 %v2201
      %v2317 = vpop.f32.mrf.mxu0
      %v2318 = vadd.f32 0.0, %v2317
      %v2319 = vpop.f32.mrf.mxu0
      %2320 = vmatprep.mubr.f32.mxu0 0.0
      %2321 = vmatmul.mubr.f32.gmra.mxu0 %v2204
      %v2322 = vpop.f32.mrf.mxu0
      %v2323 = vadd.f32 0.0, %v2322
      %v2324 = vpop.f32.mrf.mxu0
      %2325 = vmatprep.mubr.f32.mxu0 0.0
      %2326 = vmatmul.mubr.f32.gmra.mxu0 %v2207
      %v2327 = vpop.f32.mrf.mxu0
      %v2328 = vadd.f32 0.0, %v2327
      %v2329 = vpop.f32.mrf.mxu0
      %2330 = vmatprep.mubr.f32.mxu0 0.0
      %2331 = vmatmul.mubr.f32.gmra.mxu0 %v2210
      %v2332 = vpop.f32.mrf.mxu0
      %v2333 = vadd.f32 0.0, %v2332
      %v2334 = vpop.f32.mrf.mxu0
      %2335 = vmatprep.mubr.f32.mxu0 0.0
      %2336 = vmatmul.mubr.f32.gmra.mxu0 %v2213
      %v2337 = vpop.f32.mrf.mxu0
      %v2338 = vadd.f32 0.0, %v2337
      %v2339 = vpop.f32.mrf.mxu0
      %2340 = vmatprep.mubr.f32.mxu0 0.0
      %2341 = vmatmul.mubr.f32.gmra.mxu0 %v2216
      %v2342 = vpop.f32.mrf.mxu0
      %v2343 = vadd.f32 0.0, %v2342
      %v2344 = vpop.f32.mrf.mxu0
      %2345 = vmatprep.mubr.f32.mxu0 0.0
      %2346 = vmatmul.mubr.f32.gmra.mxu0 %v2219
      %v2347 = vpop.f32.mrf.mxu0
      %v2348 = vadd.f32 0.0, %v2347
      %v2349 = vpop.f32.mrf.mxu0
      %2350 = vmatprep.mubr.f32.mxu0 0.0
      %2351 = vmatmul.mubr.f32.gmra.mxu0 %v2222
      %v2352 = vpop.f32.mrf.mxu0
      %v2353 = vadd.f32 0.0, %v2352
      %v2354 = vpop.f32.mrf.mxu0
      %2355 = vmatprep.mubr.f32.mxu0 0.0
      %2356 = vmatmul.mubr.f32.gmra.mxu0 %v2225
      %v2357 = vpop.f32.mrf.mxu0
      %v2358 = vadd.f32 0.0, %v2357
      %v2359 = vpop.f32.mrf.mxu0
      %2360 = vmatprep.mubr.f32.mxu0 0.0
      %2361 = vmatmul.mubr.f32.gmra.mxu0 %v2228
      %v2362 = vpop.f32.mrf.mxu0
      %v2363 = vadd.f32 0.0, %v2362
      %v2364 = vpop.f32.mrf.mxu0
      %2365 = vmatprep.mubr.f32.mxu0 0.0
      %2366 = vmatmul.mubr.f32.gmra.mxu0 %v2231
      %v2367 = vpop.f32.mrf.mxu0
      %v2368 = vadd.f32 0.0, %v2367
      %v2369 = vpop.f32.mrf.mxu0
      %2370 = vmatprep.mubr.f32.mxu0 0.0
      %2371 = vmatmul.mubr.f32.gmra.mxu0 %v2234
      %v2372 = vpop.f32.mrf.mxu0
      %v2373 = vadd.f32 0.0, %v2372
      %v2374 = vpop.f32.mrf.mxu0
      %2375 = vmatprep.mubr.f32.mxu0 0.0
      %2376 = vmatmul.mubr.f32.gmra.mxu0 %v2237
      %v2377 = vpop.f32.mrf.mxu0
      %v2378 = vadd.f32 0.0, %v2377
      %v2379 = vpop.f32.mrf.mxu0
      %2380 = vmatprep.mubr.f32.mxu0 0.0
      %2381 = vmatmul.mubr.f32.gmra.mxu0 %v2240
      %v2382 = vpop.f32.mrf.mxu0
      %v2383 = vadd.f32 0.0, %v2382
      %v2384 = vpop.f32.mrf.mxu0
      %2385 = vmatprep.mubr.f32.mxu0 0.0
      %2386 = vmatmul.mubr.f32.gmra.mxu0 %v2243
      %v2387 = vpop.f32.mrf.mxu0
      %v2388 = vadd.f32 0.0, %v2387
      %v2389 = vpop.f32.mrf.mxu0
      %2390 = vmatprep.mubr.f32.mxu0 0.0
      %2391 = vmatmul.mubr.f32.gmra.mxu0 %v2246
      %v2392 = vpop.f32.mrf.mxu0
      %v2393 = vadd.f32 0.0, %v2392
      %v2394 = vpop.f32.mrf.mxu0
      %2395 = vdwg.mxu0
      %v2396 = vadd.f32 %v2166, %v2318
      %v2397 = vadd.f32 %v2167, %v2323
      %v2398 = vadd.f32 %v2168, %v2328
      %v2399 = vadd.f32 %v2169, %v2333
      %v2400 = vadd.f32 %v2170, %v2338
      %v2401 = vadd.f32 %v2171, %v2343
      %v2402 = vadd.f32 %v2172, %v2348
      %v2403 = vadd.f32 %v2173, %v2353
      %v2404 = vadd.f32 %v2174, %v2358
      %v2405 = vadd.f32 %v2175, %v2363
      %v2406 = vadd.f32 %v2176, %v2368
      %v2407 = vadd.f32 %v2177, %v2373
      %v2408 = vadd.f32 %v2178, %v2378
      %v2409 = vadd.f32 %v2179, %v2383
      %v2410 = vadd.f32 %v2180, %v2388
      %v2411 = vadd.f32 %v2181, %v2393
      %v2412 = vld [vmem:[%s2] sm:$0x1]
      %v2414 = vlaneseq
      %v2415 = vshrl.u32 %v2414, 7
      %v2416 = vsub.s32 0, %v2415
      %v2417 = vrot.slane %v2412, %v2416
      %v2419 = vadd.f32 %v2396, %v2417
      %v2420 = vadd.f32 %v2397, %v2417
      %v2421 = vadd.f32 %v2398, %v2417
      %v2422 = vadd.f32 %v2399, %v2417
      %v2423 = vadd.f32 %v2400, %v2417
      %v2424 = vadd.f32 %v2401, %v2417
      %v2425 = vadd.f32 %v2402, %v2417
      %v2426 = vadd.f32 %v2403, %v2417
      %v2427 = vadd.f32 %v2404, %v2417
      %v2428 = vadd.f32 %v2405, %v2417
      %v2429 = vadd.f32 %v2406, %v2417
      %v2430 = vadd.f32 %v2407, %v2417
      %v2431 = vadd.f32 %v2408, %v2417
      %v2432 = vadd.f32 %v2409, %v2417
      %v2433 = vadd.f32 %v2410, %v2417
      %v2434 = vadd.f32 %v2411, %v2417
      %vm2435 = vcmp.gt.f32.partialorder %v2419, 0.0
      %vm2436 = vcmp.gt.f32.partialorder %v2420, 0.0
      %vm2437 = vcmp.gt.f32.partialorder %v2421, 0.0
      %vm2438 = vcmp.gt.f32.partialorder %v2422, 0.0
      %vm2439 = vcmp.gt.f32.partialorder %v2423, 0.0
      %vm2440 = vcmp.gt.f32.partialorder %v2424, 0.0
      %vm2441 = vcmp.gt.f32.partialorder %v2425, 0.0
      %vm2442 = vcmp.gt.f32.partialorder %v2426, 0.0
      %vm2443 = vcmp.gt.f32.partialorder %v2427, 0.0
      %vm2444 = vcmp.gt.f32.partialorder %v2428, 0.0
      %vm2445 = vcmp.gt.f32.partialorder %v2429, 0.0
      %vm2446 = vcmp.gt.f32.partialorder %v2430, 0.0
      %vm2447 = vcmp.gt.f32.partialorder %v2431, 0.0
      %vm2448 = vcmp.gt.f32.partialorder %v2432, 0.0
      %vm2449 = vcmp.gt.f32.partialorder %v2433, 0.0
      %vm2450 = vcmp.gt.f32.partialorder %v2434, 0.0
      %v2451 = vmul.f32 %v2419, 0.01
      %v2452 = vmul.f32 %v2420, 0.01
      %v2453 = vmul.f32 %v2421, 0.01
      %v2454 = vmul.f32 %v2422, 0.01
      %v2455 = vmul.f32 %v2423, 0.01
      %v2456 = vmul.f32 %v2424, 0.01
      %v2457 = vmul.f32 %v2425, 0.01
      %v2458 = vmul.f32 %v2426, 0.01
      %v2459 = vmul.f32 %v2427, 0.01
      %v2460 = vmul.f32 %v2428, 0.01
      %v2461 = vmul.f32 %v2429, 0.01
      %v2462 = vmul.f32 %v2430, 0.01
      %v2463 = vmul.f32 %v2431, 0.01
      %v2464 = vmul.f32 %v2432, 0.01
      %v2465 = vmul.f32 %v2433, 0.01
      %v2466 = vmul.f32 %v2434, 0.01
      %v2467 = vsel %vm2435, %v2419, %v2451
      %v2468 = vsel %vm2436, %v2420, %v2452
      %v2469 = vsel %vm2437, %v2421, %v2453
      %v2470 = vsel %vm2438, %v2422, %v2454
      %v2471 = vsel %vm2439, %v2423, %v2455
      %v2472 = vsel %vm2440, %v2424, %v2456
      %v2473 = vsel %vm2441, %v2425, %v2457
      %v2474 = vsel %vm2442, %v2426, %v2458
      %v2475 = vsel %vm2443, %v2427, %v2459
      %v2476 = vsel %vm2444, %v2428, %v2460
      %v2477 = vsel %vm2445, %v2429, %v2461
      %v2478 = vsel %vm2446, %v2430, %v2462
      %v2479 = vsel %vm2447, %v2431, %v2463
      %v2480 = vsel %vm2448, %v2432, %v2464
      %v2481 = vsel %vm2449, %v2433, %v2465
      %v2482 = vsel %vm2450, %v2434, %v2466
      %s2483 = scalar_lea.vmem [#allocation3], 24
      %vm2484 = vcmask 64512
      %2485 = vst.msk [vmem:[%s2483 + $0x1] sm:$0xff] %vm2484, %v2467
      %2486 = vst.msk [vmem:[%s2483 + $0x9] sm:$0xff] %vm2484, %v2468
      %2487 = vst.msk [vmem:[%s2483 + $0x19] sm:$0xff] %vm2484, %v2469
      %2488 = vst.msk [vmem:[%s2483 + $0x21] sm:$0xff] %vm2484, %v2470
      %2489 = vst.msk [vmem:[%s2483 + $0x31] sm:$0xff] %vm2484, %v2471
      %2490 = vst.msk [vmem:[%s2483 + $0x39] sm:$0xff] %vm2484, %v2472
      %2491 = vst.msk [vmem:[%s2483 + $0x49] sm:$0xff] %vm2484, %v2473
      %2492 = vst.msk [vmem:[%s2483 + $0x51] sm:$0xff] %vm2484, %v2474
      %2493 = vst.msk [vmem:[%s2483 + $0x61] sm:$0xff] %vm2484, %v2475
      %2494 = vst.msk [vmem:[%s2483 + $0x69] sm:$0xff] %vm2484, %v2476
      %2495 = vst.msk [vmem:[%s2483 + $0x79] sm:$0xff] %vm2484, %v2477
      %2496 = vst.msk [vmem:[%s2483 + $0x81] sm:$0xff] %vm2484, %v2478
      %2497 = vst.msk [vmem:[%s2483 + $0x91] sm:$0xff] %vm2484, %v2479
      %2498 = vst.msk [vmem:[%s2483 + $0x99] sm:$0xff] %vm2484, %v2480
      %2499 = vst.msk [vmem:[%s2483 + $0xa9] sm:$0xff] %vm2484, %v2481
      %2500 = vst.msk [vmem:[%s2483 + $0xb1] sm:$0xff] %vm2484, %v2482
      %s2501 = ssub.s32 %s250, 1
      %p2502 = scmp.gt.s32.totalorder %s2501, 0
      %s2503 = scalar_select %p2502, %s2501, 0
      %s2504 = smul.u32 %s2503, 24
      %s2505 = scalar_lea.vmem [#allocation2], %s2504
      %v2506 = vld [vmem:[%s2505] sm:$0xff]
      %v2507 = vld [vmem:[%s2505 + $0x8] sm:$0xff]
      %v2508 = vld [vmem:[%s1] sm:$0xf]
      %v2509 = vld [vmem:[%s2505 + $0x1] sm:$0xff]
      %v2510 = vld [vmem:[%s2505 + $0x9] sm:$0xff]
      %v2511 = vld [vmem:[%s401] sm:$0xf]
      %v2513 = vsel %vm284, %v2509, 0
      %v2516 = vsel %vm284, %v2510, 0
      %v2519 = vsel %vm451, %v2511, 0
      %2521 = vmatprep.subr.mxu0 0.0
      %2522 = vmatpush1.msra.mxu0 0.0
      %2523 = vmatprep.subr.mxu0 0.0
      %2524 = vmatpush1.msra.mxu0 0.0
      %2525 = vmatprep.subr.mxu0 0.0
      %2526 = vmatpush1.msra.mxu0 0.0
      %2527 = vmatprep.subr.mxu0 0.0
      %2528 = vmatpush1.msra.mxu0 0.0
      %2529 = vmatprep.subr.mxu0 0.0
      %2530 = vmatpush1.msra.mxu0 0.0
      %2531 = vmatprep.subr.mxu0 0.0
      %2532 = vmatpush1.msra.mxu0 0.0
      %2533 = vmatprep.subr.mxu0 0.0
      %2534 = vmatpush1.msra.mxu0 0.0
      %2535 = vmatprep.subr.mxu0 0.0
      %2536 = vmatpush1.msra.mxu0 0.0
      %2537 = vmatprep.subr.mxu0 0.0
      %2538 = vmatpush1.msra.mxu0 0.0
      %2539 = vmatprep.subr.mxu0 0.0
      %2540 = vmatpush1.msra.mxu0 0.0
      %2541 = vmatprep.subr.mxu0 0.0
      %2542 = vmatpush1.msra.mxu0 0.0
      %2543 = vmatprep.subr.mxu0 0.0
      %2544 = vmatpush1.msra.mxu0 0.0
      %2545 = vmatprep.subr.mxu0 0.0
      %2546 = vmatpush1.msra.mxu0 0.0
      %2547 = vmatprep.subr.mxu0 0.0
      %2548 = vmatpush1.msra.mxu0 0.0
      %2549 = vmatprep.subr.mxu0 0.0
      %2550 = vmatpush1.msra.mxu0 0.0
      %2551 = vmatprep.subr.mxu0 0.0
      %2552 = vmatpush1.msra.mxu0 %v2519
      %2553 = vmatprep.subr.mxu0 0.0
      %2554 = vmatpush2.msra.mxu0 0.0
      %2555 = vmatprep.subr.mxu0 0.0
      %2556 = vmatpush2.msra.mxu0 0.0
      %2557 = vmatprep.subr.mxu0 0.0
      %2558 = vmatpush2.msra.mxu0 0.0
      %2559 = vmatprep.subr.mxu0 0.0
      %2560 = vmatpush2.msra.mxu0 0.0
      %2561 = vmatprep.subr.mxu0 0.0
      %2562 = vmatpush2.msra.mxu0 0.0
      %2563 = vmatprep.subr.mxu0 0.0
      %2564 = vmatpush2.msra.mxu0 0.0
      %2565 = vmatprep.subr.mxu0 0.0
      %2566 = vmatpush2.msra.mxu0 0.0
      %2567 = vmatprep.subr.mxu0 0.0
      %2568 = vmatpush2.msra.mxu0 0.0
      %2569 = vmatprep.subr.mxu0 0.0
      %2570 = vmatpush2.msra.mxu0 0.0
      %2571 = vmatprep.subr.mxu0 0.0
      %2572 = vmatpush2.msra.mxu0 0.0
      %2573 = vmatprep.subr.mxu0 0.0
      %2574 = vmatpush2.msra.mxu0 0.0
      %2575 = vmatprep.subr.mxu0 0.0
      %2576 = vmatpush2.msra.mxu0 0.0
      %2577 = vmatprep.subr.mxu0 0.0
      %2578 = vmatpush2.msra.mxu0 0.0
      %2579 = vmatprep.subr.mxu0 0.0
      %2580 = vmatpush2.msra.mxu0 0.0
      %2581 = vmatprep.subr.mxu0 0.0
      %2582 = vmatpush2.msra.mxu0 0.0
      %2583 = vmatprep.subr.mxu0 0.0
      %2584 = vmatpush2.msra.mxu0 0.0
      %2585 = vmatprep.mubr.f32.mxu0 0.0
      %2586 = vmatmul.mubr.f32.gmra.mxu0 %v2513
      %v2587 = vpop.f32.mrf.mxu0
      %v2588 = vadd.f32 0.0, %v2587
      %v2589 = vpop.f32.mrf.mxu0
      %2590 = vmatprep.mubr.f32.mxu0 0.0
      %2591 = vmatmul.mubr.f32.gmra.mxu0 %v2516
      %v2592 = vpop.f32.mrf.mxu0
      %v2593 = vadd.f32 0.0, %v2592
      %v2594 = vpop.f32.mrf.mxu0
      %2595 = vdwg.mxu0
      %v2597 = vsel %vm284, %v2506, 0
      %v2600 = vsel %vm284, %v2507, 0
      %v2603 = vsel %vm451, %v2508, 0
      %2605 = vmatprep.subr.mxu0 0.0
      %2606 = vmatpush1.msra.mxu0 0.0
      %2607 = vmatprep.subr.mxu0 0.0
      %2608 = vmatpush1.msra.mxu0 0.0
      %2609 = vmatprep.subr.mxu0 0.0
      %2610 = vmatpush1.msra.mxu0 0.0
      %2611 = vmatprep.subr.mxu0 0.0
      %2612 = vmatpush1.msra.mxu0 0.0
      %2613 = vmatprep.subr.mxu0 0.0
      %2614 = vmatpush1.msra.mxu0 0.0
      %2615 = vmatprep.subr.mxu0 0.0
      %2616 = vmatpush1.msra.mxu0 0.0
      %2617 = vmatprep.subr.mxu0 0.0
      %2618 = vmatpush1.msra.mxu0 0.0
      %2619 = vmatprep.subr.mxu0 0.0
      %2620 = vmatpush1.msra.mxu0 0.0
      %2621 = vmatprep.subr.mxu0 0.0
      %2622 = vmatpush1.msra.mxu0 0.0
      %2623 = vmatprep.subr.mxu0 0.0
      %2624 = vmatpush1.msra.mxu0 0.0
      %2625 = vmatprep.subr.mxu0 0.0
      %2626 = vmatpush1.msra.mxu0 0.0
      %2627 = vmatprep.subr.mxu0 0.0
      %2628 = vmatpush1.msra.mxu0 0.0
      %2629 = vmatprep.subr.mxu0 0.0
      %2630 = vmatpush1.msra.mxu0 0.0
      %2631 = vmatprep.subr.mxu0 0.0
      %2632 = vmatpush1.msra.mxu0 0.0
      %2633 = vmatprep.subr.mxu0 0.0
      %2634 = vmatpush1.msra.mxu0 0.0
      %2635 = vmatprep.subr.mxu0 0.0
      %2636 = vmatpush1.msra.mxu0 %v2603
      %2637 = vmatprep.subr.mxu0 0.0
      %2638 = vmatpush2.msra.mxu0 0.0
      %2639 = vmatprep.subr.mxu0 0.0
      %2640 = vmatpush2.msra.mxu0 0.0
      %2641 = vmatprep.subr.mxu0 0.0
      %2642 = vmatpush2.msra.mxu0 0.0
      %2643 = vmatprep.subr.mxu0 0.0
      %2644 = vmatpush2.msra.mxu0 0.0
      %2645 = vmatprep.subr.mxu0 0.0
      %2646 = vmatpush2.msra.mxu0 0.0
      %2647 = vmatprep.subr.mxu0 0.0
      %2648 = vmatpush2.msra.mxu0 0.0
      %2649 = vmatprep.subr.mxu0 0.0
      %2650 = vmatpush2.msra.mxu0 0.0
      %2651 = vmatprep.subr.mxu0 0.0
      %2652 = vmatpush2.msra.mxu0 0.0
      %2653 = vmatprep.subr.mxu0 0.0
      %2654 = vmatpush2.msra.mxu0 0.0
      %2655 = vmatprep.subr.mxu0 0.0
      %2656 = vmatpush2.msra.mxu0 0.0
      %2657 = vmatprep.subr.mxu0 0.0
      %2658 = vmatpush2.msra.mxu0 0.0
      %2659 = vmatprep.subr.mxu0 0.0
      %2660 = vmatpush2.msra.mxu0 0.0
      %2661 = vmatprep.subr.mxu0 0.0
      %2662 = vmatpush2.msra.mxu0 0.0
      %2663 = vmatprep.subr.mxu0 0.0
      %2664 = vmatpush2.msra.mxu0 0.0
      %2665 = vmatprep.subr.mxu0 0.0
      %2666 = vmatpush2.msra.mxu0 0.0
      %2667 = vmatprep.subr.mxu0 0.0
      %2668 = vmatpush2.msra.mxu0 0.0
      %2669 = vmatprep.mubr.f32.mxu0 0.0
      %2670 = vmatmul.mubr.f32.gmra.mxu0 %v2597
      %v2671 = vpop.f32.mrf.mxu0
      %v2672 = vadd.f32 %v2588, %v2671
      %v2673 = vpop.f32.mrf.mxu0
      %2674 = vmatprep.mubr.f32.mxu0 0.0
      %2675 = vmatmul.mubr.f32.gmra.mxu0 %v2600
      %v2676 = vpop.f32.mrf.mxu0
      %v2677 = vadd.f32 %v2593, %v2676
      %v2678 = vpop.f32.mrf.mxu0
      %2679 = vdwg.mxu0
      %v2680 = vld [vmem:[%s2505 + $0x2] sm:$0xff]
      %v2681 = vld [vmem:[%s2505 + $0xa] sm:$0xff]
      %v2682 = vld [vmem:[%s812] sm:$0xf]
      %v2684 = vsel %vm284, %v2680, 0
      %v2687 = vsel %vm284, %v2681, 0
      %v2690 = vsel %vm451, %v2682, 0
      %2692 = vmatprep.subr.mxu0 0.0
      %2693 = vmatpush1.msra.mxu0 0.0
      %2694 = vmatprep.subr.mxu0 0.0
      %2695 = vmatpush1.msra.mxu0 0.0
      %2696 = vmatprep.subr.mxu0 0.0
      %2697 = vmatpush1.msra.mxu0 0.0
      %2698 = vmatprep.subr.mxu0 0.0
      %2699 = vmatpush1.msra.mxu0 0.0
      %2700 = vmatprep.subr.mxu0 0.0
      %2701 = vmatpush1.msra.mxu0 0.0
      %2702 = vmatprep.subr.mxu0 0.0
      %2703 = vmatpush1.msra.mxu0 0.0
      %2704 = vmatprep.subr.mxu0 0.0
      %2705 = vmatpush1.msra.mxu0 0.0
      %2706 = vmatprep.subr.mxu0 0.0
      %2707 = vmatpush1.msra.mxu0 0.0
      %2708 = vmatprep.subr.mxu0 0.0
      %2709 = vmatpush1.msra.mxu0 0.0
      %2710 = vmatprep.subr.mxu0 0.0
      %2711 = vmatpush1.msra.mxu0 0.0
      %2712 = vmatprep.subr.mxu0 0.0
      %2713 = vmatpush1.msra.mxu0 0.0
      %2714 = vmatprep.subr.mxu0 0.0
      %2715 = vmatpush1.msra.mxu0 0.0
      %2716 = vmatprep.subr.mxu0 0.0
      %2717 = vmatpush1.msra.mxu0 0.0
      %2718 = vmatprep.subr.mxu0 0.0
      %2719 = vmatpush1.msra.mxu0 0.0
      %2720 = vmatprep.subr.mxu0 0.0
      %2721 = vmatpush1.msra.mxu0 0.0
      %2722 = vmatprep.subr.mxu0 0.0
      %2723 = vmatpush1.msra.mxu0 %v2690
      %2724 = vmatprep.subr.mxu0 0.0
      %2725 = vmatpush2.msra.mxu0 0.0
      %2726 = vmatprep.subr.mxu0 0.0
      %2727 = vmatpush2.msra.mxu0 0.0
      %2728 = vmatprep.subr.mxu0 0.0
      %2729 = vmatpush2.msra.mxu0 0.0
      %2730 = vmatprep.subr.mxu0 0.0
      %2731 = vmatpush2.msra.mxu0 0.0
      %2732 = vmatprep.subr.mxu0 0.0
      %2733 = vmatpush2.msra.mxu0 0.0
      %2734 = vmatprep.subr.mxu0 0.0
      %2735 = vmatpush2.msra.mxu0 0.0
      %2736 = vmatprep.subr.mxu0 0.0
      %2737 = vmatpush2.msra.mxu0 0.0
      %2738 = vmatprep.subr.mxu0 0.0
      %2739 = vmatpush2.msra.mxu0 0.0
      %2740 = vmatprep.subr.mxu0 0.0
      %2741 = vmatpush2.msra.mxu0 0.0
      %2742 = vmatprep.subr.mxu0 0.0
      %2743 = vmatpush2.msra.mxu0 0.0
      %2744 = vmatprep.subr.mxu0 0.0
      %2745 = vmatpush2.msra.mxu0 0.0
      %2746 = vmatprep.subr.mxu0 0.0
      %2747 = vmatpush2.msra.mxu0 0.0
      %2748 = vmatprep.subr.mxu0 0.0
      %2749 = vmatpush2.msra.mxu0 0.0
      %2750 = vmatprep.subr.mxu0 0.0
      %2751 = vmatpush2.msra.mxu0 0.0
      %2752 = vmatprep.subr.mxu0 0.0
      %2753 = vmatpush2.msra.mxu0 0.0
      %2754 = vmatprep.subr.mxu0 0.0
      %2755 = vmatpush2.msra.mxu0 0.0
      %2756 = vmatprep.mubr.f32.mxu0 0.0
      %2757 = vmatmul.mubr.f32.gmra.mxu0 %v2684
      %v2758 = vpop.f32.mrf.mxu0
      %v2759 = vadd.f32 0.0, %v2758
      %v2760 = vpop.f32.mrf.mxu0
      %2761 = vmatprep.mubr.f32.mxu0 0.0
      %2762 = vmatmul.mubr.f32.gmra.mxu0 %v2687
      %v2763 = vpop.f32.mrf.mxu0
      %v2764 = vadd.f32 0.0, %v2763
      %v2765 = vpop.f32.mrf.mxu0
      %2766 = vdwg.mxu0
      %v2767 = vadd.f32 %v2672, %v2759
      %v2768 = vadd.f32 %v2677, %v2764
      %s2769 = sadd.s32 %s2503, 1
      %s2770 = smul.u32 %s2769, 24
      %s2771 = scalar_lea.vmem [#allocation2], %s2770
      %v2772 = vld [vmem:[%s2771] sm:$0xff]
      %v2773 = vld [vmem:[%s2771 + $0x8] sm:$0xff]
      %v2774 = vld [vmem:[%s1045] sm:$0xf]
      %v2776 = vsel %vm284, %v2772, 0
      %v2779 = vsel %vm284, %v2773, 0
      %v2782 = vsel %vm451, %v2774, 0
      %2784 = vmatprep.subr.mxu0 0.0
      %2785 = vmatpush1.msra.mxu0 0.0
      %2786 = vmatprep.subr.mxu0 0.0
      %2787 = vmatpush1.msra.mxu0 0.0
      %2788 = vmatprep.subr.mxu0 0.0
      %2789 = vmatpush1.msra.mxu0 0.0
      %2790 = vmatprep.subr.mxu0 0.0
      %2791 = vmatpush1.msra.mxu0 0.0
      %2792 = vmatprep.subr.mxu0 0.0
      %2793 = vmatpush1.msra.mxu0 0.0
      %2794 = vmatprep.subr.mxu0 0.0
      %2795 = vmatpush1.msra.mxu0 0.0
      %2796 = vmatprep.subr.mxu0 0.0
      %2797 = vmatpush1.msra.mxu0 0.0
      %2798 = vmatprep.subr.mxu0 0.0
      %2799 = vmatpush1.msra.mxu0 0.0
      %2800 = vmatprep.subr.mxu0 0.0
      %2801 = vmatpush1.msra.mxu0 0.0
      %2802 = vmatprep.subr.mxu0 0.0
      %2803 = vmatpush1.msra.mxu0 0.0
      %2804 = vmatprep.subr.mxu0 0.0
      %2805 = vmatpush1.msra.mxu0 0.0
      %2806 = vmatprep.subr.mxu0 0.0
      %2807 = vmatpush1.msra.mxu0 0.0
      %2808 = vmatprep.subr.mxu0 0.0
      %2809 = vmatpush1.msra.mxu0 0.0
      %2810 = vmatprep.subr.mxu0 0.0
      %2811 = vmatpush1.msra.mxu0 0.0
      %2812 = vmatprep.subr.mxu0 0.0
      %2813 = vmatpush1.msra.mxu0 0.0
      %2814 = vmatprep.subr.mxu0 0.0
      %2815 = vmatpush1.msra.mxu0 %v2782
      %2816 = vmatprep.subr.mxu0 0.0
      %2817 = vmatpush2.msra.mxu0 0.0
      %2818 = vmatprep.subr.mxu0 0.0
      %2819 = vmatpush2.msra.mxu0 0.0
      %2820 = vmatprep.subr.mxu0 0.0
      %2821 = vmatpush2.msra.mxu0 0.0
      %2822 = vmatprep.subr.mxu0 0.0
      %2823 = vmatpush2.msra.mxu0 0.0
      %2824 = vmatprep.subr.mxu0 0.0
      %2825 = vmatpush2.msra.mxu0 0.0
      %2826 = vmatprep.subr.mxu0 0.0
      %2827 = vmatpush2.msra.mxu0 0.0
      %2828 = vmatprep.subr.mxu0 0.0
      %2829 = vmatpush2.msra.mxu0 0.0
      %2830 = vmatprep.subr.mxu0 0.0
      %2831 = vmatpush2.msra.mxu0 0.0
      %2832 = vmatprep.subr.mxu0 0.0
      %2833 = vmatpush2.msra.mxu0 0.0
      %2834 = vmatprep.subr.mxu0 0.0
      %2835 = vmatpush2.msra.mxu0 0.0
      %2836 = vmatprep.subr.mxu0 0.0
      %2837 = vmatpush2.msra.mxu0 0.0
      %2838 = vmatprep.subr.mxu0 0.0
      %2839 = vmatpush2.msra.mxu0 0.0
      %2840 = vmatprep.subr.mxu0 0.0
      %2841 = vmatpush2.msra.mxu0 0.0
      %2842 = vmatprep.subr.mxu0 0.0
      %2843 = vmatpush2.msra.mxu0 0.0
      %2844 = vmatprep.subr.mxu0 0.0
      %2845 = vmatpush2.msra.mxu0 0.0
      %2846 = vmatprep.subr.mxu0 0.0
      %2847 = vmatpush2.msra.mxu0 0.0
      %2848 = vmatprep.mubr.f32.mxu0 0.0
      %2849 = vmatmul.mubr.f32.gmra.mxu0 %v2776
      %v2850 = vpop.f32.mrf.mxu0
      %v2851 = vadd.f32 0.0, %v2850
      %v2852 = vpop.f32.mrf.mxu0
      %2853 = vmatprep.mubr.f32.mxu0 0.0
      %2854 = vmatmul.mubr.f32.gmra.mxu0 %v2779
      %v2855 = vpop.f32.mrf.mxu0
      %v2856 = vadd.f32 0.0, %v2855
      %v2857 = vpop.f32.mrf.mxu0
      %2858 = vdwg.mxu0
      %v2859 = vadd.f32 %v2767, %v2851
      %v2860 = vadd.f32 %v2768, %v2856
      %v2861 = vld [vmem:[%s2771 + $0x1] sm:$0xff]
      %v2862 = vld [vmem:[%s2771 + $0x9] sm:$0xff]
      %v2863 = vld [vmem:[%s1275] sm:$0xf]
      %v2865 = vsel %vm284, %v2861, 0
      %v2868 = vsel %vm284, %v2862, 0
      %v2871 = vsel %vm451, %v2863, 0
      %2873 = vmatprep.subr.mxu0 0.0
      %2874 = vmatpush1.msra.mxu0 0.0
      %2875 = vmatprep.subr.mxu0 0.0
      %2876 = vmatpush1.msra.mxu0 0.0
      %2877 = vmatprep.subr.mxu0 0.0
      %2878 = vmatpush1.msra.mxu0 0.0
      %2879 = vmatprep.subr.mxu0 0.0
      %2880 = vmatpush1.msra.mxu0 0.0
      %2881 = vmatprep.subr.mxu0 0.0
      %2882 = vmatpush1.msra.mxu0 0.0
      %2883 = vmatprep.subr.mxu0 0.0
      %2884 = vmatpush1.msra.mxu0 0.0
      %2885 = vmatprep.subr.mxu0 0.0
      %2886 = vmatpush1.msra.mxu0 0.0
      %2887 = vmatprep.subr.mxu0 0.0
      %2888 = vmatpush1.msra.mxu0 0.0
      %2889 = vmatprep.subr.mxu0 0.0
      %2890 = vmatpush1.msra.mxu0 0.0
      %2891 = vmatprep.subr.mxu0 0.0
      %2892 = vmatpush1.msra.mxu0 0.0
      %2893 = vmatprep.subr.mxu0 0.0
      %2894 = vmatpush1.msra.mxu0 0.0
      %2895 = vmatprep.subr.mxu0 0.0
      %2896 = vmatpush1.msra.mxu0 0.0
      %2897 = vmatprep.subr.mxu0 0.0
      %2898 = vmatpush1.msra.mxu0 0.0
      %2899 = vmatprep.subr.mxu0 0.0
      %2900 = vmatpush1.msra.mxu0 0.0
      %2901 = vmatprep.subr.mxu0 0.0
      %2902 = vmatpush1.msra.mxu0 0.0
      %2903 = vmatprep.subr.mxu0 0.0
      %2904 = vmatpush1.msra.mxu0 %v2871
      %2905 = vmatprep.subr.mxu0 0.0
      %2906 = vmatpush2.msra.mxu0 0.0
      %2907 = vmatprep.subr.mxu0 0.0
      %2908 = vmatpush2.msra.mxu0 0.0
      %2909 = vmatprep.subr.mxu0 0.0
      %2910 = vmatpush2.msra.mxu0 0.0
      %2911 = vmatprep.subr.mxu0 0.0
      %2912 = vmatpush2.msra.mxu0 0.0
      %2913 = vmatprep.subr.mxu0 0.0
      %2914 = vmatpush2.msra.mxu0 0.0
      %2915 = vmatprep.subr.mxu0 0.0
      %2916 = vmatpush2.msra.mxu0 0.0
      %2917 = vmatprep.subr.mxu0 0.0
      %2918 = vmatpush2.msra.mxu0 0.0
      %2919 = vmatprep.subr.mxu0 0.0
      %2920 = vmatpush2.msra.mxu0 0.0
      %2921 = vmatprep.subr.mxu0 0.0
      %2922 = vmatpush2.msra.mxu0 0.0
      %2923 = vmatprep.subr.mxu0 0.0
      %2924 = vmatpush2.msra.mxu0 0.0
      %2925 = vmatprep.subr.mxu0 0.0
      %2926 = vmatpush2.msra.mxu0 0.0
      %2927 = vmatprep.subr.mxu0 0.0
      %2928 = vmatpush2.msra.mxu0 0.0
      %2929 = vmatprep.subr.mxu0 0.0
      %2930 = vmatpush2.msra.mxu0 0.0
      %2931 = vmatprep.subr.mxu0 0.0
      %2932 = vmatpush2.msra.mxu0 0.0
      %2933 = vmatprep.subr.mxu0 0.0
      %2934 = vmatpush2.msra.mxu0 0.0
      %2935 = vmatprep.subr.mxu0 0.0
      %2936 = vmatpush2.msra.mxu0 0.0
      %2937 = vmatprep.mubr.f32.mxu0 0.0
      %2938 = vmatmul.mubr.f32.gmra.mxu0 %v2865
      %v2939 = vpop.f32.mrf.mxu0
      %v2940 = vadd.f32 0.0, %v2939
      %v2941 = vpop.f32.mrf.mxu0
      %2942 = vmatprep.mubr.f32.mxu0 0.0
      %2943 = vmatmul.mubr.f32.gmra.mxu0 %v2868
      %v2944 = vpop.f32.mrf.mxu0
      %v2945 = vadd.f32 0.0, %v2944
      %v2946 = vpop.f32.mrf.mxu0
      %2947 = vdwg.mxu0
      %v2948 = vadd.f32 %v2859, %v2940
      %v2949 = vadd.f32 %v2860, %v2945
      %v2950 = vld [vmem:[%s2771 + $0x2] sm:$0xff]
      %v2951 = vld [vmem:[%s2771 + $0xa] sm:$0xff]
      %v2952 = vld [vmem:[%s1505] sm:$0xf]
      %v2954 = vsel %vm284, %v2950, 0
      %v2957 = vsel %vm284, %v2951, 0
      %v2960 = vsel %vm451, %v2952, 0
      %2962 = vmatprep.subr.mxu0 0.0
      %2963 = vmatpush1.msra.mxu0 0.0
      %2964 = vmatprep.subr.mxu0 0.0
      %2965 = vmatpush1.msra.mxu0 0.0
      %2966 = vmatprep.subr.mxu0 0.0
      %2967 = vmatpush1.msra.mxu0 0.0
      %2968 = vmatprep.subr.mxu0 0.0
      %2969 = vmatpush1.msra.mxu0 0.0
      %2970 = vmatprep.subr.mxu0 0.0
      %2971 = vmatpush1.msra.mxu0 0.0
      %2972 = vmatprep.subr.mxu0 0.0
      %2973 = vmatpush1.msra.mxu0 0.0
      %2974 = vmatprep.subr.mxu0 0.0
      %2975 = vmatpush1.msra.mxu0 0.0
      %2976 = vmatprep.subr.mxu0 0.0
      %2977 = vmatpush1.msra.mxu0 0.0
      %2978 = vmatprep.subr.mxu0 0.0
      %2979 = vmatpush1.msra.mxu0 0.0
      %2980 = vmatprep.subr.mxu0 0.0
      %2981 = vmatpush1.msra.mxu0 0.0
      %2982 = vmatprep.subr.mxu0 0.0
      %2983 = vmatpush1.msra.mxu0 0.0
      %2984 = vmatprep.subr.mxu0 0.0
      %2985 = vmatpush1.msra.mxu0 0.0
      %2986 = vmatprep.subr.mxu0 0.0
      %2987 = vmatpush1.msra.mxu0 0.0
      %2988 = vmatprep.subr.mxu0 0.0
      %2989 = vmatpush1.msra.mxu0 0.0
      %2990 = vmatprep.subr.mxu0 0.0
      %2991 = vmatpush1.msra.mxu0 0.0
      %2992 = vmatprep.subr.mxu0 0.0
      %2993 = vmatpush1.msra.mxu0 %v2960
      %2994 = vmatprep.subr.mxu0 0.0
      %2995 = vmatpush2.msra.mxu0 0.0
      %2996 = vmatprep.subr.mxu0 0.0
      %2997 = vmatpush2.msra.mxu0 0.0
      %2998 = vmatprep.subr.mxu0 0.0
      %2999 = vmatpush2.msra.mxu0 0.0
      %3000 = vmatprep.subr.mxu0 0.0
      %3001 = vmatpush2.msra.mxu0 0.0
      %3002 = vmatprep.subr.mxu0 0.0
      %3003 = vmatpush2.msra.mxu0 0.0
      %3004 = vmatprep.subr.mxu0 0.0
      %3005 = vmatpush2.msra.mxu0 0.0
      %3006 = vmatprep.subr.mxu0 0.0
      %3007 = vmatpush2.msra.mxu0 0.0
      %3008 = vmatprep.subr.mxu0 0.0
      %3009 = vmatpush2.msra.mxu0 0.0
      %3010 = vmatprep.subr.mxu0 0.0
      %3011 = vmatpush2.msra.mxu0 0.0
      %3012 = vmatprep.subr.mxu0 0.0
      %3013 = vmatpush2.msra.mxu0 0.0
      %3014 = vmatprep.subr.mxu0 0.0
      %3015 = vmatpush2.msra.mxu0 0.0
      %3016 = vmatprep.subr.mxu0 0.0
      %3017 = vmatpush2.msra.mxu0 0.0
      %3018 = vmatprep.subr.mxu0 0.0
      %3019 = vmatpush2.msra.mxu0 0.0
      %3020 = vmatprep.subr.mxu0 0.0
      %3021 = vmatpush2.msra.mxu0 0.0
      %3022 = vmatprep.subr.mxu0 0.0
      %3023 = vmatpush2.msra.mxu0 0.0
      %3024 = vmatprep.subr.mxu0 0.0
      %3025 = vmatpush2.msra.mxu0 0.0
      %3026 = vmatprep.mubr.f32.mxu0 0.0
      %3027 = vmatmul.mubr.f32.gmra.mxu0 %v2954
      %v3028 = vpop.f32.mrf.mxu0
      %v3029 = vadd.f32 0.0, %v3028
      %v3030 = vpop.f32.mrf.mxu0
      %3031 = vmatprep.mubr.f32.mxu0 0.0
      %3032 = vmatmul.mubr.f32.gmra.mxu0 %v2957
      %v3033 = vpop.f32.mrf.mxu0
      %v3034 = vadd.f32 0.0, %v3033
      %v3035 = vpop.f32.mrf.mxu0
      %3036 = vdwg.mxu0
      %v3037 = vadd.f32 %v2948, %v3029
      %v3038 = vadd.f32 %v2949, %v3034
      %s3039 = sadd.s32 %s2503, 2
      %s3040 = smul.u32 %s3039, 24
      %s3041 = scalar_lea.vmem [#allocation2], %s3040
      %v3042 = vld [vmem:[%s3041] sm:$0xff]
      %v3043 = vld [vmem:[%s3041 + $0x8] sm:$0xff]
      %v3044 = vld [vmem:[%s1738] sm:$0xf]
      %v3046 = vsel %vm284, %v3042, 0
      %v3049 = vsel %vm284, %v3043, 0
      %v3052 = vsel %vm451, %v3044, 0
      %3054 = vmatprep.subr.mxu0 0.0
      %3055 = vmatpush1.msra.mxu0 0.0
      %3056 = vmatprep.subr.mxu0 0.0
      %3057 = vmatpush1.msra.mxu0 0.0
      %3058 = vmatprep.subr.mxu0 0.0
      %3059 = vmatpush1.msra.mxu0 0.0
      %3060 = vmatprep.subr.mxu0 0.0
      %3061 = vmatpush1.msra.mxu0 0.0
      %3062 = vmatprep.subr.mxu0 0.0
      %3063 = vmatpush1.msra.mxu0 0.0
      %3064 = vmatprep.subr.mxu0 0.0
      %3065 = vmatpush1.msra.mxu0 0.0
      %3066 = vmatprep.subr.mxu0 0.0
      %3067 = vmatpush1.msra.mxu0 0.0
      %3068 = vmatprep.subr.mxu0 0.0
      %3069 = vmatpush1.msra.mxu0 0.0
      %3070 = vmatprep.subr.mxu0 0.0
      %3071 = vmatpush1.msra.mxu0 0.0
      %3072 = vmatprep.subr.mxu0 0.0
      %3073 = vmatpush1.msra.mxu0 0.0
      %3074 = vmatprep.subr.mxu0 0.0
      %3075 = vmatpush1.msra.mxu0 0.0
      %3076 = vmatprep.subr.mxu0 0.0
      %3077 = vmatpush1.msra.mxu0 0.0
      %3078 = vmatprep.subr.mxu0 0.0
      %3079 = vmatpush1.msra.mxu0 0.0
      %3080 = vmatprep.subr.mxu0 0.0
      %3081 = vmatpush1.msra.mxu0 0.0
      %3082 = vmatprep.subr.mxu0 0.0
      %3083 = vmatpush1.msra.mxu0 0.0
      %3084 = vmatprep.subr.mxu0 0.0
      %3085 = vmatpush1.msra.mxu0 %v3052
      %3086 = vmatprep.subr.mxu0 0.0
      %3087 = vmatpush2.msra.mxu0 0.0
      %3088 = vmatprep.subr.mxu0 0.0
      %3089 = vmatpush2.msra.mxu0 0.0
      %3090 = vmatprep.subr.mxu0 0.0
      %3091 = vmatpush2.msra.mxu0 0.0
      %3092 = vmatprep.subr.mxu0 0.0
      %3093 = vmatpush2.msra.mxu0 0.0
      %3094 = vmatprep.subr.mxu0 0.0
      %3095 = vmatpush2.msra.mxu0 0.0
      %3096 = vmatprep.subr.mxu0 0.0
      %3097 = vmatpush2.msra.mxu0 0.0
      %3098 = vmatprep.subr.mxu0 0.0
      %3099 = vmatpush2.msra.mxu0 0.0
      %3100 = vmatprep.subr.mxu0 0.0
      %3101 = vmatpush2.msra.mxu0 0.0
      %3102 = vmatprep.subr.mxu0 0.0
      %3103 = vmatpush2.msra.mxu0 0.0
      %3104 = vmatprep.subr.mxu0 0.0
      %3105 = vmatpush2.msra.mxu0 0.0
      %3106 = vmatprep.subr.mxu0 0.0
      %3107 = vmatpush2.msra.mxu0 0.0
      %3108 = vmatprep.subr.mxu0 0.0
      %3109 = vmatpush2.msra.mxu0 0.0
      %3110 = vmatprep.subr.mxu0 0.0
      %3111 = vmatpush2.msra.mxu0 0.0
      %3112 = vmatprep.subr.mxu0 0.0
      %3113 = vmatpush2.msra.mxu0 0.0
      %3114 = vmatprep.subr.mxu0 0.0
      %3115 = vmatpush2.msra.mxu0 0.0
      %3116 = vmatprep.subr.mxu0 0.0
      %3117 = vmatpush2.msra.mxu0 0.0
      %3118 = vmatprep.mubr.f32.mxu0 0.0
      %3119 = vmatmul.mubr.f32.gmra.mxu0 %v3046
      %v3120 = vpop.f32.mrf.mxu0
      %v3121 = vadd.f32 0.0, %v3120
      %v3122 = vpop.f32.mrf.mxu0
      %3123 = vmatprep.mubr.f32.mxu0 0.0
      %3124 = vmatmul.mubr.f32.gmra.mxu0 %v3049
      %v3125 = vpop.f32.mrf.mxu0
      %v3126 = vadd.f32 0.0, %v3125
      %v3127 = vpop.f32.mrf.mxu0
      %3128 = vdwg.mxu0
      %v3129 = vadd.f32 %v3037, %v3121
      %v3130 = vadd.f32 %v3038, %v3126
      %v3131 = vld [vmem:[%s3041 + $0x1] sm:$0xff]
      %v3132 = vld [vmem:[%s3041 + $0x9] sm:$0xff]
      %v3133 = vld [vmem:[%s1968] sm:$0xf]
      %v3135 = vsel %vm284, %v3131, 0
      %v3138 = vsel %vm284, %v3132, 0
      %v3141 = vsel %vm451, %v3133, 0
      %3143 = vmatprep.subr.mxu0 0.0
      %3144 = vmatpush1.msra.mxu0 0.0
      %3145 = vmatprep.subr.mxu0 0.0
      %3146 = vmatpush1.msra.mxu0 0.0
      %3147 = vmatprep.subr.mxu0 0.0
      %3148 = vmatpush1.msra.mxu0 0.0
      %3149 = vmatprep.subr.mxu0 0.0
      %3150 = vmatpush1.msra.mxu0 0.0
      %3151 = vmatprep.subr.mxu0 0.0
      %3152 = vmatpush1.msra.mxu0 0.0
      %3153 = vmatprep.subr.mxu0 0.0
      %3154 = vmatpush1.msra.mxu0 0.0
      %3155 = vmatprep.subr.mxu0 0.0
      %3156 = vmatpush1.msra.mxu0 0.0
      %3157 = vmatprep.subr.mxu0 0.0
      %3158 = vmatpush1.msra.mxu0 0.0
      %3159 = vmatprep.subr.mxu0 0.0
      %3160 = vmatpush1.msra.mxu0 0.0
      %3161 = vmatprep.subr.mxu0 0.0
      %3162 = vmatpush1.msra.mxu0 0.0
      %3163 = vmatprep.subr.mxu0 0.0
      %3164 = vmatpush1.msra.mxu0 0.0
      %3165 = vmatprep.subr.mxu0 0.0
      %3166 = vmatpush1.msra.mxu0 0.0
      %3167 = vmatprep.subr.mxu0 0.0
      %3168 = vmatpush1.msra.mxu0 0.0
      %3169 = vmatprep.subr.mxu0 0.0
      %3170 = vmatpush1.msra.mxu0 0.0
      %3171 = vmatprep.subr.mxu0 0.0
      %3172 = vmatpush1.msra.mxu0 0.0
      %3173 = vmatprep.subr.mxu0 0.0
      %3174 = vmatpush1.msra.mxu0 %v3141
      %3175 = vmatprep.subr.mxu0 0.0
      %3176 = vmatpush2.msra.mxu0 0.0
      %3177 = vmatprep.subr.mxu0 0.0
      %3178 = vmatpush2.msra.mxu0 0.0
      %3179 = vmatprep.subr.mxu0 0.0
      %3180 = vmatpush2.msra.mxu0 0.0
      %3181 = vmatprep.subr.mxu0 0.0
      %3182 = vmatpush2.msra.mxu0 0.0
      %3183 = vmatprep.subr.mxu0 0.0
      %3184 = vmatpush2.msra.mxu0 0.0
      %3185 = vmatprep.subr.mxu0 0.0
      %3186 = vmatpush2.msra.mxu0 0.0
      %3187 = vmatprep.subr.mxu0 0.0
      %3188 = vmatpush2.msra.mxu0 0.0
      %3189 = vmatprep.subr.mxu0 0.0
      %3190 = vmatpush2.msra.mxu0 0.0
      %3191 = vmatprep.subr.mxu0 0.0
      %3192 = vmatpush2.msra.mxu0 0.0
      %3193 = vmatprep.subr.mxu0 0.0
      %3194 = vmatpush2.msra.mxu0 0.0
      %3195 = vmatprep.subr.mxu0 0.0
      %3196 = vmatpush2.msra.mxu0 0.0
      %3197 = vmatprep.subr.mxu0 0.0
      %3198 = vmatpush2.msra.mxu0 0.0
      %3199 = vmatprep.subr.mxu0 0.0
      %3200 = vmatpush2.msra.mxu0 0.0
      %3201 = vmatprep.subr.mxu0 0.0
      %3202 = vmatpush2.msra.mxu0 0.0
      %3203 = vmatprep.subr.mxu0 0.0
      %3204 = vmatpush2.msra.mxu0 0.0
      %3205 = vmatprep.subr.mxu0 0.0
      %3206 = vmatpush2.msra.mxu0 0.0
      %3207 = vmatprep.mubr.f32.mxu0 0.0
      %3208 = vmatmul.mubr.f32.gmra.mxu0 %v3135
      %v3209 = vpop.f32.mrf.mxu0
      %v3210 = vadd.f32 0.0, %v3209
      %v3211 = vpop.f32.mrf.mxu0
      %3212 = vmatprep.mubr.f32.mxu0 0.0
      %3213 = vmatmul.mubr.f32.gmra.mxu0 %v3138
      %v3214 = vpop.f32.mrf.mxu0
      %v3215 = vadd.f32 0.0, %v3214
      %v3216 = vpop.f32.mrf.mxu0
      %3217 = vdwg.mxu0
      %v3218 = vadd.f32 %v3129, %v3210
      %v3219 = vadd.f32 %v3130, %v3215
      %v3220 = vld [vmem:[%s3041 + $0x2] sm:$0xff]
      %v3221 = vld [vmem:[%s3041 + $0xa] sm:$0xff]
      %v3222 = vld [vmem:[%s2198] sm:$0xf]
      %v3224 = vsel %vm284, %v3220, 0
      %v3227 = vsel %vm284, %v3221, 0
      %v3230 = vsel %vm451, %v3222, 0
      %3232 = vmatprep.subr.mxu0 0.0
      %3233 = vmatpush1.msra.mxu0 0.0
      %3234 = vmatprep.subr.mxu0 0.0
      %3235 = vmatpush1.msra.mxu0 0.0
      %3236 = vmatprep.subr.mxu0 0.0
      %3237 = vmatpush1.msra.mxu0 0.0
      %3238 = vmatprep.subr.mxu0 0.0
      %3239 = vmatpush1.msra.mxu0 0.0
      %3240 = vmatprep.subr.mxu0 0.0
      %3241 = vmatpush1.msra.mxu0 0.0
      %3242 = vmatprep.subr.mxu0 0.0
      %3243 = vmatpush1.msra.mxu0 0.0
      %3244 = vmatprep.subr.mxu0 0.0
      %3245 = vmatpush1.msra.mxu0 0.0
      %3246 = vmatprep.subr.mxu0 0.0
      %3247 = vmatpush1.msra.mxu0 0.0
      %3248 = vmatprep.subr.mxu0 0.0
      %3249 = vmatpush1.msra.mxu0 0.0
      %3250 = vmatprep.subr.mxu0 0.0
      %3251 = vmatpush1.msra.mxu0 0.0
      %3252 = vmatprep.subr.mxu0 0.0
      %3253 = vmatpush1.msra.mxu0 0.0
      %3254 = vmatprep.subr.mxu0 0.0
      %3255 = vmatpush1.msra.mxu0 0.0
      %3256 = vmatprep.subr.mxu0 0.0
      %3257 = vmatpush1.msra.mxu0 0.0
      %3258 = vmatprep.subr.mxu0 0.0
      %3259 = vmatpush1.msra.mxu0 0.0
      %3260 = vmatprep.subr.mxu0 0.0
      %3261 = vmatpush1.msra.mxu0 0.0
      %3262 = vmatprep.subr.mxu0 0.0
      %3263 = vmatpush1.msra.mxu0 %v3230
      %3264 = vmatprep.subr.mxu0 0.0
      %3265 = vmatpush2.msra.mxu0 0.0
      %3266 = vmatprep.subr.mxu0 0.0
      %3267 = vmatpush2.msra.mxu0 0.0
      %3268 = vmatprep.subr.mxu0 0.0
      %3269 = vmatpush2.msra.mxu0 0.0
      %3270 = vmatprep.subr.mxu0 0.0
      %3271 = vmatpush2.msra.mxu0 0.0
      %3272 = vmatprep.subr.mxu0 0.0
      %3273 = vmatpush2.msra.mxu0 0.0
      %3274 = vmatprep.subr.mxu0 0.0
      %3275 = vmatpush2.msra.mxu0 0.0
      %3276 = vmatprep.subr.mxu0 0.0
      %3277 = vmatpush2.msra.mxu0 0.0
      %3278 = vmatprep.subr.mxu0 0.0
      %3279 = vmatpush2.msra.mxu0 0.0
      %3280 = vmatprep.subr.mxu0 0.0
      %3281 = vmatpush2.msra.mxu0 0.0
      %3282 = vmatprep.subr.mxu0 0.0
      %3283 = vmatpush2.msra.mxu0 0.0
      %3284 = vmatprep.subr.mxu0 0.0
      %3285 = vmatpush2.msra.mxu0 0.0
      %3286 = vmatprep.subr.mxu0 0.0
      %3287 = vmatpush2.msra.mxu0 0.0
      %3288 = vmatprep.subr.mxu0 0.0
      %3289 = vmatpush2.msra.mxu0 0.0
      %3290 = vmatprep.subr.mxu0 0.0
      %3291 = vmatpush2.msra.mxu0 0.0
      %3292 = vmatprep.subr.mxu0 0.0
      %3293 = vmatpush2.msra.mxu0 0.0
      %3294 = vmatprep.subr.mxu0 0.0
      %3295 = vmatpush2.msra.mxu0 0.0
      %3296 = vmatprep.mubr.f32.mxu0 0.0
      %3297 = vmatmul.mubr.f32.gmra.mxu0 %v3224
      %v3298 = vpop.f32.mrf.mxu0
      %v3299 = vadd.f32 0.0, %v3298
      %v3300 = vpop.f32.mrf.mxu0
      %3301 = vmatprep.mubr.f32.mxu0 0.0
      %3302 = vmatmul.mubr.f32.gmra.mxu0 %v3227
      %v3303 = vpop.f32.mrf.mxu0
      %v3304 = vadd.f32 0.0, %v3303
      %v3305 = vpop.f32.mrf.mxu0
      %3306 = vdwg.mxu0
      %v3307 = vadd.f32 %v3218, %v3299
      %v3308 = vadd.f32 %v3219, %v3304
      %v3309 = vld [vmem:[%s2] sm:$0x1]
      %v3311 = vlaneseq
      %v3312 = vshrl.u32 %v3311, 7
      %v3313 = vsub.s32 0, %v3312
      %v3314 = vrot.slane %v3309, %v3313
      %v3316 = vadd.f32 %v3307, %v3314
      %v3317 = vadd.f32 %v3308, %v3314
      %vm3318 = vcmp.gt.f32.partialorder %v3316, 0.0
      %vm3319 = vcmp.gt.f32.partialorder %v3317, 0.0
      %v3320 = vmul.f32 %v3316, 0.01
      %v3321 = vmul.f32 %v3317, 0.01
      %v3322 = vsel %vm3318, %v3316, %v3320
      %v3323 = vsel %vm3319, %v3317, %v3321
      %3324 = vst.msk [vmem:[#allocation3 + $0x1] sm:$0xff] %vm2484, %v3322
      %3325 = vst.msk [vmem:[#allocation3 + $0x9] sm:$0xff] %vm2484, %v3323
      %s3326 = sadd.s32 %s250, 8
      %p3327 = scmp.lt.s32.totalorder %s3326, 15
      %s3328 = scalar_select %p3327, %s3326, 15
      %s3329 = smul.u32 %s3328, 24
      %s3330 = scalar_lea.vmem [#allocation2], %s3329
      %v3331 = vld [vmem:[%s3330] sm:$0xff]
      %v3332 = vld [vmem:[%s3330 + $0x8] sm:$0xff]
      %v3333 = vld [vmem:[%s1] sm:$0xf]
      %v3334 = vld [vmem:[%s3330 + $0x1] sm:$0xff]
      %v3335 = vld [vmem:[%s3330 + $0x9] sm:$0xff]
      %v3336 = vld [vmem:[%s401] sm:$0xf]
      %v3338 = vsel %vm284, %v3334, 0
      %v3341 = vsel %vm284, %v3335, 0
      %v3344 = vsel %vm451, %v3336, 0
      %3346 = vmatprep.subr.mxu0 0.0
      %3347 = vmatpush1.msra.mxu0 0.0
      %3348 = vmatprep.subr.mxu0 0.0
      %3349 = vmatpush1.msra.mxu0 0.0
      %3350 = vmatprep.subr.mxu0 0.0
      %3351 = vmatpush1.msra.mxu0 0.0
      %3352 = vmatprep.subr.mxu0 0.0
      %3353 = vmatpush1.msra.mxu0 0.0
      %3354 = vmatprep.subr.mxu0 0.0
      %3355 = vmatpush1.msra.mxu0 0.0
      %3356 = vmatprep.subr.mxu0 0.0
      %3357 = vmatpush1.msra.mxu0 0.0
      %3358 = vmatprep.subr.mxu0 0.0
      %3359 = vmatpush1.msra.mxu0 0.0
      %3360 = vmatprep.subr.mxu0 0.0
      %3361 = vmatpush1.msra.mxu0 0.0
      %3362 = vmatprep.subr.mxu0 0.0
      %3363 = vmatpush1.msra.mxu0 0.0
      %3364 = vmatprep.subr.mxu0 0.0
      %3365 = vmatpush1.msra.mxu0 0.0
      %3366 = vmatprep.subr.mxu0 0.0
      %3367 = vmatpush1.msra.mxu0 0.0
      %3368 = vmatprep.subr.mxu0 0.0
      %3369 = vmatpush1.msra.mxu0 0.0
      %3370 = vmatprep.subr.mxu0 0.0
      %3371 = vmatpush1.msra.mxu0 0.0
      %3372 = vmatprep.subr.mxu0 0.0
      %3373 = vmatpush1.msra.mxu0 0.0
      %3374 = vmatprep.subr.mxu0 0.0
      %3375 = vmatpush1.msra.mxu0 0.0
      %3376 = vmatprep.subr.mxu0 0.0
      %3377 = vmatpush1.msra.mxu0 %v3344
      %3378 = vmatprep.subr.mxu0 0.0
      %3379 = vmatpush2.msra.mxu0 0.0
      %3380 = vmatprep.subr.mxu0 0.0
      %3381 = vmatpush2.msra.mxu0 0.0
      %3382 = vmatprep.subr.mxu0 0.0
      %3383 = vmatpush2.msra.mxu0 0.0
      %3384 = vmatprep.subr.mxu0 0.0
      %3385 = vmatpush2.msra.mxu0 0.0
      %3386 = vmatprep.subr.mxu0 0.0
      %3387 = vmatpush2.msra.mxu0 0.0
      %3388 = vmatprep.subr.mxu0 0.0
      %3389 = vmatpush2.msra.mxu0 0.0
      %3390 = vmatprep.subr.mxu0 0.0
      %3391 = vmatpush2.msra.mxu0 0.0
      %3392 = vmatprep.subr.mxu0 0.0
      %3393 = vmatpush2.msra.mxu0 0.0
      %3394 = vmatprep.subr.mxu0 0.0
      %3395 = vmatpush2.msra.mxu0 0.0
      %3396 = vmatprep.subr.mxu0 0.0
      %3397 = vmatpush2.msra.mxu0 0.0
      %3398 = vmatprep.subr.mxu0 0.0
      %3399 = vmatpush2.msra.mxu0 0.0
      %3400 = vmatprep.subr.mxu0 0.0
      %3401 = vmatpush2.msra.mxu0 0.0
      %3402 = vmatprep.subr.mxu0 0.0
      %3403 = vmatpush2.msra.mxu0 0.0
      %3404 = vmatprep.subr.mxu0 0.0
      %3405 = vmatpush2.msra.mxu0 0.0
      %3406 = vmatprep.subr.mxu0 0.0
      %3407 = vmatpush2.msra.mxu0 0.0
      %3408 = vmatprep.subr.mxu0 0.0
      %3409 = vmatpush2.msra.mxu0 0.0
      %3410 = vmatprep.mubr.f32.mxu0 0.0
      %3411 = vmatmul.mubr.f32.gmra.mxu0 %v3338
      %v3412 = vpop.f32.mrf.mxu0
      %v3413 = vadd.f32 0.0, %v3412
      %v3414 = vpop.f32.mrf.mxu0
      %3415 = vmatprep.mubr.f32.mxu0 0.0
      %3416 = vmatmul.mubr.f32.gmra.mxu0 %v3341
      %v3417 = vpop.f32.mrf.mxu0
      %v3418 = vadd.f32 0.0, %v3417
      %v3419 = vpop.f32.mrf.mxu0
      %3420 = vdwg.mxu0
      %v3422 = vsel %vm284, %v3331, 0
      %v3425 = vsel %vm284, %v3332, 0
      %v3428 = vsel %vm451, %v3333, 0
      %3430 = vmatprep.subr.mxu0 0.0
      %3431 = vmatpush1.msra.mxu0 0.0
      %3432 = vmatprep.subr.mxu0 0.0
      %3433 = vmatpush1.msra.mxu0 0.0
      %3434 = vmatprep.subr.mxu0 0.0
      %3435 = vmatpush1.msra.mxu0 0.0
      %3436 = vmatprep.subr.mxu0 0.0
      %3437 = vmatpush1.msra.mxu0 0.0
      %3438 = vmatprep.subr.mxu0 0.0
      %3439 = vmatpush1.msra.mxu0 0.0
      %3440 = vmatprep.subr.mxu0 0.0
      %3441 = vmatpush1.msra.mxu0 0.0
      %3442 = vmatprep.subr.mxu0 0.0
      %3443 = vmatpush1.msra.mxu0 0.0
      %3444 = vmatprep.subr.mxu0 0.0
      %3445 = vmatpush1.msra.mxu0 0.0
      %3446 = vmatprep.subr.mxu0 0.0
      %3447 = vmatpush1.msra.mxu0 0.0
      %3448 = vmatprep.subr.mxu0 0.0
      %3449 = vmatpush1.msra.mxu0 0.0
      %3450 = vmatprep.subr.mxu0 0.0
      %3451 = vmatpush1.msra.mxu0 0.0
      %3452 = vmatprep.subr.mxu0 0.0
      %3453 = vmatpush1.msra.mxu0 0.0
      %3454 = vmatprep.subr.mxu0 0.0
      %3455 = vmatpush1.msra.mxu0 0.0
      %3456 = vmatprep.subr.mxu0 0.0
      %3457 = vmatpush1.msra.mxu0 0.0
      %3458 = vmatprep.subr.mxu0 0.0
      %3459 = vmatpush1.msra.mxu0 0.0
      %3460 = vmatprep.subr.mxu0 0.0
      %3461 = vmatpush1.msra.mxu0 %v3428
      %3462 = vmatprep.subr.mxu0 0.0
      %3463 = vmatpush2.msra.mxu0 0.0
      %3464 = vmatprep.subr.mxu0 0.0
      %3465 = vmatpush2.msra.mxu0 0.0
      %3466 = vmatprep.subr.mxu0 0.0
      %3467 = vmatpush2.msra.mxu0 0.0
      %3468 = vmatprep.subr.mxu0 0.0
      %3469 = vmatpush2.msra.mxu0 0.0
      %3470 = vmatprep.subr.mxu0 0.0
      %3471 = vmatpush2.msra.mxu0 0.0
      %3472 = vmatprep.subr.mxu0 0.0
      %3473 = vmatpush2.msra.mxu0 0.0
      %3474 = vmatprep.subr.mxu0 0.0
      %3475 = vmatpush2.msra.mxu0 0.0
      %3476 = vmatprep.subr.mxu0 0.0
      %3477 = vmatpush2.msra.mxu0 0.0
      %3478 = vmatprep.subr.mxu0 0.0
      %3479 = vmatpush2.msra.mxu0 0.0
      %3480 = vmatprep.subr.mxu0 0.0
      %3481 = vmatpush2.msra.mxu0 0.0
      %3482 = vmatprep.subr.mxu0 0.0
      %3483 = vmatpush2.msra.mxu0 0.0
      %3484 = vmatprep.subr.mxu0 0.0
      %3485 = vmatpush2.msra.mxu0 0.0
      %3486 = vmatprep.subr.mxu0 0.0
      %3487 = vmatpush2.msra.mxu0 0.0
      %3488 = vmatprep.subr.mxu0 0.0
      %3489 = vmatpush2.msra.mxu0 0.0
      %3490 = vmatprep.subr.mxu0 0.0
      %3491 = vmatpush2.msra.mxu0 0.0
      %3492 = vmatprep.subr.mxu0 0.0
      %3493 = vmatpush2.msra.mxu0 0.0
      %3494 = vmatprep.mubr.f32.mxu0 0.0
      %3495 = vmatmul.mubr.f32.gmra.mxu0 %v3422
      %v3496 = vpop.f32.mrf.mxu0
      %v3497 = vadd.f32 %v3413, %v3496
      %v3498 = vpop.f32.mrf.mxu0
      %3499 = vmatprep.mubr.f32.mxu0 0.0
      %3500 = vmatmul.mubr.f32.gmra.mxu0 %v3425
      %v3501 = vpop.f32.mrf.mxu0
      %v3502 = vadd.f32 %v3418, %v3501
      %v3503 = vpop.f32.mrf.mxu0
      %3504 = vdwg.mxu0
      %v3505 = vld [vmem:[%s3330 + $0x2] sm:$0xff]
      %v3506 = vld [vmem:[%s3330 + $0xa] sm:$0xff]
      %v3507 = vld [vmem:[%s812] sm:$0xf]
      %v3509 = vsel %vm284, %v3505, 0
      %v3512 = vsel %vm284, %v3506, 0
      %v3515 = vsel %vm451, %v3507, 0
      %3517 = vmatprep.subr.mxu0 0.0
      %3518 = vmatpush1.msra.mxu0 0.0
      %3519 = vmatprep.subr.mxu0 0.0
      %3520 = vmatpush1.msra.mxu0 0.0
      %3521 = vmatprep.subr.mxu0 0.0
      %3522 = vmatpush1.msra.mxu0 0.0
      %3523 = vmatprep.subr.mxu0 0.0
      %3524 = vmatpush1.msra.mxu0 0.0
      %3525 = vmatprep.subr.mxu0 0.0
      %3526 = vmatpush1.msra.mxu0 0.0
      %3527 = vmatprep.subr.mxu0 0.0
      %3528 = vmatpush1.msra.mxu0 0.0
      %3529 = vmatprep.subr.mxu0 0.0
      %3530 = vmatpush1.msra.mxu0 0.0
      %3531 = vmatprep.subr.mxu0 0.0
      %3532 = vmatpush1.msra.mxu0 0.0
      %3533 = vmatprep.subr.mxu0 0.0
      %3534 = vmatpush1.msra.mxu0 0.0
      %3535 = vmatprep.subr.mxu0 0.0
      %3536 = vmatpush1.msra.mxu0 0.0
      %3537 = vmatprep.subr.mxu0 0.0
      %3538 = vmatpush1.msra.mxu0 0.0
      %3539 = vmatprep.subr.mxu0 0.0
      %3540 = vmatpush1.msra.mxu0 0.0
      %3541 = vmatprep.subr.mxu0 0.0
      %3542 = vmatpush1.msra.mxu0 0.0
      %3543 = vmatprep.subr.mxu0 0.0
      %3544 = vmatpush1.msra.mxu0 0.0
      %3545 = vmatprep.subr.mxu0 0.0
      %3546 = vmatpush1.msra.mxu0 0.0
      %3547 = vmatprep.subr.mxu0 0.0
      %3548 = vmatpush1.msra.mxu0 %v3515
      %3549 = vmatprep.subr.mxu0 0.0
      %3550 = vmatpush2.msra.mxu0 0.0
      %3551 = vmatprep.subr.mxu0 0.0
      %3552 = vmatpush2.msra.mxu0 0.0
      %3553 = vmatprep.subr.mxu0 0.0
      %3554 = vmatpush2.msra.mxu0 0.0
      %3555 = vmatprep.subr.mxu0 0.0
      %3556 = vmatpush2.msra.mxu0 0.0
      %3557 = vmatprep.subr.mxu0 0.0
      %3558 = vmatpush2.msra.mxu0 0.0
      %3559 = vmatprep.subr.mxu0 0.0
      %3560 = vmatpush2.msra.mxu0 0.0
      %3561 = vmatprep.subr.mxu0 0.0
      %3562 = vmatpush2.msra.mxu0 0.0
      %3563 = vmatprep.subr.mxu0 0.0
      %3564 = vmatpush2.msra.mxu0 0.0
      %3565 = vmatprep.subr.mxu0 0.0
      %3566 = vmatpush2.msra.mxu0 0.0
      %3567 = vmatprep.subr.mxu0 0.0
      %3568 = vmatpush2.msra.mxu0 0.0
      %3569 = vmatprep.subr.mxu0 0.0
      %3570 = vmatpush2.msra.mxu0 0.0
      %3571 = vmatprep.subr.mxu0 0.0
      %3572 = vmatpush2.msra.mxu0 0.0
      %3573 = vmatprep.subr.mxu0 0.0
      %3574 = vmatpush2.msra.mxu0 0.0
      %3575 = vmatprep.subr.mxu0 0.0
      %3576 = vmatpush2.msra.mxu0 0.0
      %3577 = vmatprep.subr.mxu0 0.0
      %3578 = vmatpush2.msra.mxu0 0.0
      %3579 = vmatprep.subr.mxu0 0.0
      %3580 = vmatpush2.msra.mxu0 0.0
      %3581 = vmatprep.mubr.f32.mxu0 0.0
      %3582 = vmatmul.mubr.f32.gmra.mxu0 %v3509
      %v3583 = vpop.f32.mrf.mxu0
      %v3584 = vadd.f32 0.0, %v3583
      %v3585 = vpop.f32.mrf.mxu0
      %3586 = vmatprep.mubr.f32.mxu0 0.0
      %3587 = vmatmul.mubr.f32.gmra.mxu0 %v3512
      %v3588 = vpop.f32.mrf.mxu0
      %v3589 = vadd.f32 0.0, %v3588
      %v3590 = vpop.f32.mrf.mxu0
      %3591 = vdwg.mxu0
      %v3592 = vadd.f32 %v3497, %v3584
      %v3593 = vadd.f32 %v3502, %v3589
      %s3594 = sadd.s32 %s3328, 1
      %s3595 = smul.u32 %s3594, 24
      %s3596 = scalar_lea.vmem [#allocation2], %s3595
      %v3597 = vld [vmem:[%s3596] sm:$0xff]
      %v3598 = vld [vmem:[%s3596 + $0x8] sm:$0xff]
      %v3599 = vld [vmem:[%s1045] sm:$0xf]
      %v3601 = vsel %vm284, %v3597, 0
      %v3604 = vsel %vm284, %v3598, 0
      %v3607 = vsel %vm451, %v3599, 0
      %3609 = vmatprep.subr.mxu0 0.0
      %3610 = vmatpush1.msra.mxu0 0.0
      %3611 = vmatprep.subr.mxu0 0.0
      %3612 = vmatpush1.msra.mxu0 0.0
      %3613 = vmatprep.subr.mxu0 0.0
      %3614 = vmatpush1.msra.mxu0 0.0
      %3615 = vmatprep.subr.mxu0 0.0
      %3616 = vmatpush1.msra.mxu0 0.0
      %3617 = vmatprep.subr.mxu0 0.0
      %3618 = vmatpush1.msra.mxu0 0.0
      %3619 = vmatprep.subr.mxu0 0.0
      %3620 = vmatpush1.msra.mxu0 0.0
      %3621 = vmatprep.subr.mxu0 0.0
      %3622 = vmatpush1.msra.mxu0 0.0
      %3623 = vmatprep.subr.mxu0 0.0
      %3624 = vmatpush1.msra.mxu0 0.0
      %3625 = vmatprep.subr.mxu0 0.0
      %3626 = vmatpush1.msra.mxu0 0.0
      %3627 = vmatprep.subr.mxu0 0.0
      %3628 = vmatpush1.msra.mxu0 0.0
      %3629 = vmatprep.subr.mxu0 0.0
      %3630 = vmatpush1.msra.mxu0 0.0
      %3631 = vmatprep.subr.mxu0 0.0
      %3632 = vmatpush1.msra.mxu0 0.0
      %3633 = vmatprep.subr.mxu0 0.0
      %3634 = vmatpush1.msra.mxu0 0.0
      %3635 = vmatprep.subr.mxu0 0.0
      %3636 = vmatpush1.msra.mxu0 0.0
      %3637 = vmatprep.subr.mxu0 0.0
      %3638 = vmatpush1.msra.mxu0 0.0
      %3639 = vmatprep.subr.mxu0 0.0
      %3640 = vmatpush1.msra.mxu0 %v3607
      %3641 = vmatprep.subr.mxu0 0.0
      %3642 = vmatpush2.msra.mxu0 0.0
      %3643 = vmatprep.subr.mxu0 0.0
      %3644 = vmatpush2.msra.mxu0 0.0
      %3645 = vmatprep.subr.mxu0 0.0
      %3646 = vmatpush2.msra.mxu0 0.0
      %3647 = vmatprep.subr.mxu0 0.0
      %3648 = vmatpush2.msra.mxu0 0.0
      %3649 = vmatprep.subr.mxu0 0.0
      %3650 = vmatpush2.msra.mxu0 0.0
      %3651 = vmatprep.subr.mxu0 0.0
      %3652 = vmatpush2.msra.mxu0 0.0
      %3653 = vmatprep.subr.mxu0 0.0
      %3654 = vmatpush2.msra.mxu0 0.0
      %3655 = vmatprep.subr.mxu0 0.0
      %3656 = vmatpush2.msra.mxu0 0.0
      %3657 = vmatprep.subr.mxu0 0.0
      %3658 = vmatpush2.msra.mxu0 0.0
      %3659 = vmatprep.subr.mxu0 0.0
      %3660 = vmatpush2.msra.mxu0 0.0
      %3661 = vmatprep.subr.mxu0 0.0
      %3662 = vmatpush2.msra.mxu0 0.0
      %3663 = vmatprep.subr.mxu0 0.0
      %3664 = vmatpush2.msra.mxu0 0.0
      %3665 = vmatprep.subr.mxu0 0.0
      %3666 = vmatpush2.msra.mxu0 0.0
      %3667 = vmatprep.subr.mxu0 0.0
      %3668 = vmatpush2.msra.mxu0 0.0
      %3669 = vmatprep.subr.mxu0 0.0
      %3670 = vmatpush2.msra.mxu0 0.0
      %3671 = vmatprep.subr.mxu0 0.0
      %3672 = vmatpush2.msra.mxu0 0.0
      %3673 = vmatprep.mubr.f32.mxu0 0.0
      %3674 = vmatmul.mubr.f32.gmra.mxu0 %v3601
      %v3675 = vpop.f32.mrf.mxu0
      %v3676 = vadd.f32 0.0, %v3675
      %v3677 = vpop.f32.mrf.mxu0
      %3678 = vmatprep.mubr.f32.mxu0 0.0
      %3679 = vmatmul.mubr.f32.gmra.mxu0 %v3604
      %v3680 = vpop.f32.mrf.mxu0
      %v3681 = vadd.f32 0.0, %v3680
      %v3682 = vpop.f32.mrf.mxu0
      %3683 = vdwg.mxu0
      %v3684 = vadd.f32 %v3592, %v3676
      %v3685 = vadd.f32 %v3593, %v3681
      %v3686 = vld [vmem:[%s3596 + $0x1] sm:$0xff]
      %v3687 = vld [vmem:[%s3596 + $0x9] sm:$0xff]
      %v3688 = vld [vmem:[%s1275] sm:$0xf]
      %v3690 = vsel %vm284, %v3686, 0
      %v3693 = vsel %vm284, %v3687, 0
      %v3696 = vsel %vm451, %v3688, 0
      %3698 = vmatprep.subr.mxu0 0.0
      %3699 = vmatpush1.msra.mxu0 0.0
      %3700 = vmatprep.subr.mxu0 0.0
      %3701 = vmatpush1.msra.mxu0 0.0
      %3702 = vmatprep.subr.mxu0 0.0
      %3703 = vmatpush1.msra.mxu0 0.0
      %3704 = vmatprep.subr.mxu0 0.0
      %3705 = vmatpush1.msra.mxu0 0.0
      %3706 = vmatprep.subr.mxu0 0.0
      %3707 = vmatpush1.msra.mxu0 0.0
      %3708 = vmatprep.subr.mxu0 0.0
      %3709 = vmatpush1.msra.mxu0 0.0
      %3710 = vmatprep.subr.mxu0 0.0
      %3711 = vmatpush1.msra.mxu0 0.0
      %3712 = vmatprep.subr.mxu0 0.0
      %3713 = vmatpush1.msra.mxu0 0.0
      %3714 = vmatprep.subr.mxu0 0.0
      %3715 = vmatpush1.msra.mxu0 0.0
      %3716 = vmatprep.subr.mxu0 0.0
      %3717 = vmatpush1.msra.mxu0 0.0
      %3718 = vmatprep.subr.mxu0 0.0
      %3719 = vmatpush1.msra.mxu0 0.0
      %3720 = vmatprep.subr.mxu0 0.0
      %3721 = vmatpush1.msra.mxu0 0.0
      %3722 = vmatprep.subr.mxu0 0.0
      %3723 = vmatpush1.msra.mxu0 0.0
      %3724 = vmatprep.subr.mxu0 0.0
      %3725 = vmatpush1.msra.mxu0 0.0
      %3726 = vmatprep.subr.mxu0 0.0
      %3727 = vmatpush1.msra.mxu0 0.0
      %3728 = vmatprep.subr.mxu0 0.0
      %3729 = vmatpush1.msra.mxu0 %v3696
      %3730 = vmatprep.subr.mxu0 0.0
      %3731 = vmatpush2.msra.mxu0 0.0
      %3732 = vmatprep.subr.mxu0 0.0
      %3733 = vmatpush2.msra.mxu0 0.0
      %3734 = vmatprep.subr.mxu0 0.0
      %3735 = vmatpush2.msra.mxu0 0.0
      %3736 = vmatprep.subr.mxu0 0.0
      %3737 = vmatpush2.msra.mxu0 0.0
      %3738 = vmatprep.subr.mxu0 0.0
      %3739 = vmatpush2.msra.mxu0 0.0
      %3740 = vmatprep.subr.mxu0 0.0
      %3741 = vmatpush2.msra.mxu0 0.0
      %3742 = vmatprep.subr.mxu0 0.0
      %3743 = vmatpush2.msra.mxu0 0.0
      %3744 = vmatprep.subr.mxu0 0.0
      %3745 = vmatpush2.msra.mxu0 0.0
      %3746 = vmatprep.subr.mxu0 0.0
      %3747 = vmatpush2.msra.mxu0 0.0
      %3748 = vmatprep.subr.mxu0 0.0
      %3749 = vmatpush2.msra.mxu0 0.0
      %3750 = vmatprep.subr.mxu0 0.0
      %3751 = vmatpush2.msra.mxu0 0.0
      %3752 = vmatprep.subr.mxu0 0.0
      %3753 = vmatpush2.msra.mxu0 0.0
      %3754 = vmatprep.subr.mxu0 0.0
      %3755 = vmatpush2.msra.mxu0 0.0
      %3756 = vmatprep.subr.mxu0 0.0
      %3757 = vmatpush2.msra.mxu0 0.0
      %3758 = vmatprep.subr.mxu0 0.0
      %3759 = vmatpush2.msra.mxu0 0.0
      %3760 = vmatprep.subr.mxu0 0.0
      %3761 = vmatpush2.msra.mxu0 0.0
      %3762 = vmatprep.mubr.f32.mxu0 0.0
      %3763 = vmatmul.mubr.f32.gmra.mxu0 %v3690
      %v3764 = vpop.f32.mrf.mxu0
      %v3765 = vadd.f32 0.0, %v3764
      %v3766 = vpop.f32.mrf.mxu0
      %3767 = vmatprep.mubr.f32.mxu0 0.0
      %3768 = vmatmul.mubr.f32.gmra.mxu0 %v3693
      %v3769 = vpop.f32.mrf.mxu0
      %v3770 = vadd.f32 0.0, %v3769
      %v3771 = vpop.f32.mrf.mxu0
      %3772 = vdwg.mxu0
      %v3773 = vadd.f32 %v3684, %v3765
      %v3774 = vadd.f32 %v3685, %v3770
      %v3775 = vld [vmem:[%s3596 + $0x2] sm:$0xff]
      %v3776 = vld [vmem:[%s3596 + $0xa] sm:$0xff]
      %v3777 = vld [vmem:[%s1505] sm:$0xf]
      %v3779 = vsel %vm284, %v3775, 0
      %v3782 = vsel %vm284, %v3776, 0
      %v3785 = vsel %vm451, %v3777, 0
      %3787 = vmatprep.subr.mxu0 0.0
      %3788 = vmatpush1.msra.mxu0 0.0
      %3789 = vmatprep.subr.mxu0 0.0
      %3790 = vmatpush1.msra.mxu0 0.0
      %3791 = vmatprep.subr.mxu0 0.0
      %3792 = vmatpush1.msra.mxu0 0.0
      %3793 = vmatprep.subr.mxu0 0.0
      %3794 = vmatpush1.msra.mxu0 0.0
      %3795 = vmatprep.subr.mxu0 0.0
      %3796 = vmatpush1.msra.mxu0 0.0
      %3797 = vmatprep.subr.mxu0 0.0
      %3798 = vmatpush1.msra.mxu0 0.0
      %3799 = vmatprep.subr.mxu0 0.0
      %3800 = vmatpush1.msra.mxu0 0.0
      %3801 = vmatprep.subr.mxu0 0.0
      %3802 = vmatpush1.msra.mxu0 0.0
      %3803 = vmatprep.subr.mxu0 0.0
      %3804 = vmatpush1.msra.mxu0 0.0
      %3805 = vmatprep.subr.mxu0 0.0
      %3806 = vmatpush1.msra.mxu0 0.0
      %3807 = vmatprep.subr.mxu0 0.0
      %3808 = vmatpush1.msra.mxu0 0.0
      %3809 = vmatprep.subr.mxu0 0.0
      %3810 = vmatpush1.msra.mxu0 0.0
      %3811 = vmatprep.subr.mxu0 0.0
      %3812 = vmatpush1.msra.mxu0 0.0
      %3813 = vmatprep.subr.mxu0 0.0
      %3814 = vmatpush1.msra.mxu0 0.0
      %3815 = vmatprep.subr.mxu0 0.0
      %3816 = vmatpush1.msra.mxu0 0.0
      %3817 = vmatprep.subr.mxu0 0.0
      %3818 = vmatpush1.msra.mxu0 %v3785
      %3819 = vmatprep.subr.mxu0 0.0
      %3820 = vmatpush2.msra.mxu0 0.0
      %3821 = vmatprep.subr.mxu0 0.0
      %3822 = vmatpush2.msra.mxu0 0.0
      %3823 = vmatprep.subr.mxu0 0.0
      %3824 = vmatpush2.msra.mxu0 0.0
      %3825 = vmatprep.subr.mxu0 0.0
      %3826 = vmatpush2.msra.mxu0 0.0
      %3827 = vmatprep.subr.mxu0 0.0
      %3828 = vmatpush2.msra.mxu0 0.0
      %3829 = vmatprep.subr.mxu0 0.0
      %3830 = vmatpush2.msra.mxu0 0.0
      %3831 = vmatprep.subr.mxu0 0.0
      %3832 = vmatpush2.msra.mxu0 0.0
      %3833 = vmatprep.subr.mxu0 0.0
      %3834 = vmatpush2.msra.mxu0 0.0
      %3835 = vmatprep.subr.mxu0 0.0
      %3836 = vmatpush2.msra.mxu0 0.0
      %3837 = vmatprep.subr.mxu0 0.0
      %3838 = vmatpush2.msra.mxu0 0.0
      %3839 = vmatprep.subr.mxu0 0.0
      %3840 = vmatpush2.msra.mxu0 0.0
      %3841 = vmatprep.subr.mxu0 0.0
      %3842 = vmatpush2.msra.mxu0 0.0
      %3843 = vmatprep.subr.mxu0 0.0
      %3844 = vmatpush2.msra.mxu0 0.0
      %3845 = vmatprep.subr.mxu0 0.0
      %3846 = vmatpush2.msra.mxu0 0.0
      %3847 = vmatprep.subr.mxu0 0.0
      %3848 = vmatpush2.msra.mxu0 0.0
      %3849 = vmatprep.subr.mxu0 0.0
      %3850 = vmatpush2.msra.mxu0 0.0
      %3851 = vmatprep.mubr.f32.mxu0 0.0
      %3852 = vmatmul.mubr.f32.gmra.mxu0 %v3779
      %v3853 = vpop.f32.mrf.mxu0
      %v3854 = vadd.f32 0.0, %v3853
      %v3855 = vpop.f32.mrf.mxu0
      %3856 = vmatprep.mubr.f32.mxu0 0.0
      %3857 = vmatmul.mubr.f32.gmra.mxu0 %v3782
      %v3858 = vpop.f32.mrf.mxu0
      %v3859 = vadd.f32 0.0, %v3858
      %v3860 = vpop.f32.mrf.mxu0
      %3861 = vdwg.mxu0
      %v3862 = vadd.f32 %v3773, %v3854
      %v3863 = vadd.f32 %v3774, %v3859
      %s3864 = sadd.s32 %s3328, 2
      %s3865 = smul.u32 %s3864, 24
      %s3866 = scalar_lea.vmem [#allocation2], %s3865
      %v3867 = vld [vmem:[%s3866] sm:$0xff]
      %v3868 = vld [vmem:[%s3866 + $0x8] sm:$0xff]
      %v3869 = vld [vmem:[%s1738] sm:$0xf]
      %v3871 = vsel %vm284, %v3867, 0
      %v3874 = vsel %vm284, %v3868, 0
      %v3877 = vsel %vm451, %v3869, 0
      %3879 = vmatprep.subr.mxu0 0.0
      %3880 = vmatpush1.msra.mxu0 0.0
      %3881 = vmatprep.subr.mxu0 0.0
      %3882 = vmatpush1.msra.mxu0 0.0
      %3883 = vmatprep.subr.mxu0 0.0
      %3884 = vmatpush1.msra.mxu0 0.0
      %3885 = vmatprep.subr.mxu0 0.0
      %3886 = vmatpush1.msra.mxu0 0.0
      %3887 = vmatprep.subr.mxu0 0.0
      %3888 = vmatpush1.msra.mxu0 0.0
      %3889 = vmatprep.subr.mxu0 0.0
      %3890 = vmatpush1.msra.mxu0 0.0
      %3891 = vmatprep.subr.mxu0 0.0
      %3892 = vmatpush1.msra.mxu0 0.0
      %3893 = vmatprep.subr.mxu0 0.0
      %3894 = vmatpush1.msra.mxu0 0.0
      %3895 = vmatprep.subr.mxu0 0.0
      %3896 = vmatpush1.msra.mxu0 0.0
      %3897 = vmatprep.subr.mxu0 0.0
      %3898 = vmatpush1.msra.mxu0 0.0
      %3899 = vmatprep.subr.mxu0 0.0
      %3900 = vmatpush1.msra.mxu0 0.0
      %3901 = vmatprep.subr.mxu0 0.0
      %3902 = vmatpush1.msra.mxu0 0.0
      %3903 = vmatprep.subr.mxu0 0.0
      %3904 = vmatpush1.msra.mxu0 0.0
      %3905 = vmatprep.subr.mxu0 0.0
      %3906 = vmatpush1.msra.mxu0 0.0
      %3907 = vmatprep.subr.mxu0 0.0
      %3908 = vmatpush1.msra.mxu0 0.0
      %3909 = vmatprep.subr.mxu0 0.0
      %3910 = vmatpush1.msra.mxu0 %v3877
      %3911 = vmatprep.subr.mxu0 0.0
      %3912 = vmatpush2.msra.mxu0 0.0
      %3913 = vmatprep.subr.mxu0 0.0
      %3914 = vmatpush2.msra.mxu0 0.0
      %3915 = vmatprep.subr.mxu0 0.0
      %3916 = vmatpush2.msra.mxu0 0.0
      %3917 = vmatprep.subr.mxu0 0.0
      %3918 = vmatpush2.msra.mxu0 0.0
      %3919 = vmatprep.subr.mxu0 0.0
      %3920 = vmatpush2.msra.mxu0 0.0
      %3921 = vmatprep.subr.mxu0 0.0
      %3922 = vmatpush2.msra.mxu0 0.0
      %3923 = vmatprep.subr.mxu0 0.0
      %3924 = vmatpush2.msra.mxu0 0.0
      %3925 = vmatprep.subr.mxu0 0.0
      %3926 = vmatpush2.msra.mxu0 0.0
      %3927 = vmatprep.subr.mxu0 0.0
      %3928 = vmatpush2.msra.mxu0 0.0
      %3929 = vmatprep.subr.mxu0 0.0
      %3930 = vmatpush2.msra.mxu0 0.0
      %3931 = vmatprep.subr.mxu0 0.0
      %3932 = vmatpush2.msra.mxu0 0.0
      %3933 = vmatprep.subr.mxu0 0.0
      %3934 = vmatpush2.msra.mxu0 0.0
      %3935 = vmatprep.subr.mxu0 0.0
      %3936 = vmatpush2.msra.mxu0 0.0
      %3937 = vmatprep.subr.mxu0 0.0
      %3938 = vmatpush2.msra.mxu0 0.0
      %3939 = vmatprep.subr.mxu0 0.0
      %3940 = vmatpush2.msra.mxu0 0.0
      %3941 = vmatprep.subr.mxu0 0.0
      %3942 = vmatpush2.msra.mxu0 0.0
      %3943 = vmatprep.mubr.f32.mxu0 0.0
      %3944 = vmatmul.mubr.f32.gmra.mxu0 %v3871
      %v3945 = vpop.f32.mrf.mxu0
      %v3946 = vadd.f32 0.0, %v3945
      %v3947 = vpop.f32.mrf.mxu0
      %3948 = vmatprep.mubr.f32.mxu0 0.0
      %3949 = vmatmul.mubr.f32.gmra.mxu0 %v3874
      %v3950 = vpop.f32.mrf.mxu0
      %v3951 = vadd.f32 0.0, %v3950
      %v3952 = vpop.f32.mrf.mxu0
      %3953 = vdwg.mxu0
      %v3954 = vadd.f32 %v3862, %v3946
      %v3955 = vadd.f32 %v3863, %v3951
      %v3956 = vld [vmem:[%s3866 + $0x1] sm:$0xff]
      %v3957 = vld [vmem:[%s3866 + $0x9] sm:$0xff]
      %v3958 = vld [vmem:[%s1968] sm:$0xf]
      %v3960 = vsel %vm284, %v3956, 0
      %v3963 = vsel %vm284, %v3957, 0
      %v3966 = vsel %vm451, %v3958, 0
      %3968 = vmatprep.subr.mxu0 0.0
      %3969 = vmatpush1.msra.mxu0 0.0
      %3970 = vmatprep.subr.mxu0 0.0
      %3971 = vmatpush1.msra.mxu0 0.0
      %3972 = vmatprep.subr.mxu0 0.0
      %3973 = vmatpush1.msra.mxu0 0.0
      %3974 = vmatprep.subr.mxu0 0.0
      %3975 = vmatpush1.msra.mxu0 0.0
      %3976 = vmatprep.subr.mxu0 0.0
      %3977 = vmatpush1.msra.mxu0 0.0
      %3978 = vmatprep.subr.mxu0 0.0
      %3979 = vmatpush1.msra.mxu0 0.0
      %3980 = vmatprep.subr.mxu0 0.0
      %3981 = vmatpush1.msra.mxu0 0.0
      %3982 = vmatprep.subr.mxu0 0.0
      %3983 = vmatpush1.msra.mxu0 0.0
      %3984 = vmatprep.subr.mxu0 0.0
      %3985 = vmatpush1.msra.mxu0 0.0
      %3986 = vmatprep.subr.mxu0 0.0
      %3987 = vmatpush1.msra.mxu0 0.0
      %3988 = vmatprep.subr.mxu0 0.0
      %3989 = vmatpush1.msra.mxu0 0.0
      %3990 = vmatprep.subr.mxu0 0.0
      %3991 = vmatpush1.msra.mxu0 0.0
      %3992 = vmatprep.subr.mxu0 0.0
      %3993 = vmatpush1.msra.mxu0 0.0
      %3994 = vmatprep.subr.mxu0 0.0
      %3995 = vmatpush1.msra.mxu0 0.0
      %3996 = vmatprep.subr.mxu0 0.0
      %3997 = vmatpush1.msra.mxu0 0.0
      %3998 = vmatprep.subr.mxu0 0.0
      %3999 = vmatpush1.msra.mxu0 %v3966
      %4000 = vmatprep.subr.mxu0 0.0
      %4001 = vmatpush2.msra.mxu0 0.0
      %4002 = vmatprep.subr.mxu0 0.0
      %4003 = vmatpush2.msra.mxu0 0.0
      %4004 = vmatprep.subr.mxu0 0.0
      %4005 = vmatpush2.msra.mxu0 0.0
      %4006 = vmatprep.subr.mxu0 0.0
      %4007 = vmatpush2.msra.mxu0 0.0
      %4008 = vmatprep.subr.mxu0 0.0
      %4009 = vmatpush2.msra.mxu0 0.0
      %4010 = vmatprep.subr.mxu0 0.0
      %4011 = vmatpush2.msra.mxu0 0.0
      %4012 = vmatprep.subr.mxu0 0.0
      %4013 = vmatpush2.msra.mxu0 0.0
      %4014 = vmatprep.subr.mxu0 0.0
      %4015 = vmatpush2.msra.mxu0 0.0
      %4016 = vmatprep.subr.mxu0 0.0
      %4017 = vmatpush2.msra.mxu0 0.0
      %4018 = vmatprep.subr.mxu0 0.0
      %4019 = vmatpush2.msra.mxu0 0.0
      %4020 = vmatprep.subr.mxu0 0.0
      %4021 = vmatpush2.msra.mxu0 0.0
      %4022 = vmatprep.subr.mxu0 0.0
      %4023 = vmatpush2.msra.mxu0 0.0
      %4024 = vmatprep.subr.mxu0 0.0
      %4025 = vmatpush2.msra.mxu0 0.0
      %4026 = vmatprep.subr.mxu0 0.0
      %4027 = vmatpush2.msra.mxu0 0.0
      %4028 = vmatprep.subr.mxu0 0.0
      %4029 = vmatpush2.msra.mxu0 0.0
      %4030 = vmatprep.subr.mxu0 0.0
      %4031 = vmatpush2.msra.mxu0 0.0
      %4032 = vmatprep.mubr.f32.mxu0 0.0
      %4033 = vmatmul.mubr.f32.gmra.mxu0 %v3960
      %v4034 = vpop.f32.mrf.mxu0
      %v4035 = vadd.f32 0.0, %v4034
      %v4036 = vpop.f32.mrf.mxu0
      %4037 = vmatprep.mubr.f32.mxu0 0.0
      %4038 = vmatmul.mubr.f32.gmra.mxu0 %v3963
      %v4039 = vpop.f32.mrf.mxu0
      %v4040 = vadd.f32 0.0, %v4039
      %v4041 = vpop.f32.mrf.mxu0
      %4042 = vdwg.mxu0
      %v4043 = vadd.f32 %v3954, %v4035
      %v4044 = vadd.f32 %v3955, %v4040
      %v4045 = vld [vmem:[%s3866 + $0x2] sm:$0xff]
      %v4046 = vld [vmem:[%s3866 + $0xa] sm:$0xff]
      %v4047 = vld [vmem:[%s2198] sm:$0xf]
      %v4049 = vsel %vm284, %v4045, 0
      %v4052 = vsel %vm284, %v4046, 0
      %v4055 = vsel %vm451, %v4047, 0
      %4057 = vmatprep.subr.mxu0 0.0
      %4058 = vmatpush1.msra.mxu0 0.0
      %4059 = vmatprep.subr.mxu0 0.0
      %4060 = vmatpush1.msra.mxu0 0.0
      %4061 = vmatprep.subr.mxu0 0.0
      %4062 = vmatpush1.msra.mxu0 0.0
      %4063 = vmatprep.subr.mxu0 0.0
      %4064 = vmatpush1.msra.mxu0 0.0
      %4065 = vmatprep.subr.mxu0 0.0
      %4066 = vmatpush1.msra.mxu0 0.0
      %4067 = vmatprep.subr.mxu0 0.0
      %4068 = vmatpush1.msra.mxu0 0.0
      %4069 = vmatprep.subr.mxu0 0.0
      %4070 = vmatpush1.msra.mxu0 0.0
      %4071 = vmatprep.subr.mxu0 0.0
      %4072 = vmatpush1.msra.mxu0 0.0
      %4073 = vmatprep.subr.mxu0 0.0
      %4074 = vmatpush1.msra.mxu0 0.0
      %4075 = vmatprep.subr.mxu0 0.0
      %4076 = vmatpush1.msra.mxu0 0.0
      %4077 = vmatprep.subr.mxu0 0.0
      %4078 = vmatpush1.msra.mxu0 0.0
      %4079 = vmatprep.subr.mxu0 0.0
      %4080 = vmatpush1.msra.mxu0 0.0
      %4081 = vmatprep.subr.mxu0 0.0
      %4082 = vmatpush1.msra.mxu0 0.0
      %4083 = vmatprep.subr.mxu0 0.0
      %4084 = vmatpush1.msra.mxu0 0.0
      %4085 = vmatprep.subr.mxu0 0.0
      %4086 = vmatpush1.msra.mxu0 0.0
      %4087 = vmatprep.subr.mxu0 0.0
      %4088 = vmatpush1.msra.mxu0 %v4055
      %4089 = vmatprep.subr.mxu0 0.0
      %4090 = vmatpush2.msra.mxu0 0.0
      %4091 = vmatprep.subr.mxu0 0.0
      %4092 = vmatpush2.msra.mxu0 0.0
      %4093 = vmatprep.subr.mxu0 0.0
      %4094 = vmatpush2.msra.mxu0 0.0
      %4095 = vmatprep.subr.mxu0 0.0
      %4096 = vmatpush2.msra.mxu0 0.0
      %4097 = vmatprep.subr.mxu0 0.0
      %4098 = vmatpush2.msra.mxu0 0.0
      %4099 = vmatprep.subr.mxu0 0.0
      %4100 = vmatpush2.msra.mxu0 0.0
      %4101 = vmatprep.subr.mxu0 0.0
      %4102 = vmatpush2.msra.mxu0 0.0
      %4103 = vmatprep.subr.mxu0 0.0
      %4104 = vmatpush2.msra.mxu0 0.0
      %4105 = vmatprep.subr.mxu0 0.0
      %4106 = vmatpush2.msra.mxu0 0.0
      %4107 = vmatprep.subr.mxu0 0.0
      %4108 = vmatpush2.msra.mxu0 0.0
      %4109 = vmatprep.subr.mxu0 0.0
      %4110 = vmatpush2.msra.mxu0 0.0
      %4111 = vmatprep.subr.mxu0 0.0
      %4112 = vmatpush2.msra.mxu0 0.0
      %4113 = vmatprep.subr.mxu0 0.0
      %4114 = vmatpush2.msra.mxu0 0.0
      %4115 = vmatprep.subr.mxu0 0.0
      %4116 = vmatpush2.msra.mxu0 0.0
      %4117 = vmatprep.subr.mxu0 0.0
      %4118 = vmatpush2.msra.mxu0 0.0
      %4119 = vmatprep.subr.mxu0 0.0
      %4120 = vmatpush2.msra.mxu0 0.0
      %4121 = vmatprep.mubr.f32.mxu0 0.0
      %4122 = vmatmul.mubr.f32.gmra.mxu0 %v4049
      %v4123 = vpop.f32.mrf.mxu0
      %v4124 = vadd.f32 0.0, %v4123
      %v4125 = vpop.f32.mrf.mxu0
      %4126 = vmatprep.mubr.f32.mxu0 0.0
      %4127 = vmatmul.mubr.f32.gmra.mxu0 %v4052
      %v4128 = vpop.f32.mrf.mxu0
      %v4129 = vadd.f32 0.0, %v4128
      %v4130 = vpop.f32.mrf.mxu0
      %4131 = vdwg.mxu0
      %v4132 = vadd.f32 %v4043, %v4124
      %v4133 = vadd.f32 %v4044, %v4129
      %v4134 = vld [vmem:[%s2] sm:$0x1]
      %v4136 = vlaneseq
      %v4137 = vshrl.u32 %v4136, 7
      %v4138 = vsub.s32 0, %v4137
      %v4139 = vrot.slane %v4134, %v4138
      %v4141 = vadd.f32 %v4132, %v4139
      %v4142 = vadd.f32 %v4133, %v4139
      %vm4143 = vcmp.gt.f32.partialorder %v4141, 0.0
      %vm4144 = vcmp.gt.f32.partialorder %v4142, 0.0
      %v4145 = vmul.f32 %v4141, 0.01
      %v4146 = vmul.f32 %v4142, 0.01
      %v4147 = vsel %vm4143, %v4141, %v4145
      %v4148 = vsel %vm4144, %v4142, %v4146
      %s4149 = scalar_lea.vmem [#allocation3], 216
      %4150 = vst.msk [vmem:[%s4149 + $0x1] sm:$0xff] %vm2484, %v4147
      %4151 = vst.msk [vmem:[%s4149 + $0x9] sm:$0xff] %vm2484, %v4148
      %v4152 = vld [vmem:[#allocation3 + $0x1] sm:$0x1]
      %v4153 = vld [vmem:[#allocation3 + $0x19] sm:$0x1]
      %v4154 = vld [vmem:[#allocation3 + $0x31] sm:$0x1]
      %v4155 = vld [vmem:[#allocation3 + $0x49] sm:$0x1]
      %v4156 = vld [vmem:[#allocation3 + $0x61] sm:$0x1]
      %v4157 = vld [vmem:[#allocation3 + $0x79] sm:$0x1]
      %v4158 = vld [vmem:[#allocation3 + $0x91] sm:$0x1]
      %v4159 = vld [vmem:[#allocation3 + $0xa9] sm:$0x1]
      %v4160 = vld [vmem:[#allocation3 + $0xc1] sm:$0x1]
      %v4161 = vld [vmem:[#allocation3 + $0xd9] sm:$0x1]
      %vm4162 = vcmask 57344
      %4163 = vst.msk [vmem:[#allocation3] sm:$0x1] %vm4162, %v4152
      %4164 = vst.msk [vmem:[#allocation3 + $0x18] sm:$0x1] %vm4162, %v4153
      %4165 = vst.msk [vmem:[#allocation3 + $0x30] sm:$0x1] %vm4162, %v4154
      %4166 = vst.msk [vmem:[#allocation3 + $0x48] sm:$0x1] %vm4162, %v4155
      %4167 = vst.msk [vmem:[#allocation3 + $0x60] sm:$0x1] %vm4162, %v4156
      %4168 = vst.msk [vmem:[#allocation3 + $0x78] sm:$0x1] %vm4162, %v4157
      %4169 = vst.msk [vmem:[#allocation3 + $0x90] sm:$0x1] %vm4162, %v4158
      %4170 = vst.msk [vmem:[#allocation3 + $0xa8] sm:$0x1] %vm4162, %v4159
      %4171 = vst.msk [vmem:[#allocation3 + $0xc0] sm:$0x1] %vm4162, %v4160
      %4172 = vst.msk [vmem:[#allocation3 + $0xd8] sm:$0x1] %vm4162, %v4161
      %v4173 = vld [vmem:[#allocation3 + $0x10] sm:$0x1]
      %v4174 = vld [vmem:[#allocation3 + $0x28] sm:$0x1]
      %v4175 = vld [vmem:[#allocation3 + $0x40] sm:$0x1]
      %v4176 = vld [vmem:[#allocation3 + $0x58] sm:$0x1]
      %v4177 = vld [vmem:[#allocation3 + $0x70] sm:$0x1]
      %v4178 = vld [vmem:[#allocation3 + $0x88] sm:$0x1]
      %v4179 = vld [vmem:[#allocation3 + $0xa0] sm:$0x1]
      %v4180 = vld [vmem:[#allocation3 + $0xb8] sm:$0x1]
      %v4181 = vld [vmem:[#allocation3 + $0xd0] sm:$0x1]
      %v4182 = vld [vmem:[#allocation3 + $0xe8] sm:$0x1]
      %4183 = vst.msk [vmem:[#allocation3 + $0x11] sm:$0x1] %vm4162, %v4173
      %4184 = vst.msk [vmem:[#allocation3 + $0x29] sm:$0x1] %vm4162, %v4174
      %4185 = vst.msk [vmem:[#allocation3 + $0x41] sm:$0x1] %vm4162, %v4175
      %4186 = vst.msk [vmem:[#allocation3 + $0x59] sm:$0x1] %vm4162, %v4176
      %4187 = vst.msk [vmem:[#allocation3 + $0x71] sm:$0x1] %vm4162, %v4177
      %4188 = vst.msk [vmem:[#allocation3 + $0x89] sm:$0x1] %vm4162, %v4178
      %4189 = vst.msk [vmem:[#allocation3 + $0xa1] sm:$0x1] %vm4162, %v4179
      %4190 = vst.msk [vmem:[#allocation3 + $0xb9] sm:$0x1] %vm4162, %v4180
      %4191 = vst.msk [vmem:[#allocation3 + $0xd1] sm:$0x1] %vm4162, %v4181
      %4192 = vst.msk [vmem:[#allocation3 + $0xe9] sm:$0x1] %vm4162, %v4182
      %v4193 = vld [vmem:[#allocation3] sm:$0xff]
      %v4194 = vld [vmem:[#allocation3 + $0x8] sm:$0xff]
      %v4195 = vld [vmem:[#allocation3 + $0x18] sm:$0xff]
      %v4196 = vld [vmem:[#allocation3 + $0x20] sm:$0xff]
      %v4197 = vld [vmem:[#allocation3 + $0x30] sm:$0xff]
      %v4198 = vld [vmem:[#allocation3 + $0x38] sm:$0xff]
      %v4199 = vld [vmem:[#allocation3 + $0x48] sm:$0xff]
      %v4200 = vld [vmem:[#allocation3 + $0x50] sm:$0xff]
      %v4201 = vld [vmem:[#allocation3 + $0x60] sm:$0xff]
      %v4202 = vld [vmem:[#allocation3 + $0x68] sm:$0xff]
      %v4203 = vld [vmem:[#allocation3 + $0x78] sm:$0xff]
      %v4204 = vld [vmem:[#allocation3 + $0x80] sm:$0xff]
      %v4205 = vld [vmem:[#allocation3 + $0x90] sm:$0xff]
      %v4206 = vld [vmem:[#allocation3 + $0x98] sm:$0xff]
      %v4207 = vld [vmem:[#allocation3 + $0xa8] sm:$0xff]
      %v4208 = vld [vmem:[#allocation3 + $0xb0] sm:$0xff]
      %v4209 = vld [vmem:[%s3] sm:$0xff]
      %v4210 = vld [vmem:[#allocation3 + $0x1] sm:$0xff]
      %v4211 = vld [vmem:[#allocation3 + $0x9] sm:$0xff]
      %v4212 = vld [vmem:[#allocation3 + $0x19] sm:$0xff]
      %v4213 = vld [vmem:[#allocation3 + $0x21] sm:$0xff]
      %v4214 = vld [vmem:[#allocation3 + $0x31] sm:$0xff]
      %v4215 = vld [vmem:[#allocation3 + $0x39] sm:$0xff]
      %v4216 = vld [vmem:[#allocation3 + $0x49] sm:$0xff]
      %v4217 = vld [vmem:[#allocation3 + $0x51] sm:$0xff]
      %v4218 = vld [vmem:[#allocation3 + $0x61] sm:$0xff]
      %v4219 = vld [vmem:[#allocation3 + $0x69] sm:$0xff]
      %v4220 = vld [vmem:[#allocation3 + $0x79] sm:$0xff]
      %v4221 = vld [vmem:[#allocation3 + $0x81] sm:$0xff]
      %v4222 = vld [vmem:[#allocation3 + $0x91] sm:$0xff]
      %v4223 = vld [vmem:[#allocation3 + $0x99] sm:$0xff]
      %v4224 = vld [vmem:[#allocation3 + $0xa9] sm:$0xff]
      %v4225 = vld [vmem:[#allocation3 + $0xb1] sm:$0xff]
      %s4226 = scalar_lea.vmem %s3, 8
      %v4227 = vld [vmem:[%s4226] sm:$0xff]
      %v4229 = vsel %vm2484, %v4210, 0
      %v4232 = vsel %vm2484, %v4211, 0
      %v4235 = vsel %vm2484, %v4212, 0
      %v4238 = vsel %vm2484, %v4213, 0
      %v4241 = vsel %vm2484, %v4214, 0
      %v4244 = vsel %vm2484, %v4215, 0
      %v4247 = vsel %vm2484, %v4216, 0
      %v4250 = vsel %vm2484, %v4217, 0
      %v4253 = vsel %vm2484, %v4218, 0
      %v4256 = vsel %vm2484, %v4219, 0
      %v4259 = vsel %vm2484, %v4220, 0
      %v4262 = vsel %vm2484, %v4221, 0
      %v4265 = vsel %vm2484, %v4222, 0
      %v4268 = vsel %vm2484, %v4223, 0
      %v4271 = vsel %vm2484, %v4224, 0
      %v4274 = vsel %vm2484, %v4225, 0
      %4276 = vmatprep.subr.mxu0 0.0
      %4277 = vmatpush1.msra.mxu0 0.0
      %4278 = vmatprep.subr.mxu0 0.0
      %4279 = vmatpush1.msra.mxu0 0.0
      %4280 = vmatprep.subr.mxu0 0.0
      %4281 = vmatpush1.msra.mxu0 0.0
      %4282 = vmatprep.subr.mxu0 0.0
      %4283 = vmatpush1.msra.mxu0 0.0
      %4284 = vmatprep.subr.mxu0 0.0
      %4285 = vmatpush1.msra.mxu0 0.0
      %4286 = vmatprep.subr.mxu0 0.0
      %4287 = vmatpush1.msra.mxu0 0.0
      %4288 = vmatprep.subr.mxu0 0.0
      %4289 = vmatpush1.msra.mxu0 0.0
      %4290 = vmatprep.subr.mxu0 0.0
      %4291 = vmatpush1.msra.mxu0 0.0
      %4292 = vmatprep.subr.mxu0 0.0
      %4293 = vmatpush1.msra.mxu0 0.0
      %4294 = vmatprep.subr.mxu0 0.0
      %4295 = vmatpush1.msra.mxu0 0.0
      %4296 = vmatprep.subr.mxu0 0.0
      %4297 = vmatpush1.msra.mxu0 0.0
      %4298 = vmatprep.subr.mxu0 0.0
      %4299 = vmatpush1.msra.mxu0 0.0
      %4300 = vmatprep.subr.mxu0 0.0
      %4301 = vmatpush1.msra.mxu0 0.0
      %4302 = vmatprep.subr.mxu0 0.0
      %4303 = vmatpush1.msra.mxu0 0.0
      %4304 = vmatprep.subr.mxu0 0.0
      %4305 = vmatpush1.msra.mxu0 0.0
      %4306 = vmatprep.subr.mxu0 0.0
      %4307 = vmatpush1.msra.mxu0 %v4227
      %4308 = vmatprep.subr.mxu0 0.0
      %4309 = vmatpush2.msra.mxu0 0.0
      %4310 = vmatprep.subr.mxu0 0.0
      %4311 = vmatpush2.msra.mxu0 0.0
      %4312 = vmatprep.subr.mxu0 0.0
      %4313 = vmatpush2.msra.mxu0 0.0
      %4314 = vmatprep.subr.mxu0 0.0
      %4315 = vmatpush2.msra.mxu0 0.0
      %4316 = vmatprep.subr.mxu0 0.0
      %4317 = vmatpush2.msra.mxu0 0.0
      %4318 = vmatprep.subr.mxu0 0.0
      %4319 = vmatpush2.msra.mxu0 0.0
      %4320 = vmatprep.subr.mxu0 0.0
      %4321 = vmatpush2.msra.mxu0 0.0
      %4322 = vmatprep.subr.mxu0 0.0
      %4323 = vmatpush2.msra.mxu0 0.0
      %4324 = vmatprep.subr.mxu0 0.0
      %4325 = vmatpush2.msra.mxu0 0.0
      %4326 = vmatprep.subr.mxu0 0.0
      %4327 = vmatpush2.msra.mxu0 0.0
      %4328 = vmatprep.subr.mxu0 0.0
      %4329 = vmatpush2.msra.mxu0 0.0
      %4330 = vmatprep.subr.mxu0 0.0
      %4331 = vmatpush2.msra.mxu0 0.0
      %4332 = vmatprep.subr.mxu0 0.0
      %4333 = vmatpush2.msra.mxu0 0.0
      %4334 = vmatprep.subr.mxu0 0.0
      %4335 = vmatpush2.msra.mxu0 0.0
      %4336 = vmatprep.subr.mxu0 0.0
      %4337 = vmatpush2.msra.mxu0 0.0
      %4338 = vmatprep.subr.mxu0 0.0
      %4339 = vmatpush2.msra.mxu0 0.0
      %4340 = vmatprep.mubr.f32.mxu0 0.0
      %4341 = vmatmul.mubr.f32.gmra.mxu0 %v4229
      %v4342 = vpop.f32.mrf.mxu0
      %v4343 = vadd.f32 0.0, %v4342
      %v4344 = vpop.f32.mrf.mxu0
      %4345 = vmatprep.mubr.f32.mxu0 0.0
      %4346 = vmatmul.mubr.f32.gmra.mxu0 %v4232
      %v4347 = vpop.f32.mrf.mxu0
      %v4348 = vadd.f32 0.0, %v4347
      %v4349 = vpop.f32.mrf.mxu0
      %4350 = vmatprep.mubr.f32.mxu0 0.0
      %4351 = vmatmul.mubr.f32.gmra.mxu0 %v4235
      %v4352 = vpop.f32.mrf.mxu0
      %v4353 = vadd.f32 0.0, %v4352
      %v4354 = vpop.f32.mrf.mxu0
      %4355 = vmatprep.mubr.f32.mxu0 0.0
      %4356 = vmatmul.mubr.f32.gmra.mxu0 %v4238
      %v4357 = vpop.f32.mrf.mxu0
      %v4358 = vadd.f32 0.0, %v4357
      %v4359 = vpop.f32.mrf.mxu0
      %4360 = vmatprep.mubr.f32.mxu0 0.0
      %4361 = vmatmul.mubr.f32.gmra.mxu0 %v4241
      %v4362 = vpop.f32.mrf.mxu0
      %v4363 = vadd.f32 0.0, %v4362
      %v4364 = vpop.f32.mrf.mxu0
      %4365 = vmatprep.mubr.f32.mxu0 0.0
      %4366 = vmatmul.mubr.f32.gmra.mxu0 %v4244
      %v4367 = vpop.f32.mrf.mxu0
      %v4368 = vadd.f32 0.0, %v4367
      %v4369 = vpop.f32.mrf.mxu0
      %4370 = vmatprep.mubr.f32.mxu0 0.0
      %4371 = vmatmul.mubr.f32.gmra.mxu0 %v4247
      %v4372 = vpop.f32.mrf.mxu0
      %v4373 = vadd.f32 0.0, %v4372
      %v4374 = vpop.f32.mrf.mxu0
      %4375 = vmatprep.mubr.f32.mxu0 0.0
      %4376 = vmatmul.mubr.f32.gmra.mxu0 %v4250
      %v4377 = vpop.f32.mrf.mxu0
      %v4378 = vadd.f32 0.0, %v4377
      %v4379 = vpop.f32.mrf.mxu0
      %4380 = vmatprep.mubr.f32.mxu0 0.0
      %4381 = vmatmul.mubr.f32.gmra.mxu0 %v4253
      %v4382 = vpop.f32.mrf.mxu0
      %v4383 = vadd.f32 0.0, %v4382
      %v4384 = vpop.f32.mrf.mxu0
      %4385 = vmatprep.mubr.f32.mxu0 0.0
      %4386 = vmatmul.mubr.f32.gmra.mxu0 %v4256
      %v4387 = vpop.f32.mrf.mxu0
      %v4388 = vadd.f32 0.0, %v4387
      %v4389 = vpop.f32.mrf.mxu0
      %4390 = vmatprep.mubr.f32.mxu0 0.0
      %4391 = vmatmul.mubr.f32.gmra.mxu0 %v4259
      %v4392 = vpop.f32.mrf.mxu0
      %v4393 = vadd.f32 0.0, %v4392
      %v4394 = vpop.f32.mrf.mxu0
      %4395 = vmatprep.mubr.f32.mxu0 0.0
      %4396 = vmatmul.mubr.f32.gmra.mxu0 %v4262
      %v4397 = vpop.f32.mrf.mxu0
      %v4398 = vadd.f32 0.0, %v4397
      %v4399 = vpop.f32.mrf.mxu0
      %4400 = vmatprep.mubr.f32.mxu0 0.0
      %4401 = vmatmul.mubr.f32.gmra.mxu0 %v4265
      %v4402 = vpop.f32.mrf.mxu0
      %v4403 = vadd.f32 0.0, %v4402
      %v4404 = vpop.f32.mrf.mxu0
      %4405 = vmatprep.mubr.f32.mxu0 0.0
      %4406 = vmatmul.mubr.f32.gmra.mxu0 %v4268
      %v4407 = vpop.f32.mrf.mxu0
      %v4408 = vadd.f32 0.0, %v4407
      %v4409 = vpop.f32.mrf.mxu0
      %4410 = vmatprep.mubr.f32.mxu0 0.0
      %4411 = vmatmul.mubr.f32.gmra.mxu0 %v4271
      %v4412 = vpop.f32.mrf.mxu0
      %v4413 = vadd.f32 0.0, %v4412
      %v4414 = vpop.f32.mrf.mxu0
      %4415 = vmatprep.mubr.f32.mxu0 0.0
      %4416 = vmatmul.mubr.f32.gmra.mxu0 %v4274
      %v4417 = vpop.f32.mrf.mxu0
      %v4418 = vadd.f32 0.0, %v4417
      %v4419 = vpop.f32.mrf.mxu0
      %4420 = vdwg.mxu0
      %v4422 = vsel %vm2484, %v4193, 0
      %v4425 = vsel %vm2484, %v4194, 0
      %v4428 = vsel %vm2484, %v4195, 0
      %v4431 = vsel %vm2484, %v4196, 0
      %v4434 = vsel %vm2484, %v4197, 0
      %v4437 = vsel %vm2484, %v4198, 0
      %v4440 = vsel %vm2484, %v4199, 0
      %v4443 = vsel %vm2484, %v4200, 0
      %v4446 = vsel %vm2484, %v4201, 0
      %v4449 = vsel %vm2484, %v4202, 0
      %v4452 = vsel %vm2484, %v4203, 0
      %v4455 = vsel %vm2484, %v4204, 0
      %v4458 = vsel %vm2484, %v4205, 0
      %v4461 = vsel %vm2484, %v4206, 0
      %v4464 = vsel %vm2484, %v4207, 0
      %v4467 = vsel %vm2484, %v4208, 0
      %4469 = vmatprep.subr.mxu0 0.0
      %4470 = vmatpush1.msra.mxu0 0.0
      %4471 = vmatprep.subr.mxu0 0.0
      %4472 = vmatpush1.msra.mxu0 0.0
      %4473 = vmatprep.subr.mxu0 0.0
      %4474 = vmatpush1.msra.mxu0 0.0
      %4475 = vmatprep.subr.mxu0 0.0
      %4476 = vmatpush1.msra.mxu0 0.0
      %4477 = vmatprep.subr.mxu0 0.0
      %4478 = vmatpush1.msra.mxu0 0.0
      %4479 = vmatprep.subr.mxu0 0.0
      %4480 = vmatpush1.msra.mxu0 0.0
      %4481 = vmatprep.subr.mxu0 0.0
      %4482 = vmatpush1.msra.mxu0 0.0
      %4483 = vmatprep.subr.mxu0 0.0
      %4484 = vmatpush1.msra.mxu0 0.0
      %4485 = vmatprep.subr.mxu0 0.0
      %4486 = vmatpush1.msra.mxu0 0.0
      %4487 = vmatprep.subr.mxu0 0.0
      %4488 = vmatpush1.msra.mxu0 0.0
      %4489 = vmatprep.subr.mxu0 0.0
      %4490 = vmatpush1.msra.mxu0 0.0
      %4491 = vmatprep.subr.mxu0 0.0
      %4492 = vmatpush1.msra.mxu0 0.0
      %4493 = vmatprep.subr.mxu0 0.0
      %4494 = vmatpush1.msra.mxu0 0.0
      %4495 = vmatprep.subr.mxu0 0.0
      %4496 = vmatpush1.msra.mxu0 0.0
      %4497 = vmatprep.subr.mxu0 0.0
      %4498 = vmatpush1.msra.mxu0 0.0
      %4499 = vmatprep.subr.mxu0 0.0
      %4500 = vmatpush1.msra.mxu0 %v4209
      %4501 = vmatprep.subr.mxu0 0.0
      %4502 = vmatpush2.msra.mxu0 0.0
      %4503 = vmatprep.subr.mxu0 0.0
      %4504 = vmatpush2.msra.mxu0 0.0
      %4505 = vmatprep.subr.mxu0 0.0
      %4506 = vmatpush2.msra.mxu0 0.0
      %4507 = vmatprep.subr.mxu0 0.0
      %4508 = vmatpush2.msra.mxu0 0.0
      %4509 = vmatprep.subr.mxu0 0.0
      %4510 = vmatpush2.msra.mxu0 0.0
      %4511 = vmatprep.subr.mxu0 0.0
      %4512 = vmatpush2.msra.mxu0 0.0
      %4513 = vmatprep.subr.mxu0 0.0
      %4514 = vmatpush2.msra.mxu0 0.0
      %4515 = vmatprep.subr.mxu0 0.0
      %4516 = vmatpush2.msra.mxu0 0.0
      %4517 = vmatprep.subr.mxu0 0.0
      %4518 = vmatpush2.msra.mxu0 0.0
      %4519 = vmatprep.subr.mxu0 0.0
      %4520 = vmatpush2.msra.mxu0 0.0
      %4521 = vmatprep.subr.mxu0 0.0
      %4522 = vmatpush2.msra.mxu0 0.0
      %4523 = vmatprep.subr.mxu0 0.0
      %4524 = vmatpush2.msra.mxu0 0.0
      %4525 = vmatprep.subr.mxu0 0.0
      %4526 = vmatpush2.msra.mxu0 0.0
      %4527 = vmatprep.subr.mxu0 0.0
      %4528 = vmatpush2.msra.mxu0 0.0
      %4529 = vmatprep.subr.mxu0 0.0
      %4530 = vmatpush2.msra.mxu0 0.0
      %4531 = vmatprep.subr.mxu0 0.0
      %4532 = vmatpush2.msra.mxu0 0.0
      %4533 = vmatprep.mubr.f32.mxu0 0.0
      %4534 = vmatmul.mubr.f32.gmra.mxu0 %v4422
      %v4535 = vpop.f32.mrf.mxu0
      %v4536 = vadd.f32 %v4343, %v4535
      %v4537 = vpop.f32.mrf.mxu0
      %4538 = vmatprep.mubr.f32.mxu0 0.0
      %4539 = vmatmul.mubr.f32.gmra.mxu0 %v4425
      %v4540 = vpop.f32.mrf.mxu0
      %v4541 = vadd.f32 %v4348, %v4540
      %v4542 = vpop.f32.mrf.mxu0
      %4543 = vmatprep.mubr.f32.mxu0 0.0
      %4544 = vmatmul.mubr.f32.gmra.mxu0 %v4428
      %v4545 = vpop.f32.mrf.mxu0
      %v4546 = vadd.f32 %v4353, %v4545
      %v4547 = vpop.f32.mrf.mxu0
      %4548 = vmatprep.mubr.f32.mxu0 0.0
      %4549 = vmatmul.mubr.f32.gmra.mxu0 %v4431
      %v4550 = vpop.f32.mrf.mxu0
      %v4551 = vadd.f32 %v4358, %v4550
      %v4552 = vpop.f32.mrf.mxu0
      %4553 = vmatprep.mubr.f32.mxu0 0.0
      %4554 = vmatmul.mubr.f32.gmra.mxu0 %v4434
      %v4555 = vpop.f32.mrf.mxu0
      %v4556 = vadd.f32 %v4363, %v4555
      %v4557 = vpop.f32.mrf.mxu0
      %4558 = vmatprep.mubr.f32.mxu0 0.0
      %4559 = vmatmul.mubr.f32.gmra.mxu0 %v4437
      %v4560 = vpop.f32.mrf.mxu0
      %v4561 = vadd.f32 %v4368, %v4560
      %v4562 = vpop.f32.mrf.mxu0
      %4563 = vmatprep.mubr.f32.mxu0 0.0
      %4564 = vmatmul.mubr.f32.gmra.mxu0 %v4440
      %v4565 = vpop.f32.mrf.mxu0
      %v4566 = vadd.f32 %v4373, %v4565
      %v4567 = vpop.f32.mrf.mxu0
      %4568 = vmatprep.mubr.f32.mxu0 0.0
      %4569 = vmatmul.mubr.f32.gmra.mxu0 %v4443
      %v4570 = vpop.f32.mrf.mxu0
      %v4571 = vadd.f32 %v4378, %v4570
      %v4572 = vpop.f32.mrf.mxu0
      %4573 = vmatprep.mubr.f32.mxu0 0.0
      %4574 = vmatmul.mubr.f32.gmra.mxu0 %v4446
      %v4575 = vpop.f32.mrf.mxu0
      %v4576 = vadd.f32 %v4383, %v4575
      %v4577 = vpop.f32.mrf.mxu0
      %4578 = vmatprep.mubr.f32.mxu0 0.0
      %4579 = vmatmul.mubr.f32.gmra.mxu0 %v4449
      %v4580 = vpop.f32.mrf.mxu0
      %v4581 = vadd.f32 %v4388, %v4580
      %v4582 = vpop.f32.mrf.mxu0
      %4583 = vmatprep.mubr.f32.mxu0 0.0
      %4584 = vmatmul.mubr.f32.gmra.mxu0 %v4452
      %v4585 = vpop.f32.mrf.mxu0
      %v4586 = vadd.f32 %v4393, %v4585
      %v4587 = vpop.f32.mrf.mxu0
      %4588 = vmatprep.mubr.f32.mxu0 0.0
      %4589 = vmatmul.mubr.f32.gmra.mxu0 %v4455
      %v4590 = vpop.f32.mrf.mxu0
      %v4591 = vadd.f32 %v4398, %v4590
      %v4592 = vpop.f32.mrf.mxu0
      %4593 = vmatprep.mubr.f32.mxu0 0.0
      %4594 = vmatmul.mubr.f32.gmra.mxu0 %v4458
      %v4595 = vpop.f32.mrf.mxu0
      %v4596 = vadd.f32 %v4403, %v4595
      %v4597 = vpop.f32.mrf.mxu0
      %4598 = vmatprep.mubr.f32.mxu0 0.0
      %4599 = vmatmul.mubr.f32.gmra.mxu0 %v4461
      %v4600 = vpop.f32.mrf.mxu0
      %v4601 = vadd.f32 %v4408, %v4600
      %v4602 = vpop.f32.mrf.mxu0
      %4603 = vmatprep.mubr.f32.mxu0 0.0
      %4604 = vmatmul.mubr.f32.gmra.mxu0 %v4464
      %v4605 = vpop.f32.mrf.mxu0
      %v4606 = vadd.f32 %v4413, %v4605
      %v4607 = vpop.f32.mrf.mxu0
      %4608 = vmatprep.mubr.f32.mxu0 0.0
      %4609 = vmatmul.mubr.f32.gmra.mxu0 %v4467
      %v4610 = vpop.f32.mrf.mxu0
      %v4611 = vadd.f32 %v4418, %v4610
      %v4612 = vpop.f32.mrf.mxu0
      %4613 = vdwg.mxu0
      %v4614 = vld [vmem:[#allocation3 + $0x2] sm:$0xff]
      %v4615 = vld [vmem:[#allocation3 + $0xa] sm:$0xff]
      %v4616 = vld [vmem:[#allocation3 + $0x1a] sm:$0xff]
      %v4617 = vld [vmem:[#allocation3 + $0x22] sm:$0xff]
      %v4618 = vld [vmem:[#allocation3 + $0x32] sm:$0xff]
      %v4619 = vld [vmem:[#allocation3 + $0x3a] sm:$0xff]
      %v4620 = vld [vmem:[#allocation3 + $0x4a] sm:$0xff]
      %v4621 = vld [vmem:[#allocation3 + $0x52] sm:$0xff]
      %v4622 = vld [vmem:[#allocation3 + $0x62] sm:$0xff]
      %v4623 = vld [vmem:[#allocation3 + $0x6a] sm:$0xff]
      %v4624 = vld [vmem:[#allocation3 + $0x7a] sm:$0xff]
      %v4625 = vld [vmem:[#allocation3 + $0x82] sm:$0xff]
      %v4626 = vld [vmem:[#allocation3 + $0x92] sm:$0xff]
      %v4627 = vld [vmem:[#allocation3 + $0x9a] sm:$0xff]
      %v4628 = vld [vmem:[#allocation3 + $0xaa] sm:$0xff]
      %v4629 = vld [vmem:[#allocation3 + $0xb2] sm:$0xff]
      %s4630 = scalar_lea.vmem %s3, 16
      %v4631 = vld [vmem:[%s4630] sm:$0xff]
      %v4633 = vsel %vm2484, %v4614, 0
      %v4636 = vsel %vm2484, %v4615, 0
      %v4639 = vsel %vm2484, %v4616, 0
      %v4642 = vsel %vm2484, %v4617, 0
      %v4645 = vsel %vm2484, %v4618, 0
      %v4648 = vsel %vm2484, %v4619, 0
      %v4651 = vsel %vm2484, %v4620, 0
      %v4654 = vsel %vm2484, %v4621, 0
      %v4657 = vsel %vm2484, %v4622, 0
      %v4660 = vsel %vm2484, %v4623, 0
      %v4663 = vsel %vm2484, %v4624, 0
      %v4666 = vsel %vm2484, %v4625, 0
      %v4669 = vsel %vm2484, %v4626, 0
      %v4672 = vsel %vm2484, %v4627, 0
      %v4675 = vsel %vm2484, %v4628, 0
      %v4678 = vsel %vm2484, %v4629, 0
      %4680 = vmatprep.subr.mxu0 0.0
      %4681 = vmatpush1.msra.mxu0 0.0
      %4682 = vmatprep.subr.mxu0 0.0
      %4683 = vmatpush1.msra.mxu0 0.0
      %4684 = vmatprep.subr.mxu0 0.0
      %4685 = vmatpush1.msra.mxu0 0.0
      %4686 = vmatprep.subr.mxu0 0.0
      %4687 = vmatpush1.msra.mxu0 0.0
      %4688 = vmatprep.subr.mxu0 0.0
      %4689 = vmatpush1.msra.mxu0 0.0
      %4690 = vmatprep.subr.mxu0 0.0
      %4691 = vmatpush1.msra.mxu0 0.0
      %4692 = vmatprep.subr.mxu0 0.0
      %4693 = vmatpush1.msra.mxu0 0.0
      %4694 = vmatprep.subr.mxu0 0.0
      %4695 = vmatpush1.msra.mxu0 0.0
      %4696 = vmatprep.subr.mxu0 0.0
      %4697 = vmatpush1.msra.mxu0 0.0
      %4698 = vmatprep.subr.mxu0 0.0
      %4699 = vmatpush1.msra.mxu0 0.0
      %4700 = vmatprep.subr.mxu0 0.0
      %4701 = vmatpush1.msra.mxu0 0.0
      %4702 = vmatprep.subr.mxu0 0.0
      %4703 = vmatpush1.msra.mxu0 0.0
      %4704 = vmatprep.subr.mxu0 0.0
      %4705 = vmatpush1.msra.mxu0 0.0
      %4706 = vmatprep.subr.mxu0 0.0
      %4707 = vmatpush1.msra.mxu0 0.0
      %4708 = vmatprep.subr.mxu0 0.0
      %4709 = vmatpush1.msra.mxu0 0.0
      %4710 = vmatprep.subr.mxu0 0.0
      %4711 = vmatpush1.msra.mxu0 %v4631
      %4712 = vmatprep.subr.mxu0 0.0
      %4713 = vmatpush2.msra.mxu0 0.0
      %4714 = vmatprep.subr.mxu0 0.0
      %4715 = vmatpush2.msra.mxu0 0.0
      %4716 = vmatprep.subr.mxu0 0.0
      %4717 = vmatpush2.msra.mxu0 0.0
      %4718 = vmatprep.subr.mxu0 0.0
      %4719 = vmatpush2.msra.mxu0 0.0
      %4720 = vmatprep.subr.mxu0 0.0
      %4721 = vmatpush2.msra.mxu0 0.0
      %4722 = vmatprep.subr.mxu0 0.0
      %4723 = vmatpush2.msra.mxu0 0.0
      %4724 = vmatprep.subr.mxu0 0.0
      %4725 = vmatpush2.msra.mxu0 0.0
      %4726 = vmatprep.subr.mxu0 0.0
      %4727 = vmatpush2.msra.mxu0 0.0
      %4728 = vmatprep.subr.mxu0 0.0
      %4729 = vmatpush2.msra.mxu0 0.0
      %4730 = vmatprep.subr.mxu0 0.0
      %4731 = vmatpush2.msra.mxu0 0.0
      %4732 = vmatprep.subr.mxu0 0.0
      %4733 = vmatpush2.msra.mxu0 0.0
      %4734 = vmatprep.subr.mxu0 0.0
      %4735 = vmatpush2.msra.mxu0 0.0
      %4736 = vmatprep.subr.mxu0 0.0
      %4737 = vmatpush2.msra.mxu0 0.0
      %4738 = vmatprep.subr.mxu0 0.0
      %4739 = vmatpush2.msra.mxu0 0.0
      %4740 = vmatprep.subr.mxu0 0.0
      %4741 = vmatpush2.msra.mxu0 0.0
      %4742 = vmatprep.subr.mxu0 0.0
      %4743 = vmatpush2.msra.mxu0 0.0
      %4744 = vmatprep.mubr.f32.mxu0 0.0
      %4745 = vmatmul.mubr.f32.gmra.mxu0 %v4633
      %v4746 = vpop.f32.mrf.mxu0
      %v4747 = vadd.f32 0.0, %v4746
      %v4748 = vpop.f32.mrf.mxu0
      %4749 = vmatprep.mubr.f32.mxu0 0.0
      %4750 = vmatmul.mubr.f32.gmra.mxu0 %v4636
      %v4751 = vpop.f32.mrf.mxu0
      %v4752 = vadd.f32 0.0, %v4751
      %v4753 = vpop.f32.mrf.mxu0
      %4754 = vmatprep.mubr.f32.mxu0 0.0
      %4755 = vmatmul.mubr.f32.gmra.mxu0 %v4639
      %v4756 = vpop.f32.mrf.mxu0
      %v4757 = vadd.f32 0.0, %v4756
      %v4758 = vpop.f32.mrf.mxu0
      %4759 = vmatprep.mubr.f32.mxu0 0.0
      %4760 = vmatmul.mubr.f32.gmra.mxu0 %v4642
      %v4761 = vpop.f32.mrf.mxu0
      %v4762 = vadd.f32 0.0, %v4761
      %v4763 = vpop.f32.mrf.mxu0
      %4764 = vmatprep.mubr.f32.mxu0 0.0
      %4765 = vmatmul.mubr.f32.gmra.mxu0 %v4645
      %v4766 = vpop.f32.mrf.mxu0
      %v4767 = vadd.f32 0.0, %v4766
      %v4768 = vpop.f32.mrf.mxu0
      %4769 = vmatprep.mubr.f32.mxu0 0.0
      %4770 = vmatmul.mubr.f32.gmra.mxu0 %v4648
      %v4771 = vpop.f32.mrf.mxu0
      %v4772 = vadd.f32 0.0, %v4771
      %v4773 = vpop.f32.mrf.mxu0
      %4774 = vmatprep.mubr.f32.mxu0 0.0
      %4775 = vmatmul.mubr.f32.gmra.mxu0 %v4651
      %v4776 = vpop.f32.mrf.mxu0
      %v4777 = vadd.f32 0.0, %v4776
      %v4778 = vpop.f32.mrf.mxu0
      %4779 = vmatprep.mubr.f32.mxu0 0.0
      %4780 = vmatmul.mubr.f32.gmra.mxu0 %v4654
      %v4781 = vpop.f32.mrf.mxu0
      %v4782 = vadd.f32 0.0, %v4781
      %v4783 = vpop.f32.mrf.mxu0
      %4784 = vmatprep.mubr.f32.mxu0 0.0
      %4785 = vmatmul.mubr.f32.gmra.mxu0 %v4657
      %v4786 = vpop.f32.mrf.mxu0
      %v4787 = vadd.f32 0.0, %v4786
      %v4788 = vpop.f32.mrf.mxu0
      %4789 = vmatprep.mubr.f32.mxu0 0.0
      %4790 = vmatmul.mubr.f32.gmra.mxu0 %v4660
      %v4791 = vpop.f32.mrf.mxu0
      %v4792 = vadd.f32 0.0, %v4791
      %v4793 = vpop.f32.mrf.mxu0
      %4794 = vmatprep.mubr.f32.mxu0 0.0
      %4795 = vmatmul.mubr.f32.gmra.mxu0 %v4663
      %v4796 = vpop.f32.mrf.mxu0
      %v4797 = vadd.f32 0.0, %v4796
      %v4798 = vpop.f32.mrf.mxu0
      %4799 = vmatprep.mubr.f32.mxu0 0.0
      %4800 = vmatmul.mubr.f32.gmra.mxu0 %v4666
      %v4801 = vpop.f32.mrf.mxu0
      %v4802 = vadd.f32 0.0, %v4801
      %v4803 = vpop.f32.mrf.mxu0
      %4804 = vmatprep.mubr.f32.mxu0 0.0
      %4805 = vmatmul.mubr.f32.gmra.mxu0 %v4669
      %v4806 = vpop.f32.mrf.mxu0
      %v4807 = vadd.f32 0.0, %v4806
      %v4808 = vpop.f32.mrf.mxu0
      %4809 = vmatprep.mubr.f32.mxu0 0.0
      %4810 = vmatmul.mubr.f32.gmra.mxu0 %v4672
      %v4811 = vpop.f32.mrf.mxu0
      %v4812 = vadd.f32 0.0, %v4811
      %v4813 = vpop.f32.mrf.mxu0
      %4814 = vmatprep.mubr.f32.mxu0 0.0
      %4815 = vmatmul.mubr.f32.gmra.mxu0 %v4675
      %v4816 = vpop.f32.mrf.mxu0
      %v4817 = vadd.f32 0.0, %v4816
      %v4818 = vpop.f32.mrf.mxu0
      %4819 = vmatprep.mubr.f32.mxu0 0.0
      %4820 = vmatmul.mubr.f32.gmra.mxu0 %v4678
      %v4821 = vpop.f32.mrf.mxu0
      %v4822 = vadd.f32 0.0, %v4821
      %v4823 = vpop.f32.mrf.mxu0
      %4824 = vdwg.mxu0
      %v4825 = vadd.f32 %v4536, %v4747
      %v4826 = vadd.f32 %v4541, %v4752
      %v4827 = vadd.f32 %v4546, %v4757
      %v4828 = vadd.f32 %v4551, %v4762
      %v4829 = vadd.f32 %v4556, %v4767
      %v4830 = vadd.f32 %v4561, %v4772
      %v4831 = vadd.f32 %v4566, %v4777
      %v4832 = vadd.f32 %v4571, %v4782
      %v4833 = vadd.f32 %v4576, %v4787
      %v4834 = vadd.f32 %v4581, %v4792
      %v4835 = vadd.f32 %v4586, %v4797
      %v4836 = vadd.f32 %v4591, %v4802
      %v4837 = vadd.f32 %v4596, %v4807
      %v4838 = vadd.f32 %v4601, %v4812
      %v4839 = vadd.f32 %v4606, %v4817
      %v4840 = vadd.f32 %v4611, %v4822
      %v4841 = vld [vmem:[%s2483] sm:$0xff]
      %v4842 = vld [vmem:[%s2483 + $0x8] sm:$0xff]
      %v4843 = vld [vmem:[%s2483 + $0x18] sm:$0xff]
      %v4844 = vld [vmem:[%s2483 + $0x20] sm:$0xff]
      %v4845 = vld [vmem:[%s2483 + $0x30] sm:$0xff]
      %v4846 = vld [vmem:[%s2483 + $0x38] sm:$0xff]
      %v4847 = vld [vmem:[%s2483 + $0x48] sm:$0xff]
      %v4848 = vld [vmem:[%s2483 + $0x50] sm:$0xff]
      %v4849 = vld [vmem:[%s2483 + $0x60] sm:$0xff]
      %v4850 = vld [vmem:[%s2483 + $0x68] sm:$0xff]
      %v4851 = vld [vmem:[%s2483 + $0x78] sm:$0xff]
      %v4852 = vld [vmem:[%s2483 + $0x80] sm:$0xff]
      %v4853 = vld [vmem:[%s2483 + $0x90] sm:$0xff]
      %v4854 = vld [vmem:[%s2483 + $0x98] sm:$0xff]
      %v4855 = vld [vmem:[%s2483 + $0xa8] sm:$0xff]
      %v4856 = vld [vmem:[%s2483 + $0xb0] sm:$0xff]
      %s4857 = scalar_lea.vmem %s3, 24
      %v4858 = vld [vmem:[%s4857] sm:$0xff]
      %v4860 = vsel %vm2484, %v4841, 0
      %v4863 = vsel %vm2484, %v4842, 0
      %v4866 = vsel %vm2484, %v4843, 0
      %v4869 = vsel %vm2484, %v4844, 0
      %v4872 = vsel %vm2484, %v4845, 0
      %v4875 = vsel %vm2484, %v4846, 0
      %v4878 = vsel %vm2484, %v4847, 0
      %v4881 = vsel %vm2484, %v4848, 0
      %v4884 = vsel %vm2484, %v4849, 0
      %v4887 = vsel %vm2484, %v4850, 0
      %v4890 = vsel %vm2484, %v4851, 0
      %v4893 = vsel %vm2484, %v4852, 0
      %v4896 = vsel %vm2484, %v4853, 0
      %v4899 = vsel %vm2484, %v4854, 0
      %v4902 = vsel %vm2484, %v4855, 0
      %v4905 = vsel %vm2484, %v4856, 0
      %4907 = vmatprep.subr.mxu0 0.0
      %4908 = vmatpush1.msra.mxu0 0.0
      %4909 = vmatprep.subr.mxu0 0.0
      %4910 = vmatpush1.msra.mxu0 0.0
      %4911 = vmatprep.subr.mxu0 0.0
      %4912 = vmatpush1.msra.mxu0 0.0
      %4913 = vmatprep.subr.mxu0 0.0
      %4914 = vmatpush1.msra.mxu0 0.0
      %4915 = vmatprep.subr.mxu0 0.0
      %4916 = vmatpush1.msra.mxu0 0.0
      %4917 = vmatprep.subr.mxu0 0.0
      %4918 = vmatpush1.msra.mxu0 0.0
      %4919 = vmatprep.subr.mxu0 0.0
      %4920 = vmatpush1.msra.mxu0 0.0
      %4921 = vmatprep.subr.mxu0 0.0
      %4922 = vmatpush1.msra.mxu0 0.0
      %4923 = vmatprep.subr.mxu0 0.0
      %4924 = vmatpush1.msra.mxu0 0.0
      %4925 = vmatprep.subr.mxu0 0.0
      %4926 = vmatpush1.msra.mxu0 0.0
      %4927 = vmatprep.subr.mxu0 0.0
      %4928 = vmatpush1.msra.mxu0 0.0
      %4929 = vmatprep.subr.mxu0 0.0
      %4930 = vmatpush1.msra.mxu0 0.0
      %4931 = vmatprep.subr.mxu0 0.0
      %4932 = vmatpush1.msra.mxu0 0.0
      %4933 = vmatprep.subr.mxu0 0.0
      %4934 = vmatpush1.msra.mxu0 0.0
      %4935 = vmatprep.subr.mxu0 0.0
      %4936 = vmatpush1.msra.mxu0 0.0
      %4937 = vmatprep.subr.mxu0 0.0
      %4938 = vmatpush1.msra.mxu0 %v4858
      %4939 = vmatprep.subr.mxu0 0.0
      %4940 = vmatpush2.msra.mxu0 0.0
      %4941 = vmatprep.subr.mxu0 0.0
      %4942 = vmatpush2.msra.mxu0 0.0
      %4943 = vmatprep.subr.mxu0 0.0
      %4944 = vmatpush2.msra.mxu0 0.0
      %4945 = vmatprep.subr.mxu0 0.0
      %4946 = vmatpush2.msra.mxu0 0.0
      %4947 = vmatprep.subr.mxu0 0.0
      %4948 = vmatpush2.msra.mxu0 0.0
      %4949 = vmatprep.subr.mxu0 0.0
      %4950 = vmatpush2.msra.mxu0 0.0
      %4951 = vmatprep.subr.mxu0 0.0
      %4952 = vmatpush2.msra.mxu0 0.0
      %4953 = vmatprep.subr.mxu0 0.0
      %4954 = vmatpush2.msra.mxu0 0.0
      %4955 = vmatprep.subr.mxu0 0.0
      %4956 = vmatpush2.msra.mxu0 0.0
      %4957 = vmatprep.subr.mxu0 0.0
      %4958 = vmatpush2.msra.mxu0 0.0
      %4959 = vmatprep.subr.mxu0 0.0
      %4960 = vmatpush2.msra.mxu0 0.0
      %4961 = vmatprep.subr.mxu0 0.0
      %4962 = vmatpush2.msra.mxu0 0.0
      %4963 = vmatprep.subr.mxu0 0.0
      %4964 = vmatpush2.msra.mxu0 0.0
      %4965 = vmatprep.subr.mxu0 0.0
      %4966 = vmatpush2.msra.mxu0 0.0
      %4967 = vmatprep.subr.mxu0 0.0
      %4968 = vmatpush2.msra.mxu0 0.0
      %4969 = vmatprep.subr.mxu0 0.0
      %4970 = vmatpush2.msra.mxu0 0.0
      %4971 = vmatprep.mubr.f32.mxu0 0.0
      %4972 = vmatmul.mubr.f32.gmra.mxu0 %v4860
      %v4973 = vpop.f32.mrf.mxu0
      %v4974 = vadd.f32 0.0, %v4973
      %v4975 = vpop.f32.mrf.mxu0
      %4976 = vmatprep.mubr.f32.mxu0 0.0
      %4977 = vmatmul.mubr.f32.gmra.mxu0 %v4863
      %v4978 = vpop.f32.mrf.mxu0
      %v4979 = vadd.f32 0.0, %v4978
      %v4980 = vpop.f32.mrf.mxu0
      %4981 = vmatprep.mubr.f32.mxu0 0.0
      %4982 = vmatmul.mubr.f32.gmra.mxu0 %v4866
      %v4983 = vpop.f32.mrf.mxu0
      %v4984 = vadd.f32 0.0, %v4983
      %v4985 = vpop.f32.mrf.mxu0
      %4986 = vmatprep.mubr.f32.mxu0 0.0
      %4987 = vmatmul.mubr.f32.gmra.mxu0 %v4869
      %v4988 = vpop.f32.mrf.mxu0
      %v4989 = vadd.f32 0.0, %v4988
      %v4990 = vpop.f32.mrf.mxu0
      %4991 = vmatprep.mubr.f32.mxu0 0.0
      %4992 = vmatmul.mubr.f32.gmra.mxu0 %v4872
      %v4993 = vpop.f32.mrf.mxu0
      %v4994 = vadd.f32 0.0, %v4993
      %v4995 = vpop.f32.mrf.mxu0
      %4996 = vmatprep.mubr.f32.mxu0 0.0
      %4997 = vmatmul.mubr.f32.gmra.mxu0 %v4875
      %v4998 = vpop.f32.mrf.mxu0
      %v4999 = vadd.f32 0.0, %v4998
      %v5000 = vpop.f32.mrf.mxu0
      %5001 = vmatprep.mubr.f32.mxu0 0.0
      %5002 = vmatmul.mubr.f32.gmra.mxu0 %v4878
      %v5003 = vpop.f32.mrf.mxu0
      %v5004 = vadd.f32 0.0, %v5003
      %v5005 = vpop.f32.mrf.mxu0
      %5006 = vmatprep.mubr.f32.mxu0 0.0
      %5007 = vmatmul.mubr.f32.gmra.mxu0 %v4881
      %v5008 = vpop.f32.mrf.mxu0
      %v5009 = vadd.f32 0.0, %v5008
      %v5010 = vpop.f32.mrf.mxu0
      %5011 = vmatprep.mubr.f32.mxu0 0.0
      %5012 = vmatmul.mubr.f32.gmra.mxu0 %v4884
      %v5013 = vpop.f32.mrf.mxu0
      %v5014 = vadd.f32 0.0, %v5013
      %v5015 = vpop.f32.mrf.mxu0
      %5016 = vmatprep.mubr.f32.mxu0 0.0
      %5017 = vmatmul.mubr.f32.gmra.mxu0 %v4887
      %v5018 = vpop.f32.mrf.mxu0
      %v5019 = vadd.f32 0.0, %v5018
      %v5020 = vpop.f32.mrf.mxu0
      %5021 = vmatprep.mubr.f32.mxu0 0.0
      %5022 = vmatmul.mubr.f32.gmra.mxu0 %v4890
      %v5023 = vpop.f32.mrf.mxu0
      %v5024 = vadd.f32 0.0, %v5023
      %v5025 = vpop.f32.mrf.mxu0
      %5026 = vmatprep.mubr.f32.mxu0 0.0
      %5027 = vmatmul.mubr.f32.gmra.mxu0 %v4893
      %v5028 = vpop.f32.mrf.mxu0
      %v5029 = vadd.f32 0.0, %v5028
      %v5030 = vpop.f32.mrf.mxu0
      %5031 = vmatprep.mubr.f32.mxu0 0.0
      %5032 = vmatmul.mubr.f32.gmra.mxu0 %v4896
      %v5033 = vpop.f32.mrf.mxu0
      %v5034 = vadd.f32 0.0, %v5033
      %v5035 = vpop.f32.mrf.mxu0
      %5036 = vmatprep.mubr.f32.mxu0 0.0
      %5037 = vmatmul.mubr.f32.gmra.mxu0 %v4899
      %v5038 = vpop.f32.mrf.mxu0
      %v5039 = vadd.f32 0.0, %v5038
      %v5040 = vpop.f32.mrf.mxu0
      %5041 = vmatprep.mubr.f32.mxu0 0.0
      %5042 = vmatmul.mubr.f32.gmra.mxu0 %v4902
      %v5043 = vpop.f32.mrf.mxu0
      %v5044 = vadd.f32 0.0, %v5043
      %v5045 = vpop.f32.mrf.mxu0
      %5046 = vmatprep.mubr.f32.mxu0 0.0
      %5047 = vmatmul.mubr.f32.gmra.mxu0 %v4905
      %v5048 = vpop.f32.mrf.mxu0
      %v5049 = vadd.f32 0.0, %v5048
      %v5050 = vpop.f32.mrf.mxu0
      %5051 = vdwg.mxu0
      %v5052 = vadd.f32 %v4825, %v4974
      %v5053 = vadd.f32 %v4826, %v4979
      %v5054 = vadd.f32 %v4827, %v4984
      %v5055 = vadd.f32 %v4828, %v4989
      %v5056 = vadd.f32 %v4829, %v4994
      %v5057 = vadd.f32 %v4830, %v4999
      %v5058 = vadd.f32 %v4831, %v5004
      %v5059 = vadd.f32 %v4832, %v5009
      %v5060 = vadd.f32 %v4833, %v5014
      %v5061 = vadd.f32 %v4834, %v5019
      %v5062 = vadd.f32 %v4835, %v5024
      %v5063 = vadd.f32 %v4836, %v5029
      %v5064 = vadd.f32 %v4837, %v5034
      %v5065 = vadd.f32 %v4838, %v5039
      %v5066 = vadd.f32 %v4839, %v5044
      %v5067 = vadd.f32 %v4840, %v5049
      %v5068 = vld [vmem:[%s2483 + $0x1] sm:$0xff]
      %v5069 = vld [vmem:[%s2483 + $0x9] sm:$0xff]
      %v5070 = vld [vmem:[%s2483 + $0x19] sm:$0xff]
      %v5071 = vld [vmem:[%s2483 + $0x21] sm:$0xff]
      %v5072 = vld [vmem:[%s2483 + $0x31] sm:$0xff]
      %v5073 = vld [vmem:[%s2483 + $0x39] sm:$0xff]
      %v5074 = vld [vmem:[%s2483 + $0x49] sm:$0xff]
      %v5075 = vld [vmem:[%s2483 + $0x51] sm:$0xff]
      %v5076 = vld [vmem:[%s2483 + $0x61] sm:$0xff]
      %v5077 = vld [vmem:[%s2483 + $0x69] sm:$0xff]
      %v5078 = vld [vmem:[%s2483 + $0x79] sm:$0xff]
      %v5079 = vld [vmem:[%s2483 + $0x81] sm:$0xff]
      %v5080 = vld [vmem:[%s2483 + $0x91] sm:$0xff]
      %v5081 = vld [vmem:[%s2483 + $0x99] sm:$0xff]
      %v5082 = vld [vmem:[%s2483 + $0xa9] sm:$0xff]
      %v5083 = vld [vmem:[%s2483 + $0xb1] sm:$0xff]
      %s5084 = scalar_lea.vmem %s3, 32
      %v5085 = vld [vmem:[%s5084] sm:$0xff]
      %v5087 = vsel %vm2484, %v5068, 0
      %v5090 = vsel %vm2484, %v5069, 0
      %v5093 = vsel %vm2484, %v5070, 0
      %v5096 = vsel %vm2484, %v5071, 0
      %v5099 = vsel %vm2484, %v5072, 0
      %v5102 = vsel %vm2484, %v5073, 0
      %v5105 = vsel %vm2484, %v5074, 0
      %v5108 = vsel %vm2484, %v5075, 0
      %v5111 = vsel %vm2484, %v5076, 0
      %v5114 = vsel %vm2484, %v5077, 0
      %v5117 = vsel %vm2484, %v5078, 0
      %v5120 = vsel %vm2484, %v5079, 0
      %v5123 = vsel %vm2484, %v5080, 0
      %v5126 = vsel %vm2484, %v5081, 0
      %v5129 = vsel %vm2484, %v5082, 0
      %v5132 = vsel %vm2484, %v5083, 0
      %5134 = vmatprep.subr.mxu0 0.0
      %5135 = vmatpush1.msra.mxu0 0.0
      %5136 = vmatprep.subr.mxu0 0.0
      %5137 = vmatpush1.msra.mxu0 0.0
      %5138 = vmatprep.subr.mxu0 0.0
      %5139 = vmatpush1.msra.mxu0 0.0
      %5140 = vmatprep.subr.mxu0 0.0
      %5141 = vmatpush1.msra.mxu0 0.0
      %5142 = vmatprep.subr.mxu0 0.0
      %5143 = vmatpush1.msra.mxu0 0.0
      %5144 = vmatprep.subr.mxu0 0.0
      %5145 = vmatpush1.msra.mxu0 0.0
      %5146 = vmatprep.subr.mxu0 0.0
      %5147 = vmatpush1.msra.mxu0 0.0
      %5148 = vmatprep.subr.mxu0 0.0
      %5149 = vmatpush1.msra.mxu0 0.0
      %5150 = vmatprep.subr.mxu0 0.0
      %5151 = vmatpush1.msra.mxu0 0.0
      %5152 = vmatprep.subr.mxu0 0.0
      %5153 = vmatpush1.msra.mxu0 0.0
      %5154 = vmatprep.subr.mxu0 0.0
      %5155 = vmatpush1.msra.mxu0 0.0
      %5156 = vmatprep.subr.mxu0 0.0
      %5157 = vmatpush1.msra.mxu0 0.0
      %5158 = vmatprep.subr.mxu0 0.0
      %5159 = vmatpush1.msra.mxu0 0.0
      %5160 = vmatprep.subr.mxu0 0.0
      %5161 = vmatpush1.msra.mxu0 0.0
      %5162 = vmatprep.subr.mxu0 0.0
      %5163 = vmatpush1.msra.mxu0 0.0
      %5164 = vmatprep.subr.mxu0 0.0
      %5165 = vmatpush1.msra.mxu0 %v5085
      %5166 = vmatprep.subr.mxu0 0.0
      %5167 = vmatpush2.msra.mxu0 0.0
      %5168 = vmatprep.subr.mxu0 0.0
      %5169 = vmatpush2.msra.mxu0 0.0
      %5170 = vmatprep.subr.mxu0 0.0
      %5171 = vmatpush2.msra.mxu0 0.0
      %5172 = vmatprep.subr.mxu0 0.0
      %5173 = vmatpush2.msra.mxu0 0.0
      %5174 = vmatprep.subr.mxu0 0.0
      %5175 = vmatpush2.msra.mxu0 0.0
      %5176 = vmatprep.subr.mxu0 0.0
      %5177 = vmatpush2.msra.mxu0 0.0
      %5178 = vmatprep.subr.mxu0 0.0
      %5179 = vmatpush2.msra.mxu0 0.0
      %5180 = vmatprep.subr.mxu0 0.0
      %5181 = vmatpush2.msra.mxu0 0.0
      %5182 = vmatprep.subr.mxu0 0.0
      %5183 = vmatpush2.msra.mxu0 0.0
      %5184 = vmatprep.subr.mxu0 0.0
      %5185 = vmatpush2.msra.mxu0 0.0
      %5186 = vmatprep.subr.mxu0 0.0
      %5187 = vmatpush2.msra.mxu0 0.0
      %5188 = vmatprep.subr.mxu0 0.0
      %5189 = vmatpush2.msra.mxu0 0.0
      %5190 = vmatprep.subr.mxu0 0.0
      %5191 = vmatpush2.msra.mxu0 0.0
      %5192 = vmatprep.subr.mxu0 0.0
      %5193 = vmatpush2.msra.mxu0 0.0
      %5194 = vmatprep.subr.mxu0 0.0
      %5195 = vmatpush2.msra.mxu0 0.0
      %5196 = vmatprep.subr.mxu0 0.0
      %5197 = vmatpush2.msra.mxu0 0.0
      %5198 = vmatprep.mubr.f32.mxu0 0.0
      %5199 = vmatmul.mubr.f32.gmra.mxu0 %v5087
      %v5200 = vpop.f32.mrf.mxu0
      %v5201 = vadd.f32 0.0, %v5200
      %v5202 = vpop.f32.mrf.mxu0
      %5203 = vmatprep.mubr.f32.mxu0 0.0
      %5204 = vmatmul.mubr.f32.gmra.mxu0 %v5090
      %v5205 = vpop.f32.mrf.mxu0
      %v5206 = vadd.f32 0.0, %v5205
      %v5207 = vpop.f32.mrf.mxu0
      %5208 = vmatprep.mubr.f32.mxu0 0.0
      %5209 = vmatmul.mubr.f32.gmra.mxu0 %v5093
      %v5210 = vpop.f32.mrf.mxu0
      %v5211 = vadd.f32 0.0, %v5210
      %v5212 = vpop.f32.mrf.mxu0
      %5213 = vmatprep.mubr.f32.mxu0 0.0
      %5214 = vmatmul.mubr.f32.gmra.mxu0 %v5096
      %v5215 = vpop.f32.mrf.mxu0
      %v5216 = vadd.f32 0.0, %v5215
      %v5217 = vpop.f32.mrf.mxu0
      %5218 = vmatprep.mubr.f32.mxu0 0.0
      %5219 = vmatmul.mubr.f32.gmra.mxu0 %v5099
      %v5220 = vpop.f32.mrf.mxu0
      %v5221 = vadd.f32 0.0, %v5220
      %v5222 = vpop.f32.mrf.mxu0
      %5223 = vmatprep.mubr.f32.mxu0 0.0
      %5224 = vmatmul.mubr.f32.gmra.mxu0 %v5102
      %v5225 = vpop.f32.mrf.mxu0
      %v5226 = vadd.f32 0.0, %v5225
      %v5227 = vpop.f32.mrf.mxu0
      %5228 = vmatprep.mubr.f32.mxu0 0.0
      %5229 = vmatmul.mubr.f32.gmra.mxu0 %v5105
      %v5230 = vpop.f32.mrf.mxu0
      %v5231 = vadd.f32 0.0, %v5230
      %v5232 = vpop.f32.mrf.mxu0
      %5233 = vmatprep.mubr.f32.mxu0 0.0
      %5234 = vmatmul.mubr.f32.gmra.mxu0 %v5108
      %v5235 = vpop.f32.mrf.mxu0
      %v5236 = vadd.f32 0.0, %v5235
      %v5237 = vpop.f32.mrf.mxu0
      %5238 = vmatprep.mubr.f32.mxu0 0.0
      %5239 = vmatmul.mubr.f32.gmra.mxu0 %v5111
      %v5240 = vpop.f32.mrf.mxu0
      %v5241 = vadd.f32 0.0, %v5240
      %v5242 = vpop.f32.mrf.mxu0
      %5243 = vmatprep.mubr.f32.mxu0 0.0
      %5244 = vmatmul.mubr.f32.gmra.mxu0 %v5114
      %v5245 = vpop.f32.mrf.mxu0
      %v5246 = vadd.f32 0.0, %v5245
      %v5247 = vpop.f32.mrf.mxu0
      %5248 = vmatprep.mubr.f32.mxu0 0.0
      %5249 = vmatmul.mubr.f32.gmra.mxu0 %v5117
      %v5250 = vpop.f32.mrf.mxu0
      %v5251 = vadd.f32 0.0, %v5250
      %v5252 = vpop.f32.mrf.mxu0
      %5253 = vmatprep.mubr.f32.mxu0 0.0
      %5254 = vmatmul.mubr.f32.gmra.mxu0 %v5120
      %v5255 = vpop.f32.mrf.mxu0
      %v5256 = vadd.f32 0.0, %v5255
      %v5257 = vpop.f32.mrf.mxu0
      %5258 = vmatprep.mubr.f32.mxu0 0.0
      %5259 = vmatmul.mubr.f32.gmra.mxu0 %v5123
      %v5260 = vpop.f32.mrf.mxu0
      %v5261 = vadd.f32 0.0, %v5260
      %v5262 = vpop.f32.mrf.mxu0
      %5263 = vmatprep.mubr.f32.mxu0 0.0
      %5264 = vmatmul.mubr.f32.gmra.mxu0 %v5126
      %v5265 = vpop.f32.mrf.mxu0
      %v5266 = vadd.f32 0.0, %v5265
      %v5267 = vpop.f32.mrf.mxu0
      %5268 = vmatprep.mubr.f32.mxu0 0.0
      %5269 = vmatmul.mubr.f32.gmra.mxu0 %v5129
      %v5270 = vpop.f32.mrf.mxu0
      %v5271 = vadd.f32 0.0, %v5270
      %v5272 = vpop.f32.mrf.mxu0
      %5273 = vmatprep.mubr.f32.mxu0 0.0
      %5274 = vmatmul.mubr.f32.gmra.mxu0 %v5132
      %v5275 = vpop.f32.mrf.mxu0
      %v5276 = vadd.f32 0.0, %v5275
      %v5277 = vpop.f32.mrf.mxu0
      %5278 = vdwg.mxu0
      %v5279 = vadd.f32 %v5052, %v5201
      %v5280 = vadd.f32 %v5053, %v5206
      %v5281 = vadd.f32 %v5054, %v5211
      %v5282 = vadd.f32 %v5055, %v5216
      %v5283 = vadd.f32 %v5056, %v5221
      %v5284 = vadd.f32 %v5057, %v5226
      %v5285 = vadd.f32 %v5058, %v5231
      %v5286 = vadd.f32 %v5059, %v5236
      %v5287 = vadd.f32 %v5060, %v5241
      %v5288 = vadd.f32 %v5061, %v5246
      %v5289 = vadd.f32 %v5062, %v5251
      %v5290 = vadd.f32 %v5063, %v5256
      %v5291 = vadd.f32 %v5064, %v5261
      %v5292 = vadd.f32 %v5065, %v5266
      %v5293 = vadd.f32 %v5066, %v5271
      %v5294 = vadd.f32 %v5067, %v5276
      %v5295 = vld [vmem:[%s2483 + $0x2] sm:$0xff]
      %v5296 = vld [vmem:[%s2483 + $0xa] sm:$0xff]
      %v5297 = vld [vmem:[%s2483 + $0x1a] sm:$0xff]
      %v5298 = vld [vmem:[%s2483 + $0x22] sm:$0xff]
      %v5299 = vld [vmem:[%s2483 + $0x32] sm:$0xff]
      %v5300 = vld [vmem:[%s2483 + $0x3a] sm:$0xff]
      %v5301 = vld [vmem:[%s2483 + $0x4a] sm:$0xff]
      %v5302 = vld [vmem:[%s2483 + $0x52] sm:$0xff]
      %v5303 = vld [vmem:[%s2483 + $0x62] sm:$0xff]
      %v5304 = vld [vmem:[%s2483 + $0x6a] sm:$0xff]
      %v5305 = vld [vmem:[%s2483 + $0x7a] sm:$0xff]
      %v5306 = vld [vmem:[%s2483 + $0x82] sm:$0xff]
      %v5307 = vld [vmem:[%s2483 + $0x92] sm:$0xff]
      %v5308 = vld [vmem:[%s2483 + $0x9a] sm:$0xff]
      %v5309 = vld [vmem:[%s2483 + $0xaa] sm:$0xff]
      %v5310 = vld [vmem:[%s2483 + $0xb2] sm:$0xff]
      %s5311 = scalar_lea.vmem %s3, 40
      %v5312 = vld [vmem:[%s5311] sm:$0xff]
      %v5314 = vsel %vm2484, %v5295, 0
      %v5317 = vsel %vm2484, %v5296, 0
      %v5320 = vsel %vm2484, %v5297, 0
      %v5323 = vsel %vm2484, %v5298, 0
      %v5326 = vsel %vm2484, %v5299, 0
      %v5329 = vsel %vm2484, %v5300, 0
      %v5332 = vsel %vm2484, %v5301, 0
      %v5335 = vsel %vm2484, %v5302, 0
      %v5338 = vsel %vm2484, %v5303, 0
      %v5341 = vsel %vm2484, %v5304, 0
      %v5344 = vsel %vm2484, %v5305, 0
      %v5347 = vsel %vm2484, %v5306, 0
      %v5350 = vsel %vm2484, %v5307, 0
      %v5353 = vsel %vm2484, %v5308, 0
      %v5356 = vsel %vm2484, %v5309, 0
      %v5359 = vsel %vm2484, %v5310, 0
      %5361 = vmatprep.subr.mxu0 0.0
      %5362 = vmatpush1.msra.mxu0 0.0
      %5363 = vmatprep.subr.mxu0 0.0
      %5364 = vmatpush1.msra.mxu0 0.0
      %5365 = vmatprep.subr.mxu0 0.0
      %5366 = vmatpush1.msra.mxu0 0.0
      %5367 = vmatprep.subr.mxu0 0.0
      %5368 = vmatpush1.msra.mxu0 0.0
      %5369 = vmatprep.subr.mxu0 0.0
      %5370 = vmatpush1.msra.mxu0 0.0
      %5371 = vmatprep.subr.mxu0 0.0
      %5372 = vmatpush1.msra.mxu0 0.0
      %5373 = vmatprep.subr.mxu0 0.0
      %5374 = vmatpush1.msra.mxu0 0.0
      %5375 = vmatprep.subr.mxu0 0.0
      %5376 = vmatpush1.msra.mxu0 0.0
      %5377 = vmatprep.subr.mxu0 0.0
      %5378 = vmatpush1.msra.mxu0 0.0
      %5379 = vmatprep.subr.mxu0 0.0
      %5380 = vmatpush1.msra.mxu0 0.0
      %5381 = vmatprep.subr.mxu0 0.0
      %5382 = vmatpush1.msra.mxu0 0.0
      %5383 = vmatprep.subr.mxu0 0.0
      %5384 = vmatpush1.msra.mxu0 0.0
      %5385 = vmatprep.subr.mxu0 0.0
      %5386 = vmatpush1.msra.mxu0 0.0
      %5387 = vmatprep.subr.mxu0 0.0
      %5388 = vmatpush1.msra.mxu0 0.0
      %5389 = vmatprep.subr.mxu0 0.0
      %5390 = vmatpush1.msra.mxu0 0.0
      %5391 = vmatprep.subr.mxu0 0.0
      %5392 = vmatpush1.msra.mxu0 %v5312
      %5393 = vmatprep.subr.mxu0 0.0
      %5394 = vmatpush2.msra.mxu0 0.0
      %5395 = vmatprep.subr.mxu0 0.0
      %5396 = vmatpush2.msra.mxu0 0.0
      %5397 = vmatprep.subr.mxu0 0.0
      %5398 = vmatpush2.msra.mxu0 0.0
      %5399 = vmatprep.subr.mxu0 0.0
      %5400 = vmatpush2.msra.mxu0 0.0
      %5401 = vmatprep.subr.mxu0 0.0
      %5402 = vmatpush2.msra.mxu0 0.0
      %5403 = vmatprep.subr.mxu0 0.0
      %5404 = vmatpush2.msra.mxu0 0.0
      %5405 = vmatprep.subr.mxu0 0.0
      %5406 = vmatpush2.msra.mxu0 0.0
      %5407 = vmatprep.subr.mxu0 0.0
      %5408 = vmatpush2.msra.mxu0 0.0
      %5409 = vmatprep.subr.mxu0 0.0
      %5410 = vmatpush2.msra.mxu0 0.0
      %5411 = vmatprep.subr.mxu0 0.0
      %5412 = vmatpush2.msra.mxu0 0.0
      %5413 = vmatprep.subr.mxu0 0.0
      %5414 = vmatpush2.msra.mxu0 0.0
      %5415 = vmatprep.subr.mxu0 0.0
      %5416 = vmatpush2.msra.mxu0 0.0
      %5417 = vmatprep.subr.mxu0 0.0
      %5418 = vmatpush2.msra.mxu0 0.0
      %5419 = vmatprep.subr.mxu0 0.0
      %5420 = vmatpush2.msra.mxu0 0.0
      %5421 = vmatprep.subr.mxu0 0.0
      %5422 = vmatpush2.msra.mxu0 0.0
      %5423 = vmatprep.subr.mxu0 0.0
      %5424 = vmatpush2.msra.mxu0 0.0
      %5425 = vmatprep.mubr.f32.mxu0 0.0
      %5426 = vmatmul.mubr.f32.gmra.mxu0 %v5314
      %v5427 = vpop.f32.mrf.mxu0
      %v5428 = vadd.f32 0.0, %v5427
      %v5429 = vpop.f32.mrf.mxu0
      %5430 = vmatprep.mubr.f32.mxu0 0.0
      %5431 = vmatmul.mubr.f32.gmra.mxu0 %v5317
      %v5432 = vpop.f32.mrf.mxu0
      %v5433 = vadd.f32 0.0, %v5432
      %v5434 = vpop.f32.mrf.mxu0
      %5435 = vmatprep.mubr.f32.mxu0 0.0
      %5436 = vmatmul.mubr.f32.gmra.mxu0 %v5320
      %v5437 = vpop.f32.mrf.mxu0
      %v5438 = vadd.f32 0.0, %v5437
      %v5439 = vpop.f32.mrf.mxu0
      %5440 = vmatprep.mubr.f32.mxu0 0.0
      %5441 = vmatmul.mubr.f32.gmra.mxu0 %v5323
      %v5442 = vpop.f32.mrf.mxu0
      %v5443 = vadd.f32 0.0, %v5442
      %v5444 = vpop.f32.mrf.mxu0
      %5445 = vmatprep.mubr.f32.mxu0 0.0
      %5446 = vmatmul.mubr.f32.gmra.mxu0 %v5326
      %v5447 = vpop.f32.mrf.mxu0
      %v5448 = vadd.f32 0.0, %v5447
      %v5449 = vpop.f32.mrf.mxu0
      %5450 = vmatprep.mubr.f32.mxu0 0.0
      %5451 = vmatmul.mubr.f32.gmra.mxu0 %v5329
      %v5452 = vpop.f32.mrf.mxu0
      %v5453 = vadd.f32 0.0, %v5452
      %v5454 = vpop.f32.mrf.mxu0
      %5455 = vmatprep.mubr.f32.mxu0 0.0
      %5456 = vmatmul.mubr.f32.gmra.mxu0 %v5332
      %v5457 = vpop.f32.mrf.mxu0
      %v5458 = vadd.f32 0.0, %v5457
      %v5459 = vpop.f32.mrf.mxu0
      %5460 = vmatprep.mubr.f32.mxu0 0.0
      %5461 = vmatmul.mubr.f32.gmra.mxu0 %v5335
      %v5462 = vpop.f32.mrf.mxu0
      %v5463 = vadd.f32 0.0, %v5462
      %v5464 = vpop.f32.mrf.mxu0
      %5465 = vmatprep.mubr.f32.mxu0 0.0
      %5466 = vmatmul.mubr.f32.gmra.mxu0 %v5338
      %v5467 = vpop.f32.mrf.mxu0
      %v5468 = vadd.f32 0.0, %v5467
      %v5469 = vpop.f32.mrf.mxu0
      %5470 = vmatprep.mubr.f32.mxu0 0.0
      %5471 = vmatmul.mubr.f32.gmra.mxu0 %v5341
      %v5472 = vpop.f32.mrf.mxu0
      %v5473 = vadd.f32 0.0, %v5472
      %v5474 = vpop.f32.mrf.mxu0
      %5475 = vmatprep.mubr.f32.mxu0 0.0
      %5476 = vmatmul.mubr.f32.gmra.mxu0 %v5344
      %v5477 = vpop.f32.mrf.mxu0
      %v5478 = vadd.f32 0.0, %v5477
      %v5479 = vpop.f32.mrf.mxu0
      %5480 = vmatprep.mubr.f32.mxu0 0.0
      %5481 = vmatmul.mubr.f32.gmra.mxu0 %v5347
      %v5482 = vpop.f32.mrf.mxu0
      %v5483 = vadd.f32 0.0, %v5482
      %v5484 = vpop.f32.mrf.mxu0
      %5485 = vmatprep.mubr.f32.mxu0 0.0
      %5486 = vmatmul.mubr.f32.gmra.mxu0 %v5350
      %v5487 = vpop.f32.mrf.mxu0
      %v5488 = vadd.f32 0.0, %v5487
      %v5489 = vpop.f32.mrf.mxu0
      %5490 = vmatprep.mubr.f32.mxu0 0.0
      %5491 = vmatmul.mubr.f32.gmra.mxu0 %v5353
      %v5492 = vpop.f32.mrf.mxu0
      %v5493 = vadd.f32 0.0, %v5492
      %v5494 = vpop.f32.mrf.mxu0
      %5495 = vmatprep.mubr.f32.mxu0 0.0
      %5496 = vmatmul.mubr.f32.gmra.mxu0 %v5356
      %v5497 = vpop.f32.mrf.mxu0
      %v5498 = vadd.f32 0.0, %v5497
      %v5499 = vpop.f32.mrf.mxu0
      %5500 = vmatprep.mubr.f32.mxu0 0.0
      %5501 = vmatmul.mubr.f32.gmra.mxu0 %v5359
      %v5502 = vpop.f32.mrf.mxu0
      %v5503 = vadd.f32 0.0, %v5502
      %v5504 = vpop.f32.mrf.mxu0
      %5505 = vdwg.mxu0
      %v5506 = vadd.f32 %v5279, %v5428
      %v5507 = vadd.f32 %v5280, %v5433
      %v5508 = vadd.f32 %v5281, %v5438
      %v5509 = vadd.f32 %v5282, %v5443
      %v5510 = vadd.f32 %v5283, %v5448
      %v5511 = vadd.f32 %v5284, %v5453
      %v5512 = vadd.f32 %v5285, %v5458
      %v5513 = vadd.f32 %v5286, %v5463
      %v5514 = vadd.f32 %v5287, %v5468
      %v5515 = vadd.f32 %v5288, %v5473
      %v5516 = vadd.f32 %v5289, %v5478
      %v5517 = vadd.f32 %v5290, %v5483
      %v5518 = vadd.f32 %v5291, %v5488
      %v5519 = vadd.f32 %v5292, %v5493
      %v5520 = vadd.f32 %v5293, %v5498
      %v5521 = vadd.f32 %v5294, %v5503
      %s5522 = scalar_lea.vmem [#allocation3], 48
      %v5523 = vld [vmem:[%s5522] sm:$0xff]
      %v5524 = vld [vmem:[%s5522 + $0x8] sm:$0xff]
      %v5525 = vld [vmem:[%s5522 + $0x18] sm:$0xff]
      %v5526 = vld [vmem:[%s5522 + $0x20] sm:$0xff]
      %v5527 = vld [vmem:[%s5522 + $0x30] sm:$0xff]
      %v5528 = vld [vmem:[%s5522 + $0x38] sm:$0xff]
      %v5529 = vld [vmem:[%s5522 + $0x48] sm:$0xff]
      %v5530 = vld [vmem:[%s5522 + $0x50] sm:$0xff]
      %v5531 = vld [vmem:[%s5522 + $0x60] sm:$0xff]
      %v5532 = vld [vmem:[%s5522 + $0x68] sm:$0xff]
      %v5533 = vld [vmem:[%s5522 + $0x78] sm:$0xff]
      %v5534 = vld [vmem:[%s5522 + $0x80] sm:$0xff]
      %v5535 = vld [vmem:[%s5522 + $0x90] sm:$0xff]
      %v5536 = vld [vmem:[%s5522 + $0x98] sm:$0xff]
      %v5537 = vld [vmem:[%s5522 + $0xa8] sm:$0xff]
      %v5538 = vld [vmem:[%s5522 + $0xb0] sm:$0xff]
      %s5539 = scalar_lea.vmem %s3, 48
      %v5540 = vld [vmem:[%s5539] sm:$0xff]
      %v5542 = vsel %vm2484, %v5523, 0
      %v5545 = vsel %vm2484, %v5524, 0
      %v5548 = vsel %vm2484, %v5525, 0
      %v5551 = vsel %vm2484, %v5526, 0
      %v5554 = vsel %vm2484, %v5527, 0
      %v5557 = vsel %vm2484, %v5528, 0
      %v5560 = vsel %vm2484, %v5529, 0
      %v5563 = vsel %vm2484, %v5530, 0
      %v5566 = vsel %vm2484, %v5531, 0
      %v5569 = vsel %vm2484, %v5532, 0
      %v5572 = vsel %vm2484, %v5533, 0
      %v5575 = vsel %vm2484, %v5534, 0
      %v5578 = vsel %vm2484, %v5535, 0
      %v5581 = vsel %vm2484, %v5536, 0
      %v5584 = vsel %vm2484, %v5537, 0
      %v5587 = vsel %vm2484, %v5538, 0
      %5589 = vmatprep.subr.mxu0 0.0
      %5590 = vmatpush1.msra.mxu0 0.0
      %5591 = vmatprep.subr.mxu0 0.0
      %5592 = vmatpush1.msra.mxu0 0.0
      %5593 = vmatprep.subr.mxu0 0.0
      %5594 = vmatpush1.msra.mxu0 0.0
      %5595 = vmatprep.subr.mxu0 0.0
      %5596 = vmatpush1.msra.mxu0 0.0
      %5597 = vmatprep.subr.mxu0 0.0
      %5598 = vmatpush1.msra.mxu0 0.0
      %5599 = vmatprep.subr.mxu0 0.0
      %5600 = vmatpush1.msra.mxu0 0.0
      %5601 = vmatprep.subr.mxu0 0.0
      %5602 = vmatpush1.msra.mxu0 0.0
      %5603 = vmatprep.subr.mxu0 0.0
      %5604 = vmatpush1.msra.mxu0 0.0
      %5605 = vmatprep.subr.mxu0 0.0
      %5606 = vmatpush1.msra.mxu0 0.0
      %5607 = vmatprep.subr.mxu0 0.0
      %5608 = vmatpush1.msra.mxu0 0.0
      %5609 = vmatprep.subr.mxu0 0.0
      %5610 = vmatpush1.msra.mxu0 0.0
      %5611 = vmatprep.subr.mxu0 0.0
      %5612 = vmatpush1.msra.mxu0 0.0
      %5613 = vmatprep.subr.mxu0 0.0
      %5614 = vmatpush1.msra.mxu0 0.0
      %5615 = vmatprep.subr.mxu0 0.0
      %5616 = vmatpush1.msra.mxu0 0.0
      %5617 = vmatprep.subr.mxu0 0.0
      %5618 = vmatpush1.msra.mxu0 0.0
      %5619 = vmatprep.subr.mxu0 0.0
      %5620 = vmatpush1.msra.mxu0 %v5540
      %5621 = vmatprep.subr.mxu0 0.0
      %5622 = vmatpush2.msra.mxu0 0.0
      %5623 = vmatprep.subr.mxu0 0.0
      %5624 = vmatpush2.msra.mxu0 0.0
      %5625 = vmatprep.subr.mxu0 0.0
      %5626 = vmatpush2.msra.mxu0 0.0
      %5627 = vmatprep.subr.mxu0 0.0
      %5628 = vmatpush2.msra.mxu0 0.0
      %5629 = vmatprep.subr.mxu0 0.0
      %5630 = vmatpush2.msra.mxu0 0.0
      %5631 = vmatprep.subr.mxu0 0.0
      %5632 = vmatpush2.msra.mxu0 0.0
      %5633 = vmatprep.subr.mxu0 0.0
      %5634 = vmatpush2.msra.mxu0 0.0
      %5635 = vmatprep.subr.mxu0 0.0
      %5636 = vmatpush2.msra.mxu0 0.0
      %5637 = vmatprep.subr.mxu0 0.0
      %5638 = vmatpush2.msra.mxu0 0.0
      %5639 = vmatprep.subr.mxu0 0.0
      %5640 = vmatpush2.msra.mxu0 0.0
      %5641 = vmatprep.subr.mxu0 0.0
      %5642 = vmatpush2.msra.mxu0 0.0
      %5643 = vmatprep.subr.mxu0 0.0
      %5644 = vmatpush2.msra.mxu0 0.0
      %5645 = vmatprep.subr.mxu0 0.0
      %5646 = vmatpush2.msra.mxu0 0.0
      %5647 = vmatprep.subr.mxu0 0.0
      %5648 = vmatpush2.msra.mxu0 0.0
      %5649 = vmatprep.subr.mxu0 0.0
      %5650 = vmatpush2.msra.mxu0 0.0
      %5651 = vmatprep.subr.mxu0 0.0
      %5652 = vmatpush2.msra.mxu0 0.0
      %5653 = vmatprep.mubr.f32.mxu0 0.0
      %5654 = vmatmul.mubr.f32.gmra.mxu0 %v5542
      %v5655 = vpop.f32.mrf.mxu0
      %v5656 = vadd.f32 0.0, %v5655
      %v5657 = vpop.f32.mrf.mxu0
      %5658 = vmatprep.mubr.f32.mxu0 0.0
      %5659 = vmatmul.mubr.f32.gmra.mxu0 %v5545
      %v5660 = vpop.f32.mrf.mxu0
      %v5661 = vadd.f32 0.0, %v5660
      %v5662 = vpop.f32.mrf.mxu0
      %5663 = vmatprep.mubr.f32.mxu0 0.0
      %5664 = vmatmul.mubr.f32.gmra.mxu0 %v5548
      %v5665 = vpop.f32.mrf.mxu0
      %v5666 = vadd.f32 0.0, %v5665
      %v5667 = vpop.f32.mrf.mxu0
      %5668 = vmatprep.mubr.f32.mxu0 0.0
      %5669 = vmatmul.mubr.f32.gmra.mxu0 %v5551
      %v5670 = vpop.f32.mrf.mxu0
      %v5671 = vadd.f32 0.0, %v5670
      %v5672 = vpop.f32.mrf.mxu0
      %5673 = vmatprep.mubr.f32.mxu0 0.0
      %5674 = vmatmul.mubr.f32.gmra.mxu0 %v5554
      %v5675 = vpop.f32.mrf.mxu0
      %v5676 = vadd.f32 0.0, %v5675
      %v5677 = vpop.f32.mrf.mxu0
      %5678 = vmatprep.mubr.f32.mxu0 0.0
      %5679 = vmatmul.mubr.f32.gmra.mxu0 %v5557
      %v5680 = vpop.f32.mrf.mxu0
      %v5681 = vadd.f32 0.0, %v5680
      %v5682 = vpop.f32.mrf.mxu0
      %5683 = vmatprep.mubr.f32.mxu0 0.0
      %5684 = vmatmul.mubr.f32.gmra.mxu0 %v5560
      %v5685 = vpop.f32.mrf.mxu0
      %v5686 = vadd.f32 0.0, %v5685
      %v5687 = vpop.f32.mrf.mxu0
      %5688 = vmatprep.mubr.f32.mxu0 0.0
      %5689 = vmatmul.mubr.f32.gmra.mxu0 %v5563
      %v5690 = vpop.f32.mrf.mxu0
      %v5691 = vadd.f32 0.0, %v5690
      %v5692 = vpop.f32.mrf.mxu0
      %5693 = vmatprep.mubr.f32.mxu0 0.0
      %5694 = vmatmul.mubr.f32.gmra.mxu0 %v5566
      %v5695 = vpop.f32.mrf.mxu0
      %v5696 = vadd.f32 0.0, %v5695
      %v5697 = vpop.f32.mrf.mxu0
      %5698 = vmatprep.mubr.f32.mxu0 0.0
      %5699 = vmatmul.mubr.f32.gmra.mxu0 %v5569
      %v5700 = vpop.f32.mrf.mxu0
      %v5701 = vadd.f32 0.0, %v5700
      %v5702 = vpop.f32.mrf.mxu0
      %5703 = vmatprep.mubr.f32.mxu0 0.0
      %5704 = vmatmul.mubr.f32.gmra.mxu0 %v5572
      %v5705 = vpop.f32.mrf.mxu0
      %v5706 = vadd.f32 0.0, %v5705
      %v5707 = vpop.f32.mrf.mxu0
      %5708 = vmatprep.mubr.f32.mxu0 0.0
      %5709 = vmatmul.mubr.f32.gmra.mxu0 %v5575
      %v5710 = vpop.f32.mrf.mxu0
      %v5711 = vadd.f32 0.0, %v5710
      %v5712 = vpop.f32.mrf.mxu0
      %5713 = vmatprep.mubr.f32.mxu0 0.0
      %5714 = vmatmul.mubr.f32.gmra.mxu0 %v5578
      %v5715 = vpop.f32.mrf.mxu0
      %v5716 = vadd.f32 0.0, %v5715
      %v5717 = vpop.f32.mrf.mxu0
      %5718 = vmatprep.mubr.f32.mxu0 0.0
      %5719 = vmatmul.mubr.f32.gmra.mxu0 %v5581
      %v5720 = vpop.f32.mrf.mxu0
      %v5721 = vadd.f32 0.0, %v5720
      %v5722 = vpop.f32.mrf.mxu0
      %5723 = vmatprep.mubr.f32.mxu0 0.0
      %5724 = vmatmul.mubr.f32.gmra.mxu0 %v5584
      %v5725 = vpop.f32.mrf.mxu0
      %v5726 = vadd.f32 0.0, %v5725
      %v5727 = vpop.f32.mrf.mxu0
      %5728 = vmatprep.mubr.f32.mxu0 0.0
      %5729 = vmatmul.mubr.f32.gmra.mxu0 %v5587
      %v5730 = vpop.f32.mrf.mxu0
      %v5731 = vadd.f32 0.0, %v5730
      %v5732 = vpop.f32.mrf.mxu0
      %5733 = vdwg.mxu0
      %v5734 = vadd.f32 %v5506, %v5656
      %v5735 = vadd.f32 %v5507, %v5661
      %v5736 = vadd.f32 %v5508, %v5666
      %v5737 = vadd.f32 %v5509, %v5671
      %v5738 = vadd.f32 %v5510, %v5676
      %v5739 = vadd.f32 %v5511, %v5681
      %v5740 = vadd.f32 %v5512, %v5686
      %v5741 = vadd.f32 %v5513, %v5691
      %v5742 = vadd.f32 %v5514, %v5696
      %v5743 = vadd.f32 %v5515, %v5701
      %v5744 = vadd.f32 %v5516, %v5706
      %v5745 = vadd.f32 %v5517, %v5711
      %v5746 = vadd.f32 %v5518, %v5716
      %v5747 = vadd.f32 %v5519, %v5721
      %v5748 = vadd.f32 %v5520, %v5726
      %v5749 = vadd.f32 %v5521, %v5731
      %v5750 = vld [vmem:[%s5522 + $0x1] sm:$0xff]
      %v5751 = vld [vmem:[%s5522 + $0x9] sm:$0xff]
      %v5752 = vld [vmem:[%s5522 + $0x19] sm:$0xff]
      %v5753 = vld [vmem:[%s5522 + $0x21] sm:$0xff]
      %v5754 = vld [vmem:[%s5522 + $0x31] sm:$0xff]
      %v5755 = vld [vmem:[%s5522 + $0x39] sm:$0xff]
      %v5756 = vld [vmem:[%s5522 + $0x49] sm:$0xff]
      %v5757 = vld [vmem:[%s5522 + $0x51] sm:$0xff]
      %v5758 = vld [vmem:[%s5522 + $0x61] sm:$0xff]
      %v5759 = vld [vmem:[%s5522 + $0x69] sm:$0xff]
      %v5760 = vld [vmem:[%s5522 + $0x79] sm:$0xff]
      %v5761 = vld [vmem:[%s5522 + $0x81] sm:$0xff]
      %v5762 = vld [vmem:[%s5522 + $0x91] sm:$0xff]
      %v5763 = vld [vmem:[%s5522 + $0x99] sm:$0xff]
      %v5764 = vld [vmem:[%s5522 + $0xa9] sm:$0xff]
      %v5765 = vld [vmem:[%s5522 + $0xb1] sm:$0xff]
      %s5766 = scalar_lea.vmem %s3, 56
      %v5767 = vld [vmem:[%s5766] sm:$0xff]
      %v5769 = vsel %vm2484, %v5750, 0
      %v5772 = vsel %vm2484, %v5751, 0
      %v5775 = vsel %vm2484, %v5752, 0
      %v5778 = vsel %vm2484, %v5753, 0
      %v5781 = vsel %vm2484, %v5754, 0
      %v5784 = vsel %vm2484, %v5755, 0
      %v5787 = vsel %vm2484, %v5756, 0
      %v5790 = vsel %vm2484, %v5757, 0
      %v5793 = vsel %vm2484, %v5758, 0
      %v5796 = vsel %vm2484, %v5759, 0
      %v5799 = vsel %vm2484, %v5760, 0
      %v5802 = vsel %vm2484, %v5761, 0
      %v5805 = vsel %vm2484, %v5762, 0
      %v5808 = vsel %vm2484, %v5763, 0
      %v5811 = vsel %vm2484, %v5764, 0
      %v5814 = vsel %vm2484, %v5765, 0
      %5816 = vmatprep.subr.mxu0 0.0
      %5817 = vmatpush1.msra.mxu0 0.0
      %5818 = vmatprep.subr.mxu0 0.0
      %5819 = vmatpush1.msra.mxu0 0.0
      %5820 = vmatprep.subr.mxu0 0.0
      %5821 = vmatpush1.msra.mxu0 0.0
      %5822 = vmatprep.subr.mxu0 0.0
      %5823 = vmatpush1.msra.mxu0 0.0
      %5824 = vmatprep.subr.mxu0 0.0
      %5825 = vmatpush1.msra.mxu0 0.0
      %5826 = vmatprep.subr.mxu0 0.0
      %5827 = vmatpush1.msra.mxu0 0.0
      %5828 = vmatprep.subr.mxu0 0.0
      %5829 = vmatpush1.msra.mxu0 0.0
      %5830 = vmatprep.subr.mxu0 0.0
      %5831 = vmatpush1.msra.mxu0 0.0
      %5832 = vmatprep.subr.mxu0 0.0
      %5833 = vmatpush1.msra.mxu0 0.0
      %5834 = vmatprep.subr.mxu0 0.0
      %5835 = vmatpush1.msra.mxu0 0.0
      %5836 = vmatprep.subr.mxu0 0.0
      %5837 = vmatpush1.msra.mxu0 0.0
      %5838 = vmatprep.subr.mxu0 0.0
      %5839 = vmatpush1.msra.mxu0 0.0
      %5840 = vmatprep.subr.mxu0 0.0
      %5841 = vmatpush1.msra.mxu0 0.0
      %5842 = vmatprep.subr.mxu0 0.0
      %5843 = vmatpush1.msra.mxu0 0.0
      %5844 = vmatprep.subr.mxu0 0.0
      %5845 = vmatpush1.msra.mxu0 0.0
      %5846 = vmatprep.subr.mxu0 0.0
      %5847 = vmatpush1.msra.mxu0 %v5767
      %5848 = vmatprep.subr.mxu0 0.0
      %5849 = vmatpush2.msra.mxu0 0.0
      %5850 = vmatprep.subr.mxu0 0.0
      %5851 = vmatpush2.msra.mxu0 0.0
      %5852 = vmatprep.subr.mxu0 0.0
      %5853 = vmatpush2.msra.mxu0 0.0
      %5854 = vmatprep.subr.mxu0 0.0
      %5855 = vmatpush2.msra.mxu0 0.0
      %5856 = vmatprep.subr.mxu0 0.0
      %5857 = vmatpush2.msra.mxu0 0.0
      %5858 = vmatprep.subr.mxu0 0.0
      %5859 = vmatpush2.msra.mxu0 0.0
      %5860 = vmatprep.subr.mxu0 0.0
      %5861 = vmatpush2.msra.mxu0 0.0
      %5862 = vmatprep.subr.mxu0 0.0
      %5863 = vmatpush2.msra.mxu0 0.0
      %5864 = vmatprep.subr.mxu0 0.0
      %5865 = vmatpush2.msra.mxu0 0.0
      %5866 = vmatprep.subr.mxu0 0.0
      %5867 = vmatpush2.msra.mxu0 0.0
      %5868 = vmatprep.subr.mxu0 0.0
      %5869 = vmatpush2.msra.mxu0 0.0
      %5870 = vmatprep.subr.mxu0 0.0
      %5871 = vmatpush2.msra.mxu0 0.0
      %5872 = vmatprep.subr.mxu0 0.0
      %5873 = vmatpush2.msra.mxu0 0.0
      %5874 = vmatprep.subr.mxu0 0.0
      %5875 = vmatpush2.msra.mxu0 0.0
      %5876 = vmatprep.subr.mxu0 0.0
      %5877 = vmatpush2.msra.mxu0 0.0
      %5878 = vmatprep.subr.mxu0 0.0
      %5879 = vmatpush2.msra.mxu0 0.0
      %5880 = vmatprep.mubr.f32.mxu0 0.0
      %5881 = vmatmul.mubr.f32.gmra.mxu0 %v5769
      %v5882 = vpop.f32.mrf.mxu0
      %v5883 = vadd.f32 0.0, %v5882
      %v5884 = vpop.f32.mrf.mxu0
      %5885 = vmatprep.mubr.f32.mxu0 0.0
      %5886 = vmatmul.mubr.f32.gmra.mxu0 %v5772
      %v5887 = vpop.f32.mrf.mxu0
      %v5888 = vadd.f32 0.0, %v5887
      %v5889 = vpop.f32.mrf.mxu0
      %5890 = vmatprep.mubr.f32.mxu0 0.0
      %5891 = vmatmul.mubr.f32.gmra.mxu0 %v5775
      %v5892 = vpop.f32.mrf.mxu0
      %v5893 = vadd.f32 0.0, %v5892
      %v5894 = vpop.f32.mrf.mxu0
      %5895 = vmatprep.mubr.f32.mxu0 0.0
      %5896 = vmatmul.mubr.f32.gmra.mxu0 %v5778
      %v5897 = vpop.f32.mrf.mxu0
      %v5898 = vadd.f32 0.0, %v5897
      %v5899 = vpop.f32.mrf.mxu0
      %5900 = vmatprep.mubr.f32.mxu0 0.0
      %5901 = vmatmul.mubr.f32.gmra.mxu0 %v5781
      %v5902 = vpop.f32.mrf.mxu0
      %v5903 = vadd.f32 0.0, %v5902
      %v5904 = vpop.f32.mrf.mxu0
      %5905 = vmatprep.mubr.f32.mxu0 0.0
      %5906 = vmatmul.mubr.f32.gmra.mxu0 %v5784
      %v5907 = vpop.f32.mrf.mxu0
      %v5908 = vadd.f32 0.0, %v5907
      %v5909 = vpop.f32.mrf.mxu0
      %5910 = vmatprep.mubr.f32.mxu0 0.0
      %5911 = vmatmul.mubr.f32.gmra.mxu0 %v5787
      %v5912 = vpop.f32.mrf.mxu0
      %v5913 = vadd.f32 0.0, %v5912
      %v5914 = vpop.f32.mrf.mxu0
      %5915 = vmatprep.mubr.f32.mxu0 0.0
      %5916 = vmatmul.mubr.f32.gmra.mxu0 %v5790
      %v5917 = vpop.f32.mrf.mxu0
      %v5918 = vadd.f32 0.0, %v5917
      %v5919 = vpop.f32.mrf.mxu0
      %5920 = vmatprep.mubr.f32.mxu0 0.0
      %5921 = vmatmul.mubr.f32.gmra.mxu0 %v5793
      %v5922 = vpop.f32.mrf.mxu0
      %v5923 = vadd.f32 0.0, %v5922
      %v5924 = vpop.f32.mrf.mxu0
      %5925 = vmatprep.mubr.f32.mxu0 0.0
      %5926 = vmatmul.mubr.f32.gmra.mxu0 %v5796
      %v5927 = vpop.f32.mrf.mxu0
      %v5928 = vadd.f32 0.0, %v5927
      %v5929 = vpop.f32.mrf.mxu0
      %5930 = vmatprep.mubr.f32.mxu0 0.0
      %5931 = vmatmul.mubr.f32.gmra.mxu0 %v5799
      %v5932 = vpop.f32.mrf.mxu0
      %v5933 = vadd.f32 0.0, %v5932
      %v5934 = vpop.f32.mrf.mxu0
      %5935 = vmatprep.mubr.f32.mxu0 0.0
      %5936 = vmatmul.mubr.f32.gmra.mxu0 %v5802
      %v5937 = vpop.f32.mrf.mxu0
      %v5938 = vadd.f32 0.0, %v5937
      %v5939 = vpop.f32.mrf.mxu0
      %5940 = vmatprep.mubr.f32.mxu0 0.0
      %5941 = vmatmul.mubr.f32.gmra.mxu0 %v5805
      %v5942 = vpop.f32.mrf.mxu0
      %v5943 = vadd.f32 0.0, %v5942
      %v5944 = vpop.f32.mrf.mxu0
      %5945 = vmatprep.mubr.f32.mxu0 0.0
      %5946 = vmatmul.mubr.f32.gmra.mxu0 %v5808
      %v5947 = vpop.f32.mrf.mxu0
      %v5948 = vadd.f32 0.0, %v5947
      %v5949 = vpop.f32.mrf.mxu0
      %5950 = vmatprep.mubr.f32.mxu0 0.0
      %5951 = vmatmul.mubr.f32.gmra.mxu0 %v5811
      %v5952 = vpop.f32.mrf.mxu0
      %v5953 = vadd.f32 0.0, %v5952
      %v5954 = vpop.f32.mrf.mxu0
      %5955 = vmatprep.mubr.f32.mxu0 0.0
      %5956 = vmatmul.mubr.f32.gmra.mxu0 %v5814
      %v5957 = vpop.f32.mrf.mxu0
      %v5958 = vadd.f32 0.0, %v5957
      %v5959 = vpop.f32.mrf.mxu0
      %5960 = vdwg.mxu0
      %v5961 = vadd.f32 %v5734, %v5883
      %v5962 = vadd.f32 %v5735, %v5888
      %v5963 = vadd.f32 %v5736, %v5893
      %v5964 = vadd.f32 %v5737, %v5898
      %v5965 = vadd.f32 %v5738, %v5903
      %v5966 = vadd.f32 %v5739, %v5908
      %v5967 = vadd.f32 %v5740, %v5913
      %v5968 = vadd.f32 %v5741, %v5918
      %v5969 = vadd.f32 %v5742, %v5923
      %v5970 = vadd.f32 %v5743, %v5928
      %v5971 = vadd.f32 %v5744, %v5933
      %v5972 = vadd.f32 %v5745, %v5938
      %v5973 = vadd.f32 %v5746, %v5943
      %v5974 = vadd.f32 %v5747, %v5948
      %v5975 = vadd.f32 %v5748, %v5953
      %v5976 = vadd.f32 %v5749, %v5958
      %v5977 = vld [vmem:[%s5522 + $0x2] sm:$0xff]
      %v5978 = vld [vmem:[%s5522 + $0xa] sm:$0xff]
      %v5979 = vld [vmem:[%s5522 + $0x1a] sm:$0xff]
      %v5980 = vld [vmem:[%s5522 + $0x22] sm:$0xff]
      %v5981 = vld [vmem:[%s5522 + $0x32] sm:$0xff]
      %v5982 = vld [vmem:[%s5522 + $0x3a] sm:$0xff]
      %v5983 = vld [vmem:[%s5522 + $0x4a] sm:$0xff]
      %v5984 = vld [vmem:[%s5522 + $0x52] sm:$0xff]
      %v5985 = vld [vmem:[%s5522 + $0x62] sm:$0xff]
      %v5986 = vld [vmem:[%s5522 + $0x6a] sm:$0xff]
      %v5987 = vld [vmem:[%s5522 + $0x7a] sm:$0xff]
      %v5988 = vld [vmem:[%s5522 + $0x82] sm:$0xff]
      %v5989 = vld [vmem:[%s5522 + $0x92] sm:$0xff]
      %v5990 = vld [vmem:[%s5522 + $0x9a] sm:$0xff]
      %v5991 = vld [vmem:[%s5522 + $0xaa] sm:$0xff]
      %v5992 = vld [vmem:[%s5522 + $0xb2] sm:$0xff]
      %s5993 = scalar_lea.vmem %s3, 64
      %v5994 = vld [vmem:[%s5993] sm:$0xff]
      %v5996 = vsel %vm2484, %v5977, 0
      %v5999 = vsel %vm2484, %v5978, 0
      %v6002 = vsel %vm2484, %v5979, 0
      %v6005 = vsel %vm2484, %v5980, 0
      %v6008 = vsel %vm2484, %v5981, 0
      %v6011 = vsel %vm2484, %v5982, 0
      %v6014 = vsel %vm2484, %v5983, 0
      %v6017 = vsel %vm2484, %v5984, 0
      %v6020 = vsel %vm2484, %v5985, 0
      %v6023 = vsel %vm2484, %v5986, 0
      %v6026 = vsel %vm2484, %v5987, 0
      %v6029 = vsel %vm2484, %v5988, 0
      %v6032 = vsel %vm2484, %v5989, 0
      %v6035 = vsel %vm2484, %v5990, 0
      %v6038 = vsel %vm2484, %v5991, 0
      %v6041 = vsel %vm2484, %v5992, 0
      %6043 = vmatprep.subr.mxu0 0.0
      %6044 = vmatpush1.msra.mxu0 0.0
      %6045 = vmatprep.subr.mxu0 0.0
      %6046 = vmatpush1.msra.mxu0 0.0
      %6047 = vmatprep.subr.mxu0 0.0
      %6048 = vmatpush1.msra.mxu0 0.0
      %6049 = vmatprep.subr.mxu0 0.0
      %6050 = vmatpush1.msra.mxu0 0.0
      %6051 = vmatprep.subr.mxu0 0.0
      %6052 = vmatpush1.msra.mxu0 0.0
      %6053 = vmatprep.subr.mxu0 0.0
      %6054 = vmatpush1.msra.mxu0 0.0
      %6055 = vmatprep.subr.mxu0 0.0
      %6056 = vmatpush1.msra.mxu0 0.0
      %6057 = vmatprep.subr.mxu0 0.0
      %6058 = vmatpush1.msra.mxu0 0.0
      %6059 = vmatprep.subr.mxu0 0.0
      %6060 = vmatpush1.msra.mxu0 0.0
      %6061 = vmatprep.subr.mxu0 0.0
      %6062 = vmatpush1.msra.mxu0 0.0
      %6063 = vmatprep.subr.mxu0 0.0
      %6064 = vmatpush1.msra.mxu0 0.0
      %6065 = vmatprep.subr.mxu0 0.0
      %6066 = vmatpush1.msra.mxu0 0.0
      %6067 = vmatprep.subr.mxu0 0.0
      %6068 = vmatpush1.msra.mxu0 0.0
      %6069 = vmatprep.subr.mxu0 0.0
      %6070 = vmatpush1.msra.mxu0 0.0
      %6071 = vmatprep.subr.mxu0 0.0
      %6072 = vmatpush1.msra.mxu0 0.0
      %6073 = vmatprep.subr.mxu0 0.0
      %6074 = vmatpush1.msra.mxu0 %v5994
      %6075 = vmatprep.subr.mxu0 0.0
      %6076 = vmatpush2.msra.mxu0 0.0
      %6077 = vmatprep.subr.mxu0 0.0
      %6078 = vmatpush2.msra.mxu0 0.0
      %6079 = vmatprep.subr.mxu0 0.0
      %6080 = vmatpush2.msra.mxu0 0.0
      %6081 = vmatprep.subr.mxu0 0.0
      %6082 = vmatpush2.msra.mxu0 0.0
      %6083 = vmatprep.subr.mxu0 0.0
      %6084 = vmatpush2.msra.mxu0 0.0
      %6085 = vmatprep.subr.mxu0 0.0
      %6086 = vmatpush2.msra.mxu0 0.0
      %6087 = vmatprep.subr.mxu0 0.0
      %6088 = vmatpush2.msra.mxu0 0.0
      %6089 = vmatprep.subr.mxu0 0.0
      %6090 = vmatpush2.msra.mxu0 0.0
      %6091 = vmatprep.subr.mxu0 0.0
      %6092 = vmatpush2.msra.mxu0 0.0
      %6093 = vmatprep.subr.mxu0 0.0
      %6094 = vmatpush2.msra.mxu0 0.0
      %6095 = vmatprep.subr.mxu0 0.0
      %6096 = vmatpush2.msra.mxu0 0.0
      %6097 = vmatprep.subr.mxu0 0.0
      %6098 = vmatpush2.msra.mxu0 0.0
      %6099 = vmatprep.subr.mxu0 0.0
      %6100 = vmatpush2.msra.mxu0 0.0
      %6101 = vmatprep.subr.mxu0 0.0
      %6102 = vmatpush2.msra.mxu0 0.0
      %6103 = vmatprep.subr.mxu0 0.0
      %6104 = vmatpush2.msra.mxu0 0.0
      %6105 = vmatprep.subr.mxu0 0.0
      %6106 = vmatpush2.msra.mxu0 0.0
      %6107 = vmatprep.mubr.f32.mxu0 0.0
      %6108 = vmatmul.mubr.f32.gmra.mxu0 %v5996
      %v6109 = vpop.f32.mrf.mxu0
      %v6110 = vadd.f32 0.0, %v6109
      %v6111 = vpop.f32.mrf.mxu0
      %6112 = vmatprep.mubr.f32.mxu0 0.0
      %6113 = vmatmul.mubr.f32.gmra.mxu0 %v5999
      %v6114 = vpop.f32.mrf.mxu0
      %v6115 = vadd.f32 0.0, %v6114
      %v6116 = vpop.f32.mrf.mxu0
      %6117 = vmatprep.mubr.f32.mxu0 0.0
      %6118 = vmatmul.mubr.f32.gmra.mxu0 %v6002
      %v6119 = vpop.f32.mrf.mxu0
      %v6120 = vadd.f32 0.0, %v6119
      %v6121 = vpop.f32.mrf.mxu0
      %6122 = vmatprep.mubr.f32.mxu0 0.0
      %6123 = vmatmul.mubr.f32.gmra.mxu0 %v6005
      %v6124 = vpop.f32.mrf.mxu0
      %v6125 = vadd.f32 0.0, %v6124
      %v6126 = vpop.f32.mrf.mxu0
      %6127 = vmatprep.mubr.f32.mxu0 0.0
      %6128 = vmatmul.mubr.f32.gmra.mxu0 %v6008
      %v6129 = vpop.f32.mrf.mxu0
      %v6130 = vadd.f32 0.0, %v6129
      %v6131 = vpop.f32.mrf.mxu0
      %6132 = vmatprep.mubr.f32.mxu0 0.0
      %6133 = vmatmul.mubr.f32.gmra.mxu0 %v6011
      %v6134 = vpop.f32.mrf.mxu0
      %v6135 = vadd.f32 0.0, %v6134
      %v6136 = vpop.f32.mrf.mxu0
      %6137 = vmatprep.mubr.f32.mxu0 0.0
      %6138 = vmatmul.mubr.f32.gmra.mxu0 %v6014
      %v6139 = vpop.f32.mrf.mxu0
      %v6140 = vadd.f32 0.0, %v6139
      %v6141 = vpop.f32.mrf.mxu0
      %6142 = vmatprep.mubr.f32.mxu0 0.0
      %6143 = vmatmul.mubr.f32.gmra.mxu0 %v6017
      %v6144 = vpop.f32.mrf.mxu0
      %v6145 = vadd.f32 0.0, %v6144
      %v6146 = vpop.f32.mrf.mxu0
      %6147 = vmatprep.mubr.f32.mxu0 0.0
      %6148 = vmatmul.mubr.f32.gmra.mxu0 %v6020
      %v6149 = vpop.f32.mrf.mxu0
      %v6150 = vadd.f32 0.0, %v6149
      %v6151 = vpop.f32.mrf.mxu0
      %6152 = vmatprep.mubr.f32.mxu0 0.0
      %6153 = vmatmul.mubr.f32.gmra.mxu0 %v6023
      %v6154 = vpop.f32.mrf.mxu0
      %v6155 = vadd.f32 0.0, %v6154
      %v6156 = vpop.f32.mrf.mxu0
      %6157 = vmatprep.mubr.f32.mxu0 0.0
      %6158 = vmatmul.mubr.f32.gmra.mxu0 %v6026
      %v6159 = vpop.f32.mrf.mxu0
      %v6160 = vadd.f32 0.0, %v6159
      %v6161 = vpop.f32.mrf.mxu0
      %6162 = vmatprep.mubr.f32.mxu0 0.0
      %6163 = vmatmul.mubr.f32.gmra.mxu0 %v6029
      %v6164 = vpop.f32.mrf.mxu0
      %v6165 = vadd.f32 0.0, %v6164
      %v6166 = vpop.f32.mrf.mxu0
      %6167 = vmatprep.mubr.f32.mxu0 0.0
      %6168 = vmatmul.mubr.f32.gmra.mxu0 %v6032
      %v6169 = vpop.f32.mrf.mxu0
      %v6170 = vadd.f32 0.0, %v6169
      %v6171 = vpop.f32.mrf.mxu0
      %6172 = vmatprep.mubr.f32.mxu0 0.0
      %6173 = vmatmul.mubr.f32.gmra.mxu0 %v6035
      %v6174 = vpop.f32.mrf.mxu0
      %v6175 = vadd.f32 0.0, %v6174
      %v6176 = vpop.f32.mrf.mxu0
      %6177 = vmatprep.mubr.f32.mxu0 0.0
      %6178 = vmatmul.mubr.f32.gmra.mxu0 %v6038
      %v6179 = vpop.f32.mrf.mxu0
      %v6180 = vadd.f32 0.0, %v6179
      %v6181 = vpop.f32.mrf.mxu0
      %6182 = vmatprep.mubr.f32.mxu0 0.0
      %6183 = vmatmul.mubr.f32.gmra.mxu0 %v6041
      %v6184 = vpop.f32.mrf.mxu0
      %v6185 = vadd.f32 0.0, %v6184
      %v6186 = vpop.f32.mrf.mxu0
      %6187 = vdwg.mxu0
      %v6188 = vadd.f32 %v5961, %v6110
      %v6189 = vadd.f32 %v5962, %v6115
      %v6190 = vadd.f32 %v5963, %v6120
      %v6191 = vadd.f32 %v5964, %v6125
      %v6192 = vadd.f32 %v5965, %v6130
      %v6193 = vadd.f32 %v5966, %v6135
      %v6194 = vadd.f32 %v5967, %v6140
      %v6195 = vadd.f32 %v5968, %v6145
      %v6196 = vadd.f32 %v5969, %v6150
      %v6197 = vadd.f32 %v5970, %v6155
      %v6198 = vadd.f32 %v5971, %v6160
      %v6199 = vadd.f32 %v5972, %v6165
      %v6200 = vadd.f32 %v5973, %v6170
      %v6201 = vadd.f32 %v5974, %v6175
      %v6202 = vadd.f32 %v5975, %v6180
      %v6203 = vadd.f32 %v5976, %v6185
      %v6204 = vld [vmem:[%s4] sm:$0x1]
      %v6206 = vlaneseq
      %v6207 = vshrl.u32 %v6206, 7
      %v6208 = vsub.s32 0, %v6207
      %v6209 = vrot.slane %v6204, %v6208
      %v6211 = vadd.f32 %v6188, %v6209
      %v6212 = vadd.f32 %v6189, %v6209
      %v6213 = vadd.f32 %v6190, %v6209
      %v6214 = vadd.f32 %v6191, %v6209
      %v6215 = vadd.f32 %v6192, %v6209
      %v6216 = vadd.f32 %v6193, %v6209
      %v6217 = vadd.f32 %v6194, %v6209
      %v6218 = vadd.f32 %v6195, %v6209
      %v6219 = vadd.f32 %v6196, %v6209
      %v6220 = vadd.f32 %v6197, %v6209
      %v6221 = vadd.f32 %v6198, %v6209
      %v6222 = vadd.f32 %v6199, %v6209
      %v6223 = vadd.f32 %v6200, %v6209
      %v6224 = vadd.f32 %v6201, %v6209
      %v6225 = vadd.f32 %v6202, %v6209
      %v6226 = vadd.f32 %v6203, %v6209
      %vm6227 = vcmp.gt.f32.partialorder %v6211, 0.0
      %vm6228 = vcmp.gt.f32.partialorder %v6212, 0.0
      %vm6229 = vcmp.gt.f32.partialorder %v6213, 0.0
      %vm6230 = vcmp.gt.f32.partialorder %v6214, 0.0
      %vm6231 = vcmp.gt.f32.partialorder %v6215, 0.0
      %vm6232 = vcmp.gt.f32.partialorder %v6216, 0.0
      %vm6233 = vcmp.gt.f32.partialorder %v6217, 0.0
      %vm6234 = vcmp.gt.f32.partialorder %v6218, 0.0
      %vm6235 = vcmp.gt.f32.partialorder %v6219, 0.0
      %vm6236 = vcmp.gt.f32.partialorder %v6220, 0.0
      %vm6237 = vcmp.gt.f32.partialorder %v6221, 0.0
      %vm6238 = vcmp.gt.f32.partialorder %v6222, 0.0
      %vm6239 = vcmp.gt.f32.partialorder %v6223, 0.0
      %vm6240 = vcmp.gt.f32.partialorder %v6224, 0.0
      %vm6241 = vcmp.gt.f32.partialorder %v6225, 0.0
      %vm6242 = vcmp.gt.f32.partialorder %v6226, 0.0
      %v6243 = vmul.f32 %v6211, 0.01
      %v6244 = vmul.f32 %v6212, 0.01
      %v6245 = vmul.f32 %v6213, 0.01
      %v6246 = vmul.f32 %v6214, 0.01
      %v6247 = vmul.f32 %v6215, 0.01
      %v6248 = vmul.f32 %v6216, 0.01
      %v6249 = vmul.f32 %v6217, 0.01
      %v6250 = vmul.f32 %v6218, 0.01
      %v6251 = vmul.f32 %v6219, 0.01
      %v6252 = vmul.f32 %v6220, 0.01
      %v6253 = vmul.f32 %v6221, 0.01
      %v6254 = vmul.f32 %v6222, 0.01
      %v6255 = vmul.f32 %v6223, 0.01
      %v6256 = vmul.f32 %v6224, 0.01
      %v6257 = vmul.f32 %v6225, 0.01
      %v6258 = vmul.f32 %v6226, 0.01
      %v6259 = vsel %vm6227, %v6211, %v6243
      %v6260 = vsel %vm6228, %v6212, %v6244
      %v6261 = vsel %vm6229, %v6213, %v6245
      %v6262 = vsel %vm6230, %v6214, %v6246
      %v6263 = vsel %vm6231, %v6215, %v6247
      %v6264 = vsel %vm6232, %v6216, %v6248
      %v6265 = vsel %vm6233, %v6217, %v6249
      %v6266 = vsel %vm6234, %v6218, %v6250
      %v6267 = vsel %vm6235, %v6219, %v6251
      %v6268 = vsel %vm6236, %v6220, %v6252
      %v6269 = vsel %vm6237, %v6221, %v6253
      %v6270 = vsel %vm6238, %v6222, %v6254
      %v6271 = vsel %vm6239, %v6223, %v6255
      %v6272 = vsel %vm6240, %v6224, %v6256
      %v6273 = vsel %vm6241, %v6225, %v6257
      %v6274 = vsel %vm6242, %v6226, %v6258
      %6275 = vst.msk [vmem:[%s248] sm:$0xff] %vm2484, %v6259
      %6276 = vst.msk [vmem:[%s248 + $0x8] sm:$0xff] %vm2484, %v6260
      %6277 = vst.msk [vmem:[%s248 + $0x10] sm:$0xff] %vm2484, %v6261
      %6278 = vst.msk [vmem:[%s248 + $0x18] sm:$0xff] %vm2484, %v6262
      %6279 = vst.msk [vmem:[%s248 + $0x20] sm:$0xff] %vm2484, %v6263
      %6280 = vst.msk [vmem:[%s248 + $0x28] sm:$0xff] %vm2484, %v6264
      %6281 = vst.msk [vmem:[%s248 + $0x30] sm:$0xff] %vm2484, %v6265
      %6282 = vst.msk [vmem:[%s248 + $0x38] sm:$0xff] %vm2484, %v6266
      %6283 = vst.msk [vmem:[%s248 + $0x40] sm:$0xff] %vm2484, %v6267
      %6284 = vst.msk [vmem:[%s248 + $0x48] sm:$0xff] %vm2484, %v6268
      %6285 = vst.msk [vmem:[%s248 + $0x50] sm:$0xff] %vm2484, %v6269
      %6286 = vst.msk [vmem:[%s248 + $0x58] sm:$0xff] %vm2484, %v6270
      %6287 = vst.msk [vmem:[%s248 + $0x60] sm:$0xff] %vm2484, %v6271
      %6288 = vst.msk [vmem:[%s248 + $0x68] sm:$0xff] %vm2484, %v6272
      %6289 = vst.msk [vmem:[%s248 + $0x70] sm:$0xff] %vm2484, %v6273
      %6290 = vst.msk [vmem:[%s248 + $0x78] sm:$0xff] %vm2484, %v6274
      %s6291 = smul.u32 8, %s21
      %p6292 = scmp.lt.s32.totalorder %s20, 1
      %s6293 = scalar_select %p6292, %s20, 1
      %p6294 = scmp.lt.s32.totalorder %s6291, 15
      %s6295 = scalar_select %p6294, %s6291, 15
      %s6296 = smul.addr %s6295, 2
      %s6297 = smul.addr %s6293, 32
      %s6298 = sadd.s32 %s6296, %s6297
      %s6299 = smul.addr %s6298, 8
      %s6300 = scalar_lea.vmem %s5, %s6299
      // Predicated region
      $region41: #{double_conv_m.1} parent=39 // pred_check
        %p6301 = pneg %p158
      $region42: #{double_conv_m.1} parent=39 // pred_check_branch
        %6303 = sbr.rel (%p6301) target = $region44
      $region43: #{double_conv_m.1} parent=39 // pred_region
        %s6304 = smul.u32 8, %s21
      $region44: #{double_conv_m.1} parent=39 // pred_fallthru
        _
    $region40: #{double_conv_m.1} parent=5 // pred_fallthru
      _
    %p6305 = scmp.le.s32.totalorder 2, %s11
    // Predicated region
    $region45: #{double_conv_m.1} parent=5 // pred_check
      %p6306 = pneg %p6305
    $region46: #{double_conv_m.1} parent=5 // pred_check_branch
      %6308 = sbr.rel (%p6306) target = $region48
    $region47: #{double_conv_m.1} parent=5 // pred_region
      %s6309 = ssub.s32 %s11, 2
      // Predicated region
      $region49: #{double_conv_m.1} parent=47 // pred_check
        %p6310 = pneg %p164
      $region50: #{double_conv_m.1} parent=47 // pred_check_branch
        %6312 = sbr.rel (%p6310) target = $region52
      $region51: #{double_conv_m.1} parent=47 // pred_region
        %s6313 = smul.u32 8, %s23
        %p6314 = scmp.lt.s32.totalorder %s22, 1
        %s6315 = scalar_select %p6314, %s22, 1
        %p6316 = scmp.lt.s32.totalorder %s6313, 15
        %s6317 = scalar_select %p6316, %s6313, 15
        %s6318 = smul.addr %s6317, 2
        %s6319 = smul.addr %s6315, 32
        %s6320 = sadd.s32 %s6318, %s6319
        %s6321 = smul.addr %s6320, 8
        %s6322 = scalar_lea.vmem %s5, %s6321
      $region52: #{double_conv_m.1} parent=47 // pred_fallthru
        _
    $region48: #{double_conv_m.1} parent=5 // pred_fallthru
      _
  $region6: #{double_conv_m.1} parent=0 // loop_footer
    %s15 = sadd.s32 1, %s11
  $region7: #{double_conv_m.1} parent=0 // loop_footer_branch
    %10 = sbr.rel target = $region3
  $region8: #{double_conv_m.1} parent=0 // loop_exit
    _

</llo_original>
